<compile_context>
chip_gen: v7x
topology: tpu7x:2x2x1
jax: 0.10.0
libtpu: 0.0.40
codegen_flags: <defaults>
</compile_context>

<pallas_src>
import functools
import math

import jax
import jax.numpy as jnp
from jax.experimental import pallas as pl
from jax.experimental.pallas import tpu as pltpu

EPS = 1e-5        # PyTorch BatchNorm2d default eps
_LANES = 128      # TPU lane width: channel padding target

_TAPS3 = tuple((ky, kx) for ky in range(3) for kx in range(3))   # 3x3, stride 1
_TAPS2 = ((0, 0), (0, 1), (1, 0), (1, 1))                        # 2x2 (space-to-depth'd stride 2)


# ----------------------------- small helpers -----------------------------

def _round_up(x, m):
    return ((x + m - 1) // m) * m


def _pad_last(a, n):
    pad = n - a.shape[-1]
    if pad == 0:
        return a
    cfg = [(0, 0)] * (a.ndim - 1) + [(0, pad)]
    return jnp.pad(a, cfg)


def _bn_vec(v, n):
    """(C,) scale/bias -> (1, 1, n) f32 (zero pad => padded channels stay 0)."""
    return jnp.pad(v.astype(jnp.float32), (0, n - v.shape[0])).reshape(1, 1, n)


def _space_to_depth2(x):
    """(N,H,W,C) -> (N,H/2,W/2,4C) with channel order (by, bx, c)."""
    n, h, w, c = x.shape
    x = x.reshape(n, h // 2, 2, w // 2, 2, c)
    x = jnp.transpose(x, (0, 1, 3, 2, 4, 5))
    return x.reshape(n, h // 2, w // 2, 4 * c)


def _pack_w3(w, cip, cop):
    """(3,3,Cin,Cout) -> (9, cip, cop) bf16 tap matrices (tap = ky*3+kx)."""
    kh, kw, cin, cout = w.shape
    wt = w.reshape(kh * kw, cin, cout)
    wt = jnp.pad(wt, ((0, 0), (0, cip - cin), (0, cop - cout)))
    return wt.astype(jnp.bfloat16)


def _pack_w3_s2d(w, cip, cop):
    """Re-pack a 3x3 stride-2 conv weight into 4 stride-1 taps over the
    space-to-depth'd input.  Tap (ay,ax) block for group (by,bx) is
    w[2*ay+by-1, 2*ax+bx-1] (zero when out of the 3x3 range)."""
    _, _, cin, cout = w.shape
    blocks = []
    for ay in (0, 1):
        for ax in (0, 1):
            groups = []
            for by in (0, 1):
                for bx in (0, 1):
                    ky, kx = 2 * ay + by - 1, 2 * ax + bx - 1
                    if 0 <= ky < 3 and 0 <= kx < 3:
                        groups.append(w[ky, kx])
                    else:
                        groups.append(jnp.zeros((cin, cout), w.dtype))
            blocks.append(jnp.concatenate(groups, axis=0))   # (4*cin, cout)
    wt = jnp.stack(blocks, axis=0)                            # (4, 4*cin, cout)
    wt = jnp.pad(wt, ((0, 0), (0, cip - 4 * cin), (0, cop - cout)))
    return wt.astype(jnp.bfloat16)


def _pack_sc(w_sc, cip, cop):
    """1x1 shortcut weight -> (cip, cop) bf16 (rows beyond Cin are zero)."""
    cin, cout = w_sc.shape
    return jnp.pad(w_sc, ((0, cip - cin), (0, cop - cout))).astype(jnp.bfloat16)


# ----------------------------- fused BasicBlock kernel -----------------------------

def _basic_block_kernel(*refs, taps1, full_halo1, has_sc):
    """Whole pre-activation BasicBlock for a B_t-image tile, fully fused in VMEM."""
    if has_sc:
        (x_ref, s1_ref, b1_ref, w1_ref, s2_ref, b2_ref, w2_ref, wsc_ref,
         y_ref, hp1_ref, hp2_ref, acc_ref) = refs
    else:
        (x_ref, s1_ref, b1_ref, w1_ref, s2_ref, b2_ref, w2_ref,
         y_ref, hp1_ref, hp2_ref, acc_ref) = refs
        wsc_ref = None

    Bt, Hi, Wi, Ci = x_ref.shape
    _, Ho, Wo, Co = y_ref.shape
    M = Bt * Ho * Wo
    f32, bf16 = jnp.float32, jnp.bfloat16

    # ---- prologue: BN1 + ReLU (f32 VPU math), single bf16 cast at the scratch write ----
    x = x_ref[...].astype(f32)                                      # (Bt, Hi, Wi, Ci)
    h_bf = jnp.maximum(x * s1_ref[...] + b1_ref[...], 0.0).astype(bf16)

    # zero ONLY the 1-pixel halo ring (interior is fully overwritten every step)
    _, Hp1, Wp1, _ = hp1_ref.shape
    hp1_ref[:, 0:1, :, :] = jnp.zeros((Bt, 1, Wp1, Ci), bf16)
    hp1_ref[:, :, 0:1, :] = jnp.zeros((Bt, Hp1, 1, Ci), bf16)
    if full_halo1:   # stride-1 conv1: halo on all four sides (s2d only needs top/left)
        hp1_ref[:, Hp1 - 1:Hp1, :, :] = jnp.zeros((Bt, 1, Wp1, Ci), bf16)
        hp1_ref[:, :, Wp1 - 1:Wp1, :] = jnp.zeros((Bt, Hp1, 1, Ci), bf16)
    hp1_ref[:, 1:1 + Hi, 1:1 + Wi, :] = h_bf

    # ---- conv1: tap-accumulated bf16 MXU matmuls into the f32 VMEM accumulator ----
    for t, (dy, dx) in enumerate(taps1):
        patch = hp1_ref[:, dy:dy + Ho, dx:dx + Wo, :].reshape(M, Ci)   # already bf16
        contrib = jnp.dot(patch, w1_ref[t], preferred_element_type=f32)
        if t == 0:
            acc_ref[...] = contrib
        else:
            acc_ref[...] += contrib

    # ---- BN2 + ReLU (f32), single bf16 cast at the scratch write ----
    mid_bf = jnp.maximum(acc_ref[...] * s2_ref[0] + b2_ref[0], 0.0).astype(bf16)
    mid_bf = mid_bf.reshape(Bt, Ho, Wo, Co)
    # TODO(synk): dropout skipped — dropRate=0.0 (no-op in this configuration).

    _, Hp2, Wp2, _ = hp2_ref.shape
    hp2_ref[:, 0:1, :, :] = jnp.zeros((Bt, 1, Wp2, Co), bf16)
    hp2_ref[:, Hp2 - 1:Hp2, :, :] = jnp.zeros((Bt, 1, Wp2, Co), bf16)
    hp2_ref[:, :, 0:1, :] = jnp.zeros((Bt, Hp2, 1, Co), bf16)
    hp2_ref[:, :, Wp2 - 1:Wp2, :] = jnp.zeros((Bt, Hp2, 1, Co), bf16)
    hp2_ref[:, 1:1 + Ho, 1:1 + Wo, :] = mid_bf

    # ---- conv2 (3x3, stride 1): accumulator re-seeded with the shortcut so the
    #      residual add is fused into the accumulation ----
    if has_sc:
        acc_ref[...] = jnp.dot(h_bf.reshape(Bt * Hi * Wi, Ci), wsc_ref[...],
                               preferred_element_type=f32)
    else:
        acc_ref[...] = x.reshape(M, Ci)        # identity shortcut (Ci == Co here)
    for t, (dy, dx) in enumerate(_TAPS3):
        patch = hp2_ref[:, dy:dy + Ho, dx:dx + Wo, :].reshape(M, Co)
        acc_ref[...] += jnp.dot(patch, w2_ref[t], preferred_element_type=f32)

    y_ref[...] = acc_ref[...].reshape(Bt, Ho, Wo, Co).astype(y_ref.dtype)


# ----------------------------- wrapper: one pallas_call per block -----------------------------

def _pick_batch_tile(n, hw):
    """Largest power-of-two batch tile that keeps >=2 grid steps (both v7x TCs
    busy) and an MXU M-dim <= 512 rows.  At N=2 this resolves to 1."""
    bt = 1
    while n % (2 * bt) == 0 and n // (2 * bt) >= 2 and 2 * bt * hw <= 512:
        bt *= 2
    return bt


def _const_spec(shape, index_map):
    """Grid-invariant operand: single-buffered so the pipeline does not waste
    VMEM double-buffering data whose index_map never changes over the grid."""
    return pl.BlockSpec(shape, index_map, pipeline_mode=pl.Buffered(1))


def _basic_block(x_p, c_in, p, s):
    """x_p: (N,H,W,Cip) bf16, channels >= c_in are zero.  Returns (y_p, c_out)."""
    N, H, W, Cip = x_p.shape
    c_out = p["conv1_w"].shape[-1]
    Cop = _round_up(c_out, _LANES)
    equal = "sc_w" not in p
    # identity shortcut is only valid with stride 1 (review correctness note)
    assert (not equal) or s == 1, "identity shortcut requires stride == 1"

    if s == 1:
        x_in = x_p
        ci_eff = Cip
        s1 = _bn_vec(p["bn1_scale"], ci_eff)
        b1 = _bn_vec(p["bn1_bias"], ci_eff)
        w1 = _pack_w3(p["conv1_w"], ci_eff, Cop)
        taps1 = _TAPS3
        pad1 = 2                                  # zero ring on all sides
    else:
        assert s == 2 and H % 2 == 0 and W % 2 == 0
        # One cheap XLA re-pack of the raw (unpadded-channel) input turns the
        # strided conv into a 4-tap stride-1 conv (only block 0 of the stack).
        xr = x_p[..., :c_in]
        ci_eff = _round_up(4 * c_in, _LANES)
        x_in = _pad_last(_space_to_depth2(xr), ci_eff).astype(jnp.bfloat16)
        s1 = _bn_vec(jnp.tile(p["bn1_scale"], 4), ci_eff)
        b1 = _bn_vec(jnp.tile(p["bn1_bias"], 4), ci_eff)
        w1 = _pack_w3_s2d(p["conv1_w"], ci_eff, Cop)
        taps1 = _TAPS2
        pad1 = 1                                  # only top/left padding is reachable

    Ho, Wo = x_in.shape[1], x_in.shape[2]
    Bt = _pick_batch_tile(N, Ho * Wo)
    s2 = _bn_vec(p["bn2_scale"], Cop)
    b2 = _bn_vec(p["bn2_bias"], Cop)
    w2 = _pack_w3(p["conv2_w"], Cop, Cop)

    in_specs = [
        pl.BlockSpec((Bt, Ho, Wo, ci_eff), lambda n: (n, 0, 0, 0)),
        _const_spec((1, 1, ci_eff), lambda n: (0, 0, 0)),
        _const_spec((1, 1, ci_eff), lambda n: (0, 0, 0)),
        _const_spec((len(taps1), ci_eff, Cop), lambda n: (0, 0, 0)),
        _const_spec((1, 1, Cop), lambda n: (0, 0, 0)),
        _const_spec((1, 1, Cop), lambda n: (0, 0, 0)),
        _const_spec((9, Cop, Cop), lambda n: (0, 0, 0)),
    ]
    args = [x_in, s1, b1, w1, s2, b2, w2]
    if not equal:
        wsc = _pack_sc(p["sc_w"], ci_eff, Cop)
        in_specs.append(_const_spec((ci_eff, Cop), lambda n: (0, 0)))
        args.append(wsc)

    flops = 2 * N * Ho * Wo * (len(taps1) * ci_eff * Cop + 9 * Cop * Cop
                               + (0 if equal else ci_eff * Cop))
    bytes_accessed = (x_in.size * 2 + w1.size * 2 + w2.size * 2
                      + (0 if equal else ci_eff * Cop * 2)
                      + N * Ho * Wo * Cop * 2
                      + 2 * (ci_eff + Cop) * 4)

    y = pl.pallas_call(
        functools.partial(_basic_block_kernel, taps1=taps1,
                          full_halo1=(pad1 == 2), has_sc=not equal),
        out_shape=jax.ShapeDtypeStruct((N, Ho, Wo, Cop), jnp.bfloat16),
        grid_spec=pltpu.PrefetchScalarGridSpec(
            num_scalar_prefetch=0,
            grid=(N // Bt,),                      # >= 2 steps -> both v7x TCs busy
            in_specs=in_specs,
            out_specs=pl.BlockSpec((Bt, Ho, Wo, Cop), lambda n: (n, 0, 0, 0)),
            scratch_shapes=[
                pltpu.VMEM((Bt, Ho + pad1, Wo + pad1, ci_eff), jnp.bfloat16),
                pltpu.VMEM((Bt, Ho + 2, Wo + 2, Cop), jnp.bfloat16),
                pltpu.VMEM((Bt * Ho * Wo, Cop), jnp.float32),   # shared f32 accumulator
            ],
        ),
        compiler_params=pltpu.CompilerParams(
            dimension_semantics=("parallel",),
            vmem_limit_bytes=32 * 1024 * 1024,    # safe on v5e/v6e/v7x; usage << limit
        ),
        cost_estimate=pl.CostEstimate(flops=flops, transcendentals=0,
                                      bytes_accessed=bytes_accessed),
    )(*args)
    return y, c_out


# ----------------------------- NetworkBlock forward -----------------------------

@functools.partial(jax.jit, static_argnames=("stride",))
def network_block_forward(x_nchw, layer_params, stride):
    x = jnp.transpose(x_nchw, (0, 2, 3, 1))                 # NCHW -> NHWC
    c = x.shape[-1]
    # Inter-block activations / residual are carried in bf16 (see review note);
    # each block accumulates in f32 internally.
    x = _pad_last(x, _round_up(c, _LANES)).astype(jnp.bfloat16)   # lane-dense channels
    for i, p in enumerate(layer_params):
        s = stride if i == 0 else 1
        x, c = _basic_block(x, c, p, s)
    y = x[..., :c].astype(jnp.float32)
    return jnp.transpose(y, (0, 3, 1, 2))                   # NHWC -> NCHW


# ----------------------------- Deterministic parameter init -----------------------------

def _bn_affine(keys, c):
    kg, kb, km, kv = keys
    gamma = 1.0 + 0.1 * jax.random.normal(kg, (c,), jnp.float32)
    beta = 0.1 * jax.random.normal(kb, (c,), jnp.float32)
    mean = 0.1 * jax.random.normal(km, (c,), jnp.float32)
    var = jax.random.uniform(kv, (c,), jnp.float32, 0.5, 1.5)
    scale = gamma / jnp.sqrt(var + EPS)          # eval-mode BN folded to scale/bias
    bias = beta - mean * scale
    return scale, bias


def init_basic_block(key, cin, cout):
    ks = jax.random.split(key, 11)
    bn1_scale, bn1_bias = _bn_affine(ks[0:4], cin)
    bn2_scale, bn2_bias = _bn_affine(ks[4:8], cout)
    std3 = math.sqrt(2.0 / (3 * 3 * cout))       # WideResNet kaiming-style init
    p = dict(
        bn1_scale=bn1_scale, bn1_bias=bn1_bias,
        bn2_scale=bn2_scale, bn2_bias=bn2_bias,
        conv1_w=std3 * jax.random.normal(ks[8], (3, 3, cin, cout), jnp.float32),
        conv2_w=std3 * jax.random.normal(ks[9], (3, 3, cout, cout), jnp.float32),
    )
    if cin != cout:
        std1 = math.sqrt(2.0 / cout)
        p["sc_w"] = std1 * jax.random.normal(ks[10], (cin, cout), jnp.float32)
    return p


def init_network_block(key, nb_layers, in_planes, out_planes):
    keys = jax.random.split(key, nb_layers)
    params = []
    for i in range(nb_layers):
        cin = in_planes if i == 0 else out_planes
        params.append(init_basic_block(keys[i], cin, out_planes))
    return params


# ----------------------------- Pure-JAX (f32) reference -----------------------------

def _ref_conv(x, w_hwio, stride, pad):
    return jax.lax.conv_general_dilated(
        x, w_hwio, window_strides=(stride, stride),
        padding=((pad, pad), (pad, pad)),
        dimension_numbers=("NHWC", "HWIO", "NHWC"))


def _ref_basic_block(x, p, stride, equal_in_out):
    h = jnp.maximum(x * p["bn1_scale"] + p["bn1_bias"], 0.0)
    out = _ref_conv(h, p["conv1_w"], stride, 1)
    out = jnp.maximum(out * p["bn2_scale"] + p["bn2_bias"], 0.0)
    out = _ref_conv(out, p["conv2_w"], 1, 1)
    if equal_in_out:
        sc = x
    else:
        w11 = p["sc_w"].reshape(1, 1, *p["sc_w"].shape)
        sc = _ref_conv(h, w11, stride, 0)
    return sc + out


def network_block_reference(x_nchw, layer_params, stride):
    x = jnp.transpose(x_nchw, (0, 2, 3, 1))
    for i, p in enumerate(layer_params):
        s = stride if i == 0 else 1
        x = _ref_basic_block(x, p, s, equal_in_out=("sc_w" not in p))
    return jnp.transpose(x, (0, 3, 1, 2))


# ----------------------------- Main -----------------------------

if __name__ == "__main__":
    key = jax.random.PRNGKey(0)
    kx, kp = jax.random.split(key)

    # NetworkBlock(nb_layers=2, in_planes=4, out_planes=8, block=BasicBlock, stride=2)
    N, C_IN, H, W = 2, 4, 16, 16
    NB_LAYERS, OUT_PLANES, STRIDE = 2, 8, 2

    x = jax.random.normal(kx, (N, C_IN, H, W), jnp.float32)   # NCHW, PyTorch convention
    params = init_network_block(kp, NB_LAYERS, C_IN, OUT_PLANES)

    y = network_block_forward(x, params, STRIDE)
    y = jax.block_until_ready(y)

    y_ref = network_block_reference(x, params, STRIDE)
    assert y.shape == (N, OUT_PLANES, H // STRIDE, W // STRIDE), y.shape
    # bf16 MXU operands (f32 accumulation) -> compare against the f32 reference
    # with a bf16-appropriate tolerance.
    assert jnp.allclose(y, y_ref, rtol=5e-2, atol=5e-2), (
        "mismatch vs JAX reference: max abs diff = %f"
        % float(jnp.max(jnp.abs(y - y_ref))))

    print("KERNEL_OK")
</pallas_src>

<mosaic_0001>
module attributes {stable_mosaic.version = 11 : i64} {
  func.func @_basic_block_kernel(%arg0: i32, %arg1: memref<1x8x8x128xbf16, #tpu.memory_space<vmem>>, %arg2: memref<1x1x128xf32, #tpu.memory_space<vmem>>, %arg3: memref<1x1x128xf32, #tpu.memory_space<vmem>>, %arg4: memref<4x128x128xbf16, #tpu.memory_space<vmem>>, %arg5: memref<1x1x128xf32, #tpu.memory_space<vmem>>, %arg6: memref<1x1x128xf32, #tpu.memory_space<vmem>>, %arg7: memref<9x128x128xbf16, #tpu.memory_space<vmem>>, %arg8: memref<128x128xbf16, #tpu.memory_space<vmem>>, %arg9: memref<1x8x8x128xbf16, #tpu.memory_space<vmem>>, %arg10: memref<1x9x9x128xbf16, #tpu.memory_space<vmem>>, %arg11: memref<1x10x10x128xbf16, #tpu.memory_space<vmem>>, %arg12: memref<64x128xf32, #tpu.memory_space<vmem>>) attributes {dimension_semantics = [#tpu.dimension_semantics<parallel>], iteration_bounds = array<i64: 2>, scalar_prefetch = 0 : i64, scratch_operands = 3 : i64, tpu.core_type = #tpu.core_type<tc>, window_params = [{transform_indices = @transform_0, window_bounds = array<i64: 1, 8, 8, 128>}, {pipeline_mode = #tpu.pipeline_mode<synchronous>, transform_indices = @transform_1, window_bounds = array<i64: 1, 1, 128>}, {pipeline_mode = #tpu.pipeline_mode<synchronous>, transform_indices = @transform_2, window_bounds = array<i64: 1, 1, 128>}, {pipeline_mode = #tpu.pipeline_mode<synchronous>, transform_indices = @transform_3, window_bounds = array<i64: 4, 128, 128>}, {pipeline_mode = #tpu.pipeline_mode<synchronous>, transform_indices = @transform_4, window_bounds = array<i64: 1, 1, 128>}, {pipeline_mode = #tpu.pipeline_mode<synchronous>, transform_indices = @transform_5, window_bounds = array<i64: 1, 1, 128>}, {pipeline_mode = #tpu.pipeline_mode<synchronous>, transform_indices = @transform_6, window_bounds = array<i64: 9, 128, 128>}, {pipeline_mode = #tpu.pipeline_mode<synchronous>, transform_indices = @transform_7, window_bounds = array<i64: 128, 128>}, {transform_indices = @transform_8, window_bounds = array<i64: 1, 8, 8, 128>}]} {
    %c0 = arith.constant 0 : index
    %c0_0 = arith.constant 0 : index
    %c0_1 = arith.constant 0 : index
    %c0_2 = arith.constant 0 : index
    %0 = vector.load %arg1[%c0, %c0_0, %c0_1, %c0_2] : memref<1x8x8x128xbf16, #tpu.memory_space<vmem>>, vector<1x8x8x128xbf16>
    %1 = arith.extf %0 : vector<1x8x8x128xbf16> to vector<1x8x8x128xf32>
    %c0_3 = arith.constant 0 : index
    %c0_4 = arith.constant 0 : index
    %c0_5 = arith.constant 0 : index
    %2 = vector.load %arg2[%c0_3, %c0_4, %c0_5] : memref<1x1x128xf32, #tpu.memory_space<vmem>>, vector<1x1x128xf32>
    %3 = vector.shape_cast %2 : vector<1x1x128xf32> to vector<1x1x1x128xf32>
    %4 = vector.broadcast %3 : vector<1x1x1x128xf32> to vector<1x8x8x128xf32>
    %5 = arith.mulf %1, %4 : vector<1x8x8x128xf32>
    %c0_6 = arith.constant 0 : index
    %c0_7 = arith.constant 0 : index
    %c0_8 = arith.constant 0 : index
    %6 = vector.load %arg3[%c0_6, %c0_7, %c0_8] : memref<1x1x128xf32, #tpu.memory_space<vmem>>, vector<1x1x128xf32>
    %7 = vector.shape_cast %6 : vector<1x1x128xf32> to vector<1x1x1x128xf32>
    %8 = vector.broadcast %7 : vector<1x1x1x128xf32> to vector<1x8x8x128xf32>
    %9 = arith.addf %5, %8 : vector<1x8x8x128xf32>
    %cst = arith.constant 0.000000e+00 : f32
    %10 = vector.broadcast %cst : f32 to vector<1x8x8x128xf32>
    %11 = arith.maximumf %9, %10 : vector<1x8x8x128xf32>
    %12 = arith.truncf %11 : vector<1x8x8x128xf32> to vector<1x8x8x128xbf16>
    %cst_9 = arith.constant 0.000000e+00 : bf16
    %13 = vector.broadcast %cst_9 : bf16 to vector<1x1x9x128xbf16>
    %c0_10 = arith.constant 0 : index
    %c0_11 = arith.constant 0 : index
    %c0_12 = arith.constant 0 : index
    %c0_13 = arith.constant 0 : index
    %14 = vector.load %arg10[%c0_10, %c0_11, %c0_12, %c0_13] : memref<1x9x9x128xbf16, #tpu.memory_space<vmem>>, vector<1x1x9x128xbf16>
    tpu.vector_store %arg10[%c0_10, %c0_11, %c0_12, %c0_13], %13 {strides = array<i32>} : memref<1x9x9x128xbf16, #tpu.memory_space<vmem>>, vector<1x1x9x128xbf16>,
    %cst_14 = arith.constant 0.000000e+00 : bf16
    %15 = vector.broadcast %cst_14 : bf16 to vector<1x9x1x128xbf16>
    %c0_15 = arith.constant 0 : index
    %c0_16 = arith.constant 0 : index
    %c0_17 = arith.constant 0 : index
    %c0_18 = arith.constant 0 : index
    %16 = vector.load %arg10[%c0_15, %c0_16, %c0_17, %c0_18] : memref<1x9x9x128xbf16, #tpu.memory_space<vmem>>, vector<1x9x1x128xbf16>
    tpu.vector_store %arg10[%c0_15, %c0_16, %c0_17, %c0_18], %15 {strides = array<i32>} : memref<1x9x9x128xbf16, #tpu.memory_space<vmem>>, vector<1x9x1x128xbf16>,
    %c0_19 = arith.constant 0 : index
    %c1 = arith.constant 1 : index
    %c1_20 = arith.constant 1 : index
    %c0_21 = arith.constant 0 : index
    %17 = vector.load %arg10[%c0_19, %c1, %c1_20, %c0_21] : memref<1x9x9x128xbf16, #tpu.memory_space<vmem>>, vector<1x8x8x128xbf16>
    tpu.vector_store %arg10[%c0_19, %c1, %c1_20, %c0_21], %12 {strides = array<i32>} : memref<1x9x9x128xbf16, #tpu.memory_space<vmem>>, vector<1x8x8x128xbf16>,
    %c0_22 = arith.constant 0 : index
    %c0_23 = arith.constant 0 : index
    %c0_24 = arith.constant 0 : index
    %c0_25 = arith.constant 0 : index
    %18 = vector.load %arg10[%c0_22, %c0_23, %c0_24, %c0_25] : memref<1x9x9x128xbf16, #tpu.memory_space<vmem>>, vector<1x8x8x128xbf16>
    %19 = vector.shape_cast %18 : vector<1x8x8x128xbf16> to vector<64x128xbf16>
    %c0_26 = arith.constant 0 : index
    %c0_27 = arith.constant 0 : index
    %c0_28 = arith.constant 0 : index
    %20 = vector.load %arg4[%c0_26, %c0_27, %c0_28] : memref<4x128x128xbf16, #tpu.memory_space<vmem>>, vector<1x128x128xbf16>
    %21 = vector.shape_cast %20 : vector<1x128x128xbf16> to vector<128x128xbf16>
    %cst_29 = arith.constant dense<0.000000e+00> : vector<64x128xf32>
    %22 = tpu.matmul %19, %21, %cst_29 {dimension_numbers = #tpu.dot_dimension_numbers<[1], [0], [0], [1], [0, 0, 1, 1], [], []>} : vector<64x128xbf16>, vector<128x128xbf16>, vector<64x128xf32> -> vector<64x128xf32>
    %c0_30 = arith.constant 0 : index
    %c0_31 = arith.constant 0 : index
    %23 = vector.load %arg12[%c0_30, %c0_31] : memref<64x128xf32, #tpu.memory_space<vmem>>, vector<64x128xf32>
    tpu.vector_store %arg12[%c0_30, %c0_31], %22 {strides = array<i32>} : memref<64x128xf32, #tpu.memory_space<vmem>>, vector<64x128xf32>,
    %c0_32 = arith.constant 0 : index
    %c0_33 = arith.constant 0 : index
    %c1_34 = arith.constant 1 : index
    %c0_35 = arith.constant 0 : index
    %24 = vector.load %arg10[%c0_32, %c0_33, %c1_34, %c0_35] : memref<1x9x9x128xbf16, #tpu.memory_space<vmem>>, vector<1x8x8x128xbf16>
    %25 = vector.shape_cast %24 : vector<1x8x8x128xbf16> to vector<64x128xbf16>
    %c1_36 = arith.constant 1 : index
    %c0_37 = arith.constant 0 : index
    %c0_38 = arith.constant 0 : index
    %26 = vector.load %arg4[%c1_36, %c0_37, %c0_38] : memref<4x128x128xbf16, #tpu.memory_space<vmem>>, vector<1x128x128xbf16>
    %27 = vector.shape_cast %26 : vector<1x128x128xbf16> to vector<128x128xbf16>
    %cst_39 = arith.constant dense<0.000000e+00> : vector<64x128xf32>
    %28 = tpu.matmul %25, %27, %cst_39 {dimension_numbers = #tpu.dot_dimension_numbers<[1], [0], [0], [1], [0, 0, 1, 1], [], []>} : vector<64x128xbf16>, vector<128x128xbf16>, vector<64x128xf32> -> vector<64x128xf32>
    %c0_40 = arith.constant 0 : index
    %c0_41 = arith.constant 0 : index
    %29 = vector.load %arg12[%c0_40, %c0_41] : memref<64x128xf32, #tpu.memory_space<vmem>>, vector<64x128xf32>
    %30 = arith.addf %29, %28 : vector<64x128xf32>
    %c0_42 = arith.constant 0 : index
    %c0_43 = arith.constant 0 : index
    %31 = vector.load %arg12[%c0_42, %c0_43] : memref<64x128xf32, #tpu.memory_space<vmem>>, vector<64x128xf32>
    tpu.vector_store %arg12[%c0_42, %c0_43], %30 {strides = array<i32>} : memref<64x128xf32, #tpu.memory_space<vmem>>, vector<64x128xf32>,
    %c0_44 = arith.constant 0 : index
    %c1_45 = arith.constant 1 : index
    %c0_46 = arith.constant 0 : index
    %c0_47 = arith.constant 0 : index
    %32 = vector.load %arg10[%c0_44, %c1_45, %c0_46, %c0_47] : memref<1x9x9x128xbf16, #tpu.memory_space<vmem>>, vector<1x8x8x128xbf16>
    %33 = vector.shape_cast %32 : vector<1x8x8x128xbf16> to vector<64x128xbf16>
    %c2 = arith.constant 2 : index
    %c0_48 = arith.constant 0 : index
    %c0_49 = arith.constant 0 : index
    %34 = vector.load %arg4[%c2, %c0_48, %c0_49] : memref<4x128x128xbf16, #tpu.memory_space<vmem>>, vector<1x128x128xbf16>
    %35 = vector.shape_cast %34 : vector<1x128x128xbf16> to vector<128x128xbf16>
    %cst_50 = arith.constant dense<0.000000e+00> : vector<64x128xf32>
    %36 = tpu.matmul %33, %35, %cst_50 {dimension_numbers = #tpu.dot_dimension_numbers<[1], [0], [0], [1], [0, 0, 1, 1], [], []>} : vector<64x128xbf16>, vector<128x128xbf16>, vector<64x128xf32> -> vector<64x128xf32>
    %c0_51 = arith.constant 0 : index
    %c0_52 = arith.constant 0 : index
    %37 = vector.load %arg12[%c0_51, %c0_52] : memref<64x128xf32, #tpu.memory_space<vmem>>, vector<64x128xf32>
    %38 = arith.addf %37, %36 : vector<64x128xf32>
    %c0_53 = arith.constant 0 : index
    %c0_54 = arith.constant 0 : index
    %39 = vector.load %arg12[%c0_53, %c0_54] : memref<64x128xf32, #tpu.memory_space<vmem>>, vector<64x128xf32>
    tpu.vector_store %arg12[%c0_53, %c0_54], %38 {strides = array<i32>} : memref<64x128xf32, #tpu.memory_space<vmem>>, vector<64x128xf32>,
    %c0_55 = arith.constant 0 : index
    %c1_56 = arith.constant 1 : index
    %c1_57 = arith.constant 1 : index
    %c0_58 = arith.constant 0 : index
    %40 = vector.load %arg10[%c0_55, %c1_56, %c1_57, %c0_58] : memref<1x9x9x128xbf16, #tpu.memory_space<vmem>>, vector<1x8x8x128xbf16>
    %41 = vector.shape_cast %40 : vector<1x8x8x128xbf16> to vector<64x128xbf16>
    %c3 = arith.constant 3 : index
    %c0_59 = arith.constant 0 : index
    %c0_60 = arith.constant 0 : index
    %42 = vector.load %arg4[%c3, %c0_59, %c0_60] : memref<4x128x128xbf16, #tpu.memory_space<vmem>>, vector<1x128x128xbf16>
    %43 = vector.shape_cast %42 : vector<1x128x128xbf16> to vector<128x128xbf16>
    %cst_61 = arith.constant dense<0.000000e+00> : vector<64x128xf32>
    %44 = tpu.matmul %41, %43, %cst_61 {dimension_numbers = #tpu.dot_dimension_numbers<[1], [0], [0], [1], [0, 0, 1, 1], [], []>} : vector<64x128xbf16>, vector<128x128xbf16>, vector<64x128xf32> -> vector<64x128xf32>
    %c0_62 = arith.constant 0 : index
    %c0_63 = arith.constant 0 : index
    %45 = vector.load %arg12[%c0_62, %c0_63] : memref<64x128xf32, #tpu.memory_space<vmem>>, vector<64x128xf32>
    %46 = arith.addf %45, %44 : vector<64x128xf32>
    %c0_64 = arith.constant 0 : index
    %c0_65 = arith.constant 0 : index
    %47 = vector.load %arg12[%c0_64, %c0_65] : memref<64x128xf32, #tpu.memory_space<vmem>>, vector<64x128xf32>
    tpu.vector_store %arg12[%c0_64, %c0_65], %46 {strides = array<i32>} : memref<64x128xf32, #tpu.memory_space<vmem>>, vector<64x128xf32>,
    %c0_66 = arith.constant 0 : index
    %c0_67 = arith.constant 0 : index
    %48 = vector.load %arg12[%c0_66, %c0_67] : memref<64x128xf32, #tpu.memory_space<vmem>>, vector<64x128xf32>
    %c0_68 = arith.constant 0 : index
    %c0_69 = arith.constant 0 : index
    %c0_70 = arith.constant 0 : index
    %49 = vector.load %arg5[%c0_68, %c0_69, %c0_70] : memref<1x1x128xf32, #tpu.memory_space<vmem>>, vector<1x1x128xf32>
    %50 = vector.shape_cast %49 : vector<1x1x128xf32> to vector<1x128xf32>
    %51 = vector.broadcast %50 : vector<1x128xf32> to vector<64x128xf32>
    %52 = arith.mulf %48, %51 : vector<64x128xf32>
    %c0_71 = arith.constant 0 : index
    %c0_72 = arith.constant 0 : index
    %c0_73 = arith.constant 0 : index
    %53 = vector.load %arg6[%c0_71, %c0_72, %c0_73] : memref<1x1x128xf32, #tpu.memory_space<vmem>>, vector<1x1x128xf32>
    %54 = vector.shape_cast %53 : vector<1x1x128xf32> to vector<1x128xf32>
    %55 = vector.broadcast %54 : vector<1x128xf32> to vector<64x128xf32>
    %56 = arith.addf %52, %55 : vector<64x128xf32>
    %cst_74 = arith.constant 0.000000e+00 : f32
    %57 = vector.broadcast %cst_74 : f32 to vector<64x128xf32>
    %58 = arith.maximumf %56, %57 : vector<64x128xf32>
    %59 = arith.truncf %58 : vector<64x128xf32> to vector<64x128xbf16>
    %60 = vector.shape_cast %59 : vector<64x128xbf16> to vector<1x8x8x128xbf16>
    %cst_75 = arith.constant 0.000000e+00 : bf16
    %61 = vector.broadcast %cst_75 : bf16 to vector<1x1x10x128xbf16>
    %c0_76 = arith.constant 0 : index
    %c0_77 = arith.constant 0 : index
    %c0_78 = arith.constant 0 : index
    %c0_79 = arith.constant 0 : index
    %62 = vector.load %arg11[%c0_76, %c0_77, %c0_78, %c0_79] : memref<1x10x10x128xbf16, #tpu.memory_space<vmem>>, vector<1x1x10x128xbf16>
    tpu.vector_store %arg11[%c0_76, %c0_77, %c0_78, %c0_79], %61 {strides = array<i32>} : memref<1x10x10x128xbf16, #tpu.memory_space<vmem>>, vector<1x1x10x128xbf16>,
    %cst_80 = arith.constant 0.000000e+00 : bf16
    %63 = vector.broadcast %cst_80 : bf16 to vector<1x1x10x128xbf16>
    %c0_81 = arith.constant 0 : index
    %c9 = arith.constant 9 : index
    %c0_82 = arith.constant 0 : index
    %c0_83 = arith.constant 0 : index
    %64 = vector.load %arg11[%c0_81, %c9, %c0_82, %c0_83] : memref<1x10x10x128xbf16, #tpu.memory_space<vmem>>, vector<1x1x10x128xbf16>
    tpu.vector_store %arg11[%c0_81, %c9, %c0_82, %c0_83], %63 {strides = array<i32>} : memref<1x10x10x128xbf16, #tpu.memory_space<vmem>>, vector<1x1x10x128xbf16>,
    %cst_84 = arith.constant 0.000000e+00 : bf16
    %65 = vector.broadcast %cst_84 : bf16 to vector<1x10x1x128xbf16>
    %c0_85 = arith.constant 0 : index
    %c0_86 = arith.constant 0 : index
    %c0_87 = arith.constant 0 : index
    %c0_88 = arith.constant 0 : index
    %66 = vector.load %arg11[%c0_85, %c0_86, %c0_87, %c0_88] : memref<1x10x10x128xbf16, #tpu.memory_space<vmem>>, vector<1x10x1x128xbf16>
    tpu.vector_store %arg11[%c0_85, %c0_86, %c0_87, %c0_88], %65 {strides = array<i32>} : memref<1x10x10x128xbf16, #tpu.memory_space<vmem>>, vector<1x10x1x128xbf16>,
    %cst_89 = arith.constant 0.000000e+00 : bf16
    %67 = vector.broadcast %cst_89 : bf16 to vector<1x10x1x128xbf16>
    %c0_90 = arith.constant 0 : index
    %c0_91 = arith.constant 0 : index
    %c9_92 = arith.constant 9 : index
    %c0_93 = arith.constant 0 : index
    %68 = vector.load %arg11[%c0_90, %c0_91, %c9_92, %c0_93] : memref<1x10x10x128xbf16, #tpu.memory_space<vmem>>, vector<1x10x1x128xbf16>
    tpu.vector_store %arg11[%c0_90, %c0_91, %c9_92, %c0_93], %67 {strides = array<i32>} : memref<1x10x10x128xbf16, #tpu.memory_space<vmem>>, vector<1x10x1x128xbf16>,
    %c0_94 = arith.constant 0 : index
    %c1_95 = arith.constant 1 : index
    %c1_96 = arith.constant 1 : index
    %c0_97 = arith.constant 0 : index
    %69 = vector.load %arg11[%c0_94, %c1_95, %c1_96, %c0_97] : memref<1x10x10x128xbf16, #tpu.memory_space<vmem>>, vector<1x8x8x128xbf16>
    tpu.vector_store %arg11[%c0_94, %c1_95, %c1_96, %c0_97], %60 {strides = array<i32>} : memref<1x10x10x128xbf16, #tpu.memory_space<vmem>>, vector<1x8x8x128xbf16>,
    %70 = vector.shape_cast %12 : vector<1x8x8x128xbf16> to vector<64x128xbf16>
    %c0_98 = arith.constant 0 : index
    %c0_99 = arith.constant 0 : index
    %71 = vector.load %arg8[%c0_98, %c0_99] : memref<128x128xbf16, #tpu.memory_space<vmem>>, vector<128x128xbf16>
    %cst_100 = arith.constant dense<0.000000e+00> : vector<64x128xf32>
    %72 = tpu.matmul %70, %71, %cst_100 {dimension_numbers = #tpu.dot_dimension_numbers<[1], [0], [0], [1], [0, 0, 1, 1], [], []>} : vector<64x128xbf16>, vector<128x128xbf16>, vector<64x128xf32> -> vector<64x128xf32>
    %c0_101 = arith.constant 0 : index
    %c0_102 = arith.constant 0 : index
    %73 = vector.load %arg12[%c0_101, %c0_102] : memref<64x128xf32, #tpu.memory_space<vmem>>, vector<64x128xf32>
    tpu.vector_store %arg12[%c0_101, %c0_102], %72 {strides = array<i32>} : memref<64x128xf32, #tpu.memory_space<vmem>>, vector<64x128xf32>,
    %c0_103 = arith.constant 0 : index
    %c0_104 = arith.constant 0 : index
    %c0_105 = arith.constant 0 : index
    %c0_106 = arith.constant 0 : index
    %74 = vector.load %arg11[%c0_103, %c0_104, %c0_105, %c0_106] : memref<1x10x10x128xbf16, #tpu.memory_space<vmem>>, vector<1x8x8x128xbf16>
    %75 = vector.shape_cast %74 : vector<1x8x8x128xbf16> to vector<64x128xbf16>
    %c0_107 = arith.constant 0 : index
    %c0_108 = arith.constant 0 : index
    %76 = vector.load %arg12[%c0_107, %c0_108] : memref<64x128xf32, #tpu.memory_space<vmem>>, vector<64x128xf32>
    %c0_109 = arith.constant 0 : index
    %c0_110 = arith.constant 0 : index
    %c0_111 = arith.constant 0 : index
    %77 = vector.load %arg7[%c0_109, %c0_110, %c0_111] : memref<9x128x128xbf16, #tpu.memory_space<vmem>>, vector<1x128x128xbf16>
    %78 = vector.shape_cast %77 : vector<1x128x128xbf16> to vector<128x128xbf16>
    %cst_112 = arith.constant dense<0.000000e+00> : vector<64x128xf32>
    %79 = tpu.matmul %75, %78, %cst_112 {dimension_numbers = #tpu.dot_dimension_numbers<[1], [0], [0], [1], [0, 0, 1, 1], [], []>} : vector<64x128xbf16>, vector<128x128xbf16>, vector<64x128xf32> -> vector<64x128xf32>
    %80 = arith.addf %76, %79 : vector<64x128xf32>
    %c0_113 = arith.constant 0 : index
    %c0_114 = arith.constant 0 : index
    %81 = vector.load %arg12[%c0_113, %c0_114] : memref<64x128xf32, #tpu.memory_space<vmem>>, vector<64x128xf32>
    tpu.vector_store %arg12[%c0_113, %c0_114], %80 {strides = array<i32>} : memref<64x128xf32, #tpu.memory_space<vmem>>, vector<64x128xf32>,
    %c0_115 = arith.constant 0 : index
    %c0_116 = arith.constant 0 : index
    %c1_117 = arith.constant 1 : index
    %c0_118 = arith.constant 0 : index
    %82 = vector.load %arg11[%c0_115, %c0_116, %c1_117, %c0_118] : memref<1x10x10x128xbf16, #tpu.memory_space<vmem>>, vector<1x8x8x128xbf16>
    %83 = vector.shape_cast %82 : vector<1x8x8x128xbf16> to vector<64x128xbf16>
    %c0_119 = arith.constant 0 : index
    %c0_120 = arith.constant 0 : index
    %84 = vector.load %arg12[%c0_119, %c0_120] : memref<64x128xf32, #tpu.memory_space<vmem>>, vector<64x128xf32>
    %c1_121 = arith.constant 1 : index
    %c0_122 = arith.constant 0 : index
    %c0_123 = arith.constant 0 : index
    %85 = vector.load %arg7[%c1_121, %c0_122, %c0_123] : memref<9x128x128xbf16, #tpu.memory_space<vmem>>, vector<1x128x128xbf16>
    %86 = vector.shape_cast %85 : vector<1x128x128xbf16> to vector<128x128xbf16>
    %cst_124 = arith.constant dense<0.000000e+00> : vector<64x128xf32>
    %87 = tpu.matmul %83, %86, %cst_124 {dimension_numbers = #tpu.dot_dimension_numbers<[1], [0], [0], [1], [0, 0, 1, 1], [], []>} : vector<64x128xbf16>, vector<128x128xbf16>, vector<64x128xf32> -> vector<64x128xf32>
    %88 = arith.addf %84, %87 : vector<64x128xf32>
    %c0_125 = arith.constant 0 : index
    %c0_126 = arith.constant 0 : index
    %89 = vector.load %arg12[%c0_125, %c0_126] : memref<64x128xf32, #tpu.memory_space<vmem>>, vector<64x128xf32>
    tpu.vector_store %arg12[%c0_125, %c0_126], %88 {strides = array<i32>} : memref<64x128xf32, #tpu.memory_space<vmem>>, vector<64x128xf32>,
    %c0_127 = arith.constant 0 : index
    %c0_128 = arith.constant 0 : index
    %c2_129 = arith.constant 2 : index
    %c0_130 = arith.constant 0 : index
    %90 = vector.load %arg11[%c0_127, %c0_128, %c2_129, %c0_130] : memref<1x10x10x128xbf16, #tpu.memory_space<vmem>>, vector<1x8x8x128xbf16>
    %91 = vector.shape_cast %90 : vector<1x8x8x128xbf16> to vector<64x128xbf16>
    %c0_131 = arith.constant 0 : index
    %c0_132 = arith.constant 0 : index
    %92 = vector.load %arg12[%c0_131, %c0_132] : memref<64x128xf32, #tpu.memory_space<vmem>>, vector<64x128xf32>
    %c2_133 = arith.constant 2 : index
    %c0_134 = arith.constant 0 : index
    %c0_135 = arith.constant 0 : index
    %93 = vector.load %arg7[%c2_133, %c0_134, %c0_135] : memref<9x128x128xbf16, #tpu.memory_space<vmem>>, vector<1x128x128xbf16>
    %94 = vector.shape_cast %93 : vector<1x128x128xbf16> to vector<128x128xbf16>
    %cst_136 = arith.constant dense<0.000000e+00> : vector<64x128xf32>
    %95 = tpu.matmul %91, %94, %cst_136 {dimension_numbers = #tpu.dot_dimension_numbers<[1], [0], [0], [1], [0, 0, 1, 1], [], []>} : vector<64x128xbf16>, vector<128x128xbf16>, vector<64x128xf32> -> vector<64x128xf32>
    %96 = arith.addf %92, %95 : vector<64x128xf32>
    %c0_137 = arith.constant 0 : index
    %c0_138 = arith.constant 0 : index
    %97 = vector.load %arg12[%c0_137, %c0_138] : memref<64x128xf32, #tpu.memory_space<vmem>>, vector<64x128xf32>
    tpu.vector_store %arg12[%c0_137, %c0_138], %96 {strides = array<i32>} : memref<64x128xf32, #tpu.memory_space<vmem>>, vector<64x128xf32>,
    %c0_139 = arith.constant 0 : index
    %c1_140 = arith.constant 1 : index
    %c0_141 = arith.constant 0 : index
    %c0_142 = arith.constant 0 : index
    %98 = vector.load %arg11[%c0_139, %c1_140, %c0_141, %c0_142] : memref<1x10x10x128xbf16, #tpu.memory_space<vmem>>, vector<1x8x8x128xbf16>
    %99 = vector.shape_cast %98 : vector<1x8x8x128xbf16> to vector<64x128xbf16>
    %c0_143 = arith.constant 0 : index
    %c0_144 = arith.constant 0 : index
    %100 = vector.load %arg12[%c0_143, %c0_144] : memref<64x128xf32, #tpu.memory_space<vmem>>, vector<64x128xf32>
    %c3_145 = arith.constant 3 : index
    %c0_146 = arith.constant 0 : index
    %c0_147 = arith.constant 0 : index
    %101 = vector.load %arg7[%c3_145, %c0_146, %c0_147] : memref<9x128x128xbf16, #tpu.memory_space<vmem>>, vector<1x128x128xbf16>
    %102 = vector.shape_cast %101 : vector<1x128x128xbf16> to vector<128x128xbf16>
    %cst_148 = arith.constant dense<0.000000e+00> : vector<64x128xf32>
    %103 = tpu.matmul %99, %102, %cst_148 {dimension_numbers = #tpu.dot_dimension_numbers<[1], [0], [0], [1], [0, 0, 1, 1], [], []>} : vector<64x128xbf16>, vector<128x128xbf16>, vector<64x128xf32> -> vector<64x128xf32>
    %104 = arith.addf %100, %103 : vector<64x128xf32>
    %c0_149 = arith.constant 0 : index
    %c0_150 = arith.constant 0 : index
    %105 = vector.load %arg12[%c0_149, %c0_150] : memref<64x128xf32, #tpu.memory_space<vmem>>, vector<64x128xf32>
    tpu.vector_store %arg12[%c0_149, %c0_150], %104 {strides = array<i32>} : memref<64x128xf32, #tpu.memory_space<vmem>>, vector<64x128xf32>,
    %c0_151 = arith.constant 0 : index
    %c1_152 = arith.constant 1 : index
    %c1_153 = arith.constant 1 : index
    %c0_154 = arith.constant 0 : index
    %106 = vector.load %arg11[%c0_151, %c1_152, %c1_153, %c0_154] : memref<1x10x10x128xbf16, #tpu.memory_space<vmem>>, vector<1x8x8x128xbf16>
    %107 = vector.shape_cast %106 : vector<1x8x8x128xbf16> to vector<64x128xbf16>
    %c0_155 = arith.constant 0 : index
    %c0_156 = arith.constant 0 : index
    %108 = vector.load %arg12[%c0_155, %c0_156] : memref<64x128xf32, #tpu.memory_space<vmem>>, vector<64x128xf32>
    %c4 = arith.constant 4 : index
    %c0_157 = arith.constant 0 : index
    %c0_158 = arith.constant 0 : index
    %109 = vector.load %arg7[%c4, %c0_157, %c0_158] : memref<9x128x128xbf16, #tpu.memory_space<vmem>>, vector<1x128x128xbf16>
    %110 = vector.shape_cast %109 : vector<1x128x128xbf16> to vector<128x128xbf16>
    %cst_159 = arith.constant dense<0.000000e+00> : vector<64x128xf32>
    %111 = tpu.matmul %107, %110, %cst_159 {dimension_numbers = #tpu.dot_dimension_numbers<[1], [0], [0], [1], [0, 0, 1, 1], [], []>} : vector<64x128xbf16>, vector<128x128xbf16>, vector<64x128xf32> -> vector<64x128xf32>
    %112 = arith.addf %108, %111 : vector<64x128xf32>
    %c0_160 = arith.constant 0 : index
    %c0_161 = arith.constant 0 : index
    %113 = vector.load %arg12[%c0_160, %c0_161] : memref<64x128xf32, #tpu.memory_space<vmem>>, vector<64x128xf32>
    tpu.vector_store %arg12[%c0_160, %c0_161], %112 {strides = array<i32>} : memref<64x128xf32, #tpu.memory_space<vmem>>, vector<64x128xf32>,
    %c0_162 = arith.constant 0 : index
    %c1_163 = arith.constant 1 : index
    %c2_164 = arith.constant 2 : index
    %c0_165 = arith.constant 0 : index
    %114 = vector.load %arg11[%c0_162, %c1_163, %c2_164, %c0_165] : memref<1x10x10x128xbf16, #tpu.memory_space<vmem>>, vector<1x8x8x128xbf16>
    %115 = vector.shape_cast %114 : vector<1x8x8x128xbf16> to vector<64x128xbf16>
    %c0_166 = arith.constant 0 : index
    %c0_167 = arith.constant 0 : index
    %116 = vector.load %arg12[%c0_166, %c0_167] : memref<64x128xf32, #tpu.memory_space<vmem>>, vector<64x128xf32>
    %c5 = arith.constant 5 : index
    %c0_168 = arith.constant 0 : index
    %c0_169 = arith.constant 0 : index
    %117 = vector.load %arg7[%c5, %c0_168, %c0_169] : memref<9x128x128xbf16, #tpu.memory_space<vmem>>, vector<1x128x128xbf16>
    %118 = vector.shape_cast %117 : vector<1x128x128xbf16> to vector<128x128xbf16>
    %cst_170 = arith.constant dense<0.000000e+00> : vector<64x128xf32>
    %119 = tpu.matmul %115, %118, %cst_170 {dimension_numbers = #tpu.dot_dimension_numbers<[1], [0], [0], [1], [0, 0, 1, 1], [], []>} : vector<64x128xbf16>, vector<128x128xbf16>, vector<64x128xf32> -> vector<64x128xf32>
    %120 = arith.addf %116, %119 : vector<64x128xf32>
    %c0_171 = arith.constant 0 : index
    %c0_172 = arith.constant 0 : index
    %121 = vector.load %arg12[%c0_171, %c0_172] : memref<64x128xf32, #tpu.memory_space<vmem>>, vector<64x128xf32>
    tpu.vector_store %arg12[%c0_171, %c0_172], %120 {strides = array<i32>} : memref<64x128xf32, #tpu.memory_space<vmem>>, vector<64x128xf32>,
    %c0_173 = arith.constant 0 : index
    %c2_174 = arith.constant 2 : index
    %c0_175 = arith.constant 0 : index
    %c0_176 = arith.constant 0 : index
    %122 = vector.load %arg11[%c0_173, %c2_174, %c0_175, %c0_176] : memref<1x10x10x128xbf16, #tpu.memory_space<vmem>>, vector<1x8x8x128xbf16>
    %123 = vector.shape_cast %122 : vector<1x8x8x128xbf16> to vector<64x128xbf16>
    %c0_177 = arith.constant 0 : index
    %c0_178 = arith.constant 0 : index
    %124 = vector.load %arg12[%c0_177, %c0_178] : memref<64x128xf32, #tpu.memory_space<vmem>>, vector<64x128xf32>
    %c6 = arith.constant 6 : index
    %c0_179 = arith.constant 0 : index
    %c0_180 = arith.constant 0 : index
    %125 = vector.load %arg7[%c6, %c0_179, %c0_180] : memref<9x128x128xbf16, #tpu.memory_space<vmem>>, vector<1x128x128xbf16>
    %126 = vector.shape_cast %125 : vector<1x128x128xbf16> to vector<128x128xbf16>
    %cst_181 = arith.constant dense<0.000000e+00> : vector<64x128xf32>
    %127 = tpu.matmul %123, %126, %cst_181 {dimension_numbers = #tpu.dot_dimension_numbers<[1], [0], [0], [1], [0, 0, 1, 1], [], []>} : vector<64x128xbf16>, vector<128x128xbf16>, vector<64x128xf32> -> vector<64x128xf32>
    %128 = arith.addf %124, %127 : vector<64x128xf32>
    %c0_182 = arith.constant 0 : index
    %c0_183 = arith.constant 0 : index
    %129 = vector.load %arg12[%c0_182, %c0_183] : memref<64x128xf32, #tpu.memory_space<vmem>>, vector<64x128xf32>
    tpu.vector_store %arg12[%c0_182, %c0_183], %128 {strides = array<i32>} : memref<64x128xf32, #tpu.memory_space<vmem>>, vector<64x128xf32>,
    %c0_184 = arith.constant 0 : index
    %c2_185 = arith.constant 2 : index
    %c1_186 = arith.constant 1 : index
    %c0_187 = arith.constant 0 : index
    %130 = vector.load %arg11[%c0_184, %c2_185, %c1_186, %c0_187] : memref<1x10x10x128xbf16, #tpu.memory_space<vmem>>, vector<1x8x8x128xbf16>
    %131 = vector.shape_cast %130 : vector<1x8x8x128xbf16> to vector<64x128xbf16>
    %c0_188 = arith.constant 0 : index
    %c0_189 = arith.constant 0 : index
    %132 = vector.load %arg12[%c0_188, %c0_189] : memref<64x128xf32, #tpu.memory_space<vmem>>, vector<64x128xf32>
    %c7 = arith.constant 7 : index
    %c0_190 = arith.constant 0 : index
    %c0_191 = arith.constant 0 : index
    %133 = vector.load %arg7[%c7, %c0_190, %c0_191] : memref<9x128x128xbf16, #tpu.memory_space<vmem>>, vector<1x128x128xbf16>
    %134 = vector.shape_cast %133 : vector<1x128x128xbf16> to vector<128x128xbf16>
    %cst_192 = arith.constant dense<0.000000e+00> : vector<64x128xf32>
    %135 = tpu.matmul %131, %134, %cst_192 {dimension_numbers = #tpu.dot_dimension_numbers<[1], [0], [0], [1], [0, 0, 1, 1], [], []>} : vector<64x128xbf16>, vector<128x128xbf16>, vector<64x128xf32> -> vector<64x128xf32>
    %136 = arith.addf %132, %135 : vector<64x128xf32>
    %c0_193 = arith.constant 0 : index
    %c0_194 = arith.constant 0 : index
    %137 = vector.load %arg12[%c0_193, %c0_194] : memref<64x128xf32, #tpu.memory_space<vmem>>, vector<64x128xf32>
    tpu.vector_store %arg12[%c0_193, %c0_194], %136 {strides = array<i32>} : memref<64x128xf32, #tpu.memory_space<vmem>>, vector<64x128xf32>,
    %c0_195 = arith.constant 0 : index
    %c2_196 = arith.constant 2 : index
    %c2_197 = arith.constant 2 : index
    %c0_198 = arith.constant 0 : index
    %138 = vector.load %arg11[%c0_195, %c2_196, %c2_197, %c0_198] : memref<1x10x10x128xbf16, #tpu.memory_space<vmem>>, vector<1x8x8x128xbf16>
    %139 = vector.shape_cast %138 : vector<1x8x8x128xbf16> to vector<64x128xbf16>
    %c0_199 = arith.constant 0 : index
    %c0_200 = arith.constant 0 : index
    %140 = vector.load %arg12[%c0_199, %c0_200] : memref<64x128xf32, #tpu.memory_space<vmem>>, vector<64x128xf32>
    %c8 = arith.constant 8 : index
    %c0_201 = arith.constant 0 : index
    %c0_202 = arith.constant 0 : index
    %141 = vector.load %arg7[%c8, %c0_201, %c0_202] : memref<9x128x128xbf16, #tpu.memory_space<vmem>>, vector<1x128x128xbf16>
    %142 = vector.shape_cast %141 : vector<1x128x128xbf16> to vector<128x128xbf16>
    %cst_203 = arith.constant dense<0.000000e+00> : vector<64x128xf32>
    %143 = tpu.matmul %139, %142, %cst_203 {dimension_numbers = #tpu.dot_dimension_numbers<[1], [0], [0], [1], [0, 0, 1, 1], [], []>} : vector<64x128xbf16>, vector<128x128xbf16>, vector<64x128xf32> -> vector<64x128xf32>
    %144 = arith.addf %140, %143 : vector<64x128xf32>
    %c0_204 = arith.constant 0 : index
    %c0_205 = arith.constant 0 : index
    %145 = vector.load %arg12[%c0_204, %c0_205] : memref<64x128xf32, #tpu.memory_space<vmem>>, vector<64x128xf32>
    tpu.vector_store %arg12[%c0_204, %c0_205], %144 {strides = array<i32>} : memref<64x128xf32, #tpu.memory_space<vmem>>, vector<64x128xf32>,
    %c0_206 = arith.constant 0 : index
    %c0_207 = arith.constant 0 : index
    %146 = vector.load %arg12[%c0_206, %c0_207] : memref<64x128xf32, #tpu.memory_space<vmem>>, vector<64x128xf32>
    %147 = vector.shape_cast %146 : vector<64x128xf32> to vector<1x8x8x128xf32>
    %148 = arith.truncf %147 : vector<1x8x8x128xf32> to vector<1x8x8x128xbf16>
    %c0_208 = arith.constant 0 : index
    %c0_209 = arith.constant 0 : index
    %c0_210 = arith.constant 0 : index
    %c0_211 = arith.constant 0 : index
    %149 = vector.load %arg9[%c0_208, %c0_209, %c0_210, %c0_211] : memref<1x8x8x128xbf16, #tpu.memory_space<vmem>>, vector<1x8x8x128xbf16>
    tpu.vector_store %arg9[%c0_208, %c0_209, %c0_210, %c0_211], %148 {strides = array<i32>} : memref<1x8x8x128xbf16, #tpu.memory_space<vmem>>, vector<1x8x8x128xbf16>,
    return
  }
  func.func @transform_0(%arg0: i32) -> (i32, i32, i32, i32) {
    %c0_i32 = arith.constant 0 : i32
    %c0_i32_0 = arith.constant 0 : i32
    %c0_i32_1 = arith.constant 0 : i32
    %c0_i32_2 = arith.constant 0 : i32
    return %arg0, %c0_i32, %c0_i32_0, %c0_i32_1 : i32, i32, i32, i32
  }
  func.func @transform_1(%arg0: i32) -> (i32, i32, i32) {
    %c0_i32 = arith.constant 0 : i32
    %c0_i32_0 = arith.constant 0 : i32
    %c0_i32_1 = arith.constant 0 : i32
    %c0_i32_2 = arith.constant 0 : i32
    return %c0_i32, %c0_i32_0, %c0_i32_1 : i32, i32, i32
  }
  func.func @transform_2(%arg0: i32) -> (i32, i32, i32) {
    %c0_i32 = arith.constant 0 : i32
    %c0_i32_0 = arith.constant 0 : i32
    %c0_i32_1 = arith.constant 0 : i32
    %c0_i32_2 = arith.constant 0 : i32
    return %c0_i32, %c0_i32_0, %c0_i32_1 : i32, i32, i32
  }
  func.func @transform_3(%arg0: i32) -> (i32, i32, i32) {
    %c0_i32 = arith.constant 0 : i32
    %c0_i32_0 = arith.constant 0 : i32
    %c0_i32_1 = arith.constant 0 : i32
    %c0_i32_2 = arith.constant 0 : i32
    return %c0_i32, %c0_i32_0, %c0_i32_1 : i32, i32, i32
  }
  func.func @transform_4(%arg0: i32) -> (i32, i32, i32) {
    %c0_i32 = arith.constant 0 : i32
    %c0_i32_0 = arith.constant 0 : i32
    %c0_i32_1 = arith.constant 0 : i32
    %c0_i32_2 = arith.constant 0 : i32
    return %c0_i32, %c0_i32_0, %c0_i32_1 : i32, i32, i32
  }
  func.func @transform_5(%arg0: i32) -> (i32, i32, i32) {
    %c0_i32 = arith.constant 0 : i32
    %c0_i32_0 = arith.constant 0 : i32
    %c0_i32_1 = arith.constant 0 : i32
    %c0_i32_2 = arith.constant 0 : i32
    return %c0_i32, %c0_i32_0, %c0_i32_1 : i32, i32, i32
  }
  func.func @transform_6(%arg0: i32) -> (i32, i32, i32) {
    %c0_i32 = arith.constant 0 : i32
    %c0_i32_0 = arith.constant 0 : i32
    %c0_i32_1 = arith.constant 0 : i32
    %c0_i32_2 = arith.constant 0 : i32
    return %c0_i32, %c0_i32_0, %c0_i32_1 : i32, i32, i32
  }
  func.func @transform_7(%arg0: i32) -> (i32, i32) {
    %c0_i32 = arith.constant 0 : i32
    %c0_i32_0 = arith.constant 0 : i32
    %c0_i32_1 = arith.constant 0 : i32
    return %c0_i32, %c0_i32_0 : i32, i32
  }
  func.func @transform_8(%arg0: i32) -> (i32, i32, i32, i32) {
    %c0_i32 = arith.constant 0 : i32
    %c0_i32_0 = arith.constant 0 : i32
    %c0_i32_1 = arith.constant 0 : i32
    %c0_i32_2 = arith.constant 0 : i32
    return %arg0, %c0_i32, %c0_i32_0, %c0_i32_1 : i32, i32, i32, i32
  }
}

module attributes {stable_mosaic.version = 11 : i64} {
  func.func @_basic_block_kernel(%arg0: i32, %arg1: memref<1x8x8x128xbf16, #tpu.memory_space<vmem>>, %arg2: memref<1x1x128xf32, #tpu.memory_space<vmem>>, %arg3: memref<1x1x128xf32, #tpu.memory_space<vmem>>, %arg4: memref<9x128x128xbf16, #tpu.memory_space<vmem>>, %arg5: memref<1x1x128xf32, #tpu.memory_space<vmem>>, %arg6: memref<1x1x128xf32, #tpu.memory_space<vmem>>, %arg7: memref<9x128x128xbf16, #tpu.memory_space<vmem>>, %arg8: memref<1x8x8x128xbf16, #tpu.memory_space<vmem>>, %arg9: memref<1x10x10x128xbf16, #tpu.memory_space<vmem>>, %arg10: memref<1x10x10x128xbf16, #tpu.memory_space<vmem>>, %arg11: memref<64x128xf32, #tpu.memory_space<vmem>>) attributes {dimension_semantics = [#tpu.dimension_semantics<parallel>], iteration_bounds = array<i64: 2>, scalar_prefetch = 0 : i64, scratch_operands = 3 : i64, tpu.core_type = #tpu.core_type<tc>, window_params = [{transform_indices = @transform_0, window_bounds = array<i64: 1, 8, 8, 128>}, {pipeline_mode = #tpu.pipeline_mode<synchronous>, transform_indices = @transform_1, window_bounds = array<i64: 1, 1, 128>}, {pipeline_mode = #tpu.pipeline_mode<synchronous>, transform_indices = @transform_2, window_bounds = array<i64: 1, 1, 128>}, {pipeline_mode = #tpu.pipeline_mode<synchronous>, transform_indices = @transform_3, window_bounds = array<i64: 9, 128, 128>}, {pipeline_mode = #tpu.pipeline_mode<synchronous>, transform_indices = @transform_4, window_bounds = array<i64: 1, 1, 128>}, {pipeline_mode = #tpu.pipeline_mode<synchronous>, transform_indices = @transform_5, window_bounds = array<i64: 1, 1, 128>}, {pipeline_mode = #tpu.pipeline_mode<synchronous>, transform_indices = @transform_6, window_bounds = array<i64: 9, 128, 128>}, {transform_indices = @transform_7, window_bounds = array<i64: 1, 8, 8, 128>}]} {
    %c0 = arith.constant 0 : index
    %c0_0 = arith.constant 0 : index
    %c0_1 = arith.constant 0 : index
    %c0_2 = arith.constant 0 : index
    %0 = vector.load %arg1[%c0, %c0_0, %c0_1, %c0_2] : memref<1x8x8x128xbf16, #tpu.memory_space<vmem>>, vector<1x8x8x128xbf16>
    %1 = arith.extf %0 : vector<1x8x8x128xbf16> to vector<1x8x8x128xf32>
    %c0_3 = arith.constant 0 : index
    %c0_4 = arith.constant 0 : index
    %c0_5 = arith.constant 0 : index
    %2 = vector.load %arg2[%c0_3, %c0_4, %c0_5] : memref<1x1x128xf32, #tpu.memory_space<vmem>>, vector<1x1x128xf32>
    %3 = vector.shape_cast %2 : vector<1x1x128xf32> to vector<1x1x1x128xf32>
    %4 = vector.broadcast %3 : vector<1x1x1x128xf32> to vector<1x8x8x128xf32>
    %5 = arith.mulf %1, %4 : vector<1x8x8x128xf32>
    %c0_6 = arith.constant 0 : index
    %c0_7 = arith.constant 0 : index
    %c0_8 = arith.constant 0 : index
    %6 = vector.load %arg3[%c0_6, %c0_7, %c0_8] : memref<1x1x128xf32, #tpu.memory_space<vmem>>, vector<1x1x128xf32>
    %7 = vector.shape_cast %6 : vector<1x1x128xf32> to vector<1x1x1x128xf32>
    %8 = vector.broadcast %7 : vector<1x1x1x128xf32> to vector<1x8x8x128xf32>
    %9 = arith.addf %5, %8 : vector<1x8x8x128xf32>
    %cst = arith.constant 0.000000e+00 : f32
    %10 = vector.broadcast %cst : f32 to vector<1x8x8x128xf32>
    %11 = arith.maximumf %9, %10 : vector<1x8x8x128xf32>
    %12 = arith.truncf %11 : vector<1x8x8x128xf32> to vector<1x8x8x128xbf16>
    %cst_9 = arith.constant 0.000000e+00 : bf16
    %13 = vector.broadcast %cst_9 : bf16 to vector<1x1x10x128xbf16>
    %c0_10 = arith.constant 0 : index
    %c0_11 = arith.constant 0 : index
    %c0_12 = arith.constant 0 : index
    %c0_13 = arith.constant 0 : index
    %14 = vector.load %arg9[%c0_10, %c0_11, %c0_12, %c0_13] : memref<1x10x10x128xbf16, #tpu.memory_space<vmem>>, vector<1x1x10x128xbf16>
    tpu.vector_store %arg9[%c0_10, %c0_11, %c0_12, %c0_13], %13 {strides = array<i32>} : memref<1x10x10x128xbf16, #tpu.memory_space<vmem>>, vector<1x1x10x128xbf16>,
    %cst_14 = arith.constant 0.000000e+00 : bf16
    %15 = vector.broadcast %cst_14 : bf16 to vector<1x10x1x128xbf16>
    %c0_15 = arith.constant 0 : index
    %c0_16 = arith.constant 0 : index
    %c0_17 = arith.constant 0 : index
    %c0_18 = arith.constant 0 : index
    %16 = vector.load %arg9[%c0_15, %c0_16, %c0_17, %c0_18] : memref<1x10x10x128xbf16, #tpu.memory_space<vmem>>, vector<1x10x1x128xbf16>
    tpu.vector_store %arg9[%c0_15, %c0_16, %c0_17, %c0_18], %15 {strides = array<i32>} : memref<1x10x10x128xbf16, #tpu.memory_space<vmem>>, vector<1x10x1x128xbf16>,
    %cst_19 = arith.constant 0.000000e+00 : bf16
    %17 = vector.broadcast %cst_19 : bf16 to vector<1x1x10x128xbf16>
    %c0_20 = arith.constant 0 : index
    %c9 = arith.constant 9 : index
    %c0_21 = arith.constant 0 : index
    %c0_22 = arith.constant 0 : index
    %18 = vector.load %arg9[%c0_20, %c9, %c0_21, %c0_22] : memref<1x10x10x128xbf16, #tpu.memory_space<vmem>>, vector<1x1x10x128xbf16>
    tpu.vector_store %arg9[%c0_20, %c9, %c0_21, %c0_22], %17 {strides = array<i32>} : memref<1x10x10x128xbf16, #tpu.memory_space<vmem>>, vector<1x1x10x128xbf16>,
    %cst_23 = arith.constant 0.000000e+00 : bf16
    %19 = vector.broadcast %cst_23 : bf16 to vector<1x10x1x128xbf16>
    %c0_24 = arith.constant 0 : index
    %c0_25 = arith.constant 0 : index
    %c9_26 = arith.constant 9 : index
    %c0_27 = arith.constant 0 : index
    %20 = vector.load %arg9[%c0_24, %c0_25, %c9_26, %c0_27] : memref<1x10x10x128xbf16, #tpu.memory_space<vmem>>, vector<1x10x1x128xbf16>
    tpu.vector_store %arg9[%c0_24, %c0_25, %c9_26, %c0_27], %19 {strides = array<i32>} : memref<1x10x10x128xbf16, #tpu.memory_space<vmem>>, vector<1x10x1x128xbf16>,
    %c0_28 = arith.constant 0 : index
    %c1 = arith.constant 1 : index
    %c1_29 = arith.constant 1 : index
    %c0_30 = arith.constant 0 : index
    %21 = vector.load %arg9[%c0_28, %c1, %c1_29, %c0_30] : memref<1x10x10x128xbf16, #tpu.memory_space<vmem>>, vector<1x8x8x128xbf16>
    tpu.vector_store %arg9[%c0_28, %c1, %c1_29, %c0_30], %12 {strides = array<i32>} : memref<1x10x10x128xbf16, #tpu.memory_space<vmem>>, vector<1x8x8x128xbf16>,
    %c0_31 = arith.constant 0 : index
    %c0_32 = arith.constant 0 : index
    %c0_33 = arith.constant 0 : index
    %c0_34 = arith.constant 0 : index
    %22 = vector.load %arg9[%c0_31, %c0_32, %c0_33, %c0_34] : memref<1x10x10x128xbf16, #tpu.memory_space<vmem>>, vector<1x8x8x128xbf16>
    %23 = vector.shape_cast %22 : vector<1x8x8x128xbf16> to vector<64x128xbf16>
    %c0_35 = arith.constant 0 : index
    %c0_36 = arith.constant 0 : index
    %c0_37 = arith.constant 0 : index
    %24 = vector.load %arg4[%c0_35, %c0_36, %c0_37] : memref<9x128x128xbf16, #tpu.memory_space<vmem>>, vector<1x128x128xbf16>
    %25 = vector.shape_cast %24 : vector<1x128x128xbf16> to vector<128x128xbf16>
    %cst_38 = arith.constant dense<0.000000e+00> : vector<64x128xf32>
    %26 = tpu.matmul %23, %25, %cst_38 {dimension_numbers = #tpu.dot_dimension_numbers<[1], [0], [0], [1], [0, 0, 1, 1], [], []>} : vector<64x128xbf16>, vector<128x128xbf16>, vector<64x128xf32> -> vector<64x128xf32>
    %c0_39 = arith.constant 0 : index
    %c0_40 = arith.constant 0 : index
    %27 = vector.load %arg11[%c0_39, %c0_40] : memref<64x128xf32, #tpu.memory_space<vmem>>, vector<64x128xf32>
    tpu.vector_store %arg11[%c0_39, %c0_40], %26 {strides = array<i32>} : memref<64x128xf32, #tpu.memory_space<vmem>>, vector<64x128xf32>,
    %c0_41 = arith.constant 0 : index
    %c0_42 = arith.constant 0 : index
    %c1_43 = arith.constant 1 : index
    %c0_44 = arith.constant 0 : index
    %28 = vector.load %arg9[%c0_41, %c0_42, %c1_43, %c0_44] : memref<1x10x10x128xbf16, #tpu.memory_space<vmem>>, vector<1x8x8x128xbf16>
    %29 = vector.shape_cast %28 : vector<1x8x8x128xbf16> to vector<64x128xbf16>
    %c1_45 = arith.constant 1 : index
    %c0_46 = arith.constant 0 : index
    %c0_47 = arith.constant 0 : index
    %30 = vector.load %arg4[%c1_45, %c0_46, %c0_47] : memref<9x128x128xbf16, #tpu.memory_space<vmem>>, vector<1x128x128xbf16>
    %31 = vector.shape_cast %30 : vector<1x128x128xbf16> to vector<128x128xbf16>
    %cst_48 = arith.constant dense<0.000000e+00> : vector<64x128xf32>
    %32 = tpu.matmul %29, %31, %cst_48 {dimension_numbers = #tpu.dot_dimension_numbers<[1], [0], [0], [1], [0, 0, 1, 1], [], []>} : vector<64x128xbf16>, vector<128x128xbf16>, vector<64x128xf32> -> vector<64x128xf32>
    %c0_49 = arith.constant 0 : index
    %c0_50 = arith.constant 0 : index
    %33 = vector.load %arg11[%c0_49, %c0_50] : memref<64x128xf32, #tpu.memory_space<vmem>>, vector<64x128xf32>
    %34 = arith.addf %33, %32 : vector<64x128xf32>
    %c0_51 = arith.constant 0 : index
    %c0_52 = arith.constant 0 : index
    %35 = vector.load %arg11[%c0_51, %c0_52] : memref<64x128xf32, #tpu.memory_space<vmem>>, vector<64x128xf32>
    tpu.vector_store %arg11[%c0_51, %c0_52], %34 {strides = array<i32>} : memref<64x128xf32, #tpu.memory_space<vmem>>, vector<64x128xf32>,
    %c0_53 = arith.constant 0 : index
    %c0_54 = arith.constant 0 : index
    %c2 = arith.constant 2 : index
    %c0_55 = arith.constant 0 : index
    %36 = vector.load %arg9[%c0_53, %c0_54, %c2, %c0_55] : memref<1x10x10x128xbf16, #tpu.memory_space<vmem>>, vector<1x8x8x128xbf16>
    %37 = vector.shape_cast %36 : vector<1x8x8x128xbf16> to vector<64x128xbf16>
    %c2_56 = arith.constant 2 : index
    %c0_57 = arith.constant 0 : index
    %c0_58 = arith.constant 0 : index
    %38 = vector.load %arg4[%c2_56, %c0_57, %c0_58] : memref<9x128x128xbf16, #tpu.memory_space<vmem>>, vector<1x128x128xbf16>
    %39 = vector.shape_cast %38 : vector<1x128x128xbf16> to vector<128x128xbf16>
    %cst_59 = arith.constant dense<0.000000e+00> : vector<64x128xf32>
    %40 = tpu.matmul %37, %39, %cst_59 {dimension_numbers = #tpu.dot_dimension_numbers<[1], [0], [0], [1], [0, 0, 1, 1], [], []>} : vector<64x128xbf16>, vector<128x128xbf16>, vector<64x128xf32> -> vector<64x128xf32>
    %c0_60 = arith.constant 0 : index
    %c0_61 = arith.constant 0 : index
    %41 = vector.load %arg11[%c0_60, %c0_61] : memref<64x128xf32, #tpu.memory_space<vmem>>, vector<64x128xf32>
    %42 = arith.addf %41, %40 : vector<64x128xf32>
    %c0_62 = arith.constant 0 : index
    %c0_63 = arith.constant 0 : index
    %43 = vector.load %arg11[%c0_62, %c0_63] : memref<64x128xf32, #tpu.memory_space<vmem>>, vector<64x128xf32>
    tpu.vector_store %arg11[%c0_62, %c0_63], %42 {strides = array<i32>} : memref<64x128xf32, #tpu.memory_space<vmem>>, vector<64x128xf32>,
    %c0_64 = arith.constant 0 : index
    %c1_65 = arith.constant 1 : index
    %c0_66 = arith.constant 0 : index
    %c0_67 = arith.constant 0 : index
    %44 = vector.load %arg9[%c0_64, %c1_65, %c0_66, %c0_67] : memref<1x10x10x128xbf16, #tpu.memory_space<vmem>>, vector<1x8x8x128xbf16>
    %45 = vector.shape_cast %44 : vector<1x8x8x128xbf16> to vector<64x128xbf16>
    %c3 = arith.constant 3 : index
    %c0_68 = arith.constant 0 : index
    %c0_69 = arith.constant 0 : index
    %46 = vector.load %arg4[%c3, %c0_68, %c0_69] : memref<9x128x128xbf16, #tpu.memory_space<vmem>>, vector<1x128x128xbf16>
    %47 = vector.shape_cast %46 : vector<1x128x128xbf16> to vector<128x128xbf16>
    %cst_70 = arith.constant dense<0.000000e+00> : vector<64x128xf32>
    %48 = tpu.matmul %45, %47, %cst_70 {dimension_numbers = #tpu.dot_dimension_numbers<[1], [0], [0], [1], [0, 0, 1, 1], [], []>} : vector<64x128xbf16>, vector<128x128xbf16>, vector<64x128xf32> -> vector<64x128xf32>
    %c0_71 = arith.constant 0 : index
    %c0_72 = arith.constant 0 : index
    %49 = vector.load %arg11[%c0_71, %c0_72] : memref<64x128xf32, #tpu.memory_space<vmem>>, vector<64x128xf32>
    %50 = arith.addf %49, %48 : vector<64x128xf32>
    %c0_73 = arith.constant 0 : index
    %c0_74 = arith.constant 0 : index
    %51 = vector.load %arg11[%c0_73, %c0_74] : memref<64x128xf32, #tpu.memory_space<vmem>>, vector<64x128xf32>
    tpu.vector_store %arg11[%c0_73, %c0_74], %50 {strides = array<i32>} : memref<64x128xf32, #tpu.memory_space<vmem>>, vector<64x128xf32>,
    %c0_75 = arith.constant 0 : index
    %c1_76 = arith.constant 1 : index
    %c1_77 = arith.constant 1 : index
    %c0_78 = arith.constant 0 : index
    %52 = vector.load %arg9[%c0_75, %c1_76, %c1_77, %c0_78] : memref<1x10x10x128xbf16, #tpu.memory_space<vmem>>, vector<1x8x8x128xbf16>
    %53 = vector.shape_cast %52 : vector<1x8x8x128xbf16> to vector<64x128xbf16>
    %c4 = arith.constant 4 : index
    %c0_79 = arith.constant 0 : index
    %c0_80 = arith.constant 0 : index
    %54 = vector.load %arg4[%c4, %c0_79, %c0_80] : memref<9x128x128xbf16, #tpu.memory_space<vmem>>, vector<1x128x128xbf16>
    %55 = vector.shape_cast %54 : vector<1x128x128xbf16> to vector<128x128xbf16>
    %cst_81 = arith.constant dense<0.000000e+00> : vector<64x128xf32>
    %56 = tpu.matmul %53, %55, %cst_81 {dimension_numbers = #tpu.dot_dimension_numbers<[1], [0], [0], [1], [0, 0, 1, 1], [], []>} : vector<64x128xbf16>, vector<128x128xbf16>, vector<64x128xf32> -> vector<64x128xf32>
    %c0_82 = arith.constant 0 : index
    %c0_83 = arith.constant 0 : index
    %57 = vector.load %arg11[%c0_82, %c0_83] : memref<64x128xf32, #tpu.memory_space<vmem>>, vector<64x128xf32>
    %58 = arith.addf %57, %56 : vector<64x128xf32>
    %c0_84 = arith.constant 0 : index
    %c0_85 = arith.constant 0 : index
    %59 = vector.load %arg11[%c0_84, %c0_85] : memref<64x128xf32, #tpu.memory_space<vmem>>, vector<64x128xf32>
    tpu.vector_store %arg11[%c0_84, %c0_85], %58 {strides = array<i32>} : memref<64x128xf32, #tpu.memory_space<vmem>>, vector<64x128xf32>,
    %c0_86 = arith.constant 0 : index
    %c1_87 = arith.constant 1 : index
    %c2_88 = arith.constant 2 : index
    %c0_89 = arith.constant 0 : index
    %60 = vector.load %arg9[%c0_86, %c1_87, %c2_88, %c0_89] : memref<1x10x10x128xbf16, #tpu.memory_space<vmem>>, vector<1x8x8x128xbf16>
    %61 = vector.shape_cast %60 : vector<1x8x8x128xbf16> to vector<64x128xbf16>
    %c5 = arith.constant 5 : index
    %c0_90 = arith.constant 0 : index
    %c0_91 = arith.constant 0 : index
    %62 = vector.load %arg4[%c5, %c0_90, %c0_91] : memref<9x128x128xbf16, #tpu.memory_space<vmem>>, vector<1x128x128xbf16>
    %63 = vector.shape_cast %62 : vector<1x128x128xbf16> to vector<128x128xbf16>
    %cst_92 = arith.constant dense<0.000000e+00> : vector<64x128xf32>
    %64 = tpu.matmul %61, %63, %cst_92 {dimension_numbers = #tpu.dot_dimension_numbers<[1], [0], [0], [1], [0, 0, 1, 1], [], []>} : vector<64x128xbf16>, vector<128x128xbf16>, vector<64x128xf32> -> vector<64x128xf32>
    %c0_93 = arith.constant 0 : index
    %c0_94 = arith.constant 0 : index
    %65 = vector.load %arg11[%c0_93, %c0_94] : memref<64x128xf32, #tpu.memory_space<vmem>>, vector<64x128xf32>
    %66 = arith.addf %65, %64 : vector<64x128xf32>
    %c0_95 = arith.constant 0 : index
    %c0_96 = arith.constant 0 : index
    %67 = vector.load %arg11[%c0_95, %c0_96] : memref<64x128xf32, #tpu.memory_space<vmem>>, vector<64x128xf32>
    tpu.vector_store %arg11[%c0_95, %c0_96], %66 {strides = array<i32>} : memref<64x128xf32, #tpu.memory_space<vmem>>, vector<64x128xf32>,
    %c0_97 = arith.constant 0 : index
    %c2_98 = arith.constant 2 : index
    %c0_99 = arith.constant 0 : index
    %c0_100 = arith.constant 0 : index
    %68 = vector.load %arg9[%c0_97, %c2_98, %c0_99, %c0_100] : memref<1x10x10x128xbf16, #tpu.memory_space<vmem>>, vector<1x8x8x128xbf16>
    %69 = vector.shape_cast %68 : vector<1x8x8x128xbf16> to vector<64x128xbf16>
    %c6 = arith.constant 6 : index
    %c0_101 = arith.constant 0 : index
    %c0_102 = arith.constant 0 : index
    %70 = vector.load %arg4[%c6, %c0_101, %c0_102] : memref<9x128x128xbf16, #tpu.memory_space<vmem>>, vector<1x128x128xbf16>
    %71 = vector.shape_cast %70 : vector<1x128x128xbf16> to vector<128x128xbf16>
    %cst_103 = arith.constant dense<0.000000e+00> : vector<64x128xf32>
    %72 = tpu.matmul %69, %71, %cst_103 {dimension_numbers = #tpu.dot_dimension_numbers<[1], [0], [0], [1], [0, 0, 1, 1], [], []>} : vector<64x128xbf16>, vector<128x128xbf16>, vector<64x128xf32> -> vector<64x128xf32>
    %c0_104 = arith.constant 0 : index
    %c0_105 = arith.constant 0 : index
    %73 = vector.load %arg11[%c0_104, %c0_105] : memref<64x128xf32, #tpu.memory_space<vmem>>, vector<64x128xf32>
    %74 = arith.addf %73, %72 : vector<64x128xf32>
    %c0_106 = arith.constant 0 : index
    %c0_107 = arith.constant 0 : index
    %75 = vector.load %arg11[%c0_106, %c0_107] : memref<64x128xf32, #tpu.memory_space<vmem>>, vector<64x128xf32>
    tpu.vector_store %arg11[%c0_106, %c0_107], %74 {strides = array<i32>} : memref<64x128xf32, #tpu.memory_space<vmem>>, vector<64x128xf32>,
    %c0_108 = arith.constant 0 : index
    %c2_109 = arith.constant 2 : index
    %c1_110 = arith.constant 1 : index
    %c0_111 = arith.constant 0 : index
    %76 = vector.load %arg9[%c0_108, %c2_109, %c1_110, %c0_111] : memref<1x10x10x128xbf16, #tpu.memory_space<vmem>>, vector<1x8x8x128xbf16>
    %77 = vector.shape_cast %76 : vector<1x8x8x128xbf16> to vector<64x128xbf16>
    %c7 = arith.constant 7 : index
    %c0_112 = arith.constant 0 : index
    %c0_113 = arith.constant 0 : index
    %78 = vector.load %arg4[%c7, %c0_112, %c0_113] : memref<9x128x128xbf16, #tpu.memory_space<vmem>>, vector<1x128x128xbf16>
    %79 = vector.shape_cast %78 : vector<1x128x128xbf16> to vector<128x128xbf16>
    %cst_114 = arith.constant dense<0.000000e+00> : vector<64x128xf32>
    %80 = tpu.matmul %77, %79, %cst_114 {dimension_numbers = #tpu.dot_dimension_numbers<[1], [0], [0], [1], [0, 0, 1, 1], [], []>} : vector<64x128xbf16>, vector<128x128xbf16>, vector<64x128xf32> -> vector<64x128xf32>
    %c0_115 = arith.constant 0 : index
    %c0_116 = arith.constant 0 : index
    %81 = vector.load %arg11[%c0_115, %c0_116] : memref<64x128xf32, #tpu.memory_space<vmem>>, vector<64x128xf32>
    %82 = arith.addf %81, %80 : vector<64x128xf32>
    %c0_117 = arith.constant 0 : index
    %c0_118 = arith.constant 0 : index
    %83 = vector.load %arg11[%c0_117, %c0_118] : memref<64x128xf32, #tpu.memory_space<vmem>>, vector<64x128xf32>
    tpu.vector_store %arg11[%c0_117, %c0_118], %82 {strides = array<i32>} : memref<64x128xf32, #tpu.memory_space<vmem>>, vector<64x128xf32>,
    %c0_119 = arith.constant 0 : index
    %c2_120 = arith.constant 2 : index
    %c2_121 = arith.constant 2 : index
    %c0_122 = arith.constant 0 : index
    %84 = vector.load %arg9[%c0_119, %c2_120, %c2_121, %c0_122] : memref<1x10x10x128xbf16, #tpu.memory_space<vmem>>, vector<1x8x8x128xbf16>
    %85 = vector.shape_cast %84 : vector<1x8x8x128xbf16> to vector<64x128xbf16>
    %c8 = arith.constant 8 : index
    %c0_123 = arith.constant 0 : index
    %c0_124 = arith.constant 0 : index
    %86 = vector.load %arg4[%c8, %c0_123, %c0_124] : memref<9x128x128xbf16, #tpu.memory_space<vmem>>, vector<1x128x128xbf16>
    %87 = vector.shape_cast %86 : vector<1x128x128xbf16> to vector<128x128xbf16>
    %cst_125 = arith.constant dense<0.000000e+00> : vector<64x128xf32>
    %88 = tpu.matmul %85, %87, %cst_125 {dimension_numbers = #tpu.dot_dimension_numbers<[1], [0], [0], [1], [0, 0, 1, 1], [], []>} : vector<64x128xbf16>, vector<128x128xbf16>, vector<64x128xf32> -> vector<64x128xf32>
    %c0_126 = arith.constant 0 : index
    %c0_127 = arith.constant 0 : index
    %89 = vector.load %arg11[%c0_126, %c0_127] : memref<64x128xf32, #tpu.memory_space<vmem>>, vector<64x128xf32>
    %90 = arith.addf %89, %88 : vector<64x128xf32>
    %c0_128 = arith.constant 0 : index
    %c0_129 = arith.constant 0 : index
    %91 = vector.load %arg11[%c0_128, %c0_129] : memref<64x128xf32, #tpu.memory_space<vmem>>, vector<64x128xf32>
    tpu.vector_store %arg11[%c0_128, %c0_129], %90 {strides = array<i32>} : memref<64x128xf32, #tpu.memory_space<vmem>>, vector<64x128xf32>,
    %c0_130 = arith.constant 0 : index
    %c0_131 = arith.constant 0 : index
    %92 = vector.load %arg11[%c0_130, %c0_131] : memref<64x128xf32, #tpu.memory_space<vmem>>, vector<64x128xf32>
    %c0_132 = arith.constant 0 : index
    %c0_133 = arith.constant 0 : index
    %c0_134 = arith.constant 0 : index
    %93 = vector.load %arg5[%c0_132, %c0_133, %c0_134] : memref<1x1x128xf32, #tpu.memory_space<vmem>>, vector<1x1x128xf32>
    %94 = vector.shape_cast %93 : vector<1x1x128xf32> to vector<1x128xf32>
    %95 = vector.broadcast %94 : vector<1x128xf32> to vector<64x128xf32>
    %96 = arith.mulf %92, %95 : vector<64x128xf32>
    %c0_135 = arith.constant 0 : index
    %c0_136 = arith.constant 0 : index
    %c0_137 = arith.constant 0 : index
    %97 = vector.load %arg6[%c0_135, %c0_136, %c0_137] : memref<1x1x128xf32, #tpu.memory_space<vmem>>, vector<1x1x128xf32>
    %98 = vector.shape_cast %97 : vector<1x1x128xf32> to vector<1x128xf32>
    %99 = vector.broadcast %98 : vector<1x128xf32> to vector<64x128xf32>
    %100 = arith.addf %96, %99 : vector<64x128xf32>
    %cst_138 = arith.constant 0.000000e+00 : f32
    %101 = vector.broadcast %cst_138 : f32 to vector<64x128xf32>
    %102 = arith.maximumf %100, %101 : vector<64x128xf32>
    %103 = arith.truncf %102 : vector<64x128xf32> to vector<64x128xbf16>
    %104 = vector.shape_cast %103 : vector<64x128xbf16> to vector<1x8x8x128xbf16>
    %cst_139 = arith.constant 0.000000e+00 : bf16
    %105 = vector.broadcast %cst_139 : bf16 to vector<1x1x10x128xbf16>
    %c0_140 = arith.constant 0 : index
    %c0_141 = arith.constant 0 : index
    %c0_142 = arith.constant 0 : index
    %c0_143 = arith.constant 0 : index
    %106 = vector.load %arg10[%c0_140, %c0_141, %c0_142, %c0_143] : memref<1x10x10x128xbf16, #tpu.memory_space<vmem>>, vector<1x1x10x128xbf16>
    tpu.vector_store %arg10[%c0_140, %c0_141, %c0_142, %c0_143], %105 {strides = array<i32>} : memref<1x10x10x128xbf16, #tpu.memory_space<vmem>>, vector<1x1x10x128xbf16>,
    %cst_144 = arith.constant 0.000000e+00 : bf16
    %107 = vector.broadcast %cst_144 : bf16 to vector<1x1x10x128xbf16>
    %c0_145 = arith.constant 0 : index
    %c9_146 = arith.constant 9 : index
    %c0_147 = arith.constant 0 : index
    %c0_148 = arith.constant 0 : index
    %108 = vector.load %arg10[%c0_145, %c9_146, %c0_147, %c0_148] : memref<1x10x10x128xbf16, #tpu.memory_space<vmem>>, vector<1x1x10x128xbf16>
    tpu.vector_store %arg10[%c0_145, %c9_146, %c0_147, %c0_148], %107 {strides = array<i32>} : memref<1x10x10x128xbf16, #tpu.memory_space<vmem>>, vector<1x1x10x128xbf16>,
    %cst_149 = arith.constant 0.000000e+00 : bf16
    %109 = vector.broadcast %cst_149 : bf16 to vector<1x10x1x128xbf16>
    %c0_150 = arith.constant 0 : index
    %c0_151 = arith.constant 0 : index
    %c0_152 = arith.constant 0 : index
    %c0_153 = arith.constant 0 : index
    %110 = vector.load %arg10[%c0_150, %c0_151, %c0_152, %c0_153] : memref<1x10x10x128xbf16, #tpu.memory_space<vmem>>, vector<1x10x1x128xbf16>
    tpu.vector_store %arg10[%c0_150, %c0_151, %c0_152, %c0_153], %109 {strides = array<i32>} : memref<1x10x10x128xbf16, #tpu.memory_space<vmem>>, vector<1x10x1x128xbf16>,
    %cst_154 = arith.constant 0.000000e+00 : bf16
    %111 = vector.broadcast %cst_154 : bf16 to vector<1x10x1x128xbf16>
    %c0_155 = arith.constant 0 : index
    %c0_156 = arith.constant 0 : index
    %c9_157 = arith.constant 9 : index
    %c0_158 = arith.constant 0 : index
    %112 = vector.load %arg10[%c0_155, %c0_156, %c9_157, %c0_158] : memref<1x10x10x128xbf16, #tpu.memory_space<vmem>>, vector<1x10x1x128xbf16>
    tpu.vector_store %arg10[%c0_155, %c0_156, %c9_157, %c0_158], %111 {strides = array<i32>} : memref<1x10x10x128xbf16, #tpu.memory_space<vmem>>, vector<1x10x1x128xbf16>,
    %c0_159 = arith.constant 0 : index
    %c1_160 = arith.constant 1 : index
    %c1_161 = arith.constant 1 : index
    %c0_162 = arith.constant 0 : index
    %113 = vector.load %arg10[%c0_159, %c1_160, %c1_161, %c0_162] : memref<1x10x10x128xbf16, #tpu.memory_space<vmem>>, vector<1x8x8x128xbf16>
    tpu.vector_store %arg10[%c0_159, %c1_160, %c1_161, %c0_162], %104 {strides = array<i32>} : memref<1x10x10x128xbf16, #tpu.memory_space<vmem>>, vector<1x8x8x128xbf16>,
    %114 = vector.shape_cast %1 : vector<1x8x8x128xf32> to vector<64x128xf32>
    %c0_163 = arith.constant 0 : index
    %c0_164 = arith.constant 0 : index
    %115 = vector.load %arg11[%c0_163, %c0_164] : memref<64x128xf32, #tpu.memory_space<vmem>>, vector<64x128xf32>
    tpu.vector_store %arg11[%c0_163, %c0_164], %114 {strides = array<i32>} : memref<64x128xf32, #tpu.memory_space<vmem>>, vector<64x128xf32>,
    %c0_165 = arith.constant 0 : index
    %c0_166 = arith.constant 0 : index
    %c0_167 = arith.constant 0 : index
    %c0_168 = arith.constant 0 : index
    %116 = vector.load %arg10[%c0_165, %c0_166, %c0_167, %c0_168] : memref<1x10x10x128xbf16, #tpu.memory_space<vmem>>, vector<1x8x8x128xbf16>
    %117 = vector.shape_cast %116 : vector<1x8x8x128xbf16> to vector<64x128xbf16>
    %c0_169 = arith.constant 0 : index
    %c0_170 = arith.constant 0 : index
    %118 = vector.load %arg11[%c0_169, %c0_170] : memref<64x128xf32, #tpu.memory_space<vmem>>, vector<64x128xf32>
    %c0_171 = arith.constant 0 : index
    %c0_172 = arith.constant 0 : index
    %c0_173 = arith.constant 0 : index
    %119 = vector.load %arg7[%c0_171, %c0_172, %c0_173] : memref<9x128x128xbf16, #tpu.memory_space<vmem>>, vector<1x128x128xbf16>
    %120 = vector.shape_cast %119 : vector<1x128x128xbf16> to vector<128x128xbf16>
    %cst_174 = arith.constant dense<0.000000e+00> : vector<64x128xf32>
    %121 = tpu.matmul %117, %120, %cst_174 {dimension_numbers = #tpu.dot_dimension_numbers<[1], [0], [0], [1], [0, 0, 1, 1], [], []>} : vector<64x128xbf16>, vector<128x128xbf16>, vector<64x128xf32> -> vector<64x128xf32>
    %122 = arith.addf %118, %121 : vector<64x128xf32>
    %c0_175 = arith.constant 0 : index
    %c0_176 = arith.constant 0 : index
    %123 = vector.load %arg11[%c0_175, %c0_176] : memref<64x128xf32, #tpu.memory_space<vmem>>, vector<64x128xf32>
    tpu.vector_store %arg11[%c0_175, %c0_176], %122 {strides = array<i32>} : memref<64x128xf32, #tpu.memory_space<vmem>>, vector<64x128xf32>,
    %c0_177 = arith.constant 0 : index
    %c0_178 = arith.constant 0 : index
    %c1_179 = arith.constant 1 : index
    %c0_180 = arith.constant 0 : index
    %124 = vector.load %arg10[%c0_177, %c0_178, %c1_179, %c0_180] : memref<1x10x10x128xbf16, #tpu.memory_space<vmem>>, vector<1x8x8x128xbf16>
    %125 = vector.shape_cast %124 : vector<1x8x8x128xbf16> to vector<64x128xbf16>
    %c0_181 = arith.constant 0 : index
    %c0_182 = arith.constant 0 : index
    %126 = vector.load %arg11[%c0_181, %c0_182] : memref<64x128xf32, #tpu.memory_space<vmem>>, vector<64x128xf32>
    %c1_183 = arith.constant 1 : index
    %c0_184 = arith.constant 0 : index
    %c0_185 = arith.constant 0 : index
    %127 = vector.load %arg7[%c1_183, %c0_184, %c0_185] : memref<9x128x128xbf16, #tpu.memory_space<vmem>>, vector<1x128x128xbf16>
    %128 = vector.shape_cast %127 : vector<1x128x128xbf16> to vector<128x128xbf16>
    %cst_186 = arith.constant dense<0.000000e+00> : vector<64x128xf32>
    %129 = tpu.matmul %125, %128, %cst_186 {dimension_numbers = #tpu.dot_dimension_numbers<[1], [0], [0], [1], [0, 0, 1, 1], [], []>} : vector<64x128xbf16>, vector<128x128xbf16>, vector<64x128xf32> -> vector<64x128xf32>
    %130 = arith.addf %126, %129 : vector<64x128xf32>
    %c0_187 = arith.constant 0 : index
    %c0_188 = arith.constant 0 : index
    %131 = vector.load %arg11[%c0_187, %c0_188] : memref<64x128xf32, #tpu.memory_space<vmem>>, vector<64x128xf32>
    tpu.vector_store %arg11[%c0_187, %c0_188], %130 {strides = array<i32>} : memref<64x128xf32, #tpu.memory_space<vmem>>, vector<64x128xf32>,
    %c0_189 = arith.constant 0 : index
    %c0_190 = arith.constant 0 : index
    %c2_191 = arith.constant 2 : index
    %c0_192 = arith.constant 0 : index
    %132 = vector.load %arg10[%c0_189, %c0_190, %c2_191, %c0_192] : memref<1x10x10x128xbf16, #tpu.memory_space<vmem>>, vector<1x8x8x128xbf16>
    %133 = vector.shape_cast %132 : vector<1x8x8x128xbf16> to vector<64x128xbf16>
    %c0_193 = arith.constant 0 : index
    %c0_194 = arith.constant 0 : index
    %134 = vector.load %arg11[%c0_193, %c0_194] : memref<64x128xf32, #tpu.memory_space<vmem>>, vector<64x128xf32>
    %c2_195 = arith.constant 2 : index
    %c0_196 = arith.constant 0 : index
    %c0_197 = arith.constant 0 : index
    %135 = vector.load %arg7[%c2_195, %c0_196, %c0_197] : memref<9x128x128xbf16, #tpu.memory_space<vmem>>, vector<1x128x128xbf16>
    %136 = vector.shape_cast %135 : vector<1x128x128xbf16> to vector<128x128xbf16>
    %cst_198 = arith.constant dense<0.000000e+00> : vector<64x128xf32>
    %137 = tpu.matmul %133, %136, %cst_198 {dimension_numbers = #tpu.dot_dimension_numbers<[1], [0], [0], [1], [0, 0, 1, 1], [], []>} : vector<64x128xbf16>, vector<128x128xbf16>, vector<64x128xf32> -> vector<64x128xf32>
    %138 = arith.addf %134, %137 : vector<64x128xf32>
    %c0_199 = arith.constant 0 : index
    %c0_200 = arith.constant 0 : index
    %139 = vector.load %arg11[%c0_199, %c0_200] : memref<64x128xf32, #tpu.memory_space<vmem>>, vector<64x128xf32>
    tpu.vector_store %arg11[%c0_199, %c0_200], %138 {strides = array<i32>} : memref<64x128xf32, #tpu.memory_space<vmem>>, vector<64x128xf32>,
    %c0_201 = arith.constant 0 : index
    %c1_202 = arith.constant 1 : index
    %c0_203 = arith.constant 0 : index
    %c0_204 = arith.constant 0 : index
    %140 = vector.load %arg10[%c0_201, %c1_202, %c0_203, %c0_204] : memref<1x10x10x128xbf16, #tpu.memory_space<vmem>>, vector<1x8x8x128xbf16>
    %141 = vector.shape_cast %140 : vector<1x8x8x128xbf16> to vector<64x128xbf16>
    %c0_205 = arith.constant 0 : index
    %c0_206 = arith.constant 0 : index
    %142 = vector.load %arg11[%c0_205, %c0_206] : memref<64x128xf32, #tpu.memory_space<vmem>>, vector<64x128xf32>
    %c3_207 = arith.constant 3 : index
    %c0_208 = arith.constant 0 : index
    %c0_209 = arith.constant 0 : index
    %143 = vector.load %arg7[%c3_207, %c0_208, %c0_209] : memref<9x128x128xbf16, #tpu.memory_space<vmem>>, vector<1x128x128xbf16>
    %144 = vector.shape_cast %143 : vector<1x128x128xbf16> to vector<128x128xbf16>
    %cst_210 = arith.constant dense<0.000000e+00> : vector<64x128xf32>
    %145 = tpu.matmul %141, %144, %cst_210 {dimension_numbers = #tpu.dot_dimension_numbers<[1], [0], [0], [1], [0, 0, 1, 1], [], []>} : vector<64x128xbf16>, vector<128x128xbf16>, vector<64x128xf32> -> vector<64x128xf32>
    %146 = arith.addf %142, %145 : vector<64x128xf32>
    %c0_211 = arith.constant 0 : index
    %c0_212 = arith.constant 0 : index
    %147 = vector.load %arg11[%c0_211, %c0_212] : memref<64x128xf32, #tpu.memory_space<vmem>>, vector<64x128xf32>
    tpu.vector_store %arg11[%c0_211, %c0_212], %146 {strides = array<i32>} : memref<64x128xf32, #tpu.memory_space<vmem>>, vector<64x128xf32>,
    %c0_213 = arith.constant 0 : index
    %c1_214 = arith.constant 1 : index
    %c1_215 = arith.constant 1 : index
    %c0_216 = arith.constant 0 : index
    %148 = vector.load %arg10[%c0_213, %c1_214, %c1_215, %c0_216] : memref<1x10x10x128xbf16, #tpu.memory_space<vmem>>, vector<1x8x8x128xbf16>
    %149 = vector.shape_cast %148 : vector<1x8x8x128xbf16> to vector<64x128xbf16>
    %c0_217 = arith.constant 0 : index
    %c0_218 = arith.constant 0 : index
    %150 = vector.load %arg11[%c0_217, %c0_218] : memref<64x128xf32, #tpu.memory_space<vmem>>, vector<64x128xf32>
    %c4_219 = arith.constant 4 : index
    %c0_220 = arith.constant 0 : index
    %c0_221 = arith.constant 0 : index
    %151 = vector.load %arg7[%c4_219, %c0_220, %c0_221] : memref<9x128x128xbf16, #tpu.memory_space<vmem>>, vector<1x128x128xbf16>
    %152 = vector.shape_cast %151 : vector<1x128x128xbf16> to vector<128x128xbf16>
    %cst_222 = arith.constant dense<0.000000e+00> : vector<64x128xf32>
    %153 = tpu.matmul %149, %152, %cst_222 {dimension_numbers = #tpu.dot_dimension_numbers<[1], [0], [0], [1], [0, 0, 1, 1], [], []>} : vector<64x128xbf16>, vector<128x128xbf16>, vector<64x128xf32> -> vector<64x128xf32>
    %154 = arith.addf %150, %153 : vector<64x128xf32>
    %c0_223 = arith.constant 0 : index
    %c0_224 = arith.constant 0 : index
    %155 = vector.load %arg11[%c0_223, %c0_224] : memref<64x128xf32, #tpu.memory_space<vmem>>, vector<64x128xf32>
    tpu.vector_store %arg11[%c0_223, %c0_224], %154 {strides = array<i32>} : memref<64x128xf32, #tpu.memory_space<vmem>>, vector<64x128xf32>,
    %c0_225 = arith.constant 0 : index
    %c1_226 = arith.constant 1 : index
    %c2_227 = arith.constant 2 : index
    %c0_228 = arith.constant 0 : index
    %156 = vector.load %arg10[%c0_225, %c1_226, %c2_227, %c0_228] : memref<1x10x10x128xbf16, #tpu.memory_space<vmem>>, vector<1x8x8x128xbf16>
    %157 = vector.shape_cast %156 : vector<1x8x8x128xbf16> to vector<64x128xbf16>
    %c0_229 = arith.constant 0 : index
    %c0_230 = arith.constant 0 : index
    %158 = vector.load %arg11[%c0_229, %c0_230] : memref<64x128xf32, #tpu.memory_space<vmem>>, vector<64x128xf32>
    %c5_231 = arith.constant 5 : index
    %c0_232 = arith.constant 0 : index
    %c0_233 = arith.constant 0 : index
    %159 = vector.load %arg7[%c5_231, %c0_232, %c0_233] : memref<9x128x128xbf16, #tpu.memory_space<vmem>>, vector<1x128x128xbf16>
    %160 = vector.shape_cast %159 : vector<1x128x128xbf16> to vector<128x128xbf16>
    %cst_234 = arith.constant dense<0.000000e+00> : vector<64x128xf32>
    %161 = tpu.matmul %157, %160, %cst_234 {dimension_numbers = #tpu.dot_dimension_numbers<[1], [0], [0], [1], [0, 0, 1, 1], [], []>} : vector<64x128xbf16>, vector<128x128xbf16>, vector<64x128xf32> -> vector<64x128xf32>
    %162 = arith.addf %158, %161 : vector<64x128xf32>
    %c0_235 = arith.constant 0 : index
    %c0_236 = arith.constant 0 : index
    %163 = vector.load %arg11[%c0_235, %c0_236] : memref<64x128xf32, #tpu.memory_space<vmem>>, vector<64x128xf32>
    tpu.vector_store %arg11[%c0_235, %c0_236], %162 {strides = array<i32>} : memref<64x128xf32, #tpu.memory_space<vmem>>, vector<64x128xf32>,
    %c0_237 = arith.constant 0 : index
    %c2_238 = arith.constant 2 : index
    %c0_239 = arith.constant 0 : index
    %c0_240 = arith.constant 0 : index
    %164 = vector.load %arg10[%c0_237, %c2_238, %c0_239, %c0_240] : memref<1x10x10x128xbf16, #tpu.memory_space<vmem>>, vector<1x8x8x128xbf16>
    %165 = vector.shape_cast %164 : vector<1x8x8x128xbf16> to vector<64x128xbf16>
    %c0_241 = arith.constant 0 : index
    %c0_242 = arith.constant 0 : index
    %166 = vector.load %arg11[%c0_241, %c0_242] : memref<64x128xf32, #tpu.memory_space<vmem>>, vector<64x128xf32>
    %c6_243 = arith.constant 6 : index
    %c0_244 = arith.constant 0 : index
    %c0_245 = arith.constant 0 : index
    %167 = vector.load %arg7[%c6_243, %c0_244, %c0_245] : memref<9x128x128xbf16, #tpu.memory_space<vmem>>, vector<1x128x128xbf16>
    %168 = vector.shape_cast %167 : vector<1x128x128xbf16> to vector<128x128xbf16>
    %cst_246 = arith.constant dense<0.000000e+00> : vector<64x128xf32>
    %169 = tpu.matmul %165, %168, %cst_246 {dimension_numbers = #tpu.dot_dimension_numbers<[1], [0], [0], [1], [0, 0, 1, 1], [], []>} : vector<64x128xbf16>, vector<128x128xbf16>, vector<64x128xf32> -> vector<64x128xf32>
    %170 = arith.addf %166, %169 : vector<64x128xf32>
    %c0_247 = arith.constant 0 : index
    %c0_248 = arith.constant 0 : index
    %171 = vector.load %arg11[%c0_247, %c0_248] : memref<64x128xf32, #tpu.memory_space<vmem>>, vector<64x128xf32>
    tpu.vector_store %arg11[%c0_247, %c0_248], %170 {strides = array<i32>} : memref<64x128xf32, #tpu.memory_space<vmem>>, vector<64x128xf32>,
    %c0_249 = arith.constant 0 : index
    %c2_250 = arith.constant 2 : index
    %c1_251 = arith.constant 1 : index
    %c0_252 = arith.constant 0 : index
    %172 = vector.load %arg10[%c0_249, %c2_250, %c1_251, %c0_252] : memref<1x10x10x128xbf16, #tpu.memory_space<vmem>>, vector<1x8x8x128xbf16>
    %173 = vector.shape_cast %172 : vector<1x8x8x128xbf16> to vector<64x128xbf16>
    %c0_253 = arith.constant 0 : index
    %c0_254 = arith.constant 0 : index
    %174 = vector.load %arg11[%c0_253, %c0_254] : memref<64x128xf32, #tpu.memory_space<vmem>>, vector<64x128xf32>
    %c7_255 = arith.constant 7 : index
    %c0_256 = arith.constant 0 : index
    %c0_257 = arith.constant 0 : index
    %175 = vector.load %arg7[%c7_255, %c0_256, %c0_257] : memref<9x128x128xbf16, #tpu.memory_space<vmem>>, vector<1x128x128xbf16>
    %176 = vector.shape_cast %175 : vector<1x128x128xbf16> to vector<128x128xbf16>
    %cst_258 = arith.constant dense<0.000000e+00> : vector<64x128xf32>
    %177 = tpu.matmul %173, %176, %cst_258 {dimension_numbers = #tpu.dot_dimension_numbers<[1], [0], [0], [1], [0, 0, 1, 1], [], []>} : vector<64x128xbf16>, vector<128x128xbf16>, vector<64x128xf32> -> vector<64x128xf32>
    %178 = arith.addf %174, %177 : vector<64x128xf32>
    %c0_259 = arith.constant 0 : index
    %c0_260 = arith.constant 0 : index
    %179 = vector.load %arg11[%c0_259, %c0_260] : memref<64x128xf32, #tpu.memory_space<vmem>>, vector<64x128xf32>
    tpu.vector_store %arg11[%c0_259, %c0_260], %178 {strides = array<i32>} : memref<64x128xf32, #tpu.memory_space<vmem>>, vector<64x128xf32>,
    %c0_261 = arith.constant 0 : index
    %c2_262 = arith.constant 2 : index
    %c2_263 = arith.constant 2 : index
    %c0_264 = arith.constant 0 : index
    %180 = vector.load %arg10[%c0_261, %c2_262, %c2_263, %c0_264] : memref<1x10x10x128xbf16, #tpu.memory_space<vmem>>, vector<1x8x8x128xbf16>
    %181 = vector.shape_cast %180 : vector<1x8x8x128xbf16> to vector<64x128xbf16>
    %c0_265 = arith.constant 0 : index
    %c0_266 = arith.constant 0 : index
    %182 = vector.load %arg11[%c0_265, %c0_266] : memref<64x128xf32, #tpu.memory_space<vmem>>, vector<64x128xf32>
    %c8_267 = arith.constant 8 : index
    %c0_268 = arith.constant 0 : index
    %c0_269 = arith.constant 0 : index
    %183 = vector.load %arg7[%c8_267, %c0_268, %c0_269] : memref<9x128x128xbf16, #tpu.memory_space<vmem>>, vector<1x128x128xbf16>
    %184 = vector.shape_cast %183 : vector<1x128x128xbf16> to vector<128x128xbf16>
    %cst_270 = arith.constant dense<0.000000e+00> : vector<64x128xf32>
    %185 = tpu.matmul %181, %184, %cst_270 {dimension_numbers = #tpu.dot_dimension_numbers<[1], [0], [0], [1], [0, 0, 1, 1], [], []>} : vector<64x128xbf16>, vector<128x128xbf16>, vector<64x128xf32> -> vector<64x128xf32>
    %186 = arith.addf %182, %185 : vector<64x128xf32>
    %c0_271 = arith.constant 0 : index
    %c0_272 = arith.constant 0 : index
    %187 = vector.load %arg11[%c0_271, %c0_272] : memref<64x128xf32, #tpu.memory_space<vmem>>, vector<64x128xf32>
    tpu.vector_store %arg11[%c0_271, %c0_272], %186 {strides = array<i32>} : memref<64x128xf32, #tpu.memory_space<vmem>>, vector<64x128xf32>,
    %c0_273 = arith.constant 0 : index
    %c0_274 = arith.constant 0 : index
    %188 = vector.load %arg11[%c0_273, %c0_274] : memref<64x128xf32, #tpu.memory_space<vmem>>, vector<64x128xf32>
    %189 = vector.shape_cast %188 : vector<64x128xf32> to vector<1x8x8x128xf32>
    %190 = arith.truncf %189 : vector<1x8x8x128xf32> to vector<1x8x8x128xbf16>
    %c0_275 = arith.constant 0 : index
    %c0_276 = arith.constant 0 : index
    %c0_277 = arith.constant 0 : index
    %c0_278 = arith.constant 0 : index
    %191 = vector.load %arg8[%c0_275, %c0_276, %c0_277, %c0_278] : memref<1x8x8x128xbf16, #tpu.memory_space<vmem>>, vector<1x8x8x128xbf16>
    tpu.vector_store %arg8[%c0_275, %c0_276, %c0_277, %c0_278], %190 {strides = array<i32>} : memref<1x8x8x128xbf16, #tpu.memory_space<vmem>>, vector<1x8x8x128xbf16>,
    return
  }
  func.func @transform_0(%arg0: i32) -> (i32, i32, i32, i32) {
    %c0_i32 = arith.constant 0 : i32
    %c0_i32_0 = arith.constant 0 : i32
    %c0_i32_1 = arith.constant 0 : i32
    %c0_i32_2 = arith.constant 0 : i32
    return %arg0, %c0_i32, %c0_i32_0, %c0_i32_1 : i32, i32, i32, i32
  }
  func.func @transform_1(%arg0: i32) -> (i32, i32, i32) {
    %c0_i32 = arith.constant 0 : i32
    %c0_i32_0 = arith.constant 0 : i32
    %c0_i32_1 = arith.constant 0 : i32
    %c0_i32_2 = arith.constant 0 : i32
    return %c0_i32, %c0_i32_0, %c0_i32_1 : i32, i32, i32
  }
  func.func @transform_2(%arg0: i32) -> (i32, i32, i32) {
    %c0_i32 = arith.constant 0 : i32
    %c0_i32_0 = arith.constant 0 : i32
    %c0_i32_1 = arith.constant 0 : i32
    %c0_i32_2 = arith.constant 0 : i32
    return %c0_i32, %c0_i32_0, %c0_i32_1 : i32, i32, i32
  }
  func.func @transform_3(%arg0: i32) -> (i32, i32, i32) {
    %c0_i32 = arith.constant 0 : i32
    %c0_i32_0 = arith.constant 0 : i32
    %c0_i32_1 = arith.constant 0 : i32
    %c0_i32_2 = arith.constant 0 : i32
    return %c0_i32, %c0_i32_0, %c0_i32_1 : i32, i32, i32
  }
  func.func @transform_4(%arg0: i32) -> (i32, i32, i32) {
    %c0_i32 = arith.constant 0 : i32
    %c0_i32_0 = arith.constant 0 : i32
    %c0_i32_1 = arith.constant 0 : i32
    %c0_i32_2 = arith.constant 0 : i32
    return %c0_i32, %c0_i32_0, %c0_i32_1 : i32, i32, i32
  }
  func.func @transform_5(%arg0: i32) -> (i32, i32, i32) {
    %c0_i32 = arith.constant 0 : i32
    %c0_i32_0 = arith.constant 0 : i32
    %c0_i32_1 = arith.constant 0 : i32
    %c0_i32_2 = arith.constant 0 : i32
    return %c0_i32, %c0_i32_0, %c0_i32_1 : i32, i32, i32
  }
  func.func @transform_6(%arg0: i32) -> (i32, i32, i32) {
    %c0_i32 = arith.constant 0 : i32
    %c0_i32_0 = arith.constant 0 : i32
    %c0_i32_1 = arith.constant 0 : i32
    %c0_i32_2 = arith.constant 0 : i32
    return %c0_i32, %c0_i32_0, %c0_i32_1 : i32, i32, i32
  }
  func.func @transform_7(%arg0: i32) -> (i32, i32, i32, i32) {
    %c0_i32 = arith.constant 0 : i32
    %c0_i32_0 = arith.constant 0 : i32
    %c0_i32_1 = arith.constant 0 : i32
    %c0_i32_2 = arith.constant 0 : i32
    return %arg0, %c0_i32, %c0_i32_0, %c0_i32_1 : i32, i32, i32, i32
  }
}

</mosaic_0001>

<llo_original>
// kernel: tile.14
$region0: #{tile.14}
  %s0 = inlined_call_operand.vmem [shape: f32[4,4], index: 0, kind: input, shape index: {}]
  %s1 = inlined_call_operand.vmem [shape: f32[16], index: 1, kind: output, shape index: {}]
  $region1: #{tile.14} parent=0
    #allocation0 [shape = 'u8[4096]{0}', space=vmem, size = 0x1000, scoped, tag = 'scoped mem for output reshape']
    #allocation1 [shape = 'u8[4096]{0}', space=vmem, size = 0x1000, scoped, tag = 'scoped mem for input reshape']
    %s3 = sshllo.u32 0, 4
    %v4 = vld [vmem:[%s0] sm:%s3]
    %5 = vst [vmem:[#allocation1] sm:%s3] %v4
    %v6 = vld [vmem:[#allocation1] sm:$0x1]
    %vm7 = vcmask 31744
    %8 = vst.msk [vmem:[#allocation0] sm:$0x1] %vm7, %v6
    %s9 = scalar_lea.vmem [#allocation1], 3
    %v10 = vld [vmem:[%s9] sm:$0x1]
    %11 = vrot.lane.b32.xlu0 %v10, 12
    %v12 = vpop.permute.xlu0 %11
    %vm13 = vcmask 130144
    %14 = vst.msk [vmem:[#allocation0] sm:$0x1] %vm13, %v12
    %s15 = scalar_lea.vmem [#allocation1], 2
    %v16 = vld [vmem:[%s15] sm:$0x1]
    %17 = vrot.lane.b32.xlu0 %v16, 8
    %v18 = vpop.permute.xlu0 %17
    %vm19 = vcmask 97344
    %20 = vst.msk [vmem:[#allocation0] sm:$0x1] %vm19, %v18
    %s21 = scalar_lea.vmem [#allocation1], 1
    %v22 = vld [vmem:[%s21] sm:$0x1]
    %23 = vrot.lane.b32.xlu0 %v22, 4
    %v24 = vpop.permute.xlu0 %23
    %vm25 = vcmask 64544
    %26 = vst.msk [vmem:[#allocation0] sm:$0x1] %vm25, %v24
    %s28 = sshllo.u32 0, 1
    %v30 = vld [vmem:[#allocation0] sm:%s28]
    %s31 = sshllo.u32 0, 1
    %32 = vst [vmem:[%s1] sm:%s31] %v30

// kernel: tile.13
$region0: #{tile.13}
  #allocation0 [shape = 's32[1]{0}', space=sflag, size = 0x4, scoped, tag = 'scoped memory for tile.13']
  %s0 = inlined_call_operand.vmem [shape: f32[4], index: 0, kind: input, shape index: {}]
  %s1 = inlined_call_operand.vmem [shape: f32[4,4], index: 1, kind: output, shape index: {}]
  // Predicated region
  $region2: #{tile.13} parent=0 // pred_check
    _
  $region3: #{tile.13} parent=0 // pred_check_branch
    %3 = sbr.rel (0) target = $region5
  $region4: #{tile.13} parent=0 // pred_region
    _
  $region5: #{tile.13} parent=0 // pred_fallthru
    _
  %v4 = vld [vmem:[%s0] ss:$0 sm:$0xff]
  %5 = vst [vmem:[%s1] sm:$0xf] %v4

// kernel: network_block_forward.2
$region0: #{network_block_forward.2}
  #allocation0 [shape = 'u32[]', space=smem, size = 0x4, offset = 0x4, fixed_abs, tag = 'smem constant byte address 0x4 - core index']
  #allocation1 [shape = 'u32[144,128]{1,0:T(1,128)}', space=vmem, size = 0x12000, scoped, tag = 'internal scratch']
  #allocation2 [shape = 'bf16[1,9,9,128]{3,2,1,0:T(8,128)(2,1)}', space=vmem, size = 0x9000, scoped, tag = 'scratch operand']
  #allocation3 [shape = 'bf16[1,10,10,128]{3,2,1,0:T(8,128)(2,1)}', space=vmem, size = 0xa000, scoped, tag = 'scratch operand']
  #allocation4 [shape = 'f32[64,128]{1,0:T(8,128)}', space=vmem, size = 0x8000, scoped, tag = 'scratch operand']
  %s0 = inlined_call_operand.vmem [shape: bf16[2,8,8,128], index: 0, kind: input, shape index: {}]
  %s1 = inlined_call_operand.vmem [shape: f32[1,1,128], index: 1, kind: input, shape index: {}]
  %s2 = inlined_call_operand.vmem [shape: f32[1,1,128], index: 2, kind: input, shape index: {}]
  %s3 = inlined_call_operand.vmem [shape: bf16[4,128,128], index: 3, kind: input, shape index: {}]
  %s4 = inlined_call_operand.vmem [shape: f32[1,1,128], index: 4, kind: input, shape index: {}]
  %s5 = inlined_call_operand.vmem [shape: f32[1,1,128], index: 5, kind: input, shape index: {}]
  %s6 = inlined_call_operand.vmem [shape: bf16[9,128,128], index: 6, kind: input, shape index: {}]
  %s7 = inlined_call_operand.vmem [shape: bf16[128,128], index: 7, kind: input, shape index: {}]
  %s8 = inlined_call_operand.vmem [shape: bf16[2,8,8,128], index: 8, kind: output, shape index: {}]
  %s9 = sld [smem:[#allocation0]]
  $region65: #{network_block_forward.2} parent=0
    _
  %s11 = ssub.s32 1, %s9
  %s12 = scalar_select 0, %s11, %s9
  loop: start=0, step=1, limit=4
  $region2: #{network_block_forward.2} parent=0 // loop_pre_header
    _
  $region3: #{network_block_forward.2} parent=0 // loop_header
    %s14 = sphi 0, %s18
    %p15 = scmp.ge.s32.totalorder %s14, 4
    %s24 = sphi 0, %s26
    %s27 = sphi 0, %s24
    %s28 = sphi 0, %s27
    %s44 = sphi 0, %s28
    %s48 = sphi 0, %s48
    %s50 = sphi 0, %s48
    %s51 = sphi 0, %s50
    %s65 = sphi 0, %s51
    %s69 = sphi 0, %s69
    %s71 = sphi 0, %s69
    %s72 = sphi 0, %s71
    %s86 = sphi 0, %s72
    %s90 = sphi 0, %s90
    %s92 = sphi 0, %s90
    %s93 = sphi 0, %s92
    %s107 = sphi 0, %s93
    %s111 = sphi 0, %s111
    %s113 = sphi 0, %s111
    %s114 = sphi 0, %s113
    %s128 = sphi 0, %s114
    %s132 = sphi 0, %s132
    %s134 = sphi 0, %s132
    %s135 = sphi 0, %s134
    %s149 = sphi 0, %s135
    %s153 = sphi 0, %s153
    %s155 = sphi 0, %s153
    %s156 = sphi 0, %s155
    %s170 = sphi 0, %s156
    %s174 = sphi 0, %s174
    %s176 = sphi 0, %s174
    %s177 = sphi 0, %s176
    %s191 = sphi 0, %s177
    %s197 = sphi 0, %s199
    %s200 = sphi 0, %s197
    %s201 = sphi 0, %s200
    %s217 = sphi 0, %s201
  $region4: #{network_block_forward.2} parent=0 // loop_header_branch
    %17 = sbr.rel (%p15) target = $region8
  $region5: #{network_block_forward.2} parent=0 // loop_body
    %s19 = ssub.s32 %s14, 1
    %s20 = ssub.s32 %s14, 2
    %s21 = sadd.s32 %s14, 1
    %s22 = ssub.s32 %s14, %s21
    %p23 = scmp.eq.s32.totalorder %s22, 0
    %s25 = sadd.s32 %s24, 1
    %s26 = scalar_select %p23, %s24, %s25
    %p29 = pneg %p23
    %p30 = scmp.eq.s32.totalorder %s14, 1
    %p31 = por %p29, %p30
    %p32 = scmp.ne.s32.totalorder %s24, %s27
    %p33 = scmp.eq.s32.totalorder %s14, 0
    %p34 = por %p32, %p33
    %p35 = scmp.ne.s32.totalorder %s24, %s27
    %p36 = scmp.eq.s32.totalorder %s19, 1
    %p37 = por %p35, %p36
    %p38 = scmp.ne.s32.totalorder %s27, %s28
    %p39 = scmp.eq.s32.totalorder %s19, 0
    %p40 = por %p38, %p39
    %p41 = scmp.ne.s32.totalorder %s27, %s28
    %p42 = scmp.eq.s32.totalorder %s20, 1
    %p43 = por %p41, %p42
    %p45 = scmp.ne.s32.totalorder %s28, %s44
    %p46 = scmp.eq.s32.totalorder %s20, 0
    %p47 = por %p45, %p46
    %s49 = sadd.s32 %s48, 1
    %p52 = scmp.eq.s32.totalorder %s14, 1
    %p53 = scmp.ne.s32.totalorder %s48, %s50
    %p54 = scmp.eq.s32.totalorder %s14, 0
    %p55 = por %p53, %p54
    %p56 = scmp.ne.s32.totalorder %s48, %s50
    %p57 = scmp.eq.s32.totalorder %s19, 1
    %p58 = por %p56, %p57
    %p59 = scmp.ne.s32.totalorder %s50, %s51
    %p60 = scmp.eq.s32.totalorder %s19, 0
    %p61 = por %p59, %p60
    %p62 = scmp.ne.s32.totalorder %s50, %s51
    %p63 = scmp.eq.s32.totalorder %s20, 1
    %p64 = por %p62, %p63
    %p66 = scmp.ne.s32.totalorder %s51, %s65
    %p67 = scmp.eq.s32.totalorder %s20, 0
    %p68 = por %p66, %p67
    %s70 = sadd.s32 %s69, 1
    %p73 = scmp.eq.s32.totalorder %s14, 1
    %p74 = scmp.ne.s32.totalorder %s69, %s71
    %p75 = scmp.eq.s32.totalorder %s14, 0
    %p76 = por %p74, %p75
    %p77 = scmp.ne.s32.totalorder %s69, %s71
    %p78 = scmp.eq.s32.totalorder %s19, 1
    %p79 = por %p77, %p78
    %p80 = scmp.ne.s32.totalorder %s71, %s72
    %p81 = scmp.eq.s32.totalorder %s19, 0
    %p82 = por %p80, %p81
    %p83 = scmp.ne.s32.totalorder %s71, %s72
    %p84 = scmp.eq.s32.totalorder %s20, 1
    %p85 = por %p83, %p84
    %p87 = scmp.ne.s32.totalorder %s72, %s86
    %p88 = scmp.eq.s32.totalorder %s20, 0
    %p89 = por %p87, %p88
    %s91 = sadd.s32 %s90, 1
    %p94 = scmp.eq.s32.totalorder %s14, 1
    %p95 = scmp.ne.s32.totalorder %s90, %s92
    %p96 = scmp.eq.s32.totalorder %s14, 0
    %p97 = por %p95, %p96
    %p98 = scmp.ne.s32.totalorder %s90, %s92
    %p99 = scmp.eq.s32.totalorder %s19, 1
    %p100 = por %p98, %p99
    %p101 = scmp.ne.s32.totalorder %s92, %s93
    %p102 = scmp.eq.s32.totalorder %s19, 0
    %p103 = por %p101, %p102
    %p104 = scmp.ne.s32.totalorder %s92, %s93
    %p105 = scmp.eq.s32.totalorder %s20, 1
    %p106 = por %p104, %p105
    %p108 = scmp.ne.s32.totalorder %s93, %s107
    %p109 = scmp.eq.s32.totalorder %s20, 0
    %p110 = por %p108, %p109
    %s112 = sadd.s32 %s111, 1
    %p115 = scmp.eq.s32.totalorder %s14, 1
    %p116 = scmp.ne.s32.totalorder %s111, %s113
    %p117 = scmp.eq.s32.totalorder %s14, 0
    %p118 = por %p116, %p117
    %p119 = scmp.ne.s32.totalorder %s111, %s113
    %p120 = scmp.eq.s32.totalorder %s19, 1
    %p121 = por %p119, %p120
    %p122 = scmp.ne.s32.totalorder %s113, %s114
    %p123 = scmp.eq.s32.totalorder %s19, 0
    %p124 = por %p122, %p123
    %p125 = scmp.ne.s32.totalorder %s113, %s114
    %p126 = scmp.eq.s32.totalorder %s20, 1
    %p127 = por %p125, %p126
    %p129 = scmp.ne.s32.totalorder %s114, %s128
    %p130 = scmp.eq.s32.totalorder %s20, 0
    %p131 = por %p129, %p130
    %s133 = sadd.s32 %s132, 1
    %p136 = scmp.eq.s32.totalorder %s14, 1
    %p137 = scmp.ne.s32.totalorder %s132, %s134
    %p138 = scmp.eq.s32.totalorder %s14, 0
    %p139 = por %p137, %p138
    %p140 = scmp.ne.s32.totalorder %s132, %s134
    %p141 = scmp.eq.s32.totalorder %s19, 1
    %p142 = por %p140, %p141
    %p143 = scmp.ne.s32.totalorder %s134, %s135
    %p144 = scmp.eq.s32.totalorder %s19, 0
    %p145 = por %p143, %p144
    %p146 = scmp.ne.s32.totalorder %s134, %s135
    %p147 = scmp.eq.s32.totalorder %s20, 1
    %p148 = por %p146, %p147
    %p150 = scmp.ne.s32.totalorder %s135, %s149
    %p151 = scmp.eq.s32.totalorder %s20, 0
    %p152 = por %p150, %p151
    %s154 = sadd.s32 %s153, 1
    %p157 = scmp.eq.s32.totalorder %s14, 1
    %p158 = scmp.ne.s32.totalorder %s153, %s155
    %p159 = scmp.eq.s32.totalorder %s14, 0
    %p160 = por %p158, %p159
    %p161 = scmp.ne.s32.totalorder %s153, %s155
    %p162 = scmp.eq.s32.totalorder %s19, 1
    %p163 = por %p161, %p162
    %p164 = scmp.ne.s32.totalorder %s155, %s156
    %p165 = scmp.eq.s32.totalorder %s19, 0
    %p166 = por %p164, %p165
    %p167 = scmp.ne.s32.totalorder %s155, %s156
    %p168 = scmp.eq.s32.totalorder %s20, 1
    %p169 = por %p167, %p168
    %p171 = scmp.ne.s32.totalorder %s156, %s170
    %p172 = scmp.eq.s32.totalorder %s20, 0
    %p173 = por %p171, %p172
    %s175 = sadd.s32 %s174, 1
    %p178 = scmp.eq.s32.totalorder %s14, 1
    %p179 = scmp.ne.s32.totalorder %s174, %s176
    %p180 = scmp.eq.s32.totalorder %s14, 0
    %p181 = por %p179, %p180
    %p182 = scmp.ne.s32.totalorder %s174, %s176
    %p183 = scmp.eq.s32.totalorder %s19, 1
    %p184 = por %p182, %p183
    %p185 = scmp.ne.s32.totalorder %s176, %s177
    %p186 = scmp.eq.s32.totalorder %s19, 0
    %p187 = por %p185, %p186
    %p188 = scmp.ne.s32.totalorder %s176, %s177
    %p189 = scmp.eq.s32.totalorder %s20, 1
    %p190 = por %p188, %p189
    %p192 = scmp.ne.s32.totalorder %s177, %s191
    %p193 = scmp.eq.s32.totalorder %s20, 0
    %p194 = por %p192, %p193
    %s195 = ssub.s32 %s14, %s21
    %p196 = scmp.eq.s32.totalorder %s195, 0
    %s198 = sadd.s32 %s197, 1
    %s199 = scalar_select %p196, %s197, %s198
    %p202 = pneg %p196
    %p203 = scmp.eq.s32.totalorder %s14, 1
    %p204 = por %p202, %p203
    %p205 = scmp.ne.s32.totalorder %s197, %s200
    %p206 = scmp.eq.s32.totalorder %s14, 0
    %p207 = por %p205, %p206
    %p208 = scmp.ne.s32.totalorder %s197, %s200
    %p209 = scmp.eq.s32.totalorder %s19, 1
    %p210 = por %p208, %p209
    %p211 = scmp.ne.s32.totalorder %s200, %s201
    %p212 = scmp.eq.s32.totalorder %s19, 0
    %p213 = por %p211, %p212
    %p214 = scmp.ne.s32.totalorder %s200, %s201
    %p215 = scmp.eq.s32.totalorder %s20, 1
    %p216 = por %p214, %p215
    %p218 = scmp.ne.s32.totalorder %s201, %s217
    %p219 = scmp.eq.s32.totalorder %s20, 0
    %p220 = por %p218, %p219
    %p221 = scmp.le.s32.totalorder 1, %s14
    %p222 = scmp.lt.s32.totalorder %s14, 3
    %p223 = pnand %p221, %p222
    %p224 = pneg %p223
    // Predicated region
    $region9: #{network_block_forward.2} parent=5 // pred_check
      _
    $region10: #{network_block_forward.2} parent=5 // pred_check_branch
      %226 = sbr.rel (%p223) target = $region12
    $region11: #{network_block_forward.2} parent=5 // pred_region
      %s227 = ssub.s32 %s14, 1
      // Predicated region
      $region13: #{network_block_forward.2} parent=11 // pred_check
        %p228 = pneg %p61
      $region14: #{network_block_forward.2} parent=11 // pred_check_branch
        %230 = sbr.rel (%p228) target = $region16
      $region15: #{network_block_forward.2} parent=11 // pred_region
        _
      $region16: #{network_block_forward.2} parent=11 // pred_fallthru
        _
      // Predicated region
      $region17: #{network_block_forward.2} parent=11 // pred_check
        %p231 = pneg %p82
      $region18: #{network_block_forward.2} parent=11 // pred_check_branch
        %233 = sbr.rel (%p231) target = $region20
      $region19: #{network_block_forward.2} parent=11 // pred_region
        _
      $region20: #{network_block_forward.2} parent=11 // pred_fallthru
        _
      // Predicated region
      $region21: #{network_block_forward.2} parent=11 // pred_check
        %p234 = pneg %p103
      $region22: #{network_block_forward.2} parent=11 // pred_check_branch
        %236 = sbr.rel (%p234) target = $region24
      $region23: #{network_block_forward.2} parent=11 // pred_region
        _
      $region24: #{network_block_forward.2} parent=11 // pred_fallthru
        _
      // Predicated region
      $region25: #{network_block_forward.2} parent=11 // pred_check
        %p237 = pneg %p124
      $region26: #{network_block_forward.2} parent=11 // pred_check_branch
        %239 = sbr.rel (%p237) target = $region28
      $region27: #{network_block_forward.2} parent=11 // pred_region
        _
      $region28: #{network_block_forward.2} parent=11 // pred_fallthru
        _
      // Predicated region
      $region29: #{network_block_forward.2} parent=11 // pred_check
        %p240 = pneg %p145
      $region30: #{network_block_forward.2} parent=11 // pred_check_branch
        %242 = sbr.rel (%p240) target = $region32
      $region31: #{network_block_forward.2} parent=11 // pred_region
        _
      $region32: #{network_block_forward.2} parent=11 // pred_fallthru
        _
      // Predicated region
      $region33: #{network_block_forward.2} parent=11 // pred_check
        %p243 = pneg %p166
      $region34: #{network_block_forward.2} parent=11 // pred_check_branch
        %245 = sbr.rel (%p243) target = $region36
      $region35: #{network_block_forward.2} parent=11 // pred_region
        _
      $region36: #{network_block_forward.2} parent=11 // pred_fallthru
        _
      // Predicated region
      $region37: #{network_block_forward.2} parent=11 // pred_check
        %p246 = pneg %p187
      $region38: #{network_block_forward.2} parent=11 // pred_check_branch
        %248 = sbr.rel (%p246) target = $region40
      $region39: #{network_block_forward.2} parent=11 // pred_region
        _
      $region40: #{network_block_forward.2} parent=11 // pred_fallthru
        _
    $region12: #{network_block_forward.2} parent=5 // pred_fallthru
      _
    %p249 = scmp.lt.s32.totalorder %s14, 2
    // Predicated region
    $region41: #{network_block_forward.2} parent=5 // pred_check
      %p250 = pneg %p249
    $region42: #{network_block_forward.2} parent=5 // pred_check_branch
      %252 = sbr.rel (%p250) target = $region44
    $region43: #{network_block_forward.2} parent=5 // pred_region
      // Predicated region
      $region45: #{network_block_forward.2} parent=43 // pred_check
        %p253 = pneg %p34
      $region46: #{network_block_forward.2} parent=43 // pred_check_branch
        %255 = sbr.rel (%p253) target = $region48
      $region47: #{network_block_forward.2} parent=43 // pred_region
        %p256 = scmp.lt.s32.totalorder %s14, 1
        %s257 = scalar_select %p256, %s14, 1
        %s258 = smul.addr %s257, 8
        %s259 = smul.addr %s258, 4
        %s260 = scalar_lea.vmem %s0, %s259
      $region48: #{network_block_forward.2} parent=43 // pred_fallthru
        _
    $region44: #{network_block_forward.2} parent=5 // pred_fallthru
      _
    %p261 = scmp.le.s32.totalorder 1, %s14
    %p262 = scmp.lt.s32.totalorder %s14, 3
    %p263 = pnand %p261, %p262
    %p264 = pneg %p263
    // Predicated region
    $region49: #{network_block_forward.2} parent=5 // pred_check
      _
    $region50: #{network_block_forward.2} parent=5 // pred_check_branch
      %266 = sbr.rel (%p263) target = $region52
    $region51: #{network_block_forward.2} parent=5 // pred_region
      %s267 = ssub.s32 %s14, 1
      %p268 = scmp.lt.s32.totalorder %s19, 1
      %s269 = scalar_select %p268, %s19, 1
      %s270 = smul.addr %s269, 8
      %s271 = smul.addr %s270, 4
      %s272 = scalar_lea.vmem %s0, %s271
      %p273 = pneg %p40
      %p274 = pneg %p37
      %p275 = pneg %p61
      %p276 = pneg %p58
      %p277 = pneg %p82
      %p278 = pneg %p79
      %p279 = pneg %p103
      %p280 = pneg %p100
      %p281 = pneg %p124
      %p282 = pneg %p121
      %p283 = pneg %p145
      %p284 = pneg %p142
      %p285 = pneg %p166
      %p286 = pneg %p163
      %p287 = pneg %p187
      %p288 = pneg %p184
      %p289 = pneg %p213
      %p290 = pneg %p210
      %p291 = scmp.lt.s32.totalorder %s19, 1
      %s292 = scalar_select %p291, %s19, 1
      %s293 = smul.addr %s292, 8
      %s294 = smul.addr %s293, 4
      %s295 = scalar_lea.vmem %s8, %s294
      %p296 = scmp.lt.s32.totalorder %s19, 1
      %s297 = scalar_select %p296, %s19, 1
      %s298 = smul.addr %s297, 8
      %s299 = smul.addr %s298, 4
      %s300 = scalar_lea.vmem %s0, %s299
      %p301 = scmp.lt.s32.totalorder %s19, 1
      %s302 = scalar_select %p301, %s19, 1
      %s303 = smul.addr %s302, 8
      %s304 = smul.addr %s303, 4
      %s305 = scalar_lea.vmem %s8, %s304
      %v307 = vld [vmem:[%s300] sm:$0xf]
      %v308 = vld [vmem:[%s300 + $0x4] sm:$0xf]
      %v309 = vld [vmem:[%s300 + $0x8] sm:$0xf]
      %v310 = vld [vmem:[%s300 + $0xc] sm:$0xf]
      %v311 = vld [vmem:[%s300 + $0x10] sm:$0xf]
      %v312 = vld [vmem:[%s300 + $0x14] sm:$0xf]
      %v313 = vld [vmem:[%s300 + $0x18] sm:$0xf]
      %v314 = vld [vmem:[%s300 + $0x1c] sm:$0xf]
      %v315 = vunpack.c.l.bf16 %v307
      %v316 = vunpack.c.l.bf16 %v308
      %v317 = vunpack.c.l.bf16 %v309
      %v318 = vunpack.c.l.bf16 %v310
      %v319 = vunpack.c.l.bf16 %v311
      %v320 = vunpack.c.l.bf16 %v312
      %v321 = vunpack.c.l.bf16 %v313
      %v322 = vunpack.c.l.bf16 %v314
      %v323 = vld [vmem:[%s1] sm:$0x1]
      %v325 = vlaneseq
      %v326 = vshrl.u32 %v325, 7
      %v327 = vsub.s32 0, %v326
      %v328 = vrot.slane %v323, %v327
      %v330 = vmul.f32 %v315, %v328
      %v331 = vmul.f32 %v316, %v328
      %v332 = vmul.f32 %v317, %v328
      %v333 = vmul.f32 %v318, %v328
      %v334 = vmul.f32 %v319, %v328
      %v335 = vmul.f32 %v320, %v328
      %v336 = vmul.f32 %v321, %v328
      %v337 = vmul.f32 %v322, %v328
      %v338 = vld [vmem:[%s2] sm:$0x1]
      %v340 = vlaneseq
      %v341 = vshrl.u32 %v340, 7
      %v342 = vsub.s32 0, %v341
      %v343 = vrot.slane %v338, %v342
      %v345 = vadd.f32 %v330, %v343
      %v346 = vadd.f32 %v331, %v343
      %v347 = vadd.f32 %v332, %v343
      %v348 = vadd.f32 %v333, %v343
      %v349 = vadd.f32 %v334, %v343
      %v350 = vadd.f32 %v335, %v343
      %v351 = vadd.f32 %v336, %v343
      %v352 = vadd.f32 %v337, %v343
      %v353 = vmax.f32 %v345, 0.0
      %v354 = vmax.f32 %v346, 0.0
      %v355 = vmax.f32 %v347, 0.0
      %v356 = vmax.f32 %v348, 0.0
      %v357 = vmax.f32 %v349, 0.0
      %v358 = vmax.f32 %v350, 0.0
      %v359 = vmax.f32 %v351, 0.0
      %v360 = vmax.f32 %v352, 0.0
      %v361 = vpack.c.bf16 %v353, %v353
      %v362 = vpack.c.bf16 %v354, %v354
      %v363 = vpack.c.bf16 %v355, %v355
      %v364 = vpack.c.bf16 %v356, %v356
      %v365 = vpack.c.bf16 %v357, %v357
      %v366 = vpack.c.bf16 %v358, %v358
      %v367 = vpack.c.bf16 %v359, %v359
      %v368 = vpack.c.bf16 %v360, %v360
      %369 = vst [vmem:[#allocation2] sm:$0xf] 0
      %vm370 = vcmask 1040384
      %vm371 = vsmask.f32 256
      %vm372 = vmand %vm370, %vm371
      %v373 = vld [vmem:[#allocation2 + $0x4] sm:$0x1]
      %v374 = vsel %vm372, 0, %v373
      %375 = vst [vmem:[#allocation2 + $0x4] sm:$0x1] %v374
      %v376 = vld [vmem:[#allocation2] sm:$0x1]
      %v377 = vsel %vm372, 0, %v376
      %378 = vst [vmem:[#allocation2] sm:$0x1] %v377
      %v379 = vld [vmem:[#allocation2 + $0x8] sm:$0x1]
      %v380 = vsel %vm372, 0, %v379
      %381 = vst [vmem:[#allocation2 + $0x8] sm:$0x1] %v380
      %v382 = vld [vmem:[#allocation2 + $0x10] sm:$0x1]
      %v383 = vsel %vm372, 0, %v382
      %384 = vst [vmem:[#allocation2 + $0x10] sm:$0x1] %v383
      %v385 = vld [vmem:[#allocation2 + $0x18] sm:$0x1]
      %v386 = vsel %vm372, 0, %v385
      %387 = vst [vmem:[#allocation2 + $0x18] sm:$0x1] %v386
      %v388 = vld [vmem:[#allocation2 + $0x20] sm:$0x1]
      %v389 = vsel %vm372, 0, %v388
      %390 = vst [vmem:[#allocation2 + $0x20] sm:$0x1] %v389
      %v391 = vld [vmem:[#allocation2 + $0x28] sm:$0x1]
      %v392 = vsel %vm372, 0, %v391
      %393 = vst [vmem:[#allocation2 + $0x28] sm:$0x1] %v392
      %v394 = vld [vmem:[#allocation2 + $0x30] sm:$0x1]
      %v395 = vsel %vm372, 0, %v394
      %396 = vst [vmem:[#allocation2 + $0x30] sm:$0x1] %v395
      %v397 = vld [vmem:[#allocation2 + $0x38] sm:$0x1]
      %v398 = vsel %vm372, 0, %v397
      %399 = vst [vmem:[#allocation2 + $0x38] sm:$0x1] %v398
      %v400 = vld [vmem:[#allocation2 + $0x40] sm:$0x1]
      %v401 = vsel %vm372, 0, %v400
      %402 = vst [vmem:[#allocation2 + $0x40] sm:$0x1] %v401
      %v411 = vunpack.c.l.b16 %v361
      %v412 = vunpack.c.l.b16 %v362
      %v413 = vunpack.c.l.b16 %v363
      %v414 = vunpack.c.l.b16 %v364
      %v415 = vunpack.c.l.b16 %v365
      %v416 = vunpack.c.l.b16 %v366
      %v417 = vunpack.c.l.b16 %v367
      %v418 = vunpack.c.l.b16 %v368
      %v419 = vpack.c.b16 %v411, %v411
      %v420 = vpack.c.b16 %v412, %v412
      %v421 = vpack.c.b16 %v413, %v413
      %v422 = vpack.c.b16 %v414, %v414
      %v423 = vpack.c.b16 %v415, %v415
      %v424 = vpack.c.b16 %v416, %v416
      %v425 = vpack.c.b16 %v417, %v417
      %v426 = vpack.c.b16 %v418, %v418
      %v428 = vshrl.u32 %v419, 16
      %v430 = vrot.slane %v428, 7
      %v431 = vshll.u32 %v419, 16
      %v433 = vor.u32 %v430, %v431
      %v434 = vrot.slane %v430, 4
      %v436 = vshrl.u32 %v420, 16
      %v438 = vrot.slane %v436, 7
      %v439 = vshll.u32 %v420, 16
      %v441 = vor.u32 %v438, %v439
      %v442 = vrot.slane %v438, 4
      %v444 = vshrl.u32 %v421, 16
      %v446 = vrot.slane %v444, 7
      %v447 = vshll.u32 %v421, 16
      %v449 = vor.u32 %v446, %v447
      %v450 = vrot.slane %v446, 4
      %v452 = vshrl.u32 %v422, 16
      %v454 = vrot.slane %v452, 7
      %v455 = vshll.u32 %v422, 16
      %v457 = vor.u32 %v454, %v455
      %v458 = vrot.slane %v454, 4
      %v460 = vshrl.u32 %v423, 16
      %v462 = vrot.slane %v460, 7
      %v463 = vshll.u32 %v423, 16
      %v465 = vor.u32 %v462, %v463
      %v466 = vrot.slane %v462, 4
      %v468 = vshrl.u32 %v424, 16
      %v470 = vrot.slane %v468, 7
      %v471 = vshll.u32 %v424, 16
      %v473 = vor.u32 %v470, %v471
      %v474 = vrot.slane %v470, 4
      %v476 = vshrl.u32 %v425, 16
      %v478 = vrot.slane %v476, 7
      %v479 = vshll.u32 %v425, 16
      %v481 = vor.u32 %v478, %v479
      %v482 = vrot.slane %v478, 4
      %v484 = vshrl.u32 %v426, 16
      %v486 = vrot.slane %v484, 7
      %v487 = vshll.u32 %v426, 16
      %v489 = vor.u32 %v486, %v487
      %v490 = vrot.slane %v486, 4
      %s507 = scalar_lea.vmem [#allocation2], 8
      %vm508 = vcmask 1043456
      %vm509 = vsmask.f32 7938
      %vm510 = vmand %vm508, %vm509
      %v511 = vld [vmem:[%s507] sm:$0xf]
      %v512 = vsel %vm510, %v433, %v511
      %513 = vst [vmem:[%s507] sm:$0xf] %v512
      %v514 = vld [vmem:[%s507 + $0x4] sm:$0x1]
      %v515 = vsel %vm372, %v434, %v514
      %516 = vst [vmem:[%s507 + $0x4] sm:$0x1] %v515
      %v517 = vld [vmem:[%s507 + $0x8] sm:$0xf]
      %v518 = vsel %vm510, %v441, %v517
      %519 = vst [vmem:[%s507 + $0x8] sm:$0xf] %v518
      %v520 = vld [vmem:[%s507 + $0xc] sm:$0x1]
      %v521 = vsel %vm372, %v442, %v520
      %522 = vst [vmem:[%s507 + $0xc] sm:$0x1] %v521
      %v523 = vld [vmem:[%s507 + $0x10] sm:$0xf]
      %v524 = vsel %vm510, %v449, %v523
      %525 = vst [vmem:[%s507 + $0x10] sm:$0xf] %v524
      %v526 = vld [vmem:[%s507 + $0x14] sm:$0x1]
      %v527 = vsel %vm372, %v450, %v526
      %528 = vst [vmem:[%s507 + $0x14] sm:$0x1] %v527
      %v529 = vld [vmem:[%s507 + $0x18] sm:$0xf]
      %v530 = vsel %vm510, %v457, %v529
      %531 = vst [vmem:[%s507 + $0x18] sm:$0xf] %v530
      %v532 = vld [vmem:[%s507 + $0x1c] sm:$0x1]
      %v533 = vsel %vm372, %v458, %v532
      %534 = vst [vmem:[%s507 + $0x1c] sm:$0x1] %v533
      %v535 = vld [vmem:[%s507 + $0x20] sm:$0xf]
      %v536 = vsel %vm510, %v465, %v535
      %537 = vst [vmem:[%s507 + $0x20] sm:$0xf] %v536
      %v538 = vld [vmem:[%s507 + $0x24] sm:$0x1]
      %v539 = vsel %vm372, %v466, %v538
      %540 = vst [vmem:[%s507 + $0x24] sm:$0x1] %v539
      %v541 = vld [vmem:[%s507 + $0x28] sm:$0xf]
      %v542 = vsel %vm510, %v473, %v541
      %543 = vst [vmem:[%s507 + $0x28] sm:$0xf] %v542
      %v544 = vld [vmem:[%s507 + $0x2c] sm:$0x1]
      %v545 = vsel %vm372, %v474, %v544
      %546 = vst [vmem:[%s507 + $0x2c] sm:$0x1] %v545
      %v547 = vld [vmem:[%s507 + $0x30] sm:$0xf]
      %v548 = vsel %vm510, %v481, %v547
      %549 = vst [vmem:[%s507 + $0x30] sm:$0xf] %v548
      %v550 = vld [vmem:[%s507 + $0x34] sm:$0x1]
      %v551 = vsel %vm372, %v482, %v550
      %552 = vst [vmem:[%s507 + $0x34] sm:$0x1] %v551
      %v553 = vld [vmem:[%s507 + $0x38] sm:$0xf]
      %v554 = vsel %vm510, %v489, %v553
      %555 = vst [vmem:[%s507 + $0x38] sm:$0xf] %v554
      %v556 = vld [vmem:[%s507 + $0x3c] sm:$0x1]
      %v557 = vsel %vm372, %v490, %v556
      %558 = vst [vmem:[%s507 + $0x3c] sm:$0x1] %v557
      %v559 = vld [vmem:[#allocation2] sm:$0xf]
      %v560 = vld [vmem:[#allocation2 + $0x8] sm:$0xf]
      %v561 = vld [vmem:[#allocation2 + $0x10] sm:$0xf]
      %v562 = vld [vmem:[#allocation2 + $0x18] sm:$0xf]
      %v563 = vld [vmem:[#allocation2 + $0x20] sm:$0xf]
      %v564 = vld [vmem:[#allocation2 + $0x28] sm:$0xf]
      %v565 = vld [vmem:[#allocation2 + $0x30] sm:$0xf]
      %v566 = vld [vmem:[#allocation2 + $0x38] sm:$0xf]
      %v567 = vld [vmem:[%s3] sm:$0xf]
      %v568 = vld [vmem:[%s3 + $0x4] sm:$0xf]
      %v569 = vld [vmem:[%s3 + $0x8] sm:$0xf]
      %v570 = vld [vmem:[%s3 + $0xc] sm:$0xf]
      %v571 = vld [vmem:[%s3 + $0x10] sm:$0xf]
      %v572 = vld [vmem:[%s3 + $0x14] sm:$0xf]
      %v573 = vld [vmem:[%s3 + $0x18] sm:$0xf]
      %v574 = vld [vmem:[%s3 + $0x1c] sm:$0xf]
      %v575 = vld [vmem:[%s3 + $0x20] sm:$0xf]
      %v576 = vld [vmem:[%s3 + $0x24] sm:$0xf]
      %v577 = vld [vmem:[%s3 + $0x28] sm:$0xf]
      %v578 = vld [vmem:[%s3 + $0x2c] sm:$0xf]
      %v579 = vld [vmem:[%s3 + $0x30] sm:$0xf]
      %v580 = vld [vmem:[%s3 + $0x34] sm:$0xf]
      %v581 = vld [vmem:[%s3 + $0x38] sm:$0xf]
      %v582 = vld [vmem:[%s3 + $0x3c] sm:$0xf]
      %v591 = vunpack.c.l.b16 %v559
      %v592 = vunpack.c.l.b16 %v560
      %v593 = vunpack.c.l.b16 %v561
      %v594 = vunpack.c.l.b16 %v562
      %v595 = vunpack.c.l.b16 %v563
      %v596 = vunpack.c.l.b16 %v564
      %v597 = vunpack.c.l.b16 %v565
      %v598 = vunpack.c.l.b16 %v566
      %v599 = vpack.c.b16 %v592, %v591
      %v600 = vpack.c.b16 %v594, %v593
      %v601 = vpack.c.b16 %v596, %v595
      %v602 = vpack.c.b16 %v598, %v597
      %v623 = vunpack.c.l.b16 %v567
      %v624 = vunpack.c.l.b16 %v568
      %v625 = vunpack.c.l.b16 %v569
      %v626 = vunpack.c.l.b16 %v570
      %v627 = vunpack.c.l.b16 %v571
      %v628 = vunpack.c.l.b16 %v572
      %v629 = vunpack.c.l.b16 %v573
      %v630 = vunpack.c.l.b16 %v574
      %v631 = vunpack.c.l.b16 %v575
      %v632 = vunpack.c.l.b16 %v576
      %v633 = vunpack.c.l.b16 %v577
      %v634 = vunpack.c.l.b16 %v578
      %v635 = vunpack.c.l.b16 %v579
      %v636 = vunpack.c.l.b16 %v580
      %v637 = vunpack.c.l.b16 %v581
      %v638 = vunpack.c.l.b16 %v582
      %v639 = vpack.c.b16 %v624, %v623
      %v640 = vpack.c.b16 %v626, %v625
      %v641 = vpack.c.b16 %v628, %v627
      %v642 = vpack.c.b16 %v630, %v629
      %v643 = vpack.c.b16 %v632, %v631
      %v644 = vpack.c.b16 %v634, %v633
      %v645 = vpack.c.b16 %v636, %v635
      %v646 = vpack.c.b16 %v638, %v637
      %655 = vmatprep.subr.bf16.mxu0 0
      %656 = vmatpush1.bf16.msra.mxu0 %v639
      %657 = vmatprep.subr.bf16.mxu0 0
      %658 = vmatpush1.bf16.msra.mxu0 %v640
      %659 = vmatprep.subr.bf16.mxu0 0
      %660 = vmatpush1.bf16.msra.mxu0 %v641
      %661 = vmatprep.subr.bf16.mxu0 0
      %662 = vmatpush1.bf16.msra.mxu0 %v642
      %663 = vmatprep.subr.bf16.mxu0 0
      %664 = vmatpush1.bf16.msra.mxu0 %v643
      %665 = vmatprep.subr.bf16.mxu0 0
      %666 = vmatpush1.bf16.msra.mxu0 %v644
      %667 = vmatprep.subr.bf16.mxu0 0
      %668 = vmatpush1.bf16.msra.mxu0 %v645
      %669 = vmatprep.subr.bf16.mxu0 0
      %670 = vmatpush1.bf16.msra.mxu0 %v646
      %671 = vmatprep.subr.bf16.mxu0 0
      %672 = vmatpush1.bf16.msra.mxu0 0
      %673 = vmatprep.subr.bf16.mxu0 0
      %674 = vmatpush1.bf16.msra.mxu0 0
      %675 = vmatprep.subr.bf16.mxu0 0
      %676 = vmatpush1.bf16.msra.mxu0 0
      %677 = vmatprep.subr.bf16.mxu0 0
      %678 = vmatpush1.bf16.msra.mxu0 0
      %679 = vmatprep.subr.bf16.mxu0 0
      %680 = vmatpush1.bf16.msra.mxu0 0
      %681 = vmatprep.subr.bf16.mxu0 0
      %682 = vmatpush1.bf16.msra.mxu0 0
      %683 = vmatprep.subr.bf16.mxu0 0
      %684 = vmatpush1.bf16.msra.mxu0 0
      %685 = vmatprep.subr.bf16.mxu0 0
      %686 = vmatpush1.bf16.msra.mxu0 0
      %687 = vmatprep.mubr.bf16.mxu0 0
      %688 = vmatmul.mubr.bf16.gmra.mrb[0].mxu0 %v599
      %v689 = vpop.f32.mrb[0].mxu0
      %v690 = vadd.f32 0.0, %v689
      %v691 = vpop.f32.mrb[0].mxu0
      %v692 = vpop.f32.mrb[0].mxu0
      %v693 = vadd.f32 0.0, %v692
      %v694 = vpop.f32.mrb[0].mxu0
      %695 = vmatprep.mubr.bf16.mxu0 0
      %696 = vmatmul.mubr.bf16.gmra.mrb[0].mxu0 %v600
      %v697 = vpop.f32.mrb[0].mxu0
      %v698 = vadd.f32 0.0, %v697
      %v699 = vpop.f32.mrb[0].mxu0
      %v700 = vpop.f32.mrb[0].mxu0
      %v701 = vadd.f32 0.0, %v700
      %v702 = vpop.f32.mrb[0].mxu0
      %703 = vmatprep.mubr.bf16.mxu0 0
      %704 = vmatmul.mubr.bf16.gmra.mrb[0].mxu0 %v601
      %v705 = vpop.f32.mrb[0].mxu0
      %v706 = vadd.f32 0.0, %v705
      %v707 = vpop.f32.mrb[0].mxu0
      %v708 = vpop.f32.mrb[0].mxu0
      %v709 = vadd.f32 0.0, %v708
      %v710 = vpop.f32.mrb[0].mxu0
      %711 = vmatprep.mubr.bf16.mxu0 0
      %712 = vmatmul.mubr.bf16.gmra.mrb[0].mxu0 %v602
      %v713 = vpop.f32.mrb[0].mxu0
      %v714 = vadd.f32 0.0, %v713
      %v715 = vpop.f32.mrb[0].mxu0
      %v716 = vpop.f32.mrb[0].mxu0
      %v717 = vadd.f32 0.0, %v716
      %v718 = vpop.f32.mrb[0].mxu0
      %719 = vdwg.mxu0
      %720 = vst [vmem:[#allocation4] sm:$0xff] %v690
      %721 = vst [vmem:[#allocation4 + $0x8] sm:$0xff] %v693
      %722 = vst [vmem:[#allocation4 + $0x10] sm:$0xff] %v698
      %723 = vst [vmem:[#allocation4 + $0x18] sm:$0xff] %v701
      %724 = vst [vmem:[#allocation4 + $0x20] sm:$0xff] %v706
      %725 = vst [vmem:[#allocation4 + $0x28] sm:$0xff] %v709
      %726 = vst [vmem:[#allocation4 + $0x30] sm:$0xff] %v714
      %727 = vst [vmem:[#allocation4 + $0x38] sm:$0xff] %v717
      %v728 = vld [vmem:[#allocation2] sm:$0xf]
      %v729 = vld [vmem:[#allocation2 + $0x4] sm:$0x1]
      %v730 = vld [vmem:[#allocation2 + $0x8] sm:$0xf]
      %v731 = vld [vmem:[#allocation2 + $0xc] sm:$0x1]
      %v732 = vld [vmem:[#allocation2 + $0x10] sm:$0xf]
      %v733 = vld [vmem:[#allocation2 + $0x14] sm:$0x1]
      %v734 = vld [vmem:[#allocation2 + $0x18] sm:$0xf]
      %v735 = vld [vmem:[#allocation2 + $0x1c] sm:$0x1]
      %v736 = vld [vmem:[#allocation2 + $0x20] sm:$0xf]
      %v737 = vld [vmem:[#allocation2 + $0x24] sm:$0x1]
      %v738 = vld [vmem:[#allocation2 + $0x28] sm:$0xf]
      %v739 = vld [vmem:[#allocation2 + $0x2c] sm:$0x1]
      %v740 = vld [vmem:[#allocation2 + $0x30] sm:$0xf]
      %v741 = vld [vmem:[#allocation2 + $0x34] sm:$0x1]
      %v742 = vld [vmem:[#allocation2 + $0x38] sm:$0xf]
      %v743 = vld [vmem:[#allocation2 + $0x3c] sm:$0x1]
      %vm744 = vsmask.f32 3328
      %vm745 = vsmask.f32 7440
      %vm746 = vmor %vm744, %vm745
      %v748 = vshrl.u32 %v728, 16
      %v750 = vrot.slane %v748, 4
      %v751 = vshll.u32 %v728, 16
      %v753 = vrot.slane %v751, 5
      %v754 = vor.u32 %v750, %v753
      %v755 = vrot.slane %v754, 4
      %v757 = vshll.u32 %v729, 16
      %v759 = vrot.slane %v757, 5
      %v760 = vsel %vm746, %v755, %v759
      %v762 = vshrl.u32 %v730, 16
      %v764 = vrot.slane %v762, 4
      %v765 = vshll.u32 %v730, 16
      %v767 = vrot.slane %v765, 5
      %v768 = vor.u32 %v764, %v767
      %v769 = vrot.slane %v768, 4
      %v771 = vshll.u32 %v731, 16
      %v773 = vrot.slane %v771, 5
      %v774 = vsel %vm746, %v769, %v773
      %v776 = vshrl.u32 %v732, 16
      %v778 = vrot.slane %v776, 4
      %v779 = vshll.u32 %v732, 16
      %v781 = vrot.slane %v779, 5
      %v782 = vor.u32 %v778, %v781
      %v783 = vrot.slane %v782, 4
      %v785 = vshll.u32 %v733, 16
      %v787 = vrot.slane %v785, 5
      %v788 = vsel %vm746, %v783, %v787
      %v790 = vshrl.u32 %v734, 16
      %v792 = vrot.slane %v790, 4
      %v793 = vshll.u32 %v734, 16
      %v795 = vrot.slane %v793, 5
      %v796 = vor.u32 %v792, %v795
      %v797 = vrot.slane %v796, 4
      %v799 = vshll.u32 %v735, 16
      %v801 = vrot.slane %v799, 5
      %v802 = vsel %vm746, %v797, %v801
      %v804 = vshrl.u32 %v736, 16
      %v806 = vrot.slane %v804, 4
      %v807 = vshll.u32 %v736, 16
      %v809 = vrot.slane %v807, 5
      %v810 = vor.u32 %v806, %v809
      %v811 = vrot.slane %v810, 4
      %v813 = vshll.u32 %v737, 16
      %v815 = vrot.slane %v813, 5
      %v816 = vsel %vm746, %v811, %v815
      %v818 = vshrl.u32 %v738, 16
      %v820 = vrot.slane %v818, 4
      %v821 = vshll.u32 %v738, 16
      %v823 = vrot.slane %v821, 5
      %v824 = vor.u32 %v820, %v823
      %v825 = vrot.slane %v824, 4
      %v827 = vshll.u32 %v739, 16
      %v829 = vrot.slane %v827, 5
      %v830 = vsel %vm746, %v825, %v829
      %v832 = vshrl.u32 %v740, 16
      %v834 = vrot.slane %v832, 4
      %v835 = vshll.u32 %v740, 16
      %v837 = vrot.slane %v835, 5
      %v838 = vor.u32 %v834, %v837
      %v839 = vrot.slane %v838, 4
      %v841 = vshll.u32 %v741, 16
      %v843 = vrot.slane %v841, 5
      %v844 = vsel %vm746, %v839, %v843
      %v846 = vshrl.u32 %v742, 16
      %v848 = vrot.slane %v846, 4
      %v849 = vshll.u32 %v742, 16
      %v851 = vrot.slane %v849, 5
      %v852 = vor.u32 %v848, %v851
      %v853 = vrot.slane %v852, 4
      %v855 = vshll.u32 %v743, 16
      %v857 = vrot.slane %v855, 5
      %v858 = vsel %vm746, %v853, %v857
      %s859 = scalar_lea.vmem %s3, 64
      %v860 = vld [vmem:[%s859] sm:$0xf]
      %v861 = vld [vmem:[%s859 + $0x4] sm:$0xf]
      %v862 = vld [vmem:[%s859 + $0x8] sm:$0xf]
      %v863 = vld [vmem:[%s859 + $0xc] sm:$0xf]
      %v864 = vld [vmem:[%s859 + $0x10] sm:$0xf]
      %v865 = vld [vmem:[%s859 + $0x14] sm:$0xf]
      %v866 = vld [vmem:[%s859 + $0x18] sm:$0xf]
      %v867 = vld [vmem:[%s859 + $0x1c] sm:$0xf]
      %v868 = vld [vmem:[%s859 + $0x20] sm:$0xf]
      %v869 = vld [vmem:[%s859 + $0x24] sm:$0xf]
      %v870 = vld [vmem:[%s859 + $0x28] sm:$0xf]
      %v871 = vld [vmem:[%s859 + $0x2c] sm:$0xf]
      %v872 = vld [vmem:[%s859 + $0x30] sm:$0xf]
      %v873 = vld [vmem:[%s859 + $0x34] sm:$0xf]
      %v874 = vld [vmem:[%s859 + $0x38] sm:$0xf]
      %v875 = vld [vmem:[%s859 + $0x3c] sm:$0xf]
      %v876 = vunpack.c.l.b16 %v760
      %v877 = vunpack.c.l.b16 %v774
      %v878 = vunpack.c.l.b16 %v788
      %v879 = vunpack.c.l.b16 %v802
      %v880 = vunpack.c.l.b16 %v816
      %v881 = vunpack.c.l.b16 %v830
      %v882 = vunpack.c.l.b16 %v844
      %v883 = vunpack.c.l.b16 %v858
      %v884 = vpack.c.b16 %v877, %v876
      %v885 = vpack.c.b16 %v879, %v878
      %v886 = vpack.c.b16 %v881, %v880
      %v887 = vpack.c.b16 %v883, %v882
      %v908 = vunpack.c.l.b16 %v860
      %v909 = vunpack.c.l.b16 %v861
      %v910 = vunpack.c.l.b16 %v862
      %v911 = vunpack.c.l.b16 %v863
      %v912 = vunpack.c.l.b16 %v864
      %v913 = vunpack.c.l.b16 %v865
      %v914 = vunpack.c.l.b16 %v866
      %v915 = vunpack.c.l.b16 %v867
      %v916 = vunpack.c.l.b16 %v868
      %v917 = vunpack.c.l.b16 %v869
      %v918 = vunpack.c.l.b16 %v870
      %v919 = vunpack.c.l.b16 %v871
      %v920 = vunpack.c.l.b16 %v872
      %v921 = vunpack.c.l.b16 %v873
      %v922 = vunpack.c.l.b16 %v874
      %v923 = vunpack.c.l.b16 %v875
      %v924 = vpack.c.b16 %v909, %v908
      %v925 = vpack.c.b16 %v911, %v910
      %v926 = vpack.c.b16 %v913, %v912
      %v927 = vpack.c.b16 %v915, %v914
      %v928 = vpack.c.b16 %v917, %v916
      %v929 = vpack.c.b16 %v919, %v918
      %v930 = vpack.c.b16 %v921, %v920
      %v931 = vpack.c.b16 %v923, %v922
      %940 = vmatprep.subr.bf16.mxu0 0
      %941 = vmatpush1.bf16.msra.mxu0 %v924
      %942 = vmatprep.subr.bf16.mxu0 0
      %943 = vmatpush1.bf16.msra.mxu0 %v925
      %944 = vmatprep.subr.bf16.mxu0 0
      %945 = vmatpush1.bf16.msra.mxu0 %v926
      %946 = vmatprep.subr.bf16.mxu0 0
      %947 = vmatpush1.bf16.msra.mxu0 %v927
      %948 = vmatprep.subr.bf16.mxu0 0
      %949 = vmatpush1.bf16.msra.mxu0 %v928
      %950 = vmatprep.subr.bf16.mxu0 0
      %951 = vmatpush1.bf16.msra.mxu0 %v929
      %952 = vmatprep.subr.bf16.mxu0 0
      %953 = vmatpush1.bf16.msra.mxu0 %v930
      %954 = vmatprep.subr.bf16.mxu0 0
      %955 = vmatpush1.bf16.msra.mxu0 %v931
      %956 = vmatprep.subr.bf16.mxu0 0
      %957 = vmatpush1.bf16.msra.mxu0 0
      %958 = vmatprep.subr.bf16.mxu0 0
      %959 = vmatpush1.bf16.msra.mxu0 0
      %960 = vmatprep.subr.bf16.mxu0 0
      %961 = vmatpush1.bf16.msra.mxu0 0
      %962 = vmatprep.subr.bf16.mxu0 0
      %963 = vmatpush1.bf16.msra.mxu0 0
      %964 = vmatprep.subr.bf16.mxu0 0
      %965 = vmatpush1.bf16.msra.mxu0 0
      %966 = vmatprep.subr.bf16.mxu0 0
      %967 = vmatpush1.bf16.msra.mxu0 0
      %968 = vmatprep.subr.bf16.mxu0 0
      %969 = vmatpush1.bf16.msra.mxu0 0
      %970 = vmatprep.subr.bf16.mxu0 0
      %971 = vmatpush1.bf16.msra.mxu0 0
      %972 = vmatprep.mubr.bf16.mxu0 0
      %973 = vmatmul.mubr.bf16.gmra.mrb[0].mxu0 %v884
      %v974 = vpop.f32.mrb[0].mxu0
      %v975 = vadd.f32 0.0, %v974
      %v976 = vpop.f32.mrb[0].mxu0
      %v977 = vpop.f32.mrb[0].mxu0
      %v978 = vadd.f32 0.0, %v977
      %v979 = vpop.f32.mrb[0].mxu0
      %980 = vmatprep.mubr.bf16.mxu0 0
      %981 = vmatmul.mubr.bf16.gmra.mrb[0].mxu0 %v885
      %v982 = vpop.f32.mrb[0].mxu0
      %v983 = vadd.f32 0.0, %v982
      %v984 = vpop.f32.mrb[0].mxu0
      %v985 = vpop.f32.mrb[0].mxu0
      %v986 = vadd.f32 0.0, %v985
      %v987 = vpop.f32.mrb[0].mxu0
      %988 = vmatprep.mubr.bf16.mxu0 0
      %989 = vmatmul.mubr.bf16.gmra.mrb[0].mxu0 %v886
      %v990 = vpop.f32.mrb[0].mxu0
      %v991 = vadd.f32 0.0, %v990
      %v992 = vpop.f32.mrb[0].mxu0
      %v993 = vpop.f32.mrb[0].mxu0
      %v994 = vadd.f32 0.0, %v993
      %v995 = vpop.f32.mrb[0].mxu0
      %996 = vmatprep.mubr.bf16.mxu0 0
      %997 = vmatmul.mubr.bf16.gmra.mrb[0].mxu0 %v887
      %v998 = vpop.f32.mrb[0].mxu0
      %v999 = vadd.f32 0.0, %v998
      %v1000 = vpop.f32.mrb[0].mxu0
      %v1001 = vpop.f32.mrb[0].mxu0
      %v1002 = vadd.f32 0.0, %v1001
      %v1003 = vpop.f32.mrb[0].mxu0
      %1004 = vdwg.mxu0
      %v1005 = vld [vmem:[#allocation4] sm:$0xff]
      %v1006 = vld [vmem:[#allocation4 + $0x8] sm:$0xff]
      %v1007 = vld [vmem:[#allocation4 + $0x10] sm:$0xff]
      %v1008 = vld [vmem:[#allocation4 + $0x18] sm:$0xff]
      %v1009 = vld [vmem:[#allocation4 + $0x20] sm:$0xff]
      %v1010 = vld [vmem:[#allocation4 + $0x28] sm:$0xff]
      %v1011 = vld [vmem:[#allocation4 + $0x30] sm:$0xff]
      %v1012 = vld [vmem:[#allocation4 + $0x38] sm:$0xff]
      %v1013 = vadd.f32 %v1005, %v975
      %v1014 = vadd.f32 %v1006, %v978
      %v1015 = vadd.f32 %v1007, %v983
      %v1016 = vadd.f32 %v1008, %v986
      %v1017 = vadd.f32 %v1009, %v991
      %v1018 = vadd.f32 %v1010, %v994
      %v1019 = vadd.f32 %v1011, %v999
      %v1020 = vadd.f32 %v1012, %v1002
      %1021 = vst [vmem:[#allocation4] sm:$0xff] %v1013
      %1022 = vst [vmem:[#allocation4 + $0x8] sm:$0xff] %v1014
      %1023 = vst [vmem:[#allocation4 + $0x10] sm:$0xff] %v1015
      %1024 = vst [vmem:[#allocation4 + $0x18] sm:$0xff] %v1016
      %1025 = vst [vmem:[#allocation4 + $0x20] sm:$0xff] %v1017
      %1026 = vst [vmem:[#allocation4 + $0x28] sm:$0xff] %v1018
      %1027 = vst [vmem:[#allocation4 + $0x30] sm:$0xff] %v1019
      %1028 = vst [vmem:[#allocation4 + $0x38] sm:$0xff] %v1020
      %v1029 = vld [vmem:[%s507] sm:$0xf]
      %v1030 = vld [vmem:[%s507 + $0x8] sm:$0xf]
      %v1031 = vld [vmem:[%s507 + $0x10] sm:$0xf]
      %v1032 = vld [vmem:[%s507 + $0x18] sm:$0xf]
      %v1033 = vld [vmem:[%s507 + $0x20] sm:$0xf]
      %v1034 = vld [vmem:[%s507 + $0x28] sm:$0xf]
      %v1035 = vld [vmem:[%s507 + $0x30] sm:$0xf]
      %v1036 = vld [vmem:[%s507 + $0x38] sm:$0xf]
      %s1037 = scalar_lea.vmem %s3, 128
      %v1038 = vld [vmem:[%s1037] sm:$0xf]
      %v1039 = vld [vmem:[%s1037 + $0x4] sm:$0xf]
      %v1040 = vld [vmem:[%s1037 + $0x8] sm:$0xf]
      %v1041 = vld [vmem:[%s1037 + $0xc] sm:$0xf]
      %v1042 = vld [vmem:[%s1037 + $0x10] sm:$0xf]
      %v1043 = vld [vmem:[%s1037 + $0x14] sm:$0xf]
      %v1044 = vld [vmem:[%s1037 + $0x18] sm:$0xf]
      %v1045 = vld [vmem:[%s1037 + $0x1c] sm:$0xf]
      %v1046 = vld [vmem:[%s1037 + $0x20] sm:$0xf]
      %v1047 = vld [vmem:[%s1037 + $0x24] sm:$0xf]
      %v1048 = vld [vmem:[%s1037 + $0x28] sm:$0xf]
      %v1049 = vld [vmem:[%s1037 + $0x2c] sm:$0xf]
      %v1050 = vld [vmem:[%s1037 + $0x30] sm:$0xf]
      %v1051 = vld [vmem:[%s1037 + $0x34] sm:$0xf]
      %v1052 = vld [vmem:[%s1037 + $0x38] sm:$0xf]
      %v1053 = vld [vmem:[%s1037 + $0x3c] sm:$0xf]
      %v1062 = vunpack.c.l.b16 %v1029
      %v1063 = vunpack.c.l.b16 %v1030
      %v1064 = vunpack.c.l.b16 %v1031
      %v1065 = vunpack.c.l.b16 %v1032
      %v1066 = vunpack.c.l.b16 %v1033
      %v1067 = vunpack.c.l.b16 %v1034
      %v1068 = vunpack.c.l.b16 %v1035
      %v1069 = vunpack.c.l.b16 %v1036
      %v1070 = vpack.c.b16 %v1063, %v1062
      %v1071 = vpack.c.b16 %v1065, %v1064
      %v1072 = vpack.c.b16 %v1067, %v1066
      %v1073 = vpack.c.b16 %v1069, %v1068
      %v1094 = vunpack.c.l.b16 %v1038
      %v1095 = vunpack.c.l.b16 %v1039
      %v1096 = vunpack.c.l.b16 %v1040
      %v1097 = vunpack.c.l.b16 %v1041
      %v1098 = vunpack.c.l.b16 %v1042
      %v1099 = vunpack.c.l.b16 %v1043
      %v1100 = vunpack.c.l.b16 %v1044
      %v1101 = vunpack.c.l.b16 %v1045
      %v1102 = vunpack.c.l.b16 %v1046
      %v1103 = vunpack.c.l.b16 %v1047
      %v1104 = vunpack.c.l.b16 %v1048
      %v1105 = vunpack.c.l.b16 %v1049
      %v1106 = vunpack.c.l.b16 %v1050
      %v1107 = vunpack.c.l.b16 %v1051
      %v1108 = vunpack.c.l.b16 %v1052
      %v1109 = vunpack.c.l.b16 %v1053
      %v1110 = vpack.c.b16 %v1095, %v1094
      %v1111 = vpack.c.b16 %v1097, %v1096
      %v1112 = vpack.c.b16 %v1099, %v1098
      %v1113 = vpack.c.b16 %v1101, %v1100
      %v1114 = vpack.c.b16 %v1103, %v1102
      %v1115 = vpack.c.b16 %v1105, %v1104
      %v1116 = vpack.c.b16 %v1107, %v1106
      %v1117 = vpack.c.b16 %v1109, %v1108
      %1126 = vmatprep.subr.bf16.mxu0 0
      %1127 = vmatpush1.bf16.msra.mxu0 %v1110
      %1128 = vmatprep.subr.bf16.mxu0 0
      %1129 = vmatpush1.bf16.msra.mxu0 %v1111
      %1130 = vmatprep.subr.bf16.mxu0 0
      %1131 = vmatpush1.bf16.msra.mxu0 %v1112
      %1132 = vmatprep.subr.bf16.mxu0 0
      %1133 = vmatpush1.bf16.msra.mxu0 %v1113
      %1134 = vmatprep.subr.bf16.mxu0 0
      %1135 = vmatpush1.bf16.msra.mxu0 %v1114
      %1136 = vmatprep.subr.bf16.mxu0 0
      %1137 = vmatpush1.bf16.msra.mxu0 %v1115
      %1138 = vmatprep.subr.bf16.mxu0 0
      %1139 = vmatpush1.bf16.msra.mxu0 %v1116
      %1140 = vmatprep.subr.bf16.mxu0 0
      %1141 = vmatpush1.bf16.msra.mxu0 %v1117
      %1142 = vmatprep.subr.bf16.mxu0 0
      %1143 = vmatpush1.bf16.msra.mxu0 0
      %1144 = vmatprep.subr.bf16.mxu0 0
      %1145 = vmatpush1.bf16.msra.mxu0 0
      %1146 = vmatprep.subr.bf16.mxu0 0
      %1147 = vmatpush1.bf16.msra.mxu0 0
      %1148 = vmatprep.subr.bf16.mxu0 0
      %1149 = vmatpush1.bf16.msra.mxu0 0
      %1150 = vmatprep.subr.bf16.mxu0 0
      %1151 = vmatpush1.bf16.msra.mxu0 0
      %1152 = vmatprep.subr.bf16.mxu0 0
      %1153 = vmatpush1.bf16.msra.mxu0 0
      %1154 = vmatprep.subr.bf16.mxu0 0
      %1155 = vmatpush1.bf16.msra.mxu0 0
      %1156 = vmatprep.subr.bf16.mxu0 0
      %1157 = vmatpush1.bf16.msra.mxu0 0
      %1158 = vmatprep.mubr.bf16.mxu0 0
      %1159 = vmatmul.mubr.bf16.gmra.mrb[0].mxu0 %v1070
      %v1160 = vpop.f32.mrb[0].mxu0
      %v1161 = vadd.f32 0.0, %v1160
      %v1162 = vpop.f32.mrb[0].mxu0
      %v1163 = vpop.f32.mrb[0].mxu0
      %v1164 = vadd.f32 0.0, %v1163
      %v1165 = vpop.f32.mrb[0].mxu0
      %1166 = vmatprep.mubr.bf16.mxu0 0
      %1167 = vmatmul.mubr.bf16.gmra.mrb[0].mxu0 %v1071
      %v1168 = vpop.f32.mrb[0].mxu0
      %v1169 = vadd.f32 0.0, %v1168
      %v1170 = vpop.f32.mrb[0].mxu0
      %v1171 = vpop.f32.mrb[0].mxu0
      %v1172 = vadd.f32 0.0, %v1171
      %v1173 = vpop.f32.mrb[0].mxu0
      %1174 = vmatprep.mubr.bf16.mxu0 0
      %1175 = vmatmul.mubr.bf16.gmra.mrb[0].mxu0 %v1072
      %v1176 = vpop.f32.mrb[0].mxu0
      %v1177 = vadd.f32 0.0, %v1176
      %v1178 = vpop.f32.mrb[0].mxu0
      %v1179 = vpop.f32.mrb[0].mxu0
      %v1180 = vadd.f32 0.0, %v1179
      %v1181 = vpop.f32.mrb[0].mxu0
      %1182 = vmatprep.mubr.bf16.mxu0 0
      %1183 = vmatmul.mubr.bf16.gmra.mrb[0].mxu0 %v1073
      %v1184 = vpop.f32.mrb[0].mxu0
      %v1185 = vadd.f32 0.0, %v1184
      %v1186 = vpop.f32.mrb[0].mxu0
      %v1187 = vpop.f32.mrb[0].mxu0
      %v1188 = vadd.f32 0.0, %v1187
      %v1189 = vpop.f32.mrb[0].mxu0
      %1190 = vdwg.mxu0
      %v1191 = vld [vmem:[#allocation4] sm:$0xff]
      %v1192 = vld [vmem:[#allocation4 + $0x8] sm:$0xff]
      %v1193 = vld [vmem:[#allocation4 + $0x10] sm:$0xff]
      %v1194 = vld [vmem:[#allocation4 + $0x18] sm:$0xff]
      %v1195 = vld [vmem:[#allocation4 + $0x20] sm:$0xff]
      %v1196 = vld [vmem:[#allocation4 + $0x28] sm:$0xff]
      %v1197 = vld [vmem:[#allocation4 + $0x30] sm:$0xff]
      %v1198 = vld [vmem:[#allocation4 + $0x38] sm:$0xff]
      %v1199 = vadd.f32 %v1191, %v1161
      %v1200 = vadd.f32 %v1192, %v1164
      %v1201 = vadd.f32 %v1193, %v1169
      %v1202 = vadd.f32 %v1194, %v1172
      %v1203 = vadd.f32 %v1195, %v1177
      %v1204 = vadd.f32 %v1196, %v1180
      %v1205 = vadd.f32 %v1197, %v1185
      %v1206 = vadd.f32 %v1198, %v1188
      %1207 = vst [vmem:[#allocation4] sm:$0xff] %v1199
      %1208 = vst [vmem:[#allocation4 + $0x8] sm:$0xff] %v1200
      %1209 = vst [vmem:[#allocation4 + $0x10] sm:$0xff] %v1201
      %1210 = vst [vmem:[#allocation4 + $0x18] sm:$0xff] %v1202
      %1211 = vst [vmem:[#allocation4 + $0x20] sm:$0xff] %v1203
      %1212 = vst [vmem:[#allocation4 + $0x28] sm:$0xff] %v1204
      %1213 = vst [vmem:[#allocation4 + $0x30] sm:$0xff] %v1205
      %1214 = vst [vmem:[#allocation4 + $0x38] sm:$0xff] %v1206
      %v1215 = vld [vmem:[%s507] sm:$0xf]
      %v1216 = vld [vmem:[%s507 + $0x4] sm:$0x1]
      %v1217 = vld [vmem:[%s507 + $0x8] sm:$0xf]
      %v1218 = vld [vmem:[%s507 + $0xc] sm:$0x1]
      %v1219 = vld [vmem:[%s507 + $0x10] sm:$0xf]
      %v1220 = vld [vmem:[%s507 + $0x14] sm:$0x1]
      %v1221 = vld [vmem:[%s507 + $0x18] sm:$0xf]
      %v1222 = vld [vmem:[%s507 + $0x1c] sm:$0x1]
      %v1223 = vld [vmem:[%s507 + $0x20] sm:$0xf]
      %v1224 = vld [vmem:[%s507 + $0x24] sm:$0x1]
      %v1225 = vld [vmem:[%s507 + $0x28] sm:$0xf]
      %v1226 = vld [vmem:[%s507 + $0x2c] sm:$0x1]
      %v1227 = vld [vmem:[%s507 + $0x30] sm:$0xf]
      %v1228 = vld [vmem:[%s507 + $0x34] sm:$0x1]
      %v1229 = vld [vmem:[%s507 + $0x38] sm:$0xf]
      %v1230 = vld [vmem:[%s507 + $0x3c] sm:$0x1]
      %v1232 = vshrl.u32 %v1215, 16
      %v1234 = vrot.slane %v1232, 4
      %v1235 = vshll.u32 %v1215, 16
      %v1237 = vrot.slane %v1235, 5
      %v1238 = vor.u32 %v1234, %v1237
      %v1239 = vrot.slane %v1238, 4
      %v1241 = vshll.u32 %v1216, 16
      %v1243 = vrot.slane %v1241, 5
      %v1244 = vsel %vm746, %v1239, %v1243
      %v1246 = vshrl.u32 %v1217, 16
      %v1248 = vrot.slane %v1246, 4
      %v1249 = vshll.u32 %v1217, 16
      %v1251 = vrot.slane %v1249, 5
      %v1252 = vor.u32 %v1248, %v1251
      %v1253 = vrot.slane %v1252, 4
      %v1255 = vshll.u32 %v1218, 16
      %v1257 = vrot.slane %v1255, 5
      %v1258 = vsel %vm746, %v1253, %v1257
      %v1260 = vshrl.u32 %v1219, 16
      %v1262 = vrot.slane %v1260, 4
      %v1263 = vshll.u32 %v1219, 16
      %v1265 = vrot.slane %v1263, 5
      %v1266 = vor.u32 %v1262, %v1265
      %v1267 = vrot.slane %v1266, 4
      %v1269 = vshll.u32 %v1220, 16
      %v1271 = vrot.slane %v1269, 5
      %v1272 = vsel %vm746, %v1267, %v1271
      %v1274 = vshrl.u32 %v1221, 16
      %v1276 = vrot.slane %v1274, 4
      %v1277 = vshll.u32 %v1221, 16
      %v1279 = vrot.slane %v1277, 5
      %v1280 = vor.u32 %v1276, %v1279
      %v1281 = vrot.slane %v1280, 4
      %v1283 = vshll.u32 %v1222, 16
      %v1285 = vrot.slane %v1283, 5
      %v1286 = vsel %vm746, %v1281, %v1285
      %v1288 = vshrl.u32 %v1223, 16
      %v1290 = vrot.slane %v1288, 4
      %v1291 = vshll.u32 %v1223, 16
      %v1293 = vrot.slane %v1291, 5
      %v1294 = vor.u32 %v1290, %v1293
      %v1295 = vrot.slane %v1294, 4
      %v1297 = vshll.u32 %v1224, 16
      %v1299 = vrot.slane %v1297, 5
      %v1300 = vsel %vm746, %v1295, %v1299
      %v1302 = vshrl.u32 %v1225, 16
      %v1304 = vrot.slane %v1302, 4
      %v1305 = vshll.u32 %v1225, 16
      %v1307 = vrot.slane %v1305, 5
      %v1308 = vor.u32 %v1304, %v1307
      %v1309 = vrot.slane %v1308, 4
      %v1311 = vshll.u32 %v1226, 16
      %v1313 = vrot.slane %v1311, 5
      %v1314 = vsel %vm746, %v1309, %v1313
      %v1316 = vshrl.u32 %v1227, 16
      %v1318 = vrot.slane %v1316, 4
      %v1319 = vshll.u32 %v1227, 16
      %v1321 = vrot.slane %v1319, 5
      %v1322 = vor.u32 %v1318, %v1321
      %v1323 = vrot.slane %v1322, 4
      %v1325 = vshll.u32 %v1228, 16
      %v1327 = vrot.slane %v1325, 5
      %v1328 = vsel %vm746, %v1323, %v1327
      %v1330 = vshrl.u32 %v1229, 16
      %v1332 = vrot.slane %v1330, 4
      %v1333 = vshll.u32 %v1229, 16
      %v1335 = vrot.slane %v1333, 5
      %v1336 = vor.u32 %v1332, %v1335
      %v1337 = vrot.slane %v1336, 4
      %v1339 = vshll.u32 %v1230, 16
      %v1341 = vrot.slane %v1339, 5
      %v1342 = vsel %vm746, %v1337, %v1341
      %s1343 = scalar_lea.vmem %s3, 192
      %v1344 = vld [vmem:[%s1343] sm:$0xf]
      %v1345 = vld [vmem:[%s1343 + $0x4] sm:$0xf]
      %v1346 = vld [vmem:[%s1343 + $0x8] sm:$0xf]
      %v1347 = vld [vmem:[%s1343 + $0xc] sm:$0xf]
      %v1348 = vld [vmem:[%s1343 + $0x10] sm:$0xf]
      %v1349 = vld [vmem:[%s1343 + $0x14] sm:$0xf]
      %v1350 = vld [vmem:[%s1343 + $0x18] sm:$0xf]
      %v1351 = vld [vmem:[%s1343 + $0x1c] sm:$0xf]
      %v1352 = vld [vmem:[%s1343 + $0x20] sm:$0xf]
      %v1353 = vld [vmem:[%s1343 + $0x24] sm:$0xf]
      %v1354 = vld [vmem:[%s1343 + $0x28] sm:$0xf]
      %v1355 = vld [vmem:[%s1343 + $0x2c] sm:$0xf]
      %v1356 = vld [vmem:[%s1343 + $0x30] sm:$0xf]
      %v1357 = vld [vmem:[%s1343 + $0x34] sm:$0xf]
      %v1358 = vld [vmem:[%s1343 + $0x38] sm:$0xf]
      %v1359 = vld [vmem:[%s1343 + $0x3c] sm:$0xf]
      %v1360 = vunpack.c.l.b16 %v1244
      %v1361 = vunpack.c.l.b16 %v1258
      %v1362 = vunpack.c.l.b16 %v1272
      %v1363 = vunpack.c.l.b16 %v1286
      %v1364 = vunpack.c.l.b16 %v1300
      %v1365 = vunpack.c.l.b16 %v1314
      %v1366 = vunpack.c.l.b16 %v1328
      %v1367 = vunpack.c.l.b16 %v1342
      %v1368 = vpack.c.b16 %v1361, %v1360
      %v1369 = vpack.c.b16 %v1363, %v1362
      %v1370 = vpack.c.b16 %v1365, %v1364
      %v1371 = vpack.c.b16 %v1367, %v1366
      %v1392 = vunpack.c.l.b16 %v1344
      %v1393 = vunpack.c.l.b16 %v1345
      %v1394 = vunpack.c.l.b16 %v1346
      %v1395 = vunpack.c.l.b16 %v1347
      %v1396 = vunpack.c.l.b16 %v1348
      %v1397 = vunpack.c.l.b16 %v1349
      %v1398 = vunpack.c.l.b16 %v1350
      %v1399 = vunpack.c.l.b16 %v1351
      %v1400 = vunpack.c.l.b16 %v1352
      %v1401 = vunpack.c.l.b16 %v1353
      %v1402 = vunpack.c.l.b16 %v1354
      %v1403 = vunpack.c.l.b16 %v1355
      %v1404 = vunpack.c.l.b16 %v1356
      %v1405 = vunpack.c.l.b16 %v1357
      %v1406 = vunpack.c.l.b16 %v1358
      %v1407 = vunpack.c.l.b16 %v1359
      %v1408 = vpack.c.b16 %v1393, %v1392
      %v1409 = vpack.c.b16 %v1395, %v1394
      %v1410 = vpack.c.b16 %v1397, %v1396
      %v1411 = vpack.c.b16 %v1399, %v1398
      %v1412 = vpack.c.b16 %v1401, %v1400
      %v1413 = vpack.c.b16 %v1403, %v1402
      %v1414 = vpack.c.b16 %v1405, %v1404
      %v1415 = vpack.c.b16 %v1407, %v1406
      %1424 = vmatprep.subr.bf16.mxu0 0
      %1425 = vmatpush1.bf16.msra.mxu0 %v1408
      %1426 = vmatprep.subr.bf16.mxu0 0
      %1427 = vmatpush1.bf16.msra.mxu0 %v1409
      %1428 = vmatprep.subr.bf16.mxu0 0
      %1429 = vmatpush1.bf16.msra.mxu0 %v1410
      %1430 = vmatprep.subr.bf16.mxu0 0
      %1431 = vmatpush1.bf16.msra.mxu0 %v1411
      %1432 = vmatprep.subr.bf16.mxu0 0
      %1433 = vmatpush1.bf16.msra.mxu0 %v1412
      %1434 = vmatprep.subr.bf16.mxu0 0
      %1435 = vmatpush1.bf16.msra.mxu0 %v1413
      %1436 = vmatprep.subr.bf16.mxu0 0
      %1437 = vmatpush1.bf16.msra.mxu0 %v1414
      %1438 = vmatprep.subr.bf16.mxu0 0
      %1439 = vmatpush1.bf16.msra.mxu0 %v1415
      %1440 = vmatprep.subr.bf16.mxu0 0
      %1441 = vmatpush1.bf16.msra.mxu0 0
      %1442 = vmatprep.subr.bf16.mxu0 0
      %1443 = vmatpush1.bf16.msra.mxu0 0
      %1444 = vmatprep.subr.bf16.mxu0 0
      %1445 = vmatpush1.bf16.msra.mxu0 0
      %1446 = vmatprep.subr.bf16.mxu0 0
      %1447 = vmatpush1.bf16.msra.mxu0 0
      %1448 = vmatprep.subr.bf16.mxu0 0
      %1449 = vmatpush1.bf16.msra.mxu0 0
      %1450 = vmatprep.subr.bf16.mxu0 0
      %1451 = vmatpush1.bf16.msra.mxu0 0
      %1452 = vmatprep.subr.bf16.mxu0 0
      %1453 = vmatpush1.bf16.msra.mxu0 0
      %1454 = vmatprep.subr.bf16.mxu0 0
      %1455 = vmatpush1.bf16.msra.mxu0 0
      %1456 = vmatprep.mubr.bf16.mxu0 0
      %1457 = vmatmul.mubr.bf16.gmra.mrb[0].mxu0 %v1368
      %v1458 = vpop.f32.mrb[0].mxu0
      %v1459 = vadd.f32 0.0, %v1458
      %v1460 = vpop.f32.mrb[0].mxu0
      %v1461 = vpop.f32.mrb[0].mxu0
      %v1462 = vadd.f32 0.0, %v1461
      %v1463 = vpop.f32.mrb[0].mxu0
      %1464 = vmatprep.mubr.bf16.mxu0 0
      %1465 = vmatmul.mubr.bf16.gmra.mrb[0].mxu0 %v1369
      %v1466 = vpop.f32.mrb[0].mxu0
      %v1467 = vadd.f32 0.0, %v1466
      %v1468 = vpop.f32.mrb[0].mxu0
      %v1469 = vpop.f32.mrb[0].mxu0
      %v1470 = vadd.f32 0.0, %v1469
      %v1471 = vpop.f32.mrb[0].mxu0
      %1472 = vmatprep.mubr.bf16.mxu0 0
      %1473 = vmatmul.mubr.bf16.gmra.mrb[0].mxu0 %v1370
      %v1474 = vpop.f32.mrb[0].mxu0
      %v1475 = vadd.f32 0.0, %v1474
      %v1476 = vpop.f32.mrb[0].mxu0
      %v1477 = vpop.f32.mrb[0].mxu0
      %v1478 = vadd.f32 0.0, %v1477
      %v1479 = vpop.f32.mrb[0].mxu0
      %1480 = vmatprep.mubr.bf16.mxu0 0
      %1481 = vmatmul.mubr.bf16.gmra.mrb[0].mxu0 %v1371
      %v1482 = vpop.f32.mrb[0].mxu0
      %v1483 = vadd.f32 0.0, %v1482
      %v1484 = vpop.f32.mrb[0].mxu0
      %v1485 = vpop.f32.mrb[0].mxu0
      %v1486 = vadd.f32 0.0, %v1485
      %v1487 = vpop.f32.mrb[0].mxu0
      %1488 = vdwg.mxu0
      %v1489 = vld [vmem:[#allocation4] sm:$0xff]
      %v1490 = vld [vmem:[#allocation4 + $0x8] sm:$0xff]
      %v1491 = vld [vmem:[#allocation4 + $0x10] sm:$0xff]
      %v1492 = vld [vmem:[#allocation4 + $0x18] sm:$0xff]
      %v1493 = vld [vmem:[#allocation4 + $0x20] sm:$0xff]
      %v1494 = vld [vmem:[#allocation4 + $0x28] sm:$0xff]
      %v1495 = vld [vmem:[#allocation4 + $0x30] sm:$0xff]
      %v1496 = vld [vmem:[#allocation4 + $0x38] sm:$0xff]
      %v1497 = vadd.f32 %v1489, %v1459
      %v1498 = vadd.f32 %v1490, %v1462
      %v1499 = vadd.f32 %v1491, %v1467
      %v1500 = vadd.f32 %v1492, %v1470
      %v1501 = vadd.f32 %v1493, %v1475
      %v1502 = vadd.f32 %v1494, %v1478
      %v1503 = vadd.f32 %v1495, %v1483
      %v1504 = vadd.f32 %v1496, %v1486
      %1505 = vst [vmem:[#allocation4] sm:$0xff] %v1497
      %1506 = vst [vmem:[#allocation4 + $0x8] sm:$0xff] %v1498
      %1507 = vst [vmem:[#allocation4 + $0x10] sm:$0xff] %v1499
      %1508 = vst [vmem:[#allocation4 + $0x18] sm:$0xff] %v1500
      %1509 = vst [vmem:[#allocation4 + $0x20] sm:$0xff] %v1501
      %1510 = vst [vmem:[#allocation4 + $0x28] sm:$0xff] %v1502
      %1511 = vst [vmem:[#allocation4 + $0x30] sm:$0xff] %v1503
      %1512 = vst [vmem:[#allocation4 + $0x38] sm:$0xff] %v1504
      %v1513 = vld [vmem:[#allocation4] sm:$0xff]
      %v1514 = vld [vmem:[#allocation4 + $0x8] sm:$0xff]
      %v1515 = vld [vmem:[#allocation4 + $0x10] sm:$0xff]
      %v1516 = vld [vmem:[#allocation4 + $0x18] sm:$0xff]
      %v1517 = vld [vmem:[#allocation4 + $0x20] sm:$0xff]
      %v1518 = vld [vmem:[#allocation4 + $0x28] sm:$0xff]
      %v1519 = vld [vmem:[#allocation4 + $0x30] sm:$0xff]
      %v1520 = vld [vmem:[#allocation4 + $0x38] sm:$0xff]
      %v1521 = vld [vmem:[%s4] sm:$0x1]
      %v1523 = vlaneseq
      %v1524 = vshrl.u32 %v1523, 7
      %v1525 = vsub.s32 0, %v1524
      %v1526 = vrot.slane %v1521, %v1525
      %v1528 = vmul.f32 %v1513, %v1526
      %v1529 = vmul.f32 %v1514, %v1526
      %v1530 = vmul.f32 %v1515, %v1526
      %v1531 = vmul.f32 %v1516, %v1526
      %v1532 = vmul.f32 %v1517, %v1526
      %v1533 = vmul.f32 %v1518, %v1526
      %v1534 = vmul.f32 %v1519, %v1526
      %v1535 = vmul.f32 %v1520, %v1526
      %v1536 = vld [vmem:[%s5] sm:$0x1]
      %v1538 = vlaneseq
      %v1539 = vshrl.u32 %v1538, 7
      %v1540 = vsub.s32 0, %v1539
      %v1541 = vrot.slane %v1536, %v1540
      %v1543 = vadd.f32 %v1528, %v1541
      %v1544 = vadd.f32 %v1529, %v1541
      %v1545 = vadd.f32 %v1530, %v1541
      %v1546 = vadd.f32 %v1531, %v1541
      %v1547 = vadd.f32 %v1532, %v1541
      %v1548 = vadd.f32 %v1533, %v1541
      %v1549 = vadd.f32 %v1534, %v1541
      %v1550 = vadd.f32 %v1535, %v1541
      %v1551 = vmax.f32 %v1543, 0.0
      %v1552 = vmax.f32 %v1544, 0.0
      %v1553 = vmax.f32 %v1545, 0.0
      %v1554 = vmax.f32 %v1546, 0.0
      %v1555 = vmax.f32 %v1547, 0.0
      %v1556 = vmax.f32 %v1548, 0.0
      %v1557 = vmax.f32 %v1549, 0.0
      %v1558 = vmax.f32 %v1550, 0.0
      %v1559 = vpack.c.bf16 %v1552, %v1551
      %v1560 = vpack.c.bf16 %v1554, %v1553
      %v1561 = vpack.c.bf16 %v1556, %v1555
      %v1562 = vpack.c.bf16 %v1558, %v1557
      %v1567 = vunpack.c.l.b16 %v1559
      %v1568 = vunpack.c.h.b16 %v1559
      %v1569 = vunpack.c.l.b16 %v1560
      %v1570 = vunpack.c.h.b16 %v1560
      %v1571 = vunpack.c.l.b16 %v1561
      %v1572 = vunpack.c.h.b16 %v1561
      %v1573 = vunpack.c.l.b16 %v1562
      %v1574 = vunpack.c.h.b16 %v1562
      %v1575 = vpack.c.b16 %v1567, %v1567
      %v1576 = vpack.c.b16 %v1568, %v1568
      %v1577 = vpack.c.b16 %v1569, %v1569
      %v1578 = vpack.c.b16 %v1570, %v1570
      %v1579 = vpack.c.b16 %v1571, %v1571
      %v1580 = vpack.c.b16 %v1572, %v1572
      %v1581 = vpack.c.b16 %v1573, %v1573
      %v1582 = vpack.c.b16 %v1574, %v1574
      %1583 = vst [vmem:[#allocation3] sm:$0xf] 0
      %1584 = vst [vmem:[#allocation3 + $0x4] sm:$0x1] 0
      %s1585 = scalar_lea.vmem [#allocation3], 72
      %1586 = vst [vmem:[%s1585] sm:$0xf] 0
      %1587 = vst [vmem:[%s1585 + $0x4] sm:$0x1] 0
      %v1588 = vld [vmem:[#allocation3] sm:$0x1]
      %v1589 = vsel %vm372, 0, %v1588
      %1590 = vst [vmem:[#allocation3] sm:$0x1] %v1589
      %v1591 = vld [vmem:[#allocation3 + $0x8] sm:$0x1]
      %v1592 = vsel %vm372, 0, %v1591
      %1593 = vst [vmem:[#allocation3 + $0x8] sm:$0x1] %v1592
      %v1594 = vld [vmem:[#allocation3 + $0x10] sm:$0x1]
      %v1595 = vsel %vm372, 0, %v1594
      %1596 = vst [vmem:[#allocation3 + $0x10] sm:$0x1] %v1595
      %v1597 = vld [vmem:[#allocation3 + $0x18] sm:$0x1]
      %v1598 = vsel %vm372, 0, %v1597
      %1599 = vst [vmem:[#allocation3 + $0x18] sm:$0x1] %v1598
      %v1600 = vld [vmem:[#allocation3 + $0x20] sm:$0x1]
      %v1601 = vsel %vm372, 0, %v1600
      %1602 = vst [vmem:[#allocation3 + $0x20] sm:$0x1] %v1601
      %v1603 = vld [vmem:[#allocation3 + $0x28] sm:$0x1]
      %v1604 = vsel %vm372, 0, %v1603
      %1605 = vst [vmem:[#allocation3 + $0x28] sm:$0x1] %v1604
      %v1606 = vld [vmem:[#allocation3 + $0x30] sm:$0x1]
      %v1607 = vsel %vm372, 0, %v1606
      %1608 = vst [vmem:[#allocation3 + $0x30] sm:$0x1] %v1607
      %v1609 = vld [vmem:[#allocation3 + $0x38] sm:$0x1]
      %v1610 = vsel %vm372, 0, %v1609
      %1611 = vst [vmem:[#allocation3 + $0x38] sm:$0x1] %v1610
      %v1612 = vld [vmem:[#allocation3 + $0x40] sm:$0x1]
      %v1613 = vsel %vm372, 0, %v1612
      %1614 = vst [vmem:[#allocation3 + $0x40] sm:$0x1] %v1613
      %v1615 = vld [vmem:[#allocation3 + $0x48] sm:$0x1]
      %v1616 = vsel %vm372, 0, %v1615
      %1617 = vst [vmem:[#allocation3 + $0x48] sm:$0x1] %v1616
      %vm1618 = vmand %vm370, %vm509
      %v1619 = vld [vmem:[#allocation3 + $0x4] sm:$0x1]
      %v1620 = vsel %vm1618, 0, %v1619
      %1621 = vst [vmem:[#allocation3 + $0x4] sm:$0x1] %v1620
      %v1622 = vld [vmem:[#allocation3 + $0xc] sm:$0x1]
      %v1623 = vsel %vm1618, 0, %v1622
      %1624 = vst [vmem:[#allocation3 + $0xc] sm:$0x1] %v1623
      %v1625 = vld [vmem:[#allocation3 + $0x14] sm:$0x1]
      %v1626 = vsel %vm1618, 0, %v1625
      %1627 = vst [vmem:[#allocation3 + $0x14] sm:$0x1] %v1626
      %v1628 = vld [vmem:[#allocation3 + $0x1c] sm:$0x1]
      %v1629 = vsel %vm1618, 0, %v1628
      %1630 = vst [vmem:[#allocation3 + $0x1c] sm:$0x1] %v1629
      %v1631 = vld [vmem:[#allocation3 + $0x24] sm:$0x1]
      %v1632 = vsel %vm1618, 0, %v1631
      %1633 = vst [vmem:[#allocation3 + $0x24] sm:$0x1] %v1632
      %v1634 = vld [vmem:[#allocation3 + $0x2c] sm:$0x1]
      %v1635 = vsel %vm1618, 0, %v1634
      %1636 = vst [vmem:[#allocation3 + $0x2c] sm:$0x1] %v1635
      %v1637 = vld [vmem:[#allocation3 + $0x34] sm:$0x1]
      %v1638 = vsel %vm1618, 0, %v1637
      %1639 = vst [vmem:[#allocation3 + $0x34] sm:$0x1] %v1638
      %v1640 = vld [vmem:[#allocation3 + $0x3c] sm:$0x1]
      %v1641 = vsel %vm1618, 0, %v1640
      %1642 = vst [vmem:[#allocation3 + $0x3c] sm:$0x1] %v1641
      %v1643 = vld [vmem:[#allocation3 + $0x44] sm:$0x1]
      %v1644 = vsel %vm1618, 0, %v1643
      %1645 = vst [vmem:[#allocation3 + $0x44] sm:$0x1] %v1644
      %v1646 = vld [vmem:[#allocation3 + $0x4c] sm:$0x1]
      %v1647 = vsel %vm1618, 0, %v1646
      %1648 = vst [vmem:[#allocation3 + $0x4c] sm:$0x1] %v1647
      %v1650 = vshrl.u32 %v1575, 16
      %v1652 = vrot.slane %v1650, 7
      %v1653 = vshll.u32 %v1575, 16
      %v1655 = vor.u32 %v1652, %v1653
      %v1656 = vrot.slane %v1652, 4
      %v1658 = vshrl.u32 %v1576, 16
      %v1660 = vrot.slane %v1658, 7
      %v1661 = vshll.u32 %v1576, 16
      %v1663 = vor.u32 %v1660, %v1661
      %v1664 = vrot.slane %v1660, 4
      %v1666 = vshrl.u32 %v1577, 16
      %v1668 = vrot.slane %v1666, 7
      %v1669 = vshll.u32 %v1577, 16
      %v1671 = vor.u32 %v1668, %v1669
      %v1672 = vrot.slane %v1668, 4
      %v1674 = vshrl.u32 %v1578, 16
      %v1676 = vrot.slane %v1674, 7
      %v1677 = vshll.u32 %v1578, 16
      %v1679 = vor.u32 %v1676, %v1677
      %v1680 = vrot.slane %v1676, 4
      %v1682 = vshrl.u32 %v1579, 16
      %v1684 = vrot.slane %v1682, 7
      %v1685 = vshll.u32 %v1579, 16
      %v1687 = vor.u32 %v1684, %v1685
      %v1688 = vrot.slane %v1684, 4
      %v1690 = vshrl.u32 %v1580, 16
      %v1692 = vrot.slane %v1690, 7
      %v1693 = vshll.u32 %v1580, 16
      %v1695 = vor.u32 %v1692, %v1693
      %v1696 = vrot.slane %v1692, 4
      %v1698 = vshrl.u32 %v1581, 16
      %v1700 = vrot.slane %v1698, 7
      %v1701 = vshll.u32 %v1581, 16
      %v1703 = vor.u32 %v1700, %v1701
      %v1704 = vrot.slane %v1700, 4
      %v1706 = vshrl.u32 %v1582, 16
      %v1708 = vrot.slane %v1706, 7
      %v1709 = vshll.u32 %v1582, 16
      %v1711 = vor.u32 %v1708, %v1709
      %v1712 = vrot.slane %v1708, 4
      %s1729 = scalar_lea.vmem [#allocation3], 8
      %v1730 = vld [vmem:[%s1729] sm:$0xf]
      %v1731 = vsel %vm510, %v1655, %v1730
      %1732 = vst [vmem:[%s1729] sm:$0xf] %v1731
      %v1733 = vld [vmem:[%s1729 + $0x4] sm:$0x1]
      %v1734 = vsel %vm372, %v1656, %v1733
      %1735 = vst [vmem:[%s1729 + $0x4] sm:$0x1] %v1734
      %v1736 = vld [vmem:[%s1729 + $0x8] sm:$0xf]
      %v1737 = vsel %vm510, %v1663, %v1736
      %1738 = vst [vmem:[%s1729 + $0x8] sm:$0xf] %v1737
      %v1739 = vld [vmem:[%s1729 + $0xc] sm:$0x1]
      %v1740 = vsel %vm372, %v1664, %v1739
      %1741 = vst [vmem:[%s1729 + $0xc] sm:$0x1] %v1740
      %v1742 = vld [vmem:[%s1729 + $0x10] sm:$0xf]
      %v1743 = vsel %vm510, %v1671, %v1742
      %1744 = vst [vmem:[%s1729 + $0x10] sm:$0xf] %v1743
      %v1745 = vld [vmem:[%s1729 + $0x14] sm:$0x1]
      %v1746 = vsel %vm372, %v1672, %v1745
      %1747 = vst [vmem:[%s1729 + $0x14] sm:$0x1] %v1746
      %v1748 = vld [vmem:[%s1729 + $0x18] sm:$0xf]
      %v1749 = vsel %vm510, %v1679, %v1748
      %1750 = vst [vmem:[%s1729 + $0x18] sm:$0xf] %v1749
      %v1751 = vld [vmem:[%s1729 + $0x1c] sm:$0x1]
      %v1752 = vsel %vm372, %v1680, %v1751
      %1753 = vst [vmem:[%s1729 + $0x1c] sm:$0x1] %v1752
      %v1754 = vld [vmem:[%s1729 + $0x20] sm:$0xf]
      %v1755 = vsel %vm510, %v1687, %v1754
      %1756 = vst [vmem:[%s1729 + $0x20] sm:$0xf] %v1755
      %v1757 = vld [vmem:[%s1729 + $0x24] sm:$0x1]
      %v1758 = vsel %vm372, %v1688, %v1757
      %1759 = vst [vmem:[%s1729 + $0x24] sm:$0x1] %v1758
      %v1760 = vld [vmem:[%s1729 + $0x28] sm:$0xf]
      %v1761 = vsel %vm510, %v1695, %v1760
      %1762 = vst [vmem:[%s1729 + $0x28] sm:$0xf] %v1761
      %v1763 = vld [vmem:[%s1729 + $0x2c] sm:$0x1]
      %v1764 = vsel %vm372, %v1696, %v1763
      %1765 = vst [vmem:[%s1729 + $0x2c] sm:$0x1] %v1764
      %v1766 = vld [vmem:[%s1729 + $0x30] sm:$0xf]
      %v1767 = vsel %vm510, %v1703, %v1766
      %1768 = vst [vmem:[%s1729 + $0x30] sm:$0xf] %v1767
      %v1769 = vld [vmem:[%s1729 + $0x34] sm:$0x1]
      %v1770 = vsel %vm372, %v1704, %v1769
      %1771 = vst [vmem:[%s1729 + $0x34] sm:$0x1] %v1770
      %v1772 = vld [vmem:[%s1729 + $0x38] sm:$0xf]
      %v1773 = vsel %vm510, %v1711, %v1772
      %1774 = vst [vmem:[%s1729 + $0x38] sm:$0xf] %v1773
      %v1775 = vld [vmem:[%s1729 + $0x3c] sm:$0x1]
      %v1776 = vsel %vm372, %v1712, %v1775
      %1777 = vst [vmem:[%s1729 + $0x3c] sm:$0x1] %v1776
      %v1778 = vld [vmem:[%s7] sm:$0xf]
      %v1779 = vld [vmem:[%s7 + $0x4] sm:$0xf]
      %v1780 = vld [vmem:[%s7 + $0x8] sm:$0xf]
      %v1781 = vld [vmem:[%s7 + $0xc] sm:$0xf]
      %v1782 = vld [vmem:[%s7 + $0x10] sm:$0xf]
      %v1783 = vld [vmem:[%s7 + $0x14] sm:$0xf]
      %v1784 = vld [vmem:[%s7 + $0x18] sm:$0xf]
      %v1785 = vld [vmem:[%s7 + $0x1c] sm:$0xf]
      %v1786 = vld [vmem:[%s7 + $0x20] sm:$0xf]
      %v1787 = vld [vmem:[%s7 + $0x24] sm:$0xf]
      %v1788 = vld [vmem:[%s7 + $0x28] sm:$0xf]
      %v1789 = vld [vmem:[%s7 + $0x2c] sm:$0xf]
      %v1790 = vld [vmem:[%s7 + $0x30] sm:$0xf]
      %v1791 = vld [vmem:[%s7 + $0x34] sm:$0xf]
      %v1792 = vld [vmem:[%s7 + $0x38] sm:$0xf]
      %v1793 = vld [vmem:[%s7 + $0x3c] sm:$0xf]
      %v1794 = vpack.c.b16 %v412, %v411
      %v1795 = vpack.c.b16 %v414, %v413
      %v1796 = vpack.c.b16 %v416, %v415
      %v1797 = vpack.c.b16 %v418, %v417
      %v1818 = vunpack.c.l.b16 %v1778
      %v1819 = vunpack.c.l.b16 %v1779
      %v1820 = vunpack.c.l.b16 %v1780
      %v1821 = vunpack.c.l.b16 %v1781
      %v1822 = vunpack.c.l.b16 %v1782
      %v1823 = vunpack.c.l.b16 %v1783
      %v1824 = vunpack.c.l.b16 %v1784
      %v1825 = vunpack.c.l.b16 %v1785
      %v1826 = vunpack.c.l.b16 %v1786
      %v1827 = vunpack.c.l.b16 %v1787
      %v1828 = vunpack.c.l.b16 %v1788
      %v1829 = vunpack.c.l.b16 %v1789
      %v1830 = vunpack.c.l.b16 %v1790
      %v1831 = vunpack.c.l.b16 %v1791
      %v1832 = vunpack.c.l.b16 %v1792
      %v1833 = vunpack.c.l.b16 %v1793
      %v1834 = vpack.c.b16 %v1819, %v1818
      %v1835 = vpack.c.b16 %v1821, %v1820
      %v1836 = vpack.c.b16 %v1823, %v1822
      %v1837 = vpack.c.b16 %v1825, %v1824
      %v1838 = vpack.c.b16 %v1827, %v1826
      %v1839 = vpack.c.b16 %v1829, %v1828
      %v1840 = vpack.c.b16 %v1831, %v1830
      %v1841 = vpack.c.b16 %v1833, %v1832
      %1850 = vmatprep.subr.bf16.mxu0 0
      %1851 = vmatpush1.bf16.msra.mxu0 %v1834
      %1852 = vmatprep.subr.bf16.mxu0 0
      %1853 = vmatpush1.bf16.msra.mxu0 %v1835
      %1854 = vmatprep.subr.bf16.mxu0 0
      %1855 = vmatpush1.bf16.msra.mxu0 %v1836
      %1856 = vmatprep.subr.bf16.mxu0 0
      %1857 = vmatpush1.bf16.msra.mxu0 %v1837
      %1858 = vmatprep.subr.bf16.mxu0 0
      %1859 = vmatpush1.bf16.msra.mxu0 %v1838
      %1860 = vmatprep.subr.bf16.mxu0 0
      %1861 = vmatpush1.bf16.msra.mxu0 %v1839
      %1862 = vmatprep.subr.bf16.mxu0 0
      %1863 = vmatpush1.bf16.msra.mxu0 %v1840
      %1864 = vmatprep.subr.bf16.mxu0 0
      %1865 = vmatpush1.bf16.msra.mxu0 %v1841
      %1866 = vmatprep.subr.bf16.mxu0 0
      %1867 = vmatpush1.bf16.msra.mxu0 0
      %1868 = vmatprep.subr.bf16.mxu0 0
      %1869 = vmatpush1.bf16.msra.mxu0 0
      %1870 = vmatprep.subr.bf16.mxu0 0
      %1871 = vmatpush1.bf16.msra.mxu0 0
      %1872 = vmatprep.subr.bf16.mxu0 0
      %1873 = vmatpush1.bf16.msra.mxu0 0
      %1874 = vmatprep.subr.bf16.mxu0 0
      %1875 = vmatpush1.bf16.msra.mxu0 0
      %1876 = vmatprep.subr.bf16.mxu0 0
      %1877 = vmatpush1.bf16.msra.mxu0 0
      %1878 = vmatprep.subr.bf16.mxu0 0
      %1879 = vmatpush1.bf16.msra.mxu0 0
      %1880 = vmatprep.subr.bf16.mxu0 0
      %1881 = vmatpush1.bf16.msra.mxu0 0
      %1882 = vmatprep.mubr.bf16.mxu0 0
      %1883 = vmatmul.mubr.bf16.gmra.mrb[0].mxu0 %v1794
      %v1884 = vpop.f32.mrb[0].mxu0
      %v1885 = vadd.f32 0.0, %v1884
      %v1886 = vpop.f32.mrb[0].mxu0
      %v1887 = vpop.f32.mrb[0].mxu0
      %v1888 = vadd.f32 0.0, %v1887
      %v1889 = vpop.f32.mrb[0].mxu0
      %1890 = vmatprep.mubr.bf16.mxu0 0
      %1891 = vmatmul.mubr.bf16.gmra.mrb[0].mxu0 %v1795
      %v1892 = vpop.f32.mrb[0].mxu0
      %v1893 = vadd.f32 0.0, %v1892
      %v1894 = vpop.f32.mrb[0].mxu0
      %v1895 = vpop.f32.mrb[0].mxu0
      %v1896 = vadd.f32 0.0, %v1895
      %v1897 = vpop.f32.mrb[0].mxu0
      %1898 = vmatprep.mubr.bf16.mxu0 0
      %1899 = vmatmul.mubr.bf16.gmra.mrb[0].mxu0 %v1796
      %v1900 = vpop.f32.mrb[0].mxu0
      %v1901 = vadd.f32 0.0, %v1900
      %v1902 = vpop.f32.mrb[0].mxu0
      %v1903 = vpop.f32.mrb[0].mxu0
      %v1904 = vadd.f32 0.0, %v1903
      %v1905 = vpop.f32.mrb[0].mxu0
      %1906 = vmatprep.mubr.bf16.mxu0 0
      %1907 = vmatmul.mubr.bf16.gmra.mrb[0].mxu0 %v1797
      %v1908 = vpop.f32.mrb[0].mxu0
      %v1909 = vadd.f32 0.0, %v1908
      %v1910 = vpop.f32.mrb[0].mxu0
      %v1911 = vpop.f32.mrb[0].mxu0
      %v1912 = vadd.f32 0.0, %v1911
      %v1913 = vpop.f32.mrb[0].mxu0
      %1914 = vdwg.mxu0
      %1915 = vst [vmem:[#allocation4] sm:$0xff] %v1885
      %1916 = vst [vmem:[#allocation4 + $0x8] sm:$0xff] %v1888
      %1917 = vst [vmem:[#allocation4 + $0x10] sm:$0xff] %v1893
      %1918 = vst [vmem:[#allocation4 + $0x18] sm:$0xff] %v1896
      %1919 = vst [vmem:[#allocation4 + $0x20] sm:$0xff] %v1901
      %1920 = vst [vmem:[#allocation4 + $0x28] sm:$0xff] %v1904
      %1921 = vst [vmem:[#allocation4 + $0x30] sm:$0xff] %v1909
      %1922 = vst [vmem:[#allocation4 + $0x38] sm:$0xff] %v1912
      %v1923 = vld [vmem:[#allocation3] sm:$0xf]
      %v1924 = vld [vmem:[#allocation3 + $0x8] sm:$0xf]
      %v1925 = vld [vmem:[#allocation3 + $0x10] sm:$0xf]
      %v1926 = vld [vmem:[#allocation3 + $0x18] sm:$0xf]
      %v1927 = vld [vmem:[#allocation3 + $0x20] sm:$0xf]
      %v1928 = vld [vmem:[#allocation3 + $0x28] sm:$0xf]
      %v1929 = vld [vmem:[#allocation3 + $0x30] sm:$0xf]
      %v1930 = vld [vmem:[#allocation3 + $0x38] sm:$0xf]
      %v1931 = vld [vmem:[#allocation4] sm:$0xff]
      %v1932 = vld [vmem:[#allocation4 + $0x8] sm:$0xff]
      %v1933 = vld [vmem:[#allocation4 + $0x10] sm:$0xff]
      %v1934 = vld [vmem:[#allocation4 + $0x18] sm:$0xff]
      %v1935 = vld [vmem:[#allocation4 + $0x20] sm:$0xff]
      %v1936 = vld [vmem:[#allocation4 + $0x28] sm:$0xff]
      %v1937 = vld [vmem:[#allocation4 + $0x30] sm:$0xff]
      %v1938 = vld [vmem:[#allocation4 + $0x38] sm:$0xff]
      %v1939 = vld [vmem:[%s6] sm:$0xf]
      %v1940 = vld [vmem:[%s6 + $0x4] sm:$0xf]
      %v1941 = vld [vmem:[%s6 + $0x8] sm:$0xf]
      %v1942 = vld [vmem:[%s6 + $0xc] sm:$0xf]
      %v1943 = vld [vmem:[%s6 + $0x10] sm:$0xf]
      %v1944 = vld [vmem:[%s6 + $0x14] sm:$0xf]
      %v1945 = vld [vmem:[%s6 + $0x18] sm:$0xf]
      %v1946 = vld [vmem:[%s6 + $0x1c] sm:$0xf]
      %v1947 = vld [vmem:[%s6 + $0x20] sm:$0xf]
      %v1948 = vld [vmem:[%s6 + $0x24] sm:$0xf]
      %v1949 = vld [vmem:[%s6 + $0x28] sm:$0xf]
      %v1950 = vld [vmem:[%s6 + $0x2c] sm:$0xf]
      %v1951 = vld [vmem:[%s6 + $0x30] sm:$0xf]
      %v1952 = vld [vmem:[%s6 + $0x34] sm:$0xf]
      %v1953 = vld [vmem:[%s6 + $0x38] sm:$0xf]
      %v1954 = vld [vmem:[%s6 + $0x3c] sm:$0xf]
      %v1963 = vunpack.c.l.b16 %v1923
      %v1964 = vunpack.c.l.b16 %v1924
      %v1965 = vunpack.c.l.b16 %v1925
      %v1966 = vunpack.c.l.b16 %v1926
      %v1967 = vunpack.c.l.b16 %v1927
      %v1968 = vunpack.c.l.b16 %v1928
      %v1969 = vunpack.c.l.b16 %v1929
      %v1970 = vunpack.c.l.b16 %v1930
      %v1971 = vpack.c.b16 %v1964, %v1963
      %v1972 = vpack.c.b16 %v1966, %v1965
      %v1973 = vpack.c.b16 %v1968, %v1967
      %v1974 = vpack.c.b16 %v1970, %v1969
      %v1995 = vunpack.c.l.b16 %v1939
      %v1996 = vunpack.c.l.b16 %v1940
      %v1997 = vunpack.c.l.b16 %v1941
      %v1998 = vunpack.c.l.b16 %v1942
      %v1999 = vunpack.c.l.b16 %v1943
      %v2000 = vunpack.c.l.b16 %v1944
      %v2001 = vunpack.c.l.b16 %v1945
      %v2002 = vunpack.c.l.b16 %v1946
      %v2003 = vunpack.c.l.b16 %v1947
      %v2004 = vunpack.c.l.b16 %v1948
      %v2005 = vunpack.c.l.b16 %v1949
      %v2006 = vunpack.c.l.b16 %v1950
      %v2007 = vunpack.c.l.b16 %v1951
      %v2008 = vunpack.c.l.b16 %v1952
      %v2009 = vunpack.c.l.b16 %v1953
      %v2010 = vunpack.c.l.b16 %v1954
      %v2011 = vpack.c.b16 %v1996, %v1995
      %v2012 = vpack.c.b16 %v1998, %v1997
      %v2013 = vpack.c.b16 %v2000, %v1999
      %v2014 = vpack.c.b16 %v2002, %v2001
      %v2015 = vpack.c.b16 %v2004, %v2003
      %v2016 = vpack.c.b16 %v2006, %v2005
      %v2017 = vpack.c.b16 %v2008, %v2007
      %v2018 = vpack.c.b16 %v2010, %v2009
      %2027 = vmatprep.subr.bf16.mxu0 0
      %2028 = vmatpush1.bf16.msra.mxu0 %v2011
      %2029 = vmatprep.subr.bf16.mxu0 0
      %2030 = vmatpush1.bf16.msra.mxu0 %v2012
      %2031 = vmatprep.subr.bf16.mxu0 0
      %2032 = vmatpush1.bf16.msra.mxu0 %v2013
      %2033 = vmatprep.subr.bf16.mxu0 0
      %2034 = vmatpush1.bf16.msra.mxu0 %v2014
      %2035 = vmatprep.subr.bf16.mxu0 0
      %2036 = vmatpush1.bf16.msra.mxu0 %v2015
      %2037 = vmatprep.subr.bf16.mxu0 0
      %2038 = vmatpush1.bf16.msra.mxu0 %v2016
      %2039 = vmatprep.subr.bf16.mxu0 0
      %2040 = vmatpush1.bf16.msra.mxu0 %v2017
      %2041 = vmatprep.subr.bf16.mxu0 0
      %2042 = vmatpush1.bf16.msra.mxu0 %v2018
      %2043 = vmatprep.subr.bf16.mxu0 0
      %2044 = vmatpush1.bf16.msra.mxu0 0
      %2045 = vmatprep.subr.bf16.mxu0 0
      %2046 = vmatpush1.bf16.msra.mxu0 0
      %2047 = vmatprep.subr.bf16.mxu0 0
      %2048 = vmatpush1.bf16.msra.mxu0 0
      %2049 = vmatprep.subr.bf16.mxu0 0
      %2050 = vmatpush1.bf16.msra.mxu0 0
      %2051 = vmatprep.subr.bf16.mxu0 0
      %2052 = vmatpush1.bf16.msra.mxu0 0
      %2053 = vmatprep.subr.bf16.mxu0 0
      %2054 = vmatpush1.bf16.msra.mxu0 0
      %2055 = vmatprep.subr.bf16.mxu0 0
      %2056 = vmatpush1.bf16.msra.mxu0 0
      %2057 = vmatprep.subr.bf16.mxu0 0
      %2058 = vmatpush1.bf16.msra.mxu0 0
      %2059 = vmatprep.mubr.bf16.mxu0 0
      %2060 = vmatmul.mubr.bf16.gmra.mrb[0].mxu0 %v1971
      %v2061 = vpop.f32.mrb[0].mxu0
      %v2062 = vadd.f32 0.0, %v2061
      %v2063 = vpop.f32.mrb[0].mxu0
      %v2064 = vpop.f32.mrb[0].mxu0
      %v2065 = vadd.f32 0.0, %v2064
      %v2066 = vpop.f32.mrb[0].mxu0
      %2067 = vmatprep.mubr.bf16.mxu0 0
      %2068 = vmatmul.mubr.bf16.gmra.mrb[0].mxu0 %v1972
      %v2069 = vpop.f32.mrb[0].mxu0
      %v2070 = vadd.f32 0.0, %v2069
      %v2071 = vpop.f32.mrb[0].mxu0
      %v2072 = vpop.f32.mrb[0].mxu0
      %v2073 = vadd.f32 0.0, %v2072
      %v2074 = vpop.f32.mrb[0].mxu0
      %2075 = vmatprep.mubr.bf16.mxu0 0
      %2076 = vmatmul.mubr.bf16.gmra.mrb[0].mxu0 %v1973
      %v2077 = vpop.f32.mrb[0].mxu0
      %v2078 = vadd.f32 0.0, %v2077
      %v2079 = vpop.f32.mrb[0].mxu0
      %v2080 = vpop.f32.mrb[0].mxu0
      %v2081 = vadd.f32 0.0, %v2080
      %v2082 = vpop.f32.mrb[0].mxu0
      %2083 = vmatprep.mubr.bf16.mxu0 0
      %2084 = vmatmul.mubr.bf16.gmra.mrb[0].mxu0 %v1974
      %v2085 = vpop.f32.mrb[0].mxu0
      %v2086 = vadd.f32 0.0, %v2085
      %v2087 = vpop.f32.mrb[0].mxu0
      %v2088 = vpop.f32.mrb[0].mxu0
      %v2089 = vadd.f32 0.0, %v2088
      %v2090 = vpop.f32.mrb[0].mxu0
      %2091 = vdwg.mxu0
      %v2092 = vadd.f32 %v1931, %v2062
      %v2093 = vadd.f32 %v1932, %v2065
      %v2094 = vadd.f32 %v1933, %v2070
      %v2095 = vadd.f32 %v1934, %v2073
      %v2096 = vadd.f32 %v1935, %v2078
      %v2097 = vadd.f32 %v1936, %v2081
      %v2098 = vadd.f32 %v1937, %v2086
      %v2099 = vadd.f32 %v1938, %v2089
      %2100 = vst [vmem:[#allocation4] sm:$0xff] %v2092
      %2101 = vst [vmem:[#allocation4 + $0x8] sm:$0xff] %v2093
      %2102 = vst [vmem:[#allocation4 + $0x10] sm:$0xff] %v2094
      %2103 = vst [vmem:[#allocation4 + $0x18] sm:$0xff] %v2095
      %2104 = vst [vmem:[#allocation4 + $0x20] sm:$0xff] %v2096
      %2105 = vst [vmem:[#allocation4 + $0x28] sm:$0xff] %v2097
      %2106 = vst [vmem:[#allocation4 + $0x30] sm:$0xff] %v2098
      %2107 = vst [vmem:[#allocation4 + $0x38] sm:$0xff] %v2099
      %v2108 = vld [vmem:[#allocation3] sm:$0xf]
      %v2109 = vld [vmem:[#allocation3 + $0x4] sm:$0x1]
      %v2110 = vld [vmem:[#allocation3 + $0x8] sm:$0xf]
      %v2111 = vld [vmem:[#allocation3 + $0xc] sm:$0x1]
      %v2112 = vld [vmem:[#allocation3 + $0x10] sm:$0xf]
      %v2113 = vld [vmem:[#allocation3 + $0x14] sm:$0x1]
      %v2114 = vld [vmem:[#allocation3 + $0x18] sm:$0xf]
      %v2115 = vld [vmem:[#allocation3 + $0x1c] sm:$0x1]
      %v2116 = vld [vmem:[#allocation3 + $0x20] sm:$0xf]
      %v2117 = vld [vmem:[#allocation3 + $0x24] sm:$0x1]
      %v2118 = vld [vmem:[#allocation3 + $0x28] sm:$0xf]
      %v2119 = vld [vmem:[#allocation3 + $0x2c] sm:$0x1]
      %v2120 = vld [vmem:[#allocation3 + $0x30] sm:$0xf]
      %v2121 = vld [vmem:[#allocation3 + $0x34] sm:$0x1]
      %v2122 = vld [vmem:[#allocation3 + $0x38] sm:$0xf]
      %v2123 = vld [vmem:[#allocation3 + $0x3c] sm:$0x1]
      %v2125 = vshrl.u32 %v2108, 16
      %v2127 = vrot.slane %v2125, 4
      %v2128 = vshll.u32 %v2108, 16
      %v2130 = vrot.slane %v2128, 5
      %v2131 = vor.u32 %v2127, %v2130
      %v2132 = vrot.slane %v2131, 4
      %v2134 = vshll.u32 %v2109, 16
      %v2136 = vrot.slane %v2134, 5
      %v2137 = vsel %vm746, %v2132, %v2136
      %v2139 = vshrl.u32 %v2110, 16
      %v2141 = vrot.slane %v2139, 4
      %v2142 = vshll.u32 %v2110, 16
      %v2144 = vrot.slane %v2142, 5
      %v2145 = vor.u32 %v2141, %v2144
      %v2146 = vrot.slane %v2145, 4
      %v2148 = vshll.u32 %v2111, 16
      %v2150 = vrot.slane %v2148, 5
      %v2151 = vsel %vm746, %v2146, %v2150
      %v2153 = vshrl.u32 %v2112, 16
      %v2155 = vrot.slane %v2153, 4
      %v2156 = vshll.u32 %v2112, 16
      %v2158 = vrot.slane %v2156, 5
      %v2159 = vor.u32 %v2155, %v2158
      %v2160 = vrot.slane %v2159, 4
      %v2162 = vshll.u32 %v2113, 16
      %v2164 = vrot.slane %v2162, 5
      %v2165 = vsel %vm746, %v2160, %v2164
      %v2167 = vshrl.u32 %v2114, 16
      %v2169 = vrot.slane %v2167, 4
      %v2170 = vshll.u32 %v2114, 16
      %v2172 = vrot.slane %v2170, 5
      %v2173 = vor.u32 %v2169, %v2172
      %v2174 = vrot.slane %v2173, 4
      %v2176 = vshll.u32 %v2115, 16
      %v2178 = vrot.slane %v2176, 5
      %v2179 = vsel %vm746, %v2174, %v2178
      %v2181 = vshrl.u32 %v2116, 16
      %v2183 = vrot.slane %v2181, 4
      %v2184 = vshll.u32 %v2116, 16
      %v2186 = vrot.slane %v2184, 5
      %v2187 = vor.u32 %v2183, %v2186
      %v2188 = vrot.slane %v2187, 4
      %v2190 = vshll.u32 %v2117, 16
      %v2192 = vrot.slane %v2190, 5
      %v2193 = vsel %vm746, %v2188, %v2192
      %v2195 = vshrl.u32 %v2118, 16
      %v2197 = vrot.slane %v2195, 4
      %v2198 = vshll.u32 %v2118, 16
      %v2200 = vrot.slane %v2198, 5
      %v2201 = vor.u32 %v2197, %v2200
      %v2202 = vrot.slane %v2201, 4
      %v2204 = vshll.u32 %v2119, 16
      %v2206 = vrot.slane %v2204, 5
      %v2207 = vsel %vm746, %v2202, %v2206
      %v2209 = vshrl.u32 %v2120, 16
      %v2211 = vrot.slane %v2209, 4
      %v2212 = vshll.u32 %v2120, 16
      %v2214 = vrot.slane %v2212, 5
      %v2215 = vor.u32 %v2211, %v2214
      %v2216 = vrot.slane %v2215, 4
      %v2218 = vshll.u32 %v2121, 16
      %v2220 = vrot.slane %v2218, 5
      %v2221 = vsel %vm746, %v2216, %v2220
      %v2223 = vshrl.u32 %v2122, 16
      %v2225 = vrot.slane %v2223, 4
      %v2226 = vshll.u32 %v2122, 16
      %v2228 = vrot.slane %v2226, 5
      %v2229 = vor.u32 %v2225, %v2228
      %v2230 = vrot.slane %v2229, 4
      %v2232 = vshll.u32 %v2123, 16
      %v2234 = vrot.slane %v2232, 5
      %v2235 = vsel %vm746, %v2230, %v2234
      %v2236 = vld [vmem:[#allocation4] sm:$0xff]
      %v2237 = vld [vmem:[#allocation4 + $0x8] sm:$0xff]
      %v2238 = vld [vmem:[#allocation4 + $0x10] sm:$0xff]
      %v2239 = vld [vmem:[#allocation4 + $0x18] sm:$0xff]
      %v2240 = vld [vmem:[#allocation4 + $0x20] sm:$0xff]
      %v2241 = vld [vmem:[#allocation4 + $0x28] sm:$0xff]
      %v2242 = vld [vmem:[#allocation4 + $0x30] sm:$0xff]
      %v2243 = vld [vmem:[#allocation4 + $0x38] sm:$0xff]
      %s2244 = scalar_lea.vmem %s6, 64
      %v2245 = vld [vmem:[%s2244] sm:$0xf]
      %v2246 = vld [vmem:[%s2244 + $0x4] sm:$0xf]
      %v2247 = vld [vmem:[%s2244 + $0x8] sm:$0xf]
      %v2248 = vld [vmem:[%s2244 + $0xc] sm:$0xf]
      %v2249 = vld [vmem:[%s2244 + $0x10] sm:$0xf]
      %v2250 = vld [vmem:[%s2244 + $0x14] sm:$0xf]
      %v2251 = vld [vmem:[%s2244 + $0x18] sm:$0xf]
      %v2252 = vld [vmem:[%s2244 + $0x1c] sm:$0xf]
      %v2253 = vld [vmem:[%s2244 + $0x20] sm:$0xf]
      %v2254 = vld [vmem:[%s2244 + $0x24] sm:$0xf]
      %v2255 = vld [vmem:[%s2244 + $0x28] sm:$0xf]
      %v2256 = vld [vmem:[%s2244 + $0x2c] sm:$0xf]
      %v2257 = vld [vmem:[%s2244 + $0x30] sm:$0xf]
      %v2258 = vld [vmem:[%s2244 + $0x34] sm:$0xf]
      %v2259 = vld [vmem:[%s2244 + $0x38] sm:$0xf]
      %v2260 = vld [vmem:[%s2244 + $0x3c] sm:$0xf]
      %v2261 = vunpack.c.l.b16 %v2137
      %v2262 = vunpack.c.l.b16 %v2151
      %v2263 = vunpack.c.l.b16 %v2165
      %v2264 = vunpack.c.l.b16 %v2179
      %v2265 = vunpack.c.l.b16 %v2193
      %v2266 = vunpack.c.l.b16 %v2207
      %v2267 = vunpack.c.l.b16 %v2221
      %v2268 = vunpack.c.l.b16 %v2235
      %v2269 = vpack.c.b16 %v2262, %v2261
      %v2270 = vpack.c.b16 %v2264, %v2263
      %v2271 = vpack.c.b16 %v2266, %v2265
      %v2272 = vpack.c.b16 %v2268, %v2267
      %v2293 = vunpack.c.l.b16 %v2245
      %v2294 = vunpack.c.l.b16 %v2246
      %v2295 = vunpack.c.l.b16 %v2247
      %v2296 = vunpack.c.l.b16 %v2248
      %v2297 = vunpack.c.l.b16 %v2249
      %v2298 = vunpack.c.l.b16 %v2250
      %v2299 = vunpack.c.l.b16 %v2251
      %v2300 = vunpack.c.l.b16 %v2252
      %v2301 = vunpack.c.l.b16 %v2253
      %v2302 = vunpack.c.l.b16 %v2254
      %v2303 = vunpack.c.l.b16 %v2255
      %v2304 = vunpack.c.l.b16 %v2256
      %v2305 = vunpack.c.l.b16 %v2257
      %v2306 = vunpack.c.l.b16 %v2258
      %v2307 = vunpack.c.l.b16 %v2259
      %v2308 = vunpack.c.l.b16 %v2260
      %v2309 = vpack.c.b16 %v2294, %v2293
      %v2310 = vpack.c.b16 %v2296, %v2295
      %v2311 = vpack.c.b16 %v2298, %v2297
      %v2312 = vpack.c.b16 %v2300, %v2299
      %v2313 = vpack.c.b16 %v2302, %v2301
      %v2314 = vpack.c.b16 %v2304, %v2303
      %v2315 = vpack.c.b16 %v2306, %v2305
      %v2316 = vpack.c.b16 %v2308, %v2307
      %2325 = vmatprep.subr.bf16.mxu0 0
      %2326 = vmatpush1.bf16.msra.mxu0 %v2309
      %2327 = vmatprep.subr.bf16.mxu0 0
      %2328 = vmatpush1.bf16.msra.mxu0 %v2310
      %2329 = vmatprep.subr.bf16.mxu0 0
      %2330 = vmatpush1.bf16.msra.mxu0 %v2311
      %2331 = vmatprep.subr.bf16.mxu0 0
      %2332 = vmatpush1.bf16.msra.mxu0 %v2312
      %2333 = vmatprep.subr.bf16.mxu0 0
      %2334 = vmatpush1.bf16.msra.mxu0 %v2313
      %2335 = vmatprep.subr.bf16.mxu0 0
      %2336 = vmatpush1.bf16.msra.mxu0 %v2314
      %2337 = vmatprep.subr.bf16.mxu0 0
      %2338 = vmatpush1.bf16.msra.mxu0 %v2315
      %2339 = vmatprep.subr.bf16.mxu0 0
      %2340 = vmatpush1.bf16.msra.mxu0 %v2316
      %2341 = vmatprep.subr.bf16.mxu0 0
      %2342 = vmatpush1.bf16.msra.mxu0 0
      %2343 = vmatprep.subr.bf16.mxu0 0
      %2344 = vmatpush1.bf16.msra.mxu0 0
      %2345 = vmatprep.subr.bf16.mxu0 0
      %2346 = vmatpush1.bf16.msra.mxu0 0
      %2347 = vmatprep.subr.bf16.mxu0 0
      %2348 = vmatpush1.bf16.msra.mxu0 0
      %2349 = vmatprep.subr.bf16.mxu0 0
      %2350 = vmatpush1.bf16.msra.mxu0 0
      %2351 = vmatprep.subr.bf16.mxu0 0
      %2352 = vmatpush1.bf16.msra.mxu0 0
      %2353 = vmatprep.subr.bf16.mxu0 0
      %2354 = vmatpush1.bf16.msra.mxu0 0
      %2355 = vmatprep.subr.bf16.mxu0 0
      %2356 = vmatpush1.bf16.msra.mxu0 0
      %2357 = vmatprep.mubr.bf16.mxu0 0
      %2358 = vmatmul.mubr.bf16.gmra.mrb[0].mxu0 %v2269
      %v2359 = vpop.f32.mrb[0].mxu0
      %v2360 = vadd.f32 0.0, %v2359
      %v2361 = vpop.f32.mrb[0].mxu0
      %v2362 = vpop.f32.mrb[0].mxu0
      %v2363 = vadd.f32 0.0, %v2362
      %v2364 = vpop.f32.mrb[0].mxu0
      %2365 = vmatprep.mubr.bf16.mxu0 0
      %2366 = vmatmul.mubr.bf16.gmra.mrb[0].mxu0 %v2270
      %v2367 = vpop.f32.mrb[0].mxu0
      %v2368 = vadd.f32 0.0, %v2367
      %v2369 = vpop.f32.mrb[0].mxu0
      %v2370 = vpop.f32.mrb[0].mxu0
      %v2371 = vadd.f32 0.0, %v2370
      %v2372 = vpop.f32.mrb[0].mxu0
      %2373 = vmatprep.mubr.bf16.mxu0 0
      %2374 = vmatmul.mubr.bf16.gmra.mrb[0].mxu0 %v2271
      %v2375 = vpop.f32.mrb[0].mxu0
      %v2376 = vadd.f32 0.0, %v2375
      %v2377 = vpop.f32.mrb[0].mxu0
      %v2378 = vpop.f32.mrb[0].mxu0
      %v2379 = vadd.f32 0.0, %v2378
      %v2380 = vpop.f32.mrb[0].mxu0
      %2381 = vmatprep.mubr.bf16.mxu0 0
      %2382 = vmatmul.mubr.bf16.gmra.mrb[0].mxu0 %v2272
      %v2383 = vpop.f32.mrb[0].mxu0
      %v2384 = vadd.f32 0.0, %v2383
      %v2385 = vpop.f32.mrb[0].mxu0
      %v2386 = vpop.f32.mrb[0].mxu0
      %v2387 = vadd.f32 0.0, %v2386
      %v2388 = vpop.f32.mrb[0].mxu0
      %2389 = vdwg.mxu0
      %v2390 = vadd.f32 %v2236, %v2360
      %v2391 = vadd.f32 %v2237, %v2363
      %v2392 = vadd.f32 %v2238, %v2368
      %v2393 = vadd.f32 %v2239, %v2371
      %v2394 = vadd.f32 %v2240, %v2376
      %v2395 = vadd.f32 %v2241, %v2379
      %v2396 = vadd.f32 %v2242, %v2384
      %v2397 = vadd.f32 %v2243, %v2387
      %2398 = vst [vmem:[#allocation4] sm:$0xff] %v2390
      %2399 = vst [vmem:[#allocation4 + $0x8] sm:$0xff] %v2391
      %2400 = vst [vmem:[#allocation4 + $0x10] sm:$0xff] %v2392
      %2401 = vst [vmem:[#allocation4 + $0x18] sm:$0xff] %v2393
      %2402 = vst [vmem:[#allocation4 + $0x20] sm:$0xff] %v2394
      %2403 = vst [vmem:[#allocation4 + $0x28] sm:$0xff] %v2395
      %2404 = vst [vmem:[#allocation4 + $0x30] sm:$0xff] %v2396
      %2405 = vst [vmem:[#allocation4 + $0x38] sm:$0xff] %v2397
      %v2406 = vld [vmem:[#allocation3] sm:$0xe]
      %v2407 = vld [vmem:[#allocation3 + $0x4] sm:$0x1]
      %v2408 = vld [vmem:[#allocation3 + $0x8] sm:$0xe]
      %v2409 = vld [vmem:[#allocation3 + $0xc] sm:$0x1]
      %v2410 = vld [vmem:[#allocation3 + $0x10] sm:$0xe]
      %v2411 = vld [vmem:[#allocation3 + $0x14] sm:$0x1]
      %v2412 = vld [vmem:[#allocation3 + $0x18] sm:$0xe]
      %v2413 = vld [vmem:[#allocation3 + $0x1c] sm:$0x1]
      %v2414 = vld [vmem:[#allocation3 + $0x20] sm:$0xe]
      %v2415 = vld [vmem:[#allocation3 + $0x24] sm:$0x1]
      %v2416 = vld [vmem:[#allocation3 + $0x28] sm:$0xe]
      %v2417 = vld [vmem:[#allocation3 + $0x2c] sm:$0x1]
      %v2418 = vld [vmem:[#allocation3 + $0x30] sm:$0xe]
      %v2419 = vld [vmem:[#allocation3 + $0x34] sm:$0x1]
      %v2420 = vld [vmem:[#allocation3 + $0x38] sm:$0xe]
      %v2421 = vld [vmem:[#allocation3 + $0x3c] sm:$0x1]
      %vm2438 = vcmask 1042432
      %vm2439 = vcmask 1046532
      %vm2440 = vmor %vm2438, %vm2439
      %v2441 = vrot.slane %v2406, 5
      %v2442 = vrot.slane %v2441, 4
      %v2443 = vrot.slane %v2407, 5
      %v2444 = vsel %vm2440, %v2442, %v2443
      %v2445 = vrot.slane %v2408, 5
      %v2446 = vrot.slane %v2445, 4
      %v2447 = vrot.slane %v2409, 5
      %v2448 = vsel %vm2440, %v2446, %v2447
      %v2449 = vrot.slane %v2410, 5
      %v2450 = vrot.slane %v2449, 4
      %v2451 = vrot.slane %v2411, 5
      %v2452 = vsel %vm2440, %v2450, %v2451
      %v2453 = vrot.slane %v2412, 5
      %v2454 = vrot.slane %v2453, 4
      %v2455 = vrot.slane %v2413, 5
      %v2456 = vsel %vm2440, %v2454, %v2455
      %v2457 = vrot.slane %v2414, 5
      %v2458 = vrot.slane %v2457, 4
      %v2459 = vrot.slane %v2415, 5
      %v2460 = vsel %vm2440, %v2458, %v2459
      %v2461 = vrot.slane %v2416, 5
      %v2462 = vrot.slane %v2461, 4
      %v2463 = vrot.slane %v2417, 5
      %v2464 = vsel %vm2440, %v2462, %v2463
      %v2465 = vrot.slane %v2418, 5
      %v2466 = vrot.slane %v2465, 4
      %v2467 = vrot.slane %v2419, 5
      %v2468 = vsel %vm2440, %v2466, %v2467
      %v2469 = vrot.slane %v2420, 5
      %v2470 = vrot.slane %v2469, 4
      %v2471 = vrot.slane %v2421, 5
      %v2472 = vsel %vm2440, %v2470, %v2471
      %v2473 = vld [vmem:[#allocation4] sm:$0xff]
      %v2474 = vld [vmem:[#allocation4 + $0x8] sm:$0xff]
      %v2475 = vld [vmem:[#allocation4 + $0x10] sm:$0xff]
      %v2476 = vld [vmem:[#allocation4 + $0x18] sm:$0xff]
      %v2477 = vld [vmem:[#allocation4 + $0x20] sm:$0xff]
      %v2478 = vld [vmem:[#allocation4 + $0x28] sm:$0xff]
      %v2479 = vld [vmem:[#allocation4 + $0x30] sm:$0xff]
      %v2480 = vld [vmem:[#allocation4 + $0x38] sm:$0xff]
      %s2481 = scalar_lea.vmem %s6, 128
      %v2482 = vld [vmem:[%s2481] sm:$0xf]
      %v2483 = vld [vmem:[%s2481 + $0x4] sm:$0xf]
      %v2484 = vld [vmem:[%s2481 + $0x8] sm:$0xf]
      %v2485 = vld [vmem:[%s2481 + $0xc] sm:$0xf]
      %v2486 = vld [vmem:[%s2481 + $0x10] sm:$0xf]
      %v2487 = vld [vmem:[%s2481 + $0x14] sm:$0xf]
      %v2488 = vld [vmem:[%s2481 + $0x18] sm:$0xf]
      %v2489 = vld [vmem:[%s2481 + $0x1c] sm:$0xf]
      %v2490 = vld [vmem:[%s2481 + $0x20] sm:$0xf]
      %v2491 = vld [vmem:[%s2481 + $0x24] sm:$0xf]
      %v2492 = vld [vmem:[%s2481 + $0x28] sm:$0xf]
      %v2493 = vld [vmem:[%s2481 + $0x2c] sm:$0xf]
      %v2494 = vld [vmem:[%s2481 + $0x30] sm:$0xf]
      %v2495 = vld [vmem:[%s2481 + $0x34] sm:$0xf]
      %v2496 = vld [vmem:[%s2481 + $0x38] sm:$0xf]
      %v2497 = vld [vmem:[%s2481 + $0x3c] sm:$0xf]
      %v2498 = vunpack.c.l.b16 %v2444
      %v2499 = vunpack.c.l.b16 %v2448
      %v2500 = vunpack.c.l.b16 %v2452
      %v2501 = vunpack.c.l.b16 %v2456
      %v2502 = vunpack.c.l.b16 %v2460
      %v2503 = vunpack.c.l.b16 %v2464
      %v2504 = vunpack.c.l.b16 %v2468
      %v2505 = vunpack.c.l.b16 %v2472
      %v2506 = vpack.c.b16 %v2499, %v2498
      %v2507 = vpack.c.b16 %v2501, %v2500
      %v2508 = vpack.c.b16 %v2503, %v2502
      %v2509 = vpack.c.b16 %v2505, %v2504
      %v2530 = vunpack.c.l.b16 %v2482
      %v2531 = vunpack.c.l.b16 %v2483
      %v2532 = vunpack.c.l.b16 %v2484
      %v2533 = vunpack.c.l.b16 %v2485
      %v2534 = vunpack.c.l.b16 %v2486
      %v2535 = vunpack.c.l.b16 %v2487
      %v2536 = vunpack.c.l.b16 %v2488
      %v2537 = vunpack.c.l.b16 %v2489
      %v2538 = vunpack.c.l.b16 %v2490
      %v2539 = vunpack.c.l.b16 %v2491
      %v2540 = vunpack.c.l.b16 %v2492
      %v2541 = vunpack.c.l.b16 %v2493
      %v2542 = vunpack.c.l.b16 %v2494
      %v2543 = vunpack.c.l.b16 %v2495
      %v2544 = vunpack.c.l.b16 %v2496
      %v2545 = vunpack.c.l.b16 %v2497
      %v2546 = vpack.c.b16 %v2531, %v2530
      %v2547 = vpack.c.b16 %v2533, %v2532
      %v2548 = vpack.c.b16 %v2535, %v2534
      %v2549 = vpack.c.b16 %v2537, %v2536
      %v2550 = vpack.c.b16 %v2539, %v2538
      %v2551 = vpack.c.b16 %v2541, %v2540
      %v2552 = vpack.c.b16 %v2543, %v2542
      %v2553 = vpack.c.b16 %v2545, %v2544
      %2562 = vmatprep.subr.bf16.mxu0 0
      %2563 = vmatpush1.bf16.msra.mxu0 %v2546
      %2564 = vmatprep.subr.bf16.mxu0 0
      %2565 = vmatpush1.bf16.msra.mxu0 %v2547
      %2566 = vmatprep.subr.bf16.mxu0 0
      %2567 = vmatpush1.bf16.msra.mxu0 %v2548
      %2568 = vmatprep.subr.bf16.mxu0 0
      %2569 = vmatpush1.bf16.msra.mxu0 %v2549
      %2570 = vmatprep.subr.bf16.mxu0 0
      %2571 = vmatpush1.bf16.msra.mxu0 %v2550
      %2572 = vmatprep.subr.bf16.mxu0 0
      %2573 = vmatpush1.bf16.msra.mxu0 %v2551
      %2574 = vmatprep.subr.bf16.mxu0 0
      %2575 = vmatpush1.bf16.msra.mxu0 %v2552
      %2576 = vmatprep.subr.bf16.mxu0 0
      %2577 = vmatpush1.bf16.msra.mxu0 %v2553
      %2578 = vmatprep.subr.bf16.mxu0 0
      %2579 = vmatpush1.bf16.msra.mxu0 0
      %2580 = vmatprep.subr.bf16.mxu0 0
      %2581 = vmatpush1.bf16.msra.mxu0 0
      %2582 = vmatprep.subr.bf16.mxu0 0
      %2583 = vmatpush1.bf16.msra.mxu0 0
      %2584 = vmatprep.subr.bf16.mxu0 0
      %2585 = vmatpush1.bf16.msra.mxu0 0
      %2586 = vmatprep.subr.bf16.mxu0 0
      %2587 = vmatpush1.bf16.msra.mxu0 0
      %2588 = vmatprep.subr.bf16.mxu0 0
      %2589 = vmatpush1.bf16.msra.mxu0 0
      %2590 = vmatprep.subr.bf16.mxu0 0
      %2591 = vmatpush1.bf16.msra.mxu0 0
      %2592 = vmatprep.subr.bf16.mxu0 0
      %2593 = vmatpush1.bf16.msra.mxu0 0
      %2594 = vmatprep.mubr.bf16.mxu0 0
      %2595 = vmatmul.mubr.bf16.gmra.mrb[0].mxu0 %v2506
      %v2596 = vpop.f32.mrb[0].mxu0
      %v2597 = vadd.f32 0.0, %v2596
      %v2598 = vpop.f32.mrb[0].mxu0
      %v2599 = vpop.f32.mrb[0].mxu0
      %v2600 = vadd.f32 0.0, %v2599
      %v2601 = vpop.f32.mrb[0].mxu0
      %2602 = vmatprep.mubr.bf16.mxu0 0
      %2603 = vmatmul.mubr.bf16.gmra.mrb[0].mxu0 %v2507
      %v2604 = vpop.f32.mrb[0].mxu0
      %v2605 = vadd.f32 0.0, %v2604
      %v2606 = vpop.f32.mrb[0].mxu0
      %v2607 = vpop.f32.mrb[0].mxu0
      %v2608 = vadd.f32 0.0, %v2607
      %v2609 = vpop.f32.mrb[0].mxu0
      %2610 = vmatprep.mubr.bf16.mxu0 0
      %2611 = vmatmul.mubr.bf16.gmra.mrb[0].mxu0 %v2508
      %v2612 = vpop.f32.mrb[0].mxu0
      %v2613 = vadd.f32 0.0, %v2612
      %v2614 = vpop.f32.mrb[0].mxu0
      %v2615 = vpop.f32.mrb[0].mxu0
      %v2616 = vadd.f32 0.0, %v2615
      %v2617 = vpop.f32.mrb[0].mxu0
      %2618 = vmatprep.mubr.bf16.mxu0 0
      %2619 = vmatmul.mubr.bf16.gmra.mrb[0].mxu0 %v2509
      %v2620 = vpop.f32.mrb[0].mxu0
      %v2621 = vadd.f32 0.0, %v2620
      %v2622 = vpop.f32.mrb[0].mxu0
      %v2623 = vpop.f32.mrb[0].mxu0
      %v2624 = vadd.f32 0.0, %v2623
      %v2625 = vpop.f32.mrb[0].mxu0
      %2626 = vdwg.mxu0
      %v2627 = vadd.f32 %v2473, %v2597
      %v2628 = vadd.f32 %v2474, %v2600
      %v2629 = vadd.f32 %v2475, %v2605
      %v2630 = vadd.f32 %v2476, %v2608
      %v2631 = vadd.f32 %v2477, %v2613
      %v2632 = vadd.f32 %v2478, %v2616
      %v2633 = vadd.f32 %v2479, %v2621
      %v2634 = vadd.f32 %v2480, %v2624
      %2635 = vst [vmem:[#allocation4] sm:$0xff] %v2627
      %2636 = vst [vmem:[#allocation4 + $0x8] sm:$0xff] %v2628
      %2637 = vst [vmem:[#allocation4 + $0x10] sm:$0xff] %v2629
      %2638 = vst [vmem:[#allocation4 + $0x18] sm:$0xff] %v2630
      %2639 = vst [vmem:[#allocation4 + $0x20] sm:$0xff] %v2631
      %2640 = vst [vmem:[#allocation4 + $0x28] sm:$0xff] %v2632
      %2641 = vst [vmem:[#allocation4 + $0x30] sm:$0xff] %v2633
      %2642 = vst [vmem:[#allocation4 + $0x38] sm:$0xff] %v2634
      %v2643 = vld [vmem:[%s1729] sm:$0xf]
      %v2644 = vld [vmem:[%s1729 + $0x8] sm:$0xf]
      %v2645 = vld [vmem:[%s1729 + $0x10] sm:$0xf]
      %v2646 = vld [vmem:[%s1729 + $0x18] sm:$0xf]
      %v2647 = vld [vmem:[%s1729 + $0x20] sm:$0xf]
      %v2648 = vld [vmem:[%s1729 + $0x28] sm:$0xf]
      %v2649 = vld [vmem:[%s1729 + $0x30] sm:$0xf]
      %v2650 = vld [vmem:[%s1729 + $0x38] sm:$0xf]
      %v2651 = vld [vmem:[#allocation4] sm:$0xff]
      %v2652 = vld [vmem:[#allocation4 + $0x8] sm:$0xff]
      %v2653 = vld [vmem:[#allocation4 + $0x10] sm:$0xff]
      %v2654 = vld [vmem:[#allocation4 + $0x18] sm:$0xff]
      %v2655 = vld [vmem:[#allocation4 + $0x20] sm:$0xff]
      %v2656 = vld [vmem:[#allocation4 + $0x28] sm:$0xff]
      %v2657 = vld [vmem:[#allocation4 + $0x30] sm:$0xff]
      %v2658 = vld [vmem:[#allocation4 + $0x38] sm:$0xff]
      %s2659 = scalar_lea.vmem %s6, 192
      %v2660 = vld [vmem:[%s2659] sm:$0xf]
      %v2661 = vld [vmem:[%s2659 + $0x4] sm:$0xf]
      %v2662 = vld [vmem:[%s2659 + $0x8] sm:$0xf]
      %v2663 = vld [vmem:[%s2659 + $0xc] sm:$0xf]
      %v2664 = vld [vmem:[%s2659 + $0x10] sm:$0xf]
      %v2665 = vld [vmem:[%s2659 + $0x14] sm:$0xf]
      %v2666 = vld [vmem:[%s2659 + $0x18] sm:$0xf]
      %v2667 = vld [vmem:[%s2659 + $0x1c] sm:$0xf]
      %v2668 = vld [vmem:[%s2659 + $0x20] sm:$0xf]
      %v2669 = vld [vmem:[%s2659 + $0x24] sm:$0xf]
      %v2670 = vld [vmem:[%s2659 + $0x28] sm:$0xf]
      %v2671 = vld [vmem:[%s2659 + $0x2c] sm:$0xf]
      %v2672 = vld [vmem:[%s2659 + $0x30] sm:$0xf]
      %v2673 = vld [vmem:[%s2659 + $0x34] sm:$0xf]
      %v2674 = vld [vmem:[%s2659 + $0x38] sm:$0xf]
      %v2675 = vld [vmem:[%s2659 + $0x3c] sm:$0xf]
      %v2684 = vunpack.c.l.b16 %v2643
      %v2685 = vunpack.c.l.b16 %v2644
      %v2686 = vunpack.c.l.b16 %v2645
      %v2687 = vunpack.c.l.b16 %v2646
      %v2688 = vunpack.c.l.b16 %v2647
      %v2689 = vunpack.c.l.b16 %v2648
      %v2690 = vunpack.c.l.b16 %v2649
      %v2691 = vunpack.c.l.b16 %v2650
      %v2692 = vpack.c.b16 %v2685, %v2684
      %v2693 = vpack.c.b16 %v2687, %v2686
      %v2694 = vpack.c.b16 %v2689, %v2688
      %v2695 = vpack.c.b16 %v2691, %v2690
      %v2716 = vunpack.c.l.b16 %v2660
      %v2717 = vunpack.c.l.b16 %v2661
      %v2718 = vunpack.c.l.b16 %v2662
      %v2719 = vunpack.c.l.b16 %v2663
      %v2720 = vunpack.c.l.b16 %v2664
      %v2721 = vunpack.c.l.b16 %v2665
      %v2722 = vunpack.c.l.b16 %v2666
      %v2723 = vunpack.c.l.b16 %v2667
      %v2724 = vunpack.c.l.b16 %v2668
      %v2725 = vunpack.c.l.b16 %v2669
      %v2726 = vunpack.c.l.b16 %v2670
      %v2727 = vunpack.c.l.b16 %v2671
      %v2728 = vunpack.c.l.b16 %v2672
      %v2729 = vunpack.c.l.b16 %v2673
      %v2730 = vunpack.c.l.b16 %v2674
      %v2731 = vunpack.c.l.b16 %v2675
      %v2732 = vpack.c.b16 %v2717, %v2716
      %v2733 = vpack.c.b16 %v2719, %v2718
      %v2734 = vpack.c.b16 %v2721, %v2720
      %v2735 = vpack.c.b16 %v2723, %v2722
      %v2736 = vpack.c.b16 %v2725, %v2724
      %v2737 = vpack.c.b16 %v2727, %v2726
      %v2738 = vpack.c.b16 %v2729, %v2728
      %v2739 = vpack.c.b16 %v2731, %v2730
      %2748 = vmatprep.subr.bf16.mxu0 0
      %2749 = vmatpush1.bf16.msra.mxu0 %v2732
      %2750 = vmatprep.subr.bf16.mxu0 0
      %2751 = vmatpush1.bf16.msra.mxu0 %v2733
      %2752 = vmatprep.subr.bf16.mxu0 0
      %2753 = vmatpush1.bf16.msra.mxu0 %v2734
      %2754 = vmatprep.subr.bf16.mxu0 0
      %2755 = vmatpush1.bf16.msra.mxu0 %v2735
      %2756 = vmatprep.subr.bf16.mxu0 0
      %2757 = vmatpush1.bf16.msra.mxu0 %v2736
      %2758 = vmatprep.subr.bf16.mxu0 0
      %2759 = vmatpush1.bf16.msra.mxu0 %v2737
      %2760 = vmatprep.subr.bf16.mxu0 0
      %2761 = vmatpush1.bf16.msra.mxu0 %v2738
      %2762 = vmatprep.subr.bf16.mxu0 0
      %2763 = vmatpush1.bf16.msra.mxu0 %v2739
      %2764 = vmatprep.subr.bf16.mxu0 0
      %2765 = vmatpush1.bf16.msra.mxu0 0
      %2766 = vmatprep.subr.bf16.mxu0 0
      %2767 = vmatpush1.bf16.msra.mxu0 0
      %2768 = vmatprep.subr.bf16.mxu0 0
      %2769 = vmatpush1.bf16.msra.mxu0 0
      %2770 = vmatprep.subr.bf16.mxu0 0
      %2771 = vmatpush1.bf16.msra.mxu0 0
      %2772 = vmatprep.subr.bf16.mxu0 0
      %2773 = vmatpush1.bf16.msra.mxu0 0
      %2774 = vmatprep.subr.bf16.mxu0 0
      %2775 = vmatpush1.bf16.msra.mxu0 0
      %2776 = vmatprep.subr.bf16.mxu0 0
      %2777 = vmatpush1.bf16.msra.mxu0 0
      %2778 = vmatprep.subr.bf16.mxu0 0
      %2779 = vmatpush1.bf16.msra.mxu0 0
      %2780 = vmatprep.mubr.bf16.mxu0 0
      %2781 = vmatmul.mubr.bf16.gmra.mrb[0].mxu0 %v2692
      %v2782 = vpop.f32.mrb[0].mxu0
      %v2783 = vadd.f32 0.0, %v2782
      %v2784 = vpop.f32.mrb[0].mxu0
      %v2785 = vpop.f32.mrb[0].mxu0
      %v2786 = vadd.f32 0.0, %v2785
      %v2787 = vpop.f32.mrb[0].mxu0
      %2788 = vmatprep.mubr.bf16.mxu0 0
      %2789 = vmatmul.mubr.bf16.gmra.mrb[0].mxu0 %v2693
      %v2790 = vpop.f32.mrb[0].mxu0
      %v2791 = vadd.f32 0.0, %v2790
      %v2792 = vpop.f32.mrb[0].mxu0
      %v2793 = vpop.f32.mrb[0].mxu0
      %v2794 = vadd.f32 0.0, %v2793
      %v2795 = vpop.f32.mrb[0].mxu0
      %2796 = vmatprep.mubr.bf16.mxu0 0
      %2797 = vmatmul.mubr.bf16.gmra.mrb[0].mxu0 %v2694
      %v2798 = vpop.f32.mrb[0].mxu0
      %v2799 = vadd.f32 0.0, %v2798
      %v2800 = vpop.f32.mrb[0].mxu0
      %v2801 = vpop.f32.mrb[0].mxu0
      %v2802 = vadd.f32 0.0, %v2801
      %v2803 = vpop.f32.mrb[0].mxu0
      %2804 = vmatprep.mubr.bf16.mxu0 0
      %2805 = vmatmul.mubr.bf16.gmra.mrb[0].mxu0 %v2695
      %v2806 = vpop.f32.mrb[0].mxu0
      %v2807 = vadd.f32 0.0, %v2806
      %v2808 = vpop.f32.mrb[0].mxu0
      %v2809 = vpop.f32.mrb[0].mxu0
      %v2810 = vadd.f32 0.0, %v2809
      %v2811 = vpop.f32.mrb[0].mxu0
      %2812 = vdwg.mxu0
      %v2813 = vadd.f32 %v2651, %v2783
      %v2814 = vadd.f32 %v2652, %v2786
      %v2815 = vadd.f32 %v2653, %v2791
      %v2816 = vadd.f32 %v2654, %v2794
      %v2817 = vadd.f32 %v2655, %v2799
      %v2818 = vadd.f32 %v2656, %v2802
      %v2819 = vadd.f32 %v2657, %v2807
      %v2820 = vadd.f32 %v2658, %v2810
      %2821 = vst [vmem:[#allocation4] sm:$0xff] %v2813
      %2822 = vst [vmem:[#allocation4 + $0x8] sm:$0xff] %v2814
      %2823 = vst [vmem:[#allocation4 + $0x10] sm:$0xff] %v2815
      %2824 = vst [vmem:[#allocation4 + $0x18] sm:$0xff] %v2816
      %2825 = vst [vmem:[#allocation4 + $0x20] sm:$0xff] %v2817
      %2826 = vst [vmem:[#allocation4 + $0x28] sm:$0xff] %v2818
      %2827 = vst [vmem:[#allocation4 + $0x30] sm:$0xff] %v2819
      %2828 = vst [vmem:[#allocation4 + $0x38] sm:$0xff] %v2820
      %v2829 = vld [vmem:[%s1729] sm:$0xf]
      %v2830 = vld [vmem:[%s1729 + $0x4] sm:$0x1]
      %v2831 = vld [vmem:[%s1729 + $0x8] sm:$0xf]
      %v2832 = vld [vmem:[%s1729 + $0xc] sm:$0x1]
      %v2833 = vld [vmem:[%s1729 + $0x10] sm:$0xf]
      %v2834 = vld [vmem:[%s1729 + $0x14] sm:$0x1]
      %v2835 = vld [vmem:[%s1729 + $0x18] sm:$0xf]
      %v2836 = vld [vmem:[%s1729 + $0x1c] sm:$0x1]
      %v2837 = vld [vmem:[%s1729 + $0x20] sm:$0xf]
      %v2838 = vld [vmem:[%s1729 + $0x24] sm:$0x1]
      %v2839 = vld [vmem:[%s1729 + $0x28] sm:$0xf]
      %v2840 = vld [vmem:[%s1729 + $0x2c] sm:$0x1]
      %v2841 = vld [vmem:[%s1729 + $0x30] sm:$0xf]
      %v2842 = vld [vmem:[%s1729 + $0x34] sm:$0x1]
      %v2843 = vld [vmem:[%s1729 + $0x38] sm:$0xf]
      %v2844 = vld [vmem:[%s1729 + $0x3c] sm:$0x1]
      %v2846 = vshrl.u32 %v2829, 16
      %v2848 = vrot.slane %v2846, 4
      %v2849 = vshll.u32 %v2829, 16
      %v2851 = vrot.slane %v2849, 5
      %v2852 = vor.u32 %v2848, %v2851
      %v2853 = vrot.slane %v2852, 4
      %v2855 = vshll.u32 %v2830, 16
      %v2857 = vrot.slane %v2855, 5
      %v2858 = vsel %vm746, %v2853, %v2857
      %v2860 = vshrl.u32 %v2831, 16
      %v2862 = vrot.slane %v2860, 4
      %v2863 = vshll.u32 %v2831, 16
      %v2865 = vrot.slane %v2863, 5
      %v2866 = vor.u32 %v2862, %v2865
      %v2867 = vrot.slane %v2866, 4
      %v2869 = vshll.u32 %v2832, 16
      %v2871 = vrot.slane %v2869, 5
      %v2872 = vsel %vm746, %v2867, %v2871
      %v2874 = vshrl.u32 %v2833, 16
      %v2876 = vrot.slane %v2874, 4
      %v2877 = vshll.u32 %v2833, 16
      %v2879 = vrot.slane %v2877, 5
      %v2880 = vor.u32 %v2876, %v2879
      %v2881 = vrot.slane %v2880, 4
      %v2883 = vshll.u32 %v2834, 16
      %v2885 = vrot.slane %v2883, 5
      %v2886 = vsel %vm746, %v2881, %v2885
      %v2888 = vshrl.u32 %v2835, 16
      %v2890 = vrot.slane %v2888, 4
      %v2891 = vshll.u32 %v2835, 16
      %v2893 = vrot.slane %v2891, 5
      %v2894 = vor.u32 %v2890, %v2893
      %v2895 = vrot.slane %v2894, 4
      %v2897 = vshll.u32 %v2836, 16
      %v2899 = vrot.slane %v2897, 5
      %v2900 = vsel %vm746, %v2895, %v2899
      %v2902 = vshrl.u32 %v2837, 16
      %v2904 = vrot.slane %v2902, 4
      %v2905 = vshll.u32 %v2837, 16
      %v2907 = vrot.slane %v2905, 5
      %v2908 = vor.u32 %v2904, %v2907
      %v2909 = vrot.slane %v2908, 4
      %v2911 = vshll.u32 %v2838, 16
      %v2913 = vrot.slane %v2911, 5
      %v2914 = vsel %vm746, %v2909, %v2913
      %v2916 = vshrl.u32 %v2839, 16
      %v2918 = vrot.slane %v2916, 4
      %v2919 = vshll.u32 %v2839, 16
      %v2921 = vrot.slane %v2919, 5
      %v2922 = vor.u32 %v2918, %v2921
      %v2923 = vrot.slane %v2922, 4
      %v2925 = vshll.u32 %v2840, 16
      %v2927 = vrot.slane %v2925, 5
      %v2928 = vsel %vm746, %v2923, %v2927
      %v2930 = vshrl.u32 %v2841, 16
      %v2932 = vrot.slane %v2930, 4
      %v2933 = vshll.u32 %v2841, 16
      %v2935 = vrot.slane %v2933, 5
      %v2936 = vor.u32 %v2932, %v2935
      %v2937 = vrot.slane %v2936, 4
      %v2939 = vshll.u32 %v2842, 16
      %v2941 = vrot.slane %v2939, 5
      %v2942 = vsel %vm746, %v2937, %v2941
      %v2944 = vshrl.u32 %v2843, 16
      %v2946 = vrot.slane %v2944, 4
      %v2947 = vshll.u32 %v2843, 16
      %v2949 = vrot.slane %v2947, 5
      %v2950 = vor.u32 %v2946, %v2949
      %v2951 = vrot.slane %v2950, 4
      %v2953 = vshll.u32 %v2844, 16
      %v2955 = vrot.slane %v2953, 5
      %v2956 = vsel %vm746, %v2951, %v2955
      %v2957 = vld [vmem:[#allocation4] sm:$0xff]
      %v2958 = vld [vmem:[#allocation4 + $0x8] sm:$0xff]
      %v2959 = vld [vmem:[#allocation4 + $0x10] sm:$0xff]
      %v2960 = vld [vmem:[#allocation4 + $0x18] sm:$0xff]
      %v2961 = vld [vmem:[#allocation4 + $0x20] sm:$0xff]
      %v2962 = vld [vmem:[#allocation4 + $0x28] sm:$0xff]
      %v2963 = vld [vmem:[#allocation4 + $0x30] sm:$0xff]
      %v2964 = vld [vmem:[#allocation4 + $0x38] sm:$0xff]
      %s2965 = scalar_lea.vmem %s6, 256
      %v2966 = vld [vmem:[%s2965] sm:$0xf]
      %v2967 = vld [vmem:[%s2965 + $0x4] sm:$0xf]
      %v2968 = vld [vmem:[%s2965 + $0x8] sm:$0xf]
      %v2969 = vld [vmem:[%s2965 + $0xc] sm:$0xf]
      %v2970 = vld [vmem:[%s2965 + $0x10] sm:$0xf]
      %v2971 = vld [vmem:[%s2965 + $0x14] sm:$0xf]
      %v2972 = vld [vmem:[%s2965 + $0x18] sm:$0xf]
      %v2973 = vld [vmem:[%s2965 + $0x1c] sm:$0xf]
      %v2974 = vld [vmem:[%s2965 + $0x20] sm:$0xf]
      %v2975 = vld [vmem:[%s2965 + $0x24] sm:$0xf]
      %v2976 = vld [vmem:[%s2965 + $0x28] sm:$0xf]
      %v2977 = vld [vmem:[%s2965 + $0x2c] sm:$0xf]
      %v2978 = vld [vmem:[%s2965 + $0x30] sm:$0xf]
      %v2979 = vld [vmem:[%s2965 + $0x34] sm:$0xf]
      %v2980 = vld [vmem:[%s2965 + $0x38] sm:$0xf]
      %v2981 = vld [vmem:[%s2965 + $0x3c] sm:$0xf]
      %v2982 = vunpack.c.l.b16 %v2858
      %v2983 = vunpack.c.l.b16 %v2872
      %v2984 = vunpack.c.l.b16 %v2886
      %v2985 = vunpack.c.l.b16 %v2900
      %v2986 = vunpack.c.l.b16 %v2914
      %v2987 = vunpack.c.l.b16 %v2928
      %v2988 = vunpack.c.l.b16 %v2942
      %v2989 = vunpack.c.l.b16 %v2956
      %v2990 = vpack.c.b16 %v2983, %v2982
      %v2991 = vpack.c.b16 %v2985, %v2984
      %v2992 = vpack.c.b16 %v2987, %v2986
      %v2993 = vpack.c.b16 %v2989, %v2988
      %v3014 = vunpack.c.l.b16 %v2966
      %v3015 = vunpack.c.l.b16 %v2967
      %v3016 = vunpack.c.l.b16 %v2968
      %v3017 = vunpack.c.l.b16 %v2969
      %v3018 = vunpack.c.l.b16 %v2970
      %v3019 = vunpack.c.l.b16 %v2971
      %v3020 = vunpack.c.l.b16 %v2972
      %v3021 = vunpack.c.l.b16 %v2973
      %v3022 = vunpack.c.l.b16 %v2974
      %v3023 = vunpack.c.l.b16 %v2975
      %v3024 = vunpack.c.l.b16 %v2976
      %v3025 = vunpack.c.l.b16 %v2977
      %v3026 = vunpack.c.l.b16 %v2978
      %v3027 = vunpack.c.l.b16 %v2979
      %v3028 = vunpack.c.l.b16 %v2980
      %v3029 = vunpack.c.l.b16 %v2981
      %v3030 = vpack.c.b16 %v3015, %v3014
      %v3031 = vpack.c.b16 %v3017, %v3016
      %v3032 = vpack.c.b16 %v3019, %v3018
      %v3033 = vpack.c.b16 %v3021, %v3020
      %v3034 = vpack.c.b16 %v3023, %v3022
      %v3035 = vpack.c.b16 %v3025, %v3024
      %v3036 = vpack.c.b16 %v3027, %v3026
      %v3037 = vpack.c.b16 %v3029, %v3028
      %3046 = vmatprep.subr.bf16.mxu0 0
      %3047 = vmatpush1.bf16.msra.mxu0 %v3030
      %3048 = vmatprep.subr.bf16.mxu0 0
      %3049 = vmatpush1.bf16.msra.mxu0 %v3031
      %3050 = vmatprep.subr.bf16.mxu0 0
      %3051 = vmatpush1.bf16.msra.mxu0 %v3032
      %3052 = vmatprep.subr.bf16.mxu0 0
      %3053 = vmatpush1.bf16.msra.mxu0 %v3033
      %3054 = vmatprep.subr.bf16.mxu0 0
      %3055 = vmatpush1.bf16.msra.mxu0 %v3034
      %3056 = vmatprep.subr.bf16.mxu0 0
      %3057 = vmatpush1.bf16.msra.mxu0 %v3035
      %3058 = vmatprep.subr.bf16.mxu0 0
      %3059 = vmatpush1.bf16.msra.mxu0 %v3036
      %3060 = vmatprep.subr.bf16.mxu0 0
      %3061 = vmatpush1.bf16.msra.mxu0 %v3037
      %3062 = vmatprep.subr.bf16.mxu0 0
      %3063 = vmatpush1.bf16.msra.mxu0 0
      %3064 = vmatprep.subr.bf16.mxu0 0
      %3065 = vmatpush1.bf16.msra.mxu0 0
      %3066 = vmatprep.subr.bf16.mxu0 0
      %3067 = vmatpush1.bf16.msra.mxu0 0
      %3068 = vmatprep.subr.bf16.mxu0 0
      %3069 = vmatpush1.bf16.msra.mxu0 0
      %3070 = vmatprep.subr.bf16.mxu0 0
      %3071 = vmatpush1.bf16.msra.mxu0 0
      %3072 = vmatprep.subr.bf16.mxu0 0
      %3073 = vmatpush1.bf16.msra.mxu0 0
      %3074 = vmatprep.subr.bf16.mxu0 0
      %3075 = vmatpush1.bf16.msra.mxu0 0
      %3076 = vmatprep.subr.bf16.mxu0 0
      %3077 = vmatpush1.bf16.msra.mxu0 0
      %3078 = vmatprep.mubr.bf16.mxu0 0
      %3079 = vmatmul.mubr.bf16.gmra.mrb[0].mxu0 %v2990
      %v3080 = vpop.f32.mrb[0].mxu0
      %v3081 = vadd.f32 0.0, %v3080
      %v3082 = vpop.f32.mrb[0].mxu0
      %v3083 = vpop.f32.mrb[0].mxu0
      %v3084 = vadd.f32 0.0, %v3083
      %v3085 = vpop.f32.mrb[0].mxu0
      %3086 = vmatprep.mubr.bf16.mxu0 0
      %3087 = vmatmul.mubr.bf16.gmra.mrb[0].mxu0 %v2991
      %v3088 = vpop.f32.mrb[0].mxu0
      %v3089 = vadd.f32 0.0, %v3088
      %v3090 = vpop.f32.mrb[0].mxu0
      %v3091 = vpop.f32.mrb[0].mxu0
      %v3092 = vadd.f32 0.0, %v3091
      %v3093 = vpop.f32.mrb[0].mxu0
      %3094 = vmatprep.mubr.bf16.mxu0 0
      %3095 = vmatmul.mubr.bf16.gmra.mrb[0].mxu0 %v2992
      %v3096 = vpop.f32.mrb[0].mxu0
      %v3097 = vadd.f32 0.0, %v3096
      %v3098 = vpop.f32.mrb[0].mxu0
      %v3099 = vpop.f32.mrb[0].mxu0
      %v3100 = vadd.f32 0.0, %v3099
      %v3101 = vpop.f32.mrb[0].mxu0
      %3102 = vmatprep.mubr.bf16.mxu0 0
      %3103 = vmatmul.mubr.bf16.gmra.mrb[0].mxu0 %v2993
      %v3104 = vpop.f32.mrb[0].mxu0
      %v3105 = vadd.f32 0.0, %v3104
      %v3106 = vpop.f32.mrb[0].mxu0
      %v3107 = vpop.f32.mrb[0].mxu0
      %v3108 = vadd.f32 0.0, %v3107
      %v3109 = vpop.f32.mrb[0].mxu0
      %3110 = vdwg.mxu0
      %v3111 = vadd.f32 %v2957, %v3081
      %v3112 = vadd.f32 %v2958, %v3084
      %v3113 = vadd.f32 %v2959, %v3089
      %v3114 = vadd.f32 %v2960, %v3092
      %v3115 = vadd.f32 %v2961, %v3097
      %v3116 = vadd.f32 %v2962, %v3100
      %v3117 = vadd.f32 %v2963, %v3105
      %v3118 = vadd.f32 %v2964, %v3108
      %3119 = vst [vmem:[#allocation4] sm:$0xff] %v3111
      %3120 = vst [vmem:[#allocation4 + $0x8] sm:$0xff] %v3112
      %3121 = vst [vmem:[#allocation4 + $0x10] sm:$0xff] %v3113
      %3122 = vst [vmem:[#allocation4 + $0x18] sm:$0xff] %v3114
      %3123 = vst [vmem:[#allocation4 + $0x20] sm:$0xff] %v3115
      %3124 = vst [vmem:[#allocation4 + $0x28] sm:$0xff] %v3116
      %3125 = vst [vmem:[#allocation4 + $0x30] sm:$0xff] %v3117
      %3126 = vst [vmem:[#allocation4 + $0x38] sm:$0xff] %v3118
      %v3127 = vld [vmem:[%s1729] sm:$0xe]
      %v3128 = vld [vmem:[%s1729 + $0x4] sm:$0x1]
      %v3129 = vld [vmem:[%s1729 + $0x8] sm:$0xe]
      %v3130 = vld [vmem:[%s1729 + $0xc] sm:$0x1]
      %v3131 = vld [vmem:[%s1729 + $0x10] sm:$0xe]
      %v3132 = vld [vmem:[%s1729 + $0x14] sm:$0x1]
      %v3133 = vld [vmem:[%s1729 + $0x18] sm:$0xe]
      %v3134 = vld [vmem:[%s1729 + $0x1c] sm:$0x1]
      %v3135 = vld [vmem:[%s1729 + $0x20] sm:$0xe]
      %v3136 = vld [vmem:[%s1729 + $0x24] sm:$0x1]
      %v3137 = vld [vmem:[%s1729 + $0x28] sm:$0xe]
      %v3138 = vld [vmem:[%s1729 + $0x2c] sm:$0x1]
      %v3139 = vld [vmem:[%s1729 + $0x30] sm:$0xe]
      %v3140 = vld [vmem:[%s1729 + $0x34] sm:$0x1]
      %v3141 = vld [vmem:[%s1729 + $0x38] sm:$0xe]
      %v3142 = vld [vmem:[%s1729 + $0x3c] sm:$0x1]
      %v3159 = vrot.slane %v3127, 5
      %v3160 = vrot.slane %v3159, 4
      %v3161 = vrot.slane %v3128, 5
      %v3162 = vsel %vm2440, %v3160, %v3161
      %v3163 = vrot.slane %v3129, 5
      %v3164 = vrot.slane %v3163, 4
      %v3165 = vrot.slane %v3130, 5
      %v3166 = vsel %vm2440, %v3164, %v3165
      %v3167 = vrot.slane %v3131, 5
      %v3168 = vrot.slane %v3167, 4
      %v3169 = vrot.slane %v3132, 5
      %v3170 = vsel %vm2440, %v3168, %v3169
      %v3171 = vrot.slane %v3133, 5
      %v3172 = vrot.slane %v3171, 4
      %v3173 = vrot.slane %v3134, 5
      %v3174 = vsel %vm2440, %v3172, %v3173
      %v3175 = vrot.slane %v3135, 5
      %v3176 = vrot.slane %v3175, 4
      %v3177 = vrot.slane %v3136, 5
      %v3178 = vsel %vm2440, %v3176, %v3177
      %v3179 = vrot.slane %v3137, 5
      %v3180 = vrot.slane %v3179, 4
      %v3181 = vrot.slane %v3138, 5
      %v3182 = vsel %vm2440, %v3180, %v3181
      %v3183 = vrot.slane %v3139, 5
      %v3184 = vrot.slane %v3183, 4
      %v3185 = vrot.slane %v3140, 5
      %v3186 = vsel %vm2440, %v3184, %v3185
      %v3187 = vrot.slane %v3141, 5
      %v3188 = vrot.slane %v3187, 4
      %v3189 = vrot.slane %v3142, 5
      %v3190 = vsel %vm2440, %v3188, %v3189
      %v3191 = vld [vmem:[#allocation4] sm:$0xff]
      %v3192 = vld [vmem:[#allocation4 + $0x8] sm:$0xff]
      %v3193 = vld [vmem:[#allocation4 + $0x10] sm:$0xff]
      %v3194 = vld [vmem:[#allocation4 + $0x18] sm:$0xff]
      %v3195 = vld [vmem:[#allocation4 + $0x20] sm:$0xff]
      %v3196 = vld [vmem:[#allocation4 + $0x28] sm:$0xff]
      %v3197 = vld [vmem:[#allocation4 + $0x30] sm:$0xff]
      %v3198 = vld [vmem:[#allocation4 + $0x38] sm:$0xff]
      %s3199 = scalar_lea.vmem %s6, 320
      %v3200 = vld [vmem:[%s3199] sm:$0xf]
      %v3201 = vld [vmem:[%s3199 + $0x4] sm:$0xf]
      %v3202 = vld [vmem:[%s3199 + $0x8] sm:$0xf]
      %v3203 = vld [vmem:[%s3199 + $0xc] sm:$0xf]
      %v3204 = vld [vmem:[%s3199 + $0x10] sm:$0xf]
      %v3205 = vld [vmem:[%s3199 + $0x14] sm:$0xf]
      %v3206 = vld [vmem:[%s3199 + $0x18] sm:$0xf]
      %v3207 = vld [vmem:[%s3199 + $0x1c] sm:$0xf]
      %v3208 = vld [vmem:[%s3199 + $0x20] sm:$0xf]
      %v3209 = vld [vmem:[%s3199 + $0x24] sm:$0xf]
      %v3210 = vld [vmem:[%s3199 + $0x28] sm:$0xf]
      %v3211 = vld [vmem:[%s3199 + $0x2c] sm:$0xf]
      %v3212 = vld [vmem:[%s3199 + $0x30] sm:$0xf]
      %v3213 = vld [vmem:[%s3199 + $0x34] sm:$0xf]
      %v3214 = vld [vmem:[%s3199 + $0x38] sm:$0xf]
      %v3215 = vld [vmem:[%s3199 + $0x3c] sm:$0xf]
      %v3216 = vunpack.c.l.b16 %v3162
      %v3217 = vunpack.c.l.b16 %v3166
      %v3218 = vunpack.c.l.b16 %v3170
      %v3219 = vunpack.c.l.b16 %v3174
      %v3220 = vunpack.c.l.b16 %v3178
      %v3221 = vunpack.c.l.b16 %v3182
      %v3222 = vunpack.c.l.b16 %v3186
      %v3223 = vunpack.c.l.b16 %v3190
      %v3224 = vpack.c.b16 %v3217, %v3216
      %v3225 = vpack.c.b16 %v3219, %v3218
      %v3226 = vpack.c.b16 %v3221, %v3220
      %v3227 = vpack.c.b16 %v3223, %v3222
      %v3248 = vunpack.c.l.b16 %v3200
      %v3249 = vunpack.c.l.b16 %v3201
      %v3250 = vunpack.c.l.b16 %v3202
      %v3251 = vunpack.c.l.b16 %v3203
      %v3252 = vunpack.c.l.b16 %v3204
      %v3253 = vunpack.c.l.b16 %v3205
      %v3254 = vunpack.c.l.b16 %v3206
      %v3255 = vunpack.c.l.b16 %v3207
      %v3256 = vunpack.c.l.b16 %v3208
      %v3257 = vunpack.c.l.b16 %v3209
      %v3258 = vunpack.c.l.b16 %v3210
      %v3259 = vunpack.c.l.b16 %v3211
      %v3260 = vunpack.c.l.b16 %v3212
      %v3261 = vunpack.c.l.b16 %v3213
      %v3262 = vunpack.c.l.b16 %v3214
      %v3263 = vunpack.c.l.b16 %v3215
      %v3264 = vpack.c.b16 %v3249, %v3248
      %v3265 = vpack.c.b16 %v3251, %v3250
      %v3266 = vpack.c.b16 %v3253, %v3252
      %v3267 = vpack.c.b16 %v3255, %v3254
      %v3268 = vpack.c.b16 %v3257, %v3256
      %v3269 = vpack.c.b16 %v3259, %v3258
      %v3270 = vpack.c.b16 %v3261, %v3260
      %v3271 = vpack.c.b16 %v3263, %v3262
      %3280 = vmatprep.subr.bf16.mxu0 0
      %3281 = vmatpush1.bf16.msra.mxu0 %v3264
      %3282 = vmatprep.subr.bf16.mxu0 0
      %3283 = vmatpush1.bf16.msra.mxu0 %v3265
      %3284 = vmatprep.subr.bf16.mxu0 0
      %3285 = vmatpush1.bf16.msra.mxu0 %v3266
      %3286 = vmatprep.subr.bf16.mxu0 0
      %3287 = vmatpush1.bf16.msra.mxu0 %v3267
      %3288 = vmatprep.subr.bf16.mxu0 0
      %3289 = vmatpush1.bf16.msra.mxu0 %v3268
      %3290 = vmatprep.subr.bf16.mxu0 0
      %3291 = vmatpush1.bf16.msra.mxu0 %v3269
      %3292 = vmatprep.subr.bf16.mxu0 0
      %3293 = vmatpush1.bf16.msra.mxu0 %v3270
      %3294 = vmatprep.subr.bf16.mxu0 0
      %3295 = vmatpush1.bf16.msra.mxu0 %v3271
      %3296 = vmatprep.subr.bf16.mxu0 0
      %3297 = vmatpush1.bf16.msra.mxu0 0
      %3298 = vmatprep.subr.bf16.mxu0 0
      %3299 = vmatpush1.bf16.msra.mxu0 0
      %3300 = vmatprep.subr.bf16.mxu0 0
      %3301 = vmatpush1.bf16.msra.mxu0 0
      %3302 = vmatprep.subr.bf16.mxu0 0
      %3303 = vmatpush1.bf16.msra.mxu0 0
      %3304 = vmatprep.subr.bf16.mxu0 0
      %3305 = vmatpush1.bf16.msra.mxu0 0
      %3306 = vmatprep.subr.bf16.mxu0 0
      %3307 = vmatpush1.bf16.msra.mxu0 0
      %3308 = vmatprep.subr.bf16.mxu0 0
      %3309 = vmatpush1.bf16.msra.mxu0 0
      %3310 = vmatprep.subr.bf16.mxu0 0
      %3311 = vmatpush1.bf16.msra.mxu0 0
      %3312 = vmatprep.mubr.bf16.mxu0 0
      %3313 = vmatmul.mubr.bf16.gmra.mrb[0].mxu0 %v3224
      %v3314 = vpop.f32.mrb[0].mxu0
      %v3315 = vadd.f32 0.0, %v3314
      %v3316 = vpop.f32.mrb[0].mxu0
      %v3317 = vpop.f32.mrb[0].mxu0
      %v3318 = vadd.f32 0.0, %v3317
      %v3319 = vpop.f32.mrb[0].mxu0
      %3320 = vmatprep.mubr.bf16.mxu0 0
      %3321 = vmatmul.mubr.bf16.gmra.mrb[0].mxu0 %v3225
      %v3322 = vpop.f32.mrb[0].mxu0
      %v3323 = vadd.f32 0.0, %v3322
      %v3324 = vpop.f32.mrb[0].mxu0
      %v3325 = vpop.f32.mrb[0].mxu0
      %v3326 = vadd.f32 0.0, %v3325
      %v3327 = vpop.f32.mrb[0].mxu0
      %3328 = vmatprep.mubr.bf16.mxu0 0
      %3329 = vmatmul.mubr.bf16.gmra.mrb[0].mxu0 %v3226
      %v3330 = vpop.f32.mrb[0].mxu0
      %v3331 = vadd.f32 0.0, %v3330
      %v3332 = vpop.f32.mrb[0].mxu0
      %v3333 = vpop.f32.mrb[0].mxu0
      %v3334 = vadd.f32 0.0, %v3333
      %v3335 = vpop.f32.mrb[0].mxu0
      %3336 = vmatprep.mubr.bf16.mxu0 0
      %3337 = vmatmul.mubr.bf16.gmra.mrb[0].mxu0 %v3227
      %v3338 = vpop.f32.mrb[0].mxu0
      %v3339 = vadd.f32 0.0, %v3338
      %v3340 = vpop.f32.mrb[0].mxu0
      %v3341 = vpop.f32.mrb[0].mxu0
      %v3342 = vadd.f32 0.0, %v3341
      %v3343 = vpop.f32.mrb[0].mxu0
      %3344 = vdwg.mxu0
      %v3345 = vadd.f32 %v3191, %v3315
      %v3346 = vadd.f32 %v3192, %v3318
      %v3347 = vadd.f32 %v3193, %v3323
      %v3348 = vadd.f32 %v3194, %v3326
      %v3349 = vadd.f32 %v3195, %v3331
      %v3350 = vadd.f32 %v3196, %v3334
      %v3351 = vadd.f32 %v3197, %v3339
      %v3352 = vadd.f32 %v3198, %v3342
      %3353 = vst [vmem:[#allocation4] sm:$0xff] %v3345
      %3354 = vst [vmem:[#allocation4 + $0x8] sm:$0xff] %v3346
      %3355 = vst [vmem:[#allocation4 + $0x10] sm:$0xff] %v3347
      %3356 = vst [vmem:[#allocation4 + $0x18] sm:$0xff] %v3348
      %3357 = vst [vmem:[#allocation4 + $0x20] sm:$0xff] %v3349
      %3358 = vst [vmem:[#allocation4 + $0x28] sm:$0xff] %v3350
      %3359 = vst [vmem:[#allocation4 + $0x30] sm:$0xff] %v3351
      %3360 = vst [vmem:[#allocation4 + $0x38] sm:$0xff] %v3352
      %s3361 = scalar_lea.vmem [#allocation3], 16
      %v3362 = vld [vmem:[%s3361] sm:$0xf]
      %v3363 = vld [vmem:[%s3361 + $0x8] sm:$0xf]
      %v3364 = vld [vmem:[%s3361 + $0x10] sm:$0xf]
      %v3365 = vld [vmem:[%s3361 + $0x18] sm:$0xf]
      %v3366 = vld [vmem:[%s3361 + $0x20] sm:$0xf]
      %v3367 = vld [vmem:[%s3361 + $0x28] sm:$0xf]
      %v3368 = vld [vmem:[%s3361 + $0x30] sm:$0xf]
      %v3369 = vld [vmem:[%s3361 + $0x38] sm:$0xf]
      %v3370 = vld [vmem:[#allocation4] sm:$0xff]
      %v3371 = vld [vmem:[#allocation4 + $0x8] sm:$0xff]
      %v3372 = vld [vmem:[#allocation4 + $0x10] sm:$0xff]
      %v3373 = vld [vmem:[#allocation4 + $0x18] sm:$0xff]
      %v3374 = vld [vmem:[#allocation4 + $0x20] sm:$0xff]
      %v3375 = vld [vmem:[#allocation4 + $0x28] sm:$0xff]
      %v3376 = vld [vmem:[#allocation4 + $0x30] sm:$0xff]
      %v3377 = vld [vmem:[#allocation4 + $0x38] sm:$0xff]
      %s3378 = scalar_lea.vmem %s6, 384
      %v3379 = vld [vmem:[%s3378] sm:$0xf]
      %v3380 = vld [vmem:[%s3378 + $0x4] sm:$0xf]
      %v3381 = vld [vmem:[%s3378 + $0x8] sm:$0xf]
      %v3382 = vld [vmem:[%s3378 + $0xc] sm:$0xf]
      %v3383 = vld [vmem:[%s3378 + $0x10] sm:$0xf]
      %v3384 = vld [vmem:[%s3378 + $0x14] sm:$0xf]
      %v3385 = vld [vmem:[%s3378 + $0x18] sm:$0xf]
      %v3386 = vld [vmem:[%s3378 + $0x1c] sm:$0xf]
      %v3387 = vld [vmem:[%s3378 + $0x20] sm:$0xf]
      %v3388 = vld [vmem:[%s3378 + $0x24] sm:$0xf]
      %v3389 = vld [vmem:[%s3378 + $0x28] sm:$0xf]
      %v3390 = vld [vmem:[%s3378 + $0x2c] sm:$0xf]
      %v3391 = vld [vmem:[%s3378 + $0x30] sm:$0xf]
      %v3392 = vld [vmem:[%s3378 + $0x34] sm:$0xf]
      %v3393 = vld [vmem:[%s3378 + $0x38] sm:$0xf]
      %v3394 = vld [vmem:[%s3378 + $0x3c] sm:$0xf]
      %v3403 = vunpack.c.l.b16 %v3362
      %v3404 = vunpack.c.l.b16 %v3363
      %v3405 = vunpack.c.l.b16 %v3364
      %v3406 = vunpack.c.l.b16 %v3365
      %v3407 = vunpack.c.l.b16 %v3366
      %v3408 = vunpack.c.l.b16 %v3367
      %v3409 = vunpack.c.l.b16 %v3368
      %v3410 = vunpack.c.l.b16 %v3369
      %v3411 = vpack.c.b16 %v3404, %v3403
      %v3412 = vpack.c.b16 %v3406, %v3405
      %v3413 = vpack.c.b16 %v3408, %v3407
      %v3414 = vpack.c.b16 %v3410, %v3409
      %v3435 = vunpack.c.l.b16 %v3379
      %v3436 = vunpack.c.l.b16 %v3380
      %v3437 = vunpack.c.l.b16 %v3381
      %v3438 = vunpack.c.l.b16 %v3382
      %v3439 = vunpack.c.l.b16 %v3383
      %v3440 = vunpack.c.l.b16 %v3384
      %v3441 = vunpack.c.l.b16 %v3385
      %v3442 = vunpack.c.l.b16 %v3386
      %v3443 = vunpack.c.l.b16 %v3387
      %v3444 = vunpack.c.l.b16 %v3388
      %v3445 = vunpack.c.l.b16 %v3389
      %v3446 = vunpack.c.l.b16 %v3390
      %v3447 = vunpack.c.l.b16 %v3391
      %v3448 = vunpack.c.l.b16 %v3392
      %v3449 = vunpack.c.l.b16 %v3393
      %v3450 = vunpack.c.l.b16 %v3394
      %v3451 = vpack.c.b16 %v3436, %v3435
      %v3452 = vpack.c.b16 %v3438, %v3437
      %v3453 = vpack.c.b16 %v3440, %v3439
      %v3454 = vpack.c.b16 %v3442, %v3441
      %v3455 = vpack.c.b16 %v3444, %v3443
      %v3456 = vpack.c.b16 %v3446, %v3445
      %v3457 = vpack.c.b16 %v3448, %v3447
      %v3458 = vpack.c.b16 %v3450, %v3449
      %3467 = vmatprep.subr.bf16.mxu0 0
      %3468 = vmatpush1.bf16.msra.mxu0 %v3451
      %3469 = vmatprep.subr.bf16.mxu0 0
      %3470 = vmatpush1.bf16.msra.mxu0 %v3452
      %3471 = vmatprep.subr.bf16.mxu0 0
      %3472 = vmatpush1.bf16.msra.mxu0 %v3453
      %3473 = vmatprep.subr.bf16.mxu0 0
      %3474 = vmatpush1.bf16.msra.mxu0 %v3454
      %3475 = vmatprep.subr.bf16.mxu0 0
      %3476 = vmatpush1.bf16.msra.mxu0 %v3455
      %3477 = vmatprep.subr.bf16.mxu0 0
      %3478 = vmatpush1.bf16.msra.mxu0 %v3456
      %3479 = vmatprep.subr.bf16.mxu0 0
      %3480 = vmatpush1.bf16.msra.mxu0 %v3457
      %3481 = vmatprep.subr.bf16.mxu0 0
      %3482 = vmatpush1.bf16.msra.mxu0 %v3458
      %3483 = vmatprep.subr.bf16.mxu0 0
      %3484 = vmatpush1.bf16.msra.mxu0 0
      %3485 = vmatprep.subr.bf16.mxu0 0
      %3486 = vmatpush1.bf16.msra.mxu0 0
      %3487 = vmatprep.subr.bf16.mxu0 0
      %3488 = vmatpush1.bf16.msra.mxu0 0
      %3489 = vmatprep.subr.bf16.mxu0 0
      %3490 = vmatpush1.bf16.msra.mxu0 0
      %3491 = vmatprep.subr.bf16.mxu0 0
      %3492 = vmatpush1.bf16.msra.mxu0 0
      %3493 = vmatprep.subr.bf16.mxu0 0
      %3494 = vmatpush1.bf16.msra.mxu0 0
      %3495 = vmatprep.subr.bf16.mxu0 0
      %3496 = vmatpush1.bf16.msra.mxu0 0
      %3497 = vmatprep.subr.bf16.mxu0 0
      %3498 = vmatpush1.bf16.msra.mxu0 0
      %3499 = vmatprep.mubr.bf16.mxu0 0
      %3500 = vmatmul.mubr.bf16.gmra.mrb[0].mxu0 %v3411
      %v3501 = vpop.f32.mrb[0].mxu0
      %v3502 = vadd.f32 0.0, %v3501
      %v3503 = vpop.f32.mrb[0].mxu0
      %v3504 = vpop.f32.mrb[0].mxu0
      %v3505 = vadd.f32 0.0, %v3504
      %v3506 = vpop.f32.mrb[0].mxu0
      %3507 = vmatprep.mubr.bf16.mxu0 0
      %3508 = vmatmul.mubr.bf16.gmra.mrb[0].mxu0 %v3412
      %v3509 = vpop.f32.mrb[0].mxu0
      %v3510 = vadd.f32 0.0, %v3509
      %v3511 = vpop.f32.mrb[0].mxu0
      %v3512 = vpop.f32.mrb[0].mxu0
      %v3513 = vadd.f32 0.0, %v3512
      %v3514 = vpop.f32.mrb[0].mxu0
      %3515 = vmatprep.mubr.bf16.mxu0 0
      %3516 = vmatmul.mubr.bf16.gmra.mrb[0].mxu0 %v3413
      %v3517 = vpop.f32.mrb[0].mxu0
      %v3518 = vadd.f32 0.0, %v3517
      %v3519 = vpop.f32.mrb[0].mxu0
      %v3520 = vpop.f32.mrb[0].mxu0
      %v3521 = vadd.f32 0.0, %v3520
      %v3522 = vpop.f32.mrb[0].mxu0
      %3523 = vmatprep.mubr.bf16.mxu0 0
      %3524 = vmatmul.mubr.bf16.gmra.mrb[0].mxu0 %v3414
      %v3525 = vpop.f32.mrb[0].mxu0
      %v3526 = vadd.f32 0.0, %v3525
      %v3527 = vpop.f32.mrb[0].mxu0
      %v3528 = vpop.f32.mrb[0].mxu0
      %v3529 = vadd.f32 0.0, %v3528
      %v3530 = vpop.f32.mrb[0].mxu0
      %3531 = vdwg.mxu0
      %v3532 = vadd.f32 %v3370, %v3502
      %v3533 = vadd.f32 %v3371, %v3505
      %v3534 = vadd.f32 %v3372, %v3510
      %v3535 = vadd.f32 %v3373, %v3513
      %v3536 = vadd.f32 %v3374, %v3518
      %v3537 = vadd.f32 %v3375, %v3521
      %v3538 = vadd.f32 %v3376, %v3526
      %v3539 = vadd.f32 %v3377, %v3529
      %3540 = vst [vmem:[#allocation4] sm:$0xff] %v3532
      %3541 = vst [vmem:[#allocation4 + $0x8] sm:$0xff] %v3533
      %3542 = vst [vmem:[#allocation4 + $0x10] sm:$0xff] %v3534
      %3543 = vst [vmem:[#allocation4 + $0x18] sm:$0xff] %v3535
      %3544 = vst [vmem:[#allocation4 + $0x20] sm:$0xff] %v3536
      %3545 = vst [vmem:[#allocation4 + $0x28] sm:$0xff] %v3537
      %3546 = vst [vmem:[#allocation4 + $0x30] sm:$0xff] %v3538
      %3547 = vst [vmem:[#allocation4 + $0x38] sm:$0xff] %v3539
      %v3548 = vld [vmem:[%s3361] sm:$0xf]
      %v3549 = vld [vmem:[%s3361 + $0x4] sm:$0x1]
      %v3550 = vld [vmem:[%s3361 + $0x8] sm:$0xf]
      %v3551 = vld [vmem:[%s3361 + $0xc] sm:$0x1]
      %v3552 = vld [vmem:[%s3361 + $0x10] sm:$0xf]
      %v3553 = vld [vmem:[%s3361 + $0x14] sm:$0x1]
      %v3554 = vld [vmem:[%s3361 + $0x18] sm:$0xf]
      %v3555 = vld [vmem:[%s3361 + $0x1c] sm:$0x1]
      %v3556 = vld [vmem:[%s3361 + $0x20] sm:$0xf]
      %v3557 = vld [vmem:[%s3361 + $0x24] sm:$0x1]
      %v3558 = vld [vmem:[%s3361 + $0x28] sm:$0xf]
      %v3559 = vld [vmem:[%s3361 + $0x2c] sm:$0x1]
      %v3560 = vld [vmem:[%s3361 + $0x30] sm:$0xf]
      %v3561 = vld [vmem:[%s3361 + $0x34] sm:$0x1]
      %v3562 = vld [vmem:[%s3361 + $0x38] sm:$0xf]
      %v3563 = vld [vmem:[%s3361 + $0x3c] sm:$0x1]
      %v3565 = vshrl.u32 %v3548, 16
      %v3567 = vrot.slane %v3565, 4
      %v3568 = vshll.u32 %v3548, 16
      %v3570 = vrot.slane %v3568, 5
      %v3571 = vor.u32 %v3567, %v3570
      %v3572 = vrot.slane %v3571, 4
      %v3574 = vshll.u32 %v3549, 16
      %v3576 = vrot.slane %v3574, 5
      %v3577 = vsel %vm746, %v3572, %v3576
      %v3579 = vshrl.u32 %v3550, 16
      %v3581 = vrot.slane %v3579, 4
      %v3582 = vshll.u32 %v3550, 16
      %v3584 = vrot.slane %v3582, 5
      %v3585 = vor.u32 %v3581, %v3584
      %v3586 = vrot.slane %v3585, 4
      %v3588 = vshll.u32 %v3551, 16
      %v3590 = vrot.slane %v3588, 5
      %v3591 = vsel %vm746, %v3586, %v3590
      %v3593 = vshrl.u32 %v3552, 16
      %v3595 = vrot.slane %v3593, 4
      %v3596 = vshll.u32 %v3552, 16
      %v3598 = vrot.slane %v3596, 5
      %v3599 = vor.u32 %v3595, %v3598
      %v3600 = vrot.slane %v3599, 4
      %v3602 = vshll.u32 %v3553, 16
      %v3604 = vrot.slane %v3602, 5
      %v3605 = vsel %vm746, %v3600, %v3604
      %v3607 = vshrl.u32 %v3554, 16
      %v3609 = vrot.slane %v3607, 4
      %v3610 = vshll.u32 %v3554, 16
      %v3612 = vrot.slane %v3610, 5
      %v3613 = vor.u32 %v3609, %v3612
      %v3614 = vrot.slane %v3613, 4
      %v3616 = vshll.u32 %v3555, 16
      %v3618 = vrot.slane %v3616, 5
      %v3619 = vsel %vm746, %v3614, %v3618
      %v3621 = vshrl.u32 %v3556, 16
      %v3623 = vrot.slane %v3621, 4
      %v3624 = vshll.u32 %v3556, 16
      %v3626 = vrot.slane %v3624, 5
      %v3627 = vor.u32 %v3623, %v3626
      %v3628 = vrot.slane %v3627, 4
      %v3630 = vshll.u32 %v3557, 16
      %v3632 = vrot.slane %v3630, 5
      %v3633 = vsel %vm746, %v3628, %v3632
      %v3635 = vshrl.u32 %v3558, 16
      %v3637 = vrot.slane %v3635, 4
      %v3638 = vshll.u32 %v3558, 16
      %v3640 = vrot.slane %v3638, 5
      %v3641 = vor.u32 %v3637, %v3640
      %v3642 = vrot.slane %v3641, 4
      %v3644 = vshll.u32 %v3559, 16
      %v3646 = vrot.slane %v3644, 5
      %v3647 = vsel %vm746, %v3642, %v3646
      %v3649 = vshrl.u32 %v3560, 16
      %v3651 = vrot.slane %v3649, 4
      %v3652 = vshll.u32 %v3560, 16
      %v3654 = vrot.slane %v3652, 5
      %v3655 = vor.u32 %v3651, %v3654
      %v3656 = vrot.slane %v3655, 4
      %v3658 = vshll.u32 %v3561, 16
      %v3660 = vrot.slane %v3658, 5
      %v3661 = vsel %vm746, %v3656, %v3660
      %v3663 = vshrl.u32 %v3562, 16
      %v3665 = vrot.slane %v3663, 4
      %v3666 = vshll.u32 %v3562, 16
      %v3668 = vrot.slane %v3666, 5
      %v3669 = vor.u32 %v3665, %v3668
      %v3670 = vrot.slane %v3669, 4
      %v3672 = vshll.u32 %v3563, 16
      %v3674 = vrot.slane %v3672, 5
      %v3675 = vsel %vm746, %v3670, %v3674
      %v3676 = vld [vmem:[#allocation4] sm:$0xff]
      %v3677 = vld [vmem:[#allocation4 + $0x8] sm:$0xff]
      %v3678 = vld [vmem:[#allocation4 + $0x10] sm:$0xff]
      %v3679 = vld [vmem:[#allocation4 + $0x18] sm:$0xff]
      %v3680 = vld [vmem:[#allocation4 + $0x20] sm:$0xff]
      %v3681 = vld [vmem:[#allocation4 + $0x28] sm:$0xff]
      %v3682 = vld [vmem:[#allocation4 + $0x30] sm:$0xff]
      %v3683 = vld [vmem:[#allocation4 + $0x38] sm:$0xff]
      %s3684 = scalar_lea.vmem %s6, 448
      %v3685 = vld [vmem:[%s3684] sm:$0xf]
      %v3686 = vld [vmem:[%s3684 + $0x4] sm:$0xf]
      %v3687 = vld [vmem:[%s3684 + $0x8] sm:$0xf]
      %v3688 = vld [vmem:[%s3684 + $0xc] sm:$0xf]
      %v3689 = vld [vmem:[%s3684 + $0x10] sm:$0xf]
      %v3690 = vld [vmem:[%s3684 + $0x14] sm:$0xf]
      %v3691 = vld [vmem:[%s3684 + $0x18] sm:$0xf]
      %v3692 = vld [vmem:[%s3684 + $0x1c] sm:$0xf]
      %v3693 = vld [vmem:[%s3684 + $0x20] sm:$0xf]
      %v3694 = vld [vmem:[%s3684 + $0x24] sm:$0xf]
      %v3695 = vld [vmem:[%s3684 + $0x28] sm:$0xf]
      %v3696 = vld [vmem:[%s3684 + $0x2c] sm:$0xf]
      %v3697 = vld [vmem:[%s3684 + $0x30] sm:$0xf]
      %v3698 = vld [vmem:[%s3684 + $0x34] sm:$0xf]
      %v3699 = vld [vmem:[%s3684 + $0x38] sm:$0xf]
      %v3700 = vld [vmem:[%s3684 + $0x3c] sm:$0xf]
      %v3701 = vunpack.c.l.b16 %v3577
      %v3702 = vunpack.c.l.b16 %v3591
      %v3703 = vunpack.c.l.b16 %v3605
      %v3704 = vunpack.c.l.b16 %v3619
      %v3705 = vunpack.c.l.b16 %v3633
      %v3706 = vunpack.c.l.b16 %v3647
      %v3707 = vunpack.c.l.b16 %v3661
      %v3708 = vunpack.c.l.b16 %v3675
      %v3709 = vpack.c.b16 %v3702, %v3701
      %v3710 = vpack.c.b16 %v3704, %v3703
      %v3711 = vpack.c.b16 %v3706, %v3705
      %v3712 = vpack.c.b16 %v3708, %v3707
      %v3733 = vunpack.c.l.b16 %v3685
      %v3734 = vunpack.c.l.b16 %v3686
      %v3735 = vunpack.c.l.b16 %v3687
      %v3736 = vunpack.c.l.b16 %v3688
      %v3737 = vunpack.c.l.b16 %v3689
      %v3738 = vunpack.c.l.b16 %v3690
      %v3739 = vunpack.c.l.b16 %v3691
      %v3740 = vunpack.c.l.b16 %v3692
      %v3741 = vunpack.c.l.b16 %v3693
      %v3742 = vunpack.c.l.b16 %v3694
      %v3743 = vunpack.c.l.b16 %v3695
      %v3744 = vunpack.c.l.b16 %v3696
      %v3745 = vunpack.c.l.b16 %v3697
      %v3746 = vunpack.c.l.b16 %v3698
      %v3747 = vunpack.c.l.b16 %v3699
      %v3748 = vunpack.c.l.b16 %v3700
      %v3749 = vpack.c.b16 %v3734, %v3733
      %v3750 = vpack.c.b16 %v3736, %v3735
      %v3751 = vpack.c.b16 %v3738, %v3737
      %v3752 = vpack.c.b16 %v3740, %v3739
      %v3753 = vpack.c.b16 %v3742, %v3741
      %v3754 = vpack.c.b16 %v3744, %v3743
      %v3755 = vpack.c.b16 %v3746, %v3745
      %v3756 = vpack.c.b16 %v3748, %v3747
      %3765 = vmatprep.subr.bf16.mxu0 0
      %3766 = vmatpush1.bf16.msra.mxu0 %v3749
      %3767 = vmatprep.subr.bf16.mxu0 0
      %3768 = vmatpush1.bf16.msra.mxu0 %v3750
      %3769 = vmatprep.subr.bf16.mxu0 0
      %3770 = vmatpush1.bf16.msra.mxu0 %v3751
      %3771 = vmatprep.subr.bf16.mxu0 0
      %3772 = vmatpush1.bf16.msra.mxu0 %v3752
      %3773 = vmatprep.subr.bf16.mxu0 0
      %3774 = vmatpush1.bf16.msra.mxu0 %v3753
      %3775 = vmatprep.subr.bf16.mxu0 0
      %3776 = vmatpush1.bf16.msra.mxu0 %v3754
      %3777 = vmatprep.subr.bf16.mxu0 0
      %3778 = vmatpush1.bf16.msra.mxu0 %v3755
      %3779 = vmatprep.subr.bf16.mxu0 0
      %3780 = vmatpush1.bf16.msra.mxu0 %v3756
      %3781 = vmatprep.subr.bf16.mxu0 0
      %3782 = vmatpush1.bf16.msra.mxu0 0
      %3783 = vmatprep.subr.bf16.mxu0 0
      %3784 = vmatpush1.bf16.msra.mxu0 0
      %3785 = vmatprep.subr.bf16.mxu0 0
      %3786 = vmatpush1.bf16.msra.mxu0 0
      %3787 = vmatprep.subr.bf16.mxu0 0
      %3788 = vmatpush1.bf16.msra.mxu0 0
      %3789 = vmatprep.subr.bf16.mxu0 0
      %3790 = vmatpush1.bf16.msra.mxu0 0
      %3791 = vmatprep.subr.bf16.mxu0 0
      %3792 = vmatpush1.bf16.msra.mxu0 0
      %3793 = vmatprep.subr.bf16.mxu0 0
      %3794 = vmatpush1.bf16.msra.mxu0 0
      %3795 = vmatprep.subr.bf16.mxu0 0
      %3796 = vmatpush1.bf16.msra.mxu0 0
      %3797 = vmatprep.mubr.bf16.mxu0 0
      %3798 = vmatmul.mubr.bf16.gmra.mrb[0].mxu0 %v3709
      %v3799 = vpop.f32.mrb[0].mxu0
      %v3800 = vadd.f32 0.0, %v3799
      %v3801 = vpop.f32.mrb[0].mxu0
      %v3802 = vpop.f32.mrb[0].mxu0
      %v3803 = vadd.f32 0.0, %v3802
      %v3804 = vpop.f32.mrb[0].mxu0
      %3805 = vmatprep.mubr.bf16.mxu0 0
      %3806 = vmatmul.mubr.bf16.gmra.mrb[0].mxu0 %v3710
      %v3807 = vpop.f32.mrb[0].mxu0
      %v3808 = vadd.f32 0.0, %v3807
      %v3809 = vpop.f32.mrb[0].mxu0
      %v3810 = vpop.f32.mrb[0].mxu0
      %v3811 = vadd.f32 0.0, %v3810
      %v3812 = vpop.f32.mrb[0].mxu0
      %3813 = vmatprep.mubr.bf16.mxu0 0
      %3814 = vmatmul.mubr.bf16.gmra.mrb[0].mxu0 %v3711
      %v3815 = vpop.f32.mrb[0].mxu0
      %v3816 = vadd.f32 0.0, %v3815
      %v3817 = vpop.f32.mrb[0].mxu0
      %v3818 = vpop.f32.mrb[0].mxu0
      %v3819 = vadd.f32 0.0, %v3818
      %v3820 = vpop.f32.mrb[0].mxu0
      %3821 = vmatprep.mubr.bf16.mxu0 0
      %3822 = vmatmul.mubr.bf16.gmra.mrb[0].mxu0 %v3712
      %v3823 = vpop.f32.mrb[0].mxu0
      %v3824 = vadd.f32 0.0, %v3823
      %v3825 = vpop.f32.mrb[0].mxu0
      %v3826 = vpop.f32.mrb[0].mxu0
      %v3827 = vadd.f32 0.0, %v3826
      %v3828 = vpop.f32.mrb[0].mxu0
      %3829 = vdwg.mxu0
      %v3830 = vadd.f32 %v3676, %v3800
      %v3831 = vadd.f32 %v3677, %v3803
      %v3832 = vadd.f32 %v3678, %v3808
      %v3833 = vadd.f32 %v3679, %v3811
      %v3834 = vadd.f32 %v3680, %v3816
      %v3835 = vadd.f32 %v3681, %v3819
      %v3836 = vadd.f32 %v3682, %v3824
      %v3837 = vadd.f32 %v3683, %v3827
      %3838 = vst [vmem:[#allocation4] sm:$0xff] %v3830
      %3839 = vst [vmem:[#allocation4 + $0x8] sm:$0xff] %v3831
      %3840 = vst [vmem:[#allocation4 + $0x10] sm:$0xff] %v3832
      %3841 = vst [vmem:[#allocation4 + $0x18] sm:$0xff] %v3833
      %3842 = vst [vmem:[#allocation4 + $0x20] sm:$0xff] %v3834
      %3843 = vst [vmem:[#allocation4 + $0x28] sm:$0xff] %v3835
      %3844 = vst [vmem:[#allocation4 + $0x30] sm:$0xff] %v3836
      %3845 = vst [vmem:[#allocation4 + $0x38] sm:$0xff] %v3837
      %v3846 = vld [vmem:[%s3361] sm:$0xe]
      %v3847 = vld [vmem:[%s3361 + $0x4] sm:$0x1]
      %v3848 = vld [vmem:[%s3361 + $0x8] sm:$0xe]
      %v3849 = vld [vmem:[%s3361 + $0xc] sm:$0x1]
      %v3850 = vld [vmem:[%s3361 + $0x10] sm:$0xe]
      %v3851 = vld [vmem:[%s3361 + $0x14] sm:$0x1]
      %v3852 = vld [vmem:[%s3361 + $0x18] sm:$0xe]
      %v3853 = vld [vmem:[%s3361 + $0x1c] sm:$0x1]
      %v3854 = vld [vmem:[%s3361 + $0x20] sm:$0xe]
      %v3855 = vld [vmem:[%s3361 + $0x24] sm:$0x1]
      %v3856 = vld [vmem:[%s3361 + $0x28] sm:$0xe]
      %v3857 = vld [vmem:[%s3361 + $0x2c] sm:$0x1]
      %v3858 = vld [vmem:[%s3361 + $0x30] sm:$0xe]
      %v3859 = vld [vmem:[%s3361 + $0x34] sm:$0x1]
      %v3860 = vld [vmem:[%s3361 + $0x38] sm:$0xe]
      %v3861 = vld [vmem:[%s3361 + $0x3c] sm:$0x1]
      %v3878 = vrot.slane %v3846, 5
      %v3879 = vrot.slane %v3878, 4
      %v3880 = vrot.slane %v3847, 5
      %v3881 = vsel %vm2440, %v3879, %v3880
      %v3882 = vrot.slane %v3848, 5
      %v3883 = vrot.slane %v3882, 4
      %v3884 = vrot.slane %v3849, 5
      %v3885 = vsel %vm2440, %v3883, %v3884
      %v3886 = vrot.slane %v3850, 5
      %v3887 = vrot.slane %v3886, 4
      %v3888 = vrot.slane %v3851, 5
      %v3889 = vsel %vm2440, %v3887, %v3888
      %v3890 = vrot.slane %v3852, 5
      %v3891 = vrot.slane %v3890, 4
      %v3892 = vrot.slane %v3853, 5
      %v3893 = vsel %vm2440, %v3891, %v3892
      %v3894 = vrot.slane %v3854, 5
      %v3895 = vrot.slane %v3894, 4
      %v3896 = vrot.slane %v3855, 5
      %v3897 = vsel %vm2440, %v3895, %v3896
      %v3898 = vrot.slane %v3856, 5
      %v3899 = vrot.slane %v3898, 4
      %v3900 = vrot.slane %v3857, 5
      %v3901 = vsel %vm2440, %v3899, %v3900
      %v3902 = vrot.slane %v3858, 5
      %v3903 = vrot.slane %v3902, 4
      %v3904 = vrot.slane %v3859, 5
      %v3905 = vsel %vm2440, %v3903, %v3904
      %v3906 = vrot.slane %v3860, 5
      %v3907 = vrot.slane %v3906, 4
      %v3908 = vrot.slane %v3861, 5
      %v3909 = vsel %vm2440, %v3907, %v3908
      %v3910 = vld [vmem:[#allocation4] sm:$0xff]
      %v3911 = vld [vmem:[#allocation4 + $0x8] sm:$0xff]
      %v3912 = vld [vmem:[#allocation4 + $0x10] sm:$0xff]
      %v3913 = vld [vmem:[#allocation4 + $0x18] sm:$0xff]
      %v3914 = vld [vmem:[#allocation4 + $0x20] sm:$0xff]
      %v3915 = vld [vmem:[#allocation4 + $0x28] sm:$0xff]
      %v3916 = vld [vmem:[#allocation4 + $0x30] sm:$0xff]
      %v3917 = vld [vmem:[#allocation4 + $0x38] sm:$0xff]
      %s3918 = scalar_lea.vmem %s6, 512
      %v3919 = vld [vmem:[%s3918] sm:$0xf]
      %v3920 = vld [vmem:[%s3918 + $0x4] sm:$0xf]
      %v3921 = vld [vmem:[%s3918 + $0x8] sm:$0xf]
      %v3922 = vld [vmem:[%s3918 + $0xc] sm:$0xf]
      %v3923 = vld [vmem:[%s3918 + $0x10] sm:$0xf]
      %v3924 = vld [vmem:[%s3918 + $0x14] sm:$0xf]
      %v3925 = vld [vmem:[%s3918 + $0x18] sm:$0xf]
      %v3926 = vld [vmem:[%s3918 + $0x1c] sm:$0xf]
      %v3927 = vld [vmem:[%s3918 + $0x20] sm:$0xf]
      %v3928 = vld [vmem:[%s3918 + $0x24] sm:$0xf]
      %v3929 = vld [vmem:[%s3918 + $0x28] sm:$0xf]
      %v3930 = vld [vmem:[%s3918 + $0x2c] sm:$0xf]
      %v3931 = vld [vmem:[%s3918 + $0x30] sm:$0xf]
      %v3932 = vld [vmem:[%s3918 + $0x34] sm:$0xf]
      %v3933 = vld [vmem:[%s3918 + $0x38] sm:$0xf]
      %v3934 = vld [vmem:[%s3918 + $0x3c] sm:$0xf]
      %v3935 = vunpack.c.l.b16 %v3881
      %v3936 = vunpack.c.l.b16 %v3885
      %v3937 = vunpack.c.l.b16 %v3889
      %v3938 = vunpack.c.l.b16 %v3893
      %v3939 = vunpack.c.l.b16 %v3897
      %v3940 = vunpack.c.l.b16 %v3901
      %v3941 = vunpack.c.l.b16 %v3905
      %v3942 = vunpack.c.l.b16 %v3909
      %v3943 = vpack.c.b16 %v3936, %v3935
      %v3944 = vpack.c.b16 %v3938, %v3937
      %v3945 = vpack.c.b16 %v3940, %v3939
      %v3946 = vpack.c.b16 %v3942, %v3941
      %v3967 = vunpack.c.l.b16 %v3919
      %v3968 = vunpack.c.l.b16 %v3920
      %v3969 = vunpack.c.l.b16 %v3921
      %v3970 = vunpack.c.l.b16 %v3922
      %v3971 = vunpack.c.l.b16 %v3923
      %v3972 = vunpack.c.l.b16 %v3924
      %v3973 = vunpack.c.l.b16 %v3925
      %v3974 = vunpack.c.l.b16 %v3926
      %v3975 = vunpack.c.l.b16 %v3927
      %v3976 = vunpack.c.l.b16 %v3928
      %v3977 = vunpack.c.l.b16 %v3929
      %v3978 = vunpack.c.l.b16 %v3930
      %v3979 = vunpack.c.l.b16 %v3931
      %v3980 = vunpack.c.l.b16 %v3932
      %v3981 = vunpack.c.l.b16 %v3933
      %v3982 = vunpack.c.l.b16 %v3934
      %v3983 = vpack.c.b16 %v3968, %v3967
      %v3984 = vpack.c.b16 %v3970, %v3969
      %v3985 = vpack.c.b16 %v3972, %v3971
      %v3986 = vpack.c.b16 %v3974, %v3973
      %v3987 = vpack.c.b16 %v3976, %v3975
      %v3988 = vpack.c.b16 %v3978, %v3977
      %v3989 = vpack.c.b16 %v3980, %v3979
      %v3990 = vpack.c.b16 %v3982, %v3981
      %3999 = vmatprep.subr.bf16.mxu0 0
      %4000 = vmatpush1.bf16.msra.mxu0 %v3983
      %4001 = vmatprep.subr.bf16.mxu0 0
      %4002 = vmatpush1.bf16.msra.mxu0 %v3984
      %4003 = vmatprep.subr.bf16.mxu0 0
      %4004 = vmatpush1.bf16.msra.mxu0 %v3985
      %4005 = vmatprep.subr.bf16.mxu0 0
      %4006 = vmatpush1.bf16.msra.mxu0 %v3986
      %4007 = vmatprep.subr.bf16.mxu0 0
      %4008 = vmatpush1.bf16.msra.mxu0 %v3987
      %4009 = vmatprep.subr.bf16.mxu0 0
      %4010 = vmatpush1.bf16.msra.mxu0 %v3988
      %4011 = vmatprep.subr.bf16.mxu0 0
      %4012 = vmatpush1.bf16.msra.mxu0 %v3989
      %4013 = vmatprep.subr.bf16.mxu0 0
      %4014 = vmatpush1.bf16.msra.mxu0 %v3990
      %4015 = vmatprep.subr.bf16.mxu0 0
      %4016 = vmatpush1.bf16.msra.mxu0 0
      %4017 = vmatprep.subr.bf16.mxu0 0
      %4018 = vmatpush1.bf16.msra.mxu0 0
      %4019 = vmatprep.subr.bf16.mxu0 0
      %4020 = vmatpush1.bf16.msra.mxu0 0
      %4021 = vmatprep.subr.bf16.mxu0 0
      %4022 = vmatpush1.bf16.msra.mxu0 0
      %4023 = vmatprep.subr.bf16.mxu0 0
      %4024 = vmatpush1.bf16.msra.mxu0 0
      %4025 = vmatprep.subr.bf16.mxu0 0
      %4026 = vmatpush1.bf16.msra.mxu0 0
      %4027 = vmatprep.subr.bf16.mxu0 0
      %4028 = vmatpush1.bf16.msra.mxu0 0
      %4029 = vmatprep.subr.bf16.mxu0 0
      %4030 = vmatpush1.bf16.msra.mxu0 0
      %4031 = vmatprep.mubr.bf16.mxu0 0
      %4032 = vmatmul.mubr.bf16.gmra.mrb[0].mxu0 %v3943
      %v4033 = vpop.f32.mrb[0].mxu0
      %v4034 = vadd.f32 0.0, %v4033
      %v4035 = vpop.f32.mrb[0].mxu0
      %v4036 = vpop.f32.mrb[0].mxu0
      %v4037 = vadd.f32 0.0, %v4036
      %v4038 = vpop.f32.mrb[0].mxu0
      %4039 = vmatprep.mubr.bf16.mxu0 0
      %4040 = vmatmul.mubr.bf16.gmra.mrb[0].mxu0 %v3944
      %v4041 = vpop.f32.mrb[0].mxu0
      %v4042 = vadd.f32 0.0, %v4041
      %v4043 = vpop.f32.mrb[0].mxu0
      %v4044 = vpop.f32.mrb[0].mxu0
      %v4045 = vadd.f32 0.0, %v4044
      %v4046 = vpop.f32.mrb[0].mxu0
      %4047 = vmatprep.mubr.bf16.mxu0 0
      %4048 = vmatmul.mubr.bf16.gmra.mrb[0].mxu0 %v3945
      %v4049 = vpop.f32.mrb[0].mxu0
      %v4050 = vadd.f32 0.0, %v4049
      %v4051 = vpop.f32.mrb[0].mxu0
      %v4052 = vpop.f32.mrb[0].mxu0
      %v4053 = vadd.f32 0.0, %v4052
      %v4054 = vpop.f32.mrb[0].mxu0
      %4055 = vmatprep.mubr.bf16.mxu0 0
      %4056 = vmatmul.mubr.bf16.gmra.mrb[0].mxu0 %v3946
      %v4057 = vpop.f32.mrb[0].mxu0
      %v4058 = vadd.f32 0.0, %v4057
      %v4059 = vpop.f32.mrb[0].mxu0
      %v4060 = vpop.f32.mrb[0].mxu0
      %v4061 = vadd.f32 0.0, %v4060
      %v4062 = vpop.f32.mrb[0].mxu0
      %4063 = vdwg.mxu0
      %v4064 = vadd.f32 %v3910, %v4034
      %v4065 = vadd.f32 %v3911, %v4037
      %v4066 = vadd.f32 %v3912, %v4042
      %v4067 = vadd.f32 %v3913, %v4045
      %v4068 = vadd.f32 %v3914, %v4050
      %v4069 = vadd.f32 %v3915, %v4053
      %v4070 = vadd.f32 %v3916, %v4058
      %v4071 = vadd.f32 %v3917, %v4061
      %4072 = vst [vmem:[#allocation4] sm:$0xff] %v4064
      %4073 = vst [vmem:[#allocation4 + $0x8] sm:$0xff] %v4065
      %4074 = vst [vmem:[#allocation4 + $0x10] sm:$0xff] %v4066
      %4075 = vst [vmem:[#allocation4 + $0x18] sm:$0xff] %v4067
      %4076 = vst [vmem:[#allocation4 + $0x20] sm:$0xff] %v4068
      %4077 = vst [vmem:[#allocation4 + $0x28] sm:$0xff] %v4069
      %4078 = vst [vmem:[#allocation4 + $0x30] sm:$0xff] %v4070
      %4079 = vst [vmem:[#allocation4 + $0x38] sm:$0xff] %v4071
      %v4080 = vld [vmem:[#allocation4] sm:$0xff]
      %v4081 = vld [vmem:[#allocation4 + $0x8] sm:$0xff]
      %v4082 = vld [vmem:[#allocation4 + $0x10] sm:$0xff]
      %v4083 = vld [vmem:[#allocation4 + $0x18] sm:$0xff]
      %v4084 = vld [vmem:[#allocation4 + $0x20] sm:$0xff]
      %v4085 = vld [vmem:[#allocation4 + $0x28] sm:$0xff]
      %v4086 = vld [vmem:[#allocation4 + $0x30] sm:$0xff]
      %v4087 = vld [vmem:[#allocation4 + $0x38] sm:$0xff]
      %v4088 = vpack.c.bf16 %v4080, %v4080
      %v4089 = vpack.c.bf16 %v4081, %v4081
      %v4090 = vpack.c.bf16 %v4082, %v4082
      %v4091 = vpack.c.bf16 %v4083, %v4083
      %v4092 = vpack.c.bf16 %v4084, %v4084
      %v4093 = vpack.c.bf16 %v4085, %v4085
      %v4094 = vpack.c.bf16 %v4086, %v4086
      %v4095 = vpack.c.bf16 %v4087, %v4087
      %4096 = vst [vmem:[%s305] sm:$0xf] %v4088
      %4097 = vst [vmem:[%s305 + $0x4] sm:$0xf] %v4089
      %4098 = vst [vmem:[%s305 + $0x8] sm:$0xf] %v4090
      %4099 = vst [vmem:[%s305 + $0xc] sm:$0xf] %v4091
      %4100 = vst [vmem:[%s305 + $0x10] sm:$0xf] %v4092
      %4101 = vst [vmem:[%s305 + $0x14] sm:$0xf] %v4093
      %4102 = vst [vmem:[%s305 + $0x18] sm:$0xf] %v4094
      %4103 = vst [vmem:[%s305 + $0x1c] sm:$0xf] %v4095
      %p4104 = scmp.lt.s32.totalorder %s19, 1
      %s4105 = scalar_select %p4104, %s19, 1
      %s4106 = smul.addr %s4105, 8
      %s4107 = smul.addr %s4106, 4
      %s4108 = scalar_lea.vmem %s8, %s4107
      // Predicated region
      $region53: #{network_block_forward.2} parent=51 // pred_check
        %p4109 = pneg %p210
      $region54: #{network_block_forward.2} parent=51 // pred_check_branch
        %4111 = sbr.rel (%p4109) target = $region56
      $region55: #{network_block_forward.2} parent=51 // pred_region
        _
      $region56: #{network_block_forward.2} parent=51 // pred_fallthru
        _
    $region52: #{network_block_forward.2} parent=5 // pred_fallthru
      _
    %p4112 = scmp.le.s32.totalorder 2, %s14
    // Predicated region
    $region57: #{network_block_forward.2} parent=5 // pred_check
      %p4113 = pneg %p4112
    $region58: #{network_block_forward.2} parent=5 // pred_check_branch
      %4115 = sbr.rel (%p4113) target = $region60
    $region59: #{network_block_forward.2} parent=5 // pred_region
      %s4116 = ssub.s32 %s14, 2
      // Predicated region
      $region61: #{network_block_forward.2} parent=59 // pred_check
        %p4117 = pneg %p216
      $region62: #{network_block_forward.2} parent=59 // pred_check_branch
        %4119 = sbr.rel (%p4117) target = $region64
      $region63: #{network_block_forward.2} parent=59 // pred_region
        %p4120 = scmp.lt.s32.totalorder %s20, 1
        %s4121 = scalar_select %p4120, %s20, 1
        %s4122 = smul.addr %s4121, 8
        %s4123 = smul.addr %s4122, 4
        %s4124 = scalar_lea.vmem %s8, %s4123
      $region64: #{network_block_forward.2} parent=59 // pred_fallthru
        _
    $region60: #{network_block_forward.2} parent=5 // pred_fallthru
      _
  $region6: #{network_block_forward.2} parent=0 // loop_footer
    %s18 = sadd.s32 1, %s14
  $region7: #{network_block_forward.2} parent=0 // loop_footer_branch
    %13 = sbr.rel target = $region3
  $region8: #{network_block_forward.2} parent=0 // loop_exit
    _

// kernel: network_block_forward.3
$region0: #{network_block_forward.3}
  #allocation0 [shape = 'u32[]', space=smem, size = 0x4, offset = 0x4, fixed_abs, tag = 'smem constant byte address 0x4 - core index']
  #allocation1 [shape = 'u32[144,128]{1,0:T(1,128)}', space=vmem, size = 0x12000, scoped, tag = 'internal scratch']
  #allocation2 [shape = 'bf16[1,10,10,128]{3,2,1,0:T(8,128)(2,1)}', space=vmem, size = 0xa000, scoped, tag = 'scratch operand']
  #allocation3 [shape = 'bf16[1,10,10,128]{3,2,1,0:T(8,128)(2,1)}', space=vmem, size = 0xa000, scoped, tag = 'scratch operand']
  #allocation4 [shape = 'f32[64,128]{1,0:T(8,128)}', space=vmem, size = 0x8000, scoped, tag = 'scratch operand']
  %s0 = inlined_call_operand.vmem [shape: bf16[2,8,8,128], index: 0, kind: input, shape index: {}]
  %s1 = inlined_call_operand.vmem [shape: f32[1,1,128], index: 1, kind: input, shape index: {}]
  %s2 = inlined_call_operand.vmem [shape: f32[1,1,128], index: 2, kind: input, shape index: {}]
  %s3 = inlined_call_operand.vmem [shape: bf16[9,128,128], index: 3, kind: input, shape index: {}]
  %s4 = inlined_call_operand.vmem [shape: f32[1,1,128], index: 4, kind: input, shape index: {}]
  %s5 = inlined_call_operand.vmem [shape: f32[1,1,128], index: 5, kind: input, shape index: {}]
  %s6 = inlined_call_operand.vmem [shape: bf16[9,128,128], index: 6, kind: input, shape index: {}]
  %s7 = inlined_call_operand.vmem [shape: bf16[2,8,8,128], index: 7, kind: output, shape index: {}]
  %s8 = sld [smem:[#allocation0]]
  $region61: #{network_block_forward.3} parent=0
    _
  %s10 = ssub.s32 1, %s8
  %s11 = scalar_select 0, %s10, %s8
  loop: start=0, step=1, limit=4
  $region2: #{network_block_forward.3} parent=0 // loop_pre_header
    _
  $region3: #{network_block_forward.3} parent=0 // loop_header
    %s13 = sphi 0, %s17
    %p14 = scmp.ge.s32.totalorder %s13, 4
    %s23 = sphi 0, %s25
    %s26 = sphi 0, %s23
    %s27 = sphi 0, %s26
    %s43 = sphi 0, %s27
    %s47 = sphi 0, %s47
    %s49 = sphi 0, %s47
    %s50 = sphi 0, %s49
    %s64 = sphi 0, %s50
    %s68 = sphi 0, %s68
    %s70 = sphi 0, %s68
    %s71 = sphi 0, %s70
    %s85 = sphi 0, %s71
    %s89 = sphi 0, %s89
    %s91 = sphi 0, %s89
    %s92 = sphi 0, %s91
    %s106 = sphi 0, %s92
    %s110 = sphi 0, %s110
    %s112 = sphi 0, %s110
    %s113 = sphi 0, %s112
    %s127 = sphi 0, %s113
    %s131 = sphi 0, %s131
    %s133 = sphi 0, %s131
    %s134 = sphi 0, %s133
    %s148 = sphi 0, %s134
    %s152 = sphi 0, %s152
    %s154 = sphi 0, %s152
    %s155 = sphi 0, %s154
    %s169 = sphi 0, %s155
    %s175 = sphi 0, %s177
    %s178 = sphi 0, %s175
    %s179 = sphi 0, %s178
    %s195 = sphi 0, %s179
  $region4: #{network_block_forward.3} parent=0 // loop_header_branch
    %16 = sbr.rel (%p14) target = $region8
  $region5: #{network_block_forward.3} parent=0 // loop_body
    %s18 = ssub.s32 %s13, 1
    %s19 = ssub.s32 %s13, 2
    %s20 = sadd.s32 %s13, 1
    %s21 = ssub.s32 %s13, %s20
    %p22 = scmp.eq.s32.totalorder %s21, 0
    %s24 = sadd.s32 %s23, 1
    %s25 = scalar_select %p22, %s23, %s24
    %p28 = pneg %p22
    %p29 = scmp.eq.s32.totalorder %s13, 1
    %p30 = por %p28, %p29
    %p31 = scmp.ne.s32.totalorder %s23, %s26
    %p32 = scmp.eq.s32.totalorder %s13, 0
    %p33 = por %p31, %p32
    %p34 = scmp.ne.s32.totalorder %s23, %s26
    %p35 = scmp.eq.s32.totalorder %s18, 1
    %p36 = por %p34, %p35
    %p37 = scmp.ne.s32.totalorder %s26, %s27
    %p38 = scmp.eq.s32.totalorder %s18, 0
    %p39 = por %p37, %p38
    %p40 = scmp.ne.s32.totalorder %s26, %s27
    %p41 = scmp.eq.s32.totalorder %s19, 1
    %p42 = por %p40, %p41
    %p44 = scmp.ne.s32.totalorder %s27, %s43
    %p45 = scmp.eq.s32.totalorder %s19, 0
    %p46 = por %p44, %p45
    %s48 = sadd.s32 %s47, 1
    %p51 = scmp.eq.s32.totalorder %s13, 1
    %p52 = scmp.ne.s32.totalorder %s47, %s49
    %p53 = scmp.eq.s32.totalorder %s13, 0
    %p54 = por %p52, %p53
    %p55 = scmp.ne.s32.totalorder %s47, %s49
    %p56 = scmp.eq.s32.totalorder %s18, 1
    %p57 = por %p55, %p56
    %p58 = scmp.ne.s32.totalorder %s49, %s50
    %p59 = scmp.eq.s32.totalorder %s18, 0
    %p60 = por %p58, %p59
    %p61 = scmp.ne.s32.totalorder %s49, %s50
    %p62 = scmp.eq.s32.totalorder %s19, 1
    %p63 = por %p61, %p62
    %p65 = scmp.ne.s32.totalorder %s50, %s64
    %p66 = scmp.eq.s32.totalorder %s19, 0
    %p67 = por %p65, %p66
    %s69 = sadd.s32 %s68, 1
    %p72 = scmp.eq.s32.totalorder %s13, 1
    %p73 = scmp.ne.s32.totalorder %s68, %s70
    %p74 = scmp.eq.s32.totalorder %s13, 0
    %p75 = por %p73, %p74
    %p76 = scmp.ne.s32.totalorder %s68, %s70
    %p77 = scmp.eq.s32.totalorder %s18, 1
    %p78 = por %p76, %p77
    %p79 = scmp.ne.s32.totalorder %s70, %s71
    %p80 = scmp.eq.s32.totalorder %s18, 0
    %p81 = por %p79, %p80
    %p82 = scmp.ne.s32.totalorder %s70, %s71
    %p83 = scmp.eq.s32.totalorder %s19, 1
    %p84 = por %p82, %p83
    %p86 = scmp.ne.s32.totalorder %s71, %s85
    %p87 = scmp.eq.s32.totalorder %s19, 0
    %p88 = por %p86, %p87
    %s90 = sadd.s32 %s89, 1
    %p93 = scmp.eq.s32.totalorder %s13, 1
    %p94 = scmp.ne.s32.totalorder %s89, %s91
    %p95 = scmp.eq.s32.totalorder %s13, 0
    %p96 = por %p94, %p95
    %p97 = scmp.ne.s32.totalorder %s89, %s91
    %p98 = scmp.eq.s32.totalorder %s18, 1
    %p99 = por %p97, %p98
    %p100 = scmp.ne.s32.totalorder %s91, %s92
    %p101 = scmp.eq.s32.totalorder %s18, 0
    %p102 = por %p100, %p101
    %p103 = scmp.ne.s32.totalorder %s91, %s92
    %p104 = scmp.eq.s32.totalorder %s19, 1
    %p105 = por %p103, %p104
    %p107 = scmp.ne.s32.totalorder %s92, %s106
    %p108 = scmp.eq.s32.totalorder %s19, 0
    %p109 = por %p107, %p108
    %s111 = sadd.s32 %s110, 1
    %p114 = scmp.eq.s32.totalorder %s13, 1
    %p115 = scmp.ne.s32.totalorder %s110, %s112
    %p116 = scmp.eq.s32.totalorder %s13, 0
    %p117 = por %p115, %p116
    %p118 = scmp.ne.s32.totalorder %s110, %s112
    %p119 = scmp.eq.s32.totalorder %s18, 1
    %p120 = por %p118, %p119
    %p121 = scmp.ne.s32.totalorder %s112, %s113
    %p122 = scmp.eq.s32.totalorder %s18, 0
    %p123 = por %p121, %p122
    %p124 = scmp.ne.s32.totalorder %s112, %s113
    %p125 = scmp.eq.s32.totalorder %s19, 1
    %p126 = por %p124, %p125
    %p128 = scmp.ne.s32.totalorder %s113, %s127
    %p129 = scmp.eq.s32.totalorder %s19, 0
    %p130 = por %p128, %p129
    %s132 = sadd.s32 %s131, 1
    %p135 = scmp.eq.s32.totalorder %s13, 1
    %p136 = scmp.ne.s32.totalorder %s131, %s133
    %p137 = scmp.eq.s32.totalorder %s13, 0
    %p138 = por %p136, %p137
    %p139 = scmp.ne.s32.totalorder %s131, %s133
    %p140 = scmp.eq.s32.totalorder %s18, 1
    %p141 = por %p139, %p140
    %p142 = scmp.ne.s32.totalorder %s133, %s134
    %p143 = scmp.eq.s32.totalorder %s18, 0
    %p144 = por %p142, %p143
    %p145 = scmp.ne.s32.totalorder %s133, %s134
    %p146 = scmp.eq.s32.totalorder %s19, 1
    %p147 = por %p145, %p146
    %p149 = scmp.ne.s32.totalorder %s134, %s148
    %p150 = scmp.eq.s32.totalorder %s19, 0
    %p151 = por %p149, %p150
    %s153 = sadd.s32 %s152, 1
    %p156 = scmp.eq.s32.totalorder %s13, 1
    %p157 = scmp.ne.s32.totalorder %s152, %s154
    %p158 = scmp.eq.s32.totalorder %s13, 0
    %p159 = por %p157, %p158
    %p160 = scmp.ne.s32.totalorder %s152, %s154
    %p161 = scmp.eq.s32.totalorder %s18, 1
    %p162 = por %p160, %p161
    %p163 = scmp.ne.s32.totalorder %s154, %s155
    %p164 = scmp.eq.s32.totalorder %s18, 0
    %p165 = por %p163, %p164
    %p166 = scmp.ne.s32.totalorder %s154, %s155
    %p167 = scmp.eq.s32.totalorder %s19, 1
    %p168 = por %p166, %p167
    %p170 = scmp.ne.s32.totalorder %s155, %s169
    %p171 = scmp.eq.s32.totalorder %s19, 0
    %p172 = por %p170, %p171
    %s173 = ssub.s32 %s13, %s20
    %p174 = scmp.eq.s32.totalorder %s173, 0
    %s176 = sadd.s32 %s175, 1
    %s177 = scalar_select %p174, %s175, %s176
    %p180 = pneg %p174
    %p181 = scmp.eq.s32.totalorder %s13, 1
    %p182 = por %p180, %p181
    %p183 = scmp.ne.s32.totalorder %s175, %s178
    %p184 = scmp.eq.s32.totalorder %s13, 0
    %p185 = por %p183, %p184
    %p186 = scmp.ne.s32.totalorder %s175, %s178
    %p187 = scmp.eq.s32.totalorder %s18, 1
    %p188 = por %p186, %p187
    %p189 = scmp.ne.s32.totalorder %s178, %s179
    %p190 = scmp.eq.s32.totalorder %s18, 0
    %p191 = por %p189, %p190
    %p192 = scmp.ne.s32.totalorder %s178, %s179
    %p193 = scmp.eq.s32.totalorder %s19, 1
    %p194 = por %p192, %p193
    %p196 = scmp.ne.s32.totalorder %s179, %s195
    %p197 = scmp.eq.s32.totalorder %s19, 0
    %p198 = por %p196, %p197
    %p199 = scmp.le.s32.totalorder 1, %s13
    %p200 = scmp.lt.s32.totalorder %s13, 3
    %p201 = pnand %p199, %p200
    %p202 = pneg %p201
    // Predicated region
    $region9: #{network_block_forward.3} parent=5 // pred_check
      _
    $region10: #{network_block_forward.3} parent=5 // pred_check_branch
      %204 = sbr.rel (%p201) target = $region12
    $region11: #{network_block_forward.3} parent=5 // pred_region
      %s205 = ssub.s32 %s13, 1
      // Predicated region
      $region13: #{network_block_forward.3} parent=11 // pred_check
        %p206 = pneg %p60
      $region14: #{network_block_forward.3} parent=11 // pred_check_branch
        %208 = sbr.rel (%p206) target = $region16
      $region15: #{network_block_forward.3} parent=11 // pred_region
        _
      $region16: #{network_block_forward.3} parent=11 // pred_fallthru
        _
      // Predicated region
      $region17: #{network_block_forward.3} parent=11 // pred_check
        %p209 = pneg %p81
      $region18: #{network_block_forward.3} parent=11 // pred_check_branch
        %211 = sbr.rel (%p209) target = $region20
      $region19: #{network_block_forward.3} parent=11 // pred_region
        _
      $region20: #{network_block_forward.3} parent=11 // pred_fallthru
        _
      // Predicated region
      $region21: #{network_block_forward.3} parent=11 // pred_check
        %p212 = pneg %p102
      $region22: #{network_block_forward.3} parent=11 // pred_check_branch
        %214 = sbr.rel (%p212) target = $region24
      $region23: #{network_block_forward.3} parent=11 // pred_region
        _
      $region24: #{network_block_forward.3} parent=11 // pred_fallthru
        _
      // Predicated region
      $region25: #{network_block_forward.3} parent=11 // pred_check
        %p215 = pneg %p123
      $region26: #{network_block_forward.3} parent=11 // pred_check_branch
        %217 = sbr.rel (%p215) target = $region28
      $region27: #{network_block_forward.3} parent=11 // pred_region
        _
      $region28: #{network_block_forward.3} parent=11 // pred_fallthru
        _
      // Predicated region
      $region29: #{network_block_forward.3} parent=11 // pred_check
        %p218 = pneg %p144
      $region30: #{network_block_forward.3} parent=11 // pred_check_branch
        %220 = sbr.rel (%p218) target = $region32
      $region31: #{network_block_forward.3} parent=11 // pred_region
        _
      $region32: #{network_block_forward.3} parent=11 // pred_fallthru
        _
      // Predicated region
      $region33: #{network_block_forward.3} parent=11 // pred_check
        %p221 = pneg %p165
      $region34: #{network_block_forward.3} parent=11 // pred_check_branch
        %223 = sbr.rel (%p221) target = $region36
      $region35: #{network_block_forward.3} parent=11 // pred_region
        _
      $region36: #{network_block_forward.3} parent=11 // pred_fallthru
        _
    $region12: #{network_block_forward.3} parent=5 // pred_fallthru
      _
    %p224 = scmp.lt.s32.totalorder %s13, 2
    // Predicated region
    $region37: #{network_block_forward.3} parent=5 // pred_check
      %p225 = pneg %p224
    $region38: #{network_block_forward.3} parent=5 // pred_check_branch
      %227 = sbr.rel (%p225) target = $region40
    $region39: #{network_block_forward.3} parent=5 // pred_region
      // Predicated region
      $region41: #{network_block_forward.3} parent=39 // pred_check
        %p228 = pneg %p33
      $region42: #{network_block_forward.3} parent=39 // pred_check_branch
        %230 = sbr.rel (%p228) target = $region44
      $region43: #{network_block_forward.3} parent=39 // pred_region
        %p231 = scmp.lt.s32.totalorder %s13, 1
        %s232 = scalar_select %p231, %s13, 1
        %s233 = smul.addr %s232, 8
        %s234 = smul.addr %s233, 4
        %s235 = scalar_lea.vmem %s0, %s234
      $region44: #{network_block_forward.3} parent=39 // pred_fallthru
        _
    $region40: #{network_block_forward.3} parent=5 // pred_fallthru
      _
    %p236 = scmp.le.s32.totalorder 1, %s13
    %p237 = scmp.lt.s32.totalorder %s13, 3
    %p238 = pnand %p236, %p237
    %p239 = pneg %p238
    // Predicated region
    $region45: #{network_block_forward.3} parent=5 // pred_check
      _
    $region46: #{network_block_forward.3} parent=5 // pred_check_branch
      %241 = sbr.rel (%p238) target = $region48
    $region47: #{network_block_forward.3} parent=5 // pred_region
      %s242 = ssub.s32 %s13, 1
      %p243 = scmp.lt.s32.totalorder %s18, 1
      %s244 = scalar_select %p243, %s18, 1
      %s245 = smul.addr %s244, 8
      %s246 = smul.addr %s245, 4
      %s247 = scalar_lea.vmem %s0, %s246
      %p248 = pneg %p39
      %p249 = pneg %p36
      %p250 = pneg %p60
      %p251 = pneg %p57
      %p252 = pneg %p81
      %p253 = pneg %p78
      %p254 = pneg %p102
      %p255 = pneg %p99
      %p256 = pneg %p123
      %p257 = pneg %p120
      %p258 = pneg %p144
      %p259 = pneg %p141
      %p260 = pneg %p165
      %p261 = pneg %p162
      %p262 = pneg %p191
      %p263 = pneg %p188
      %p264 = scmp.lt.s32.totalorder %s18, 1
      %s265 = scalar_select %p264, %s18, 1
      %s266 = smul.addr %s265, 8
      %s267 = smul.addr %s266, 4
      %s268 = scalar_lea.vmem %s7, %s267
      %p269 = scmp.lt.s32.totalorder %s18, 1
      %s270 = scalar_select %p269, %s18, 1
      %s271 = smul.addr %s270, 8
      %s272 = smul.addr %s271, 4
      %s273 = scalar_lea.vmem %s0, %s272
      %p274 = scmp.lt.s32.totalorder %s18, 1
      %s275 = scalar_select %p274, %s18, 1
      %s276 = smul.addr %s275, 8
      %s277 = smul.addr %s276, 4
      %s278 = scalar_lea.vmem %s7, %s277
      %v280 = vld [vmem:[%s273] sm:$0xf]
      %v281 = vld [vmem:[%s273 + $0x4] sm:$0xf]
      %v282 = vld [vmem:[%s273 + $0x8] sm:$0xf]
      %v283 = vld [vmem:[%s273 + $0xc] sm:$0xf]
      %v284 = vld [vmem:[%s273 + $0x10] sm:$0xf]
      %v285 = vld [vmem:[%s273 + $0x14] sm:$0xf]
      %v286 = vld [vmem:[%s273 + $0x18] sm:$0xf]
      %v287 = vld [vmem:[%s273 + $0x1c] sm:$0xf]
      %v288 = vunpack.c.l.bf16 %v280
      %v289 = vunpack.c.l.bf16 %v281
      %v290 = vunpack.c.l.bf16 %v282
      %v291 = vunpack.c.l.bf16 %v283
      %v292 = vunpack.c.l.bf16 %v284
      %v293 = vunpack.c.l.bf16 %v285
      %v294 = vunpack.c.l.bf16 %v286
      %v295 = vunpack.c.l.bf16 %v287
      %v296 = vld [vmem:[%s1] sm:$0x1]
      %v298 = vlaneseq
      %v299 = vshrl.u32 %v298, 7
      %v300 = vsub.s32 0, %v299
      %v301 = vrot.slane %v296, %v300
      %v303 = vmul.f32 %v288, %v301
      %v304 = vmul.f32 %v289, %v301
      %v305 = vmul.f32 %v290, %v301
      %v306 = vmul.f32 %v291, %v301
      %v307 = vmul.f32 %v292, %v301
      %v308 = vmul.f32 %v293, %v301
      %v309 = vmul.f32 %v294, %v301
      %v310 = vmul.f32 %v295, %v301
      %v311 = vld [vmem:[%s2] sm:$0x1]
      %v313 = vlaneseq
      %v314 = vshrl.u32 %v313, 7
      %v315 = vsub.s32 0, %v314
      %v316 = vrot.slane %v311, %v315
      %v318 = vadd.f32 %v303, %v316
      %v319 = vadd.f32 %v304, %v316
      %v320 = vadd.f32 %v305, %v316
      %v321 = vadd.f32 %v306, %v316
      %v322 = vadd.f32 %v307, %v316
      %v323 = vadd.f32 %v308, %v316
      %v324 = vadd.f32 %v309, %v316
      %v325 = vadd.f32 %v310, %v316
      %v326 = vmax.f32 %v318, 0.0
      %v327 = vmax.f32 %v319, 0.0
      %v328 = vmax.f32 %v320, 0.0
      %v329 = vmax.f32 %v321, 0.0
      %v330 = vmax.f32 %v322, 0.0
      %v331 = vmax.f32 %v323, 0.0
      %v332 = vmax.f32 %v324, 0.0
      %v333 = vmax.f32 %v325, 0.0
      %v334 = vpack.c.bf16 %v326, %v326
      %v335 = vpack.c.bf16 %v327, %v327
      %v336 = vpack.c.bf16 %v328, %v328
      %v337 = vpack.c.bf16 %v329, %v329
      %v338 = vpack.c.bf16 %v330, %v330
      %v339 = vpack.c.bf16 %v331, %v331
      %v340 = vpack.c.bf16 %v332, %v332
      %v341 = vpack.c.bf16 %v333, %v333
      %342 = vst [vmem:[#allocation2] sm:$0xf] 0
      %343 = vst [vmem:[#allocation2 + $0x4] sm:$0x1] 0
      %vm344 = vcmask 1040384
      %vm345 = vsmask.f32 256
      %vm346 = vmand %vm344, %vm345
      %v347 = vld [vmem:[#allocation2] sm:$0x1]
      %v348 = vsel %vm346, 0, %v347
      %349 = vst [vmem:[#allocation2] sm:$0x1] %v348
      %v350 = vld [vmem:[#allocation2 + $0x8] sm:$0x1]
      %v351 = vsel %vm346, 0, %v350
      %352 = vst [vmem:[#allocation2 + $0x8] sm:$0x1] %v351
      %v353 = vld [vmem:[#allocation2 + $0x10] sm:$0x1]
      %v354 = vsel %vm346, 0, %v353
      %355 = vst [vmem:[#allocation2 + $0x10] sm:$0x1] %v354
      %v356 = vld [vmem:[#allocation2 + $0x18] sm:$0x1]
      %v357 = vsel %vm346, 0, %v356
      %358 = vst [vmem:[#allocation2 + $0x18] sm:$0x1] %v357
      %v359 = vld [vmem:[#allocation2 + $0x20] sm:$0x1]
      %v360 = vsel %vm346, 0, %v359
      %361 = vst [vmem:[#allocation2 + $0x20] sm:$0x1] %v360
      %v362 = vld [vmem:[#allocation2 + $0x28] sm:$0x1]
      %v363 = vsel %vm346, 0, %v362
      %364 = vst [vmem:[#allocation2 + $0x28] sm:$0x1] %v363
      %v365 = vld [vmem:[#allocation2 + $0x30] sm:$0x1]
      %v366 = vsel %vm346, 0, %v365
      %367 = vst [vmem:[#allocation2 + $0x30] sm:$0x1] %v366
      %v368 = vld [vmem:[#allocation2 + $0x38] sm:$0x1]
      %v369 = vsel %vm346, 0, %v368
      %370 = vst [vmem:[#allocation2 + $0x38] sm:$0x1] %v369
      %v371 = vld [vmem:[#allocation2 + $0x40] sm:$0x1]
      %v372 = vsel %vm346, 0, %v371
      %373 = vst [vmem:[#allocation2 + $0x40] sm:$0x1] %v372
      %v374 = vld [vmem:[#allocation2 + $0x48] sm:$0x1]
      %v375 = vsel %vm346, 0, %v374
      %376 = vst [vmem:[#allocation2 + $0x48] sm:$0x1] %v375
      %s377 = scalar_lea.vmem [#allocation2], 72
      %378 = vst [vmem:[%s377] sm:$0xf] 0
      %379 = vst [vmem:[%s377 + $0x4] sm:$0x1] 0
      %vm380 = vsmask.f32 7938
      %vm381 = vmand %vm344, %vm380
      %v382 = vld [vmem:[#allocation2 + $0x4] sm:$0x1]
      %v383 = vsel %vm381, 0, %v382
      %384 = vst [vmem:[#allocation2 + $0x4] sm:$0x1] %v383
      %v385 = vld [vmem:[#allocation2 + $0xc] sm:$0x1]
      %v386 = vsel %vm381, 0, %v385
      %387 = vst [vmem:[#allocation2 + $0xc] sm:$0x1] %v386
      %v388 = vld [vmem:[#allocation2 + $0x14] sm:$0x1]
      %v389 = vsel %vm381, 0, %v388
      %390 = vst [vmem:[#allocation2 + $0x14] sm:$0x1] %v389
      %v391 = vld [vmem:[#allocation2 + $0x1c] sm:$0x1]
      %v392 = vsel %vm381, 0, %v391
      %393 = vst [vmem:[#allocation2 + $0x1c] sm:$0x1] %v392
      %v394 = vld [vmem:[#allocation2 + $0x24] sm:$0x1]
      %v395 = vsel %vm381, 0, %v394
      %396 = vst [vmem:[#allocation2 + $0x24] sm:$0x1] %v395
      %v397 = vld [vmem:[#allocation2 + $0x2c] sm:$0x1]
      %v398 = vsel %vm381, 0, %v397
      %399 = vst [vmem:[#allocation2 + $0x2c] sm:$0x1] %v398
      %v400 = vld [vmem:[#allocation2 + $0x34] sm:$0x1]
      %v401 = vsel %vm381, 0, %v400
      %402 = vst [vmem:[#allocation2 + $0x34] sm:$0x1] %v401
      %v403 = vld [vmem:[#allocation2 + $0x3c] sm:$0x1]
      %v404 = vsel %vm381, 0, %v403
      %405 = vst [vmem:[#allocation2 + $0x3c] sm:$0x1] %v404
      %v406 = vld [vmem:[#allocation2 + $0x44] sm:$0x1]
      %v407 = vsel %vm381, 0, %v406
      %408 = vst [vmem:[#allocation2 + $0x44] sm:$0x1] %v407
      %v409 = vld [vmem:[#allocation2 + $0x4c] sm:$0x1]
      %v410 = vsel %vm381, 0, %v409
      %411 = vst [vmem:[#allocation2 + $0x4c] sm:$0x1] %v410
      %v420 = vunpack.c.l.b16 %v334
      %v421 = vunpack.c.l.b16 %v335
      %v422 = vunpack.c.l.b16 %v336
      %v423 = vunpack.c.l.b16 %v337
      %v424 = vunpack.c.l.b16 %v338
      %v425 = vunpack.c.l.b16 %v339
      %v426 = vunpack.c.l.b16 %v340
      %v427 = vunpack.c.l.b16 %v341
      %v428 = vpack.c.b16 %v420, %v420
      %v429 = vpack.c.b16 %v421, %v421
      %v430 = vpack.c.b16 %v422, %v422
      %v431 = vpack.c.b16 %v423, %v423
      %v432 = vpack.c.b16 %v424, %v424
      %v433 = vpack.c.b16 %v425, %v425
      %v434 = vpack.c.b16 %v426, %v426
      %v435 = vpack.c.b16 %v427, %v427
      %v437 = vshrl.u32 %v428, 16
      %v439 = vrot.slane %v437, 7
      %v440 = vshll.u32 %v428, 16
      %v442 = vor.u32 %v439, %v440
      %v443 = vrot.slane %v439, 4
      %v445 = vshrl.u32 %v429, 16
      %v447 = vrot.slane %v445, 7
      %v448 = vshll.u32 %v429, 16
      %v450 = vor.u32 %v447, %v448
      %v451 = vrot.slane %v447, 4
      %v453 = vshrl.u32 %v430, 16
      %v455 = vrot.slane %v453, 7
      %v456 = vshll.u32 %v430, 16
      %v458 = vor.u32 %v455, %v456
      %v459 = vrot.slane %v455, 4
      %v461 = vshrl.u32 %v431, 16
      %v463 = vrot.slane %v461, 7
      %v464 = vshll.u32 %v431, 16
      %v466 = vor.u32 %v463, %v464
      %v467 = vrot.slane %v463, 4
      %v469 = vshrl.u32 %v432, 16
      %v471 = vrot.slane %v469, 7
      %v472 = vshll.u32 %v432, 16
      %v474 = vor.u32 %v471, %v472
      %v475 = vrot.slane %v471, 4
      %v477 = vshrl.u32 %v433, 16
      %v479 = vrot.slane %v477, 7
      %v480 = vshll.u32 %v433, 16
      %v482 = vor.u32 %v479, %v480
      %v483 = vrot.slane %v479, 4
      %v485 = vshrl.u32 %v434, 16
      %v487 = vrot.slane %v485, 7
      %v488 = vshll.u32 %v434, 16
      %v490 = vor.u32 %v487, %v488
      %v491 = vrot.slane %v487, 4
      %v493 = vshrl.u32 %v435, 16
      %v495 = vrot.slane %v493, 7
      %v496 = vshll.u32 %v435, 16
      %v498 = vor.u32 %v495, %v496
      %v499 = vrot.slane %v495, 4
      %s516 = scalar_lea.vmem [#allocation2], 8
      %vm517 = vcmask 1043456
      %vm518 = vmand %vm517, %vm380
      %v519 = vld [vmem:[%s516] sm:$0xf]
      %v520 = vsel %vm518, %v442, %v519
      %521 = vst [vmem:[%s516] sm:$0xf] %v520
      %v522 = vld [vmem:[%s516 + $0x4] sm:$0x1]
      %v523 = vsel %vm346, %v443, %v522
      %524 = vst [vmem:[%s516 + $0x4] sm:$0x1] %v523
      %v525 = vld [vmem:[%s516 + $0x8] sm:$0xf]
      %v526 = vsel %vm518, %v450, %v525
      %527 = vst [vmem:[%s516 + $0x8] sm:$0xf] %v526
      %v528 = vld [vmem:[%s516 + $0xc] sm:$0x1]
      %v529 = vsel %vm346, %v451, %v528
      %530 = vst [vmem:[%s516 + $0xc] sm:$0x1] %v529
      %v531 = vld [vmem:[%s516 + $0x10] sm:$0xf]
      %v532 = vsel %vm518, %v458, %v531
      %533 = vst [vmem:[%s516 + $0x10] sm:$0xf] %v532
      %v534 = vld [vmem:[%s516 + $0x14] sm:$0x1]
      %v535 = vsel %vm346, %v459, %v534
      %536 = vst [vmem:[%s516 + $0x14] sm:$0x1] %v535
      %v537 = vld [vmem:[%s516 + $0x18] sm:$0xf]
      %v538 = vsel %vm518, %v466, %v537
      %539 = vst [vmem:[%s516 + $0x18] sm:$0xf] %v538
      %v540 = vld [vmem:[%s516 + $0x1c] sm:$0x1]
      %v541 = vsel %vm346, %v467, %v540
      %542 = vst [vmem:[%s516 + $0x1c] sm:$0x1] %v541
      %v543 = vld [vmem:[%s516 + $0x20] sm:$0xf]
      %v544 = vsel %vm518, %v474, %v543
      %545 = vst [vmem:[%s516 + $0x20] sm:$0xf] %v544
      %v546 = vld [vmem:[%s516 + $0x24] sm:$0x1]
      %v547 = vsel %vm346, %v475, %v546
      %548 = vst [vmem:[%s516 + $0x24] sm:$0x1] %v547
      %v549 = vld [vmem:[%s516 + $0x28] sm:$0xf]
      %v550 = vsel %vm518, %v482, %v549
      %551 = vst [vmem:[%s516 + $0x28] sm:$0xf] %v550
      %v552 = vld [vmem:[%s516 + $0x2c] sm:$0x1]
      %v553 = vsel %vm346, %v483, %v552
      %554 = vst [vmem:[%s516 + $0x2c] sm:$0x1] %v553
      %v555 = vld [vmem:[%s516 + $0x30] sm:$0xf]
      %v556 = vsel %vm518, %v490, %v555
      %557 = vst [vmem:[%s516 + $0x30] sm:$0xf] %v556
      %v558 = vld [vmem:[%s516 + $0x34] sm:$0x1]
      %v559 = vsel %vm346, %v491, %v558
      %560 = vst [vmem:[%s516 + $0x34] sm:$0x1] %v559
      %v561 = vld [vmem:[%s516 + $0x38] sm:$0xf]
      %v562 = vsel %vm518, %v498, %v561
      %563 = vst [vmem:[%s516 + $0x38] sm:$0xf] %v562
      %v564 = vld [vmem:[%s516 + $0x3c] sm:$0x1]
      %v565 = vsel %vm346, %v499, %v564
      %566 = vst [vmem:[%s516 + $0x3c] sm:$0x1] %v565
      %v567 = vld [vmem:[#allocation2] sm:$0xf]
      %v568 = vld [vmem:[#allocation2 + $0x8] sm:$0xf]
      %v569 = vld [vmem:[#allocation2 + $0x10] sm:$0xf]
      %v570 = vld [vmem:[#allocation2 + $0x18] sm:$0xf]
      %v571 = vld [vmem:[#allocation2 + $0x20] sm:$0xf]
      %v572 = vld [vmem:[#allocation2 + $0x28] sm:$0xf]
      %v573 = vld [vmem:[#allocation2 + $0x30] sm:$0xf]
      %v574 = vld [vmem:[#allocation2 + $0x38] sm:$0xf]
      %v575 = vld [vmem:[%s3] sm:$0xf]
      %v576 = vld [vmem:[%s3 + $0x4] sm:$0xf]
      %v577 = vld [vmem:[%s3 + $0x8] sm:$0xf]
      %v578 = vld [vmem:[%s3 + $0xc] sm:$0xf]
      %v579 = vld [vmem:[%s3 + $0x10] sm:$0xf]
      %v580 = vld [vmem:[%s3 + $0x14] sm:$0xf]
      %v581 = vld [vmem:[%s3 + $0x18] sm:$0xf]
      %v582 = vld [vmem:[%s3 + $0x1c] sm:$0xf]
      %v583 = vld [vmem:[%s3 + $0x20] sm:$0xf]
      %v584 = vld [vmem:[%s3 + $0x24] sm:$0xf]
      %v585 = vld [vmem:[%s3 + $0x28] sm:$0xf]
      %v586 = vld [vmem:[%s3 + $0x2c] sm:$0xf]
      %v587 = vld [vmem:[%s3 + $0x30] sm:$0xf]
      %v588 = vld [vmem:[%s3 + $0x34] sm:$0xf]
      %v589 = vld [vmem:[%s3 + $0x38] sm:$0xf]
      %v590 = vld [vmem:[%s3 + $0x3c] sm:$0xf]
      %v599 = vunpack.c.l.b16 %v567
      %v600 = vunpack.c.l.b16 %v568
      %v601 = vunpack.c.l.b16 %v569
      %v602 = vunpack.c.l.b16 %v570
      %v603 = vunpack.c.l.b16 %v571
      %v604 = vunpack.c.l.b16 %v572
      %v605 = vunpack.c.l.b16 %v573
      %v606 = vunpack.c.l.b16 %v574
      %v607 = vpack.c.b16 %v600, %v599
      %v608 = vpack.c.b16 %v602, %v601
      %v609 = vpack.c.b16 %v604, %v603
      %v610 = vpack.c.b16 %v606, %v605
      %v631 = vunpack.c.l.b16 %v575
      %v632 = vunpack.c.l.b16 %v576
      %v633 = vunpack.c.l.b16 %v577
      %v634 = vunpack.c.l.b16 %v578
      %v635 = vunpack.c.l.b16 %v579
      %v636 = vunpack.c.l.b16 %v580
      %v637 = vunpack.c.l.b16 %v581
      %v638 = vunpack.c.l.b16 %v582
      %v639 = vunpack.c.l.b16 %v583
      %v640 = vunpack.c.l.b16 %v584
      %v641 = vunpack.c.l.b16 %v585
      %v642 = vunpack.c.l.b16 %v586
      %v643 = vunpack.c.l.b16 %v587
      %v644 = vunpack.c.l.b16 %v588
      %v645 = vunpack.c.l.b16 %v589
      %v646 = vunpack.c.l.b16 %v590
      %v647 = vpack.c.b16 %v632, %v631
      %v648 = vpack.c.b16 %v634, %v633
      %v649 = vpack.c.b16 %v636, %v635
      %v650 = vpack.c.b16 %v638, %v637
      %v651 = vpack.c.b16 %v640, %v639
      %v652 = vpack.c.b16 %v642, %v641
      %v653 = vpack.c.b16 %v644, %v643
      %v654 = vpack.c.b16 %v646, %v645
      %663 = vmatprep.subr.bf16.mxu0 0
      %664 = vmatpush1.bf16.msra.mxu0 %v647
      %665 = vmatprep.subr.bf16.mxu0 0
      %666 = vmatpush1.bf16.msra.mxu0 %v648
      %667 = vmatprep.subr.bf16.mxu0 0
      %668 = vmatpush1.bf16.msra.mxu0 %v649
      %669 = vmatprep.subr.bf16.mxu0 0
      %670 = vmatpush1.bf16.msra.mxu0 %v650
      %671 = vmatprep.subr.bf16.mxu0 0
      %672 = vmatpush1.bf16.msra.mxu0 %v651
      %673 = vmatprep.subr.bf16.mxu0 0
      %674 = vmatpush1.bf16.msra.mxu0 %v652
      %675 = vmatprep.subr.bf16.mxu0 0
      %676 = vmatpush1.bf16.msra.mxu0 %v653
      %677 = vmatprep.subr.bf16.mxu0 0
      %678 = vmatpush1.bf16.msra.mxu0 %v654
      %679 = vmatprep.subr.bf16.mxu0 0
      %680 = vmatpush1.bf16.msra.mxu0 0
      %681 = vmatprep.subr.bf16.mxu0 0
      %682 = vmatpush1.bf16.msra.mxu0 0
      %683 = vmatprep.subr.bf16.mxu0 0
      %684 = vmatpush1.bf16.msra.mxu0 0
      %685 = vmatprep.subr.bf16.mxu0 0
      %686 = vmatpush1.bf16.msra.mxu0 0
      %687 = vmatprep.subr.bf16.mxu0 0
      %688 = vmatpush1.bf16.msra.mxu0 0
      %689 = vmatprep.subr.bf16.mxu0 0
      %690 = vmatpush1.bf16.msra.mxu0 0
      %691 = vmatprep.subr.bf16.mxu0 0
      %692 = vmatpush1.bf16.msra.mxu0 0
      %693 = vmatprep.subr.bf16.mxu0 0
      %694 = vmatpush1.bf16.msra.mxu0 0
      %695 = vmatprep.mubr.bf16.mxu0 0
      %696 = vmatmul.mubr.bf16.gmra.mrb[0].mxu0 %v607
      %v697 = vpop.f32.mrb[0].mxu0
      %v698 = vadd.f32 0.0, %v697
      %v699 = vpop.f32.mrb[0].mxu0
      %v700 = vpop.f32.mrb[0].mxu0
      %v701 = vadd.f32 0.0, %v700
      %v702 = vpop.f32.mrb[0].mxu0
      %703 = vmatprep.mubr.bf16.mxu0 0
      %704 = vmatmul.mubr.bf16.gmra.mrb[0].mxu0 %v608
      %v705 = vpop.f32.mrb[0].mxu0
      %v706 = vadd.f32 0.0, %v705
      %v707 = vpop.f32.mrb[0].mxu0
      %v708 = vpop.f32.mrb[0].mxu0
      %v709 = vadd.f32 0.0, %v708
      %v710 = vpop.f32.mrb[0].mxu0
      %711 = vmatprep.mubr.bf16.mxu0 0
      %712 = vmatmul.mubr.bf16.gmra.mrb[0].mxu0 %v609
      %v713 = vpop.f32.mrb[0].mxu0
      %v714 = vadd.f32 0.0, %v713
      %v715 = vpop.f32.mrb[0].mxu0
      %v716 = vpop.f32.mrb[0].mxu0
      %v717 = vadd.f32 0.0, %v716
      %v718 = vpop.f32.mrb[0].mxu0
      %719 = vmatprep.mubr.bf16.mxu0 0
      %720 = vmatmul.mubr.bf16.gmra.mrb[0].mxu0 %v610
      %v721 = vpop.f32.mrb[0].mxu0
      %v722 = vadd.f32 0.0, %v721
      %v723 = vpop.f32.mrb[0].mxu0
      %v724 = vpop.f32.mrb[0].mxu0
      %v725 = vadd.f32 0.0, %v724
      %v726 = vpop.f32.mrb[0].mxu0
      %727 = vdwg.mxu0
      %728 = vst [vmem:[#allocation4] sm:$0xff] %v698
      %729 = vst [vmem:[#allocation4 + $0x8] sm:$0xff] %v701
      %730 = vst [vmem:[#allocation4 + $0x10] sm:$0xff] %v706
      %731 = vst [vmem:[#allocation4 + $0x18] sm:$0xff] %v709
      %732 = vst [vmem:[#allocation4 + $0x20] sm:$0xff] %v714
      %733 = vst [vmem:[#allocation4 + $0x28] sm:$0xff] %v717
      %734 = vst [vmem:[#allocation4 + $0x30] sm:$0xff] %v722
      %735 = vst [vmem:[#allocation4 + $0x38] sm:$0xff] %v725
      %v736 = vld [vmem:[#allocation2] sm:$0xf]
      %v737 = vld [vmem:[#allocation2 + $0x4] sm:$0x1]
      %v738 = vld [vmem:[#allocation2 + $0x8] sm:$0xf]
      %v739 = vld [vmem:[#allocation2 + $0xc] sm:$0x1]
      %v740 = vld [vmem:[#allocation2 + $0x10] sm:$0xf]
      %v741 = vld [vmem:[#allocation2 + $0x14] sm:$0x1]
      %v742 = vld [vmem:[#allocation2 + $0x18] sm:$0xf]
      %v743 = vld [vmem:[#allocation2 + $0x1c] sm:$0x1]
      %v744 = vld [vmem:[#allocation2 + $0x20] sm:$0xf]
      %v745 = vld [vmem:[#allocation2 + $0x24] sm:$0x1]
      %v746 = vld [vmem:[#allocation2 + $0x28] sm:$0xf]
      %v747 = vld [vmem:[#allocation2 + $0x2c] sm:$0x1]
      %v748 = vld [vmem:[#allocation2 + $0x30] sm:$0xf]
      %v749 = vld [vmem:[#allocation2 + $0x34] sm:$0x1]
      %v750 = vld [vmem:[#allocation2 + $0x38] sm:$0xf]
      %v751 = vld [vmem:[#allocation2 + $0x3c] sm:$0x1]
      %vm752 = vsmask.f32 3328
      %vm753 = vsmask.f32 7440
      %vm754 = vmor %vm752, %vm753
      %v756 = vshrl.u32 %v736, 16
      %v758 = vrot.slane %v756, 4
      %v759 = vshll.u32 %v736, 16
      %v761 = vrot.slane %v759, 5
      %v762 = vor.u32 %v758, %v761
      %v763 = vrot.slane %v762, 4
      %v765 = vshll.u32 %v737, 16
      %v767 = vrot.slane %v765, 5
      %v768 = vsel %vm754, %v763, %v767
      %v770 = vshrl.u32 %v738, 16
      %v772 = vrot.slane %v770, 4
      %v773 = vshll.u32 %v738, 16
      %v775 = vrot.slane %v773, 5
      %v776 = vor.u32 %v772, %v775
      %v777 = vrot.slane %v776, 4
      %v779 = vshll.u32 %v739, 16
      %v781 = vrot.slane %v779, 5
      %v782 = vsel %vm754, %v777, %v781
      %v784 = vshrl.u32 %v740, 16
      %v786 = vrot.slane %v784, 4
      %v787 = vshll.u32 %v740, 16
      %v789 = vrot.slane %v787, 5
      %v790 = vor.u32 %v786, %v789
      %v791 = vrot.slane %v790, 4
      %v793 = vshll.u32 %v741, 16
      %v795 = vrot.slane %v793, 5
      %v796 = vsel %vm754, %v791, %v795
      %v798 = vshrl.u32 %v742, 16
      %v800 = vrot.slane %v798, 4
      %v801 = vshll.u32 %v742, 16
      %v803 = vrot.slane %v801, 5
      %v804 = vor.u32 %v800, %v803
      %v805 = vrot.slane %v804, 4
      %v807 = vshll.u32 %v743, 16
      %v809 = vrot.slane %v807, 5
      %v810 = vsel %vm754, %v805, %v809
      %v812 = vshrl.u32 %v744, 16
      %v814 = vrot.slane %v812, 4
      %v815 = vshll.u32 %v744, 16
      %v817 = vrot.slane %v815, 5
      %v818 = vor.u32 %v814, %v817
      %v819 = vrot.slane %v818, 4
      %v821 = vshll.u32 %v745, 16
      %v823 = vrot.slane %v821, 5
      %v824 = vsel %vm754, %v819, %v823
      %v826 = vshrl.u32 %v746, 16
      %v828 = vrot.slane %v826, 4
      %v829 = vshll.u32 %v746, 16
      %v831 = vrot.slane %v829, 5
      %v832 = vor.u32 %v828, %v831
      %v833 = vrot.slane %v832, 4
      %v835 = vshll.u32 %v747, 16
      %v837 = vrot.slane %v835, 5
      %v838 = vsel %vm754, %v833, %v837
      %v840 = vshrl.u32 %v748, 16
      %v842 = vrot.slane %v840, 4
      %v843 = vshll.u32 %v748, 16
      %v845 = vrot.slane %v843, 5
      %v846 = vor.u32 %v842, %v845
      %v847 = vrot.slane %v846, 4
      %v849 = vshll.u32 %v749, 16
      %v851 = vrot.slane %v849, 5
      %v852 = vsel %vm754, %v847, %v851
      %v854 = vshrl.u32 %v750, 16
      %v856 = vrot.slane %v854, 4
      %v857 = vshll.u32 %v750, 16
      %v859 = vrot.slane %v857, 5
      %v860 = vor.u32 %v856, %v859
      %v861 = vrot.slane %v860, 4
      %v863 = vshll.u32 %v751, 16
      %v865 = vrot.slane %v863, 5
      %v866 = vsel %vm754, %v861, %v865
      %s867 = scalar_lea.vmem %s3, 64
      %v868 = vld [vmem:[%s867] sm:$0xf]
      %v869 = vld [vmem:[%s867 + $0x4] sm:$0xf]
      %v870 = vld [vmem:[%s867 + $0x8] sm:$0xf]
      %v871 = vld [vmem:[%s867 + $0xc] sm:$0xf]
      %v872 = vld [vmem:[%s867 + $0x10] sm:$0xf]
      %v873 = vld [vmem:[%s867 + $0x14] sm:$0xf]
      %v874 = vld [vmem:[%s867 + $0x18] sm:$0xf]
      %v875 = vld [vmem:[%s867 + $0x1c] sm:$0xf]
      %v876 = vld [vmem:[%s867 + $0x20] sm:$0xf]
      %v877 = vld [vmem:[%s867 + $0x24] sm:$0xf]
      %v878 = vld [vmem:[%s867 + $0x28] sm:$0xf]
      %v879 = vld [vmem:[%s867 + $0x2c] sm:$0xf]
      %v880 = vld [vmem:[%s867 + $0x30] sm:$0xf]
      %v881 = vld [vmem:[%s867 + $0x34] sm:$0xf]
      %v882 = vld [vmem:[%s867 + $0x38] sm:$0xf]
      %v883 = vld [vmem:[%s867 + $0x3c] sm:$0xf]
      %v884 = vunpack.c.l.b16 %v768
      %v885 = vunpack.c.l.b16 %v782
      %v886 = vunpack.c.l.b16 %v796
      %v887 = vunpack.c.l.b16 %v810
      %v888 = vunpack.c.l.b16 %v824
      %v889 = vunpack.c.l.b16 %v838
      %v890 = vunpack.c.l.b16 %v852
      %v891 = vunpack.c.l.b16 %v866
      %v892 = vpack.c.b16 %v885, %v884
      %v893 = vpack.c.b16 %v887, %v886
      %v894 = vpack.c.b16 %v889, %v888
      %v895 = vpack.c.b16 %v891, %v890
      %v916 = vunpack.c.l.b16 %v868
      %v917 = vunpack.c.l.b16 %v869
      %v918 = vunpack.c.l.b16 %v870
      %v919 = vunpack.c.l.b16 %v871
      %v920 = vunpack.c.l.b16 %v872
      %v921 = vunpack.c.l.b16 %v873
      %v922 = vunpack.c.l.b16 %v874
      %v923 = vunpack.c.l.b16 %v875
      %v924 = vunpack.c.l.b16 %v876
      %v925 = vunpack.c.l.b16 %v877
      %v926 = vunpack.c.l.b16 %v878
      %v927 = vunpack.c.l.b16 %v879
      %v928 = vunpack.c.l.b16 %v880
      %v929 = vunpack.c.l.b16 %v881
      %v930 = vunpack.c.l.b16 %v882
      %v931 = vunpack.c.l.b16 %v883
      %v932 = vpack.c.b16 %v917, %v916
      %v933 = vpack.c.b16 %v919, %v918
      %v934 = vpack.c.b16 %v921, %v920
      %v935 = vpack.c.b16 %v923, %v922
      %v936 = vpack.c.b16 %v925, %v924
      %v937 = vpack.c.b16 %v927, %v926
      %v938 = vpack.c.b16 %v929, %v928
      %v939 = vpack.c.b16 %v931, %v930
      %948 = vmatprep.subr.bf16.mxu0 0
      %949 = vmatpush1.bf16.msra.mxu0 %v932
      %950 = vmatprep.subr.bf16.mxu0 0
      %951 = vmatpush1.bf16.msra.mxu0 %v933
      %952 = vmatprep.subr.bf16.mxu0 0
      %953 = vmatpush1.bf16.msra.mxu0 %v934
      %954 = vmatprep.subr.bf16.mxu0 0
      %955 = vmatpush1.bf16.msra.mxu0 %v935
      %956 = vmatprep.subr.bf16.mxu0 0
      %957 = vmatpush1.bf16.msra.mxu0 %v936
      %958 = vmatprep.subr.bf16.mxu0 0
      %959 = vmatpush1.bf16.msra.mxu0 %v937
      %960 = vmatprep.subr.bf16.mxu0 0
      %961 = vmatpush1.bf16.msra.mxu0 %v938
      %962 = vmatprep.subr.bf16.mxu0 0
      %963 = vmatpush1.bf16.msra.mxu0 %v939
      %964 = vmatprep.subr.bf16.mxu0 0
      %965 = vmatpush1.bf16.msra.mxu0 0
      %966 = vmatprep.subr.bf16.mxu0 0
      %967 = vmatpush1.bf16.msra.mxu0 0
      %968 = vmatprep.subr.bf16.mxu0 0
      %969 = vmatpush1.bf16.msra.mxu0 0
      %970 = vmatprep.subr.bf16.mxu0 0
      %971 = vmatpush1.bf16.msra.mxu0 0
      %972 = vmatprep.subr.bf16.mxu0 0
      %973 = vmatpush1.bf16.msra.mxu0 0
      %974 = vmatprep.subr.bf16.mxu0 0
      %975 = vmatpush1.bf16.msra.mxu0 0
      %976 = vmatprep.subr.bf16.mxu0 0
      %977 = vmatpush1.bf16.msra.mxu0 0
      %978 = vmatprep.subr.bf16.mxu0 0
      %979 = vmatpush1.bf16.msra.mxu0 0
      %980 = vmatprep.mubr.bf16.mxu0 0
      %981 = vmatmul.mubr.bf16.gmra.mrb[0].mxu0 %v892
      %v982 = vpop.f32.mrb[0].mxu0
      %v983 = vadd.f32 0.0, %v982
      %v984 = vpop.f32.mrb[0].mxu0
      %v985 = vpop.f32.mrb[0].mxu0
      %v986 = vadd.f32 0.0, %v985
      %v987 = vpop.f32.mrb[0].mxu0
      %988 = vmatprep.mubr.bf16.mxu0 0
      %989 = vmatmul.mubr.bf16.gmra.mrb[0].mxu0 %v893
      %v990 = vpop.f32.mrb[0].mxu0
      %v991 = vadd.f32 0.0, %v990
      %v992 = vpop.f32.mrb[0].mxu0
      %v993 = vpop.f32.mrb[0].mxu0
      %v994 = vadd.f32 0.0, %v993
      %v995 = vpop.f32.mrb[0].mxu0
      %996 = vmatprep.mubr.bf16.mxu0 0
      %997 = vmatmul.mubr.bf16.gmra.mrb[0].mxu0 %v894
      %v998 = vpop.f32.mrb[0].mxu0
      %v999 = vadd.f32 0.0, %v998
      %v1000 = vpop.f32.mrb[0].mxu0
      %v1001 = vpop.f32.mrb[0].mxu0
      %v1002 = vadd.f32 0.0, %v1001
      %v1003 = vpop.f32.mrb[0].mxu0
      %1004 = vmatprep.mubr.bf16.mxu0 0
      %1005 = vmatmul.mubr.bf16.gmra.mrb[0].mxu0 %v895
      %v1006 = vpop.f32.mrb[0].mxu0
      %v1007 = vadd.f32 0.0, %v1006
      %v1008 = vpop.f32.mrb[0].mxu0
      %v1009 = vpop.f32.mrb[0].mxu0
      %v1010 = vadd.f32 0.0, %v1009
      %v1011 = vpop.f32.mrb[0].mxu0
      %1012 = vdwg.mxu0
      %v1013 = vld [vmem:[#allocation4] sm:$0xff]
      %v1014 = vld [vmem:[#allocation4 + $0x8] sm:$0xff]
      %v1015 = vld [vmem:[#allocation4 + $0x10] sm:$0xff]
      %v1016 = vld [vmem:[#allocation4 + $0x18] sm:$0xff]
      %v1017 = vld [vmem:[#allocation4 + $0x20] sm:$0xff]
      %v1018 = vld [vmem:[#allocation4 + $0x28] sm:$0xff]
      %v1019 = vld [vmem:[#allocation4 + $0x30] sm:$0xff]
      %v1020 = vld [vmem:[#allocation4 + $0x38] sm:$0xff]
      %v1021 = vadd.f32 %v1013, %v983
      %v1022 = vadd.f32 %v1014, %v986
      %v1023 = vadd.f32 %v1015, %v991
      %v1024 = vadd.f32 %v1016, %v994
      %v1025 = vadd.f32 %v1017, %v999
      %v1026 = vadd.f32 %v1018, %v1002
      %v1027 = vadd.f32 %v1019, %v1007
      %v1028 = vadd.f32 %v1020, %v1010
      %1029 = vst [vmem:[#allocation4] sm:$0xff] %v1021
      %1030 = vst [vmem:[#allocation4 + $0x8] sm:$0xff] %v1022
      %1031 = vst [vmem:[#allocation4 + $0x10] sm:$0xff] %v1023
      %1032 = vst [vmem:[#allocation4 + $0x18] sm:$0xff] %v1024
      %1033 = vst [vmem:[#allocation4 + $0x20] sm:$0xff] %v1025
      %1034 = vst [vmem:[#allocation4 + $0x28] sm:$0xff] %v1026
      %1035 = vst [vmem:[#allocation4 + $0x30] sm:$0xff] %v1027
      %1036 = vst [vmem:[#allocation4 + $0x38] sm:$0xff] %v1028
      %v1037 = vld [vmem:[#allocation2] sm:$0xe]
      %v1038 = vld [vmem:[#allocation2 + $0x4] sm:$0x1]
      %v1039 = vld [vmem:[#allocation2 + $0x8] sm:$0xe]
      %v1040 = vld [vmem:[#allocation2 + $0xc] sm:$0x1]
      %v1041 = vld [vmem:[#allocation2 + $0x10] sm:$0xe]
      %v1042 = vld [vmem:[#allocation2 + $0x14] sm:$0x1]
      %v1043 = vld [vmem:[#allocation2 + $0x18] sm:$0xe]
      %v1044 = vld [vmem:[#allocation2 + $0x1c] sm:$0x1]
      %v1045 = vld [vmem:[#allocation2 + $0x20] sm:$0xe]
      %v1046 = vld [vmem:[#allocation2 + $0x24] sm:$0x1]
      %v1047 = vld [vmem:[#allocation2 + $0x28] sm:$0xe]
      %v1048 = vld [vmem:[#allocation2 + $0x2c] sm:$0x1]
      %v1049 = vld [vmem:[#allocation2 + $0x30] sm:$0xe]
      %v1050 = vld [vmem:[#allocation2 + $0x34] sm:$0x1]
      %v1051 = vld [vmem:[#allocation2 + $0x38] sm:$0xe]
      %v1052 = vld [vmem:[#allocation2 + $0x3c] sm:$0x1]
      %vm1069 = vcmask 1042432
      %vm1070 = vcmask 1046532
      %vm1071 = vmor %vm1069, %vm1070
      %v1072 = vrot.slane %v1037, 5
      %v1073 = vrot.slane %v1072, 4
      %v1074 = vrot.slane %v1038, 5
      %v1075 = vsel %vm1071, %v1073, %v1074
      %v1076 = vrot.slane %v1039, 5
      %v1077 = vrot.slane %v1076, 4
      %v1078 = vrot.slane %v1040, 5
      %v1079 = vsel %vm1071, %v1077, %v1078
      %v1080 = vrot.slane %v1041, 5
      %v1081 = vrot.slane %v1080, 4
      %v1082 = vrot.slane %v1042, 5
      %v1083 = vsel %vm1071, %v1081, %v1082
      %v1084 = vrot.slane %v1043, 5
      %v1085 = vrot.slane %v1084, 4
      %v1086 = vrot.slane %v1044, 5
      %v1087 = vsel %vm1071, %v1085, %v1086
      %v1088 = vrot.slane %v1045, 5
      %v1089 = vrot.slane %v1088, 4
      %v1090 = vrot.slane %v1046, 5
      %v1091 = vsel %vm1071, %v1089, %v1090
      %v1092 = vrot.slane %v1047, 5
      %v1093 = vrot.slane %v1092, 4
      %v1094 = vrot.slane %v1048, 5
      %v1095 = vsel %vm1071, %v1093, %v1094
      %v1096 = vrot.slane %v1049, 5
      %v1097 = vrot.slane %v1096, 4
      %v1098 = vrot.slane %v1050, 5
      %v1099 = vsel %vm1071, %v1097, %v1098
      %v1100 = vrot.slane %v1051, 5
      %v1101 = vrot.slane %v1100, 4
      %v1102 = vrot.slane %v1052, 5
      %v1103 = vsel %vm1071, %v1101, %v1102
      %s1104 = scalar_lea.vmem %s3, 128
      %v1105 = vld [vmem:[%s1104] sm:$0xf]
      %v1106 = vld [vmem:[%s1104 + $0x4] sm:$0xf]
      %v1107 = vld [vmem:[%s1104 + $0x8] sm:$0xf]
      %v1108 = vld [vmem:[%s1104 + $0xc] sm:$0xf]
      %v1109 = vld [vmem:[%s1104 + $0x10] sm:$0xf]
      %v1110 = vld [vmem:[%s1104 + $0x14] sm:$0xf]
      %v1111 = vld [vmem:[%s1104 + $0x18] sm:$0xf]
      %v1112 = vld [vmem:[%s1104 + $0x1c] sm:$0xf]
      %v1113 = vld [vmem:[%s1104 + $0x20] sm:$0xf]
      %v1114 = vld [vmem:[%s1104 + $0x24] sm:$0xf]
      %v1115 = vld [vmem:[%s1104 + $0x28] sm:$0xf]
      %v1116 = vld [vmem:[%s1104 + $0x2c] sm:$0xf]
      %v1117 = vld [vmem:[%s1104 + $0x30] sm:$0xf]
      %v1118 = vld [vmem:[%s1104 + $0x34] sm:$0xf]
      %v1119 = vld [vmem:[%s1104 + $0x38] sm:$0xf]
      %v1120 = vld [vmem:[%s1104 + $0x3c] sm:$0xf]
      %v1121 = vunpack.c.l.b16 %v1075
      %v1122 = vunpack.c.l.b16 %v1079
      %v1123 = vunpack.c.l.b16 %v1083
      %v1124 = vunpack.c.l.b16 %v1087
      %v1125 = vunpack.c.l.b16 %v1091
      %v1126 = vunpack.c.l.b16 %v1095
      %v1127 = vunpack.c.l.b16 %v1099
      %v1128 = vunpack.c.l.b16 %v1103
      %v1129 = vpack.c.b16 %v1122, %v1121
      %v1130 = vpack.c.b16 %v1124, %v1123
      %v1131 = vpack.c.b16 %v1126, %v1125
      %v1132 = vpack.c.b16 %v1128, %v1127
      %v1153 = vunpack.c.l.b16 %v1105
      %v1154 = vunpack.c.l.b16 %v1106
      %v1155 = vunpack.c.l.b16 %v1107
      %v1156 = vunpack.c.l.b16 %v1108
      %v1157 = vunpack.c.l.b16 %v1109
      %v1158 = vunpack.c.l.b16 %v1110
      %v1159 = vunpack.c.l.b16 %v1111
      %v1160 = vunpack.c.l.b16 %v1112
      %v1161 = vunpack.c.l.b16 %v1113
      %v1162 = vunpack.c.l.b16 %v1114
      %v1163 = vunpack.c.l.b16 %v1115
      %v1164 = vunpack.c.l.b16 %v1116
      %v1165 = vunpack.c.l.b16 %v1117
      %v1166 = vunpack.c.l.b16 %v1118
      %v1167 = vunpack.c.l.b16 %v1119
      %v1168 = vunpack.c.l.b16 %v1120
      %v1169 = vpack.c.b16 %v1154, %v1153
      %v1170 = vpack.c.b16 %v1156, %v1155
      %v1171 = vpack.c.b16 %v1158, %v1157
      %v1172 = vpack.c.b16 %v1160, %v1159
      %v1173 = vpack.c.b16 %v1162, %v1161
      %v1174 = vpack.c.b16 %v1164, %v1163
      %v1175 = vpack.c.b16 %v1166, %v1165
      %v1176 = vpack.c.b16 %v1168, %v1167
      %1185 = vmatprep.subr.bf16.mxu0 0
      %1186 = vmatpush1.bf16.msra.mxu0 %v1169
      %1187 = vmatprep.subr.bf16.mxu0 0
      %1188 = vmatpush1.bf16.msra.mxu0 %v1170
      %1189 = vmatprep.subr.bf16.mxu0 0
      %1190 = vmatpush1.bf16.msra.mxu0 %v1171
      %1191 = vmatprep.subr.bf16.mxu0 0
      %1192 = vmatpush1.bf16.msra.mxu0 %v1172
      %1193 = vmatprep.subr.bf16.mxu0 0
      %1194 = vmatpush1.bf16.msra.mxu0 %v1173
      %1195 = vmatprep.subr.bf16.mxu0 0
      %1196 = vmatpush1.bf16.msra.mxu0 %v1174
      %1197 = vmatprep.subr.bf16.mxu0 0
      %1198 = vmatpush1.bf16.msra.mxu0 %v1175
      %1199 = vmatprep.subr.bf16.mxu0 0
      %1200 = vmatpush1.bf16.msra.mxu0 %v1176
      %1201 = vmatprep.subr.bf16.mxu0 0
      %1202 = vmatpush1.bf16.msra.mxu0 0
      %1203 = vmatprep.subr.bf16.mxu0 0
      %1204 = vmatpush1.bf16.msra.mxu0 0
      %1205 = vmatprep.subr.bf16.mxu0 0
      %1206 = vmatpush1.bf16.msra.mxu0 0
      %1207 = vmatprep.subr.bf16.mxu0 0
      %1208 = vmatpush1.bf16.msra.mxu0 0
      %1209 = vmatprep.subr.bf16.mxu0 0
      %1210 = vmatpush1.bf16.msra.mxu0 0
      %1211 = vmatprep.subr.bf16.mxu0 0
      %1212 = vmatpush1.bf16.msra.mxu0 0
      %1213 = vmatprep.subr.bf16.mxu0 0
      %1214 = vmatpush1.bf16.msra.mxu0 0
      %1215 = vmatprep.subr.bf16.mxu0 0
      %1216 = vmatpush1.bf16.msra.mxu0 0
      %1217 = vmatprep.mubr.bf16.mxu0 0
      %1218 = vmatmul.mubr.bf16.gmra.mrb[0].mxu0 %v1129
      %v1219 = vpop.f32.mrb[0].mxu0
      %v1220 = vadd.f32 0.0, %v1219
      %v1221 = vpop.f32.mrb[0].mxu0
      %v1222 = vpop.f32.mrb[0].mxu0
      %v1223 = vadd.f32 0.0, %v1222
      %v1224 = vpop.f32.mrb[0].mxu0
      %1225 = vmatprep.mubr.bf16.mxu0 0
      %1226 = vmatmul.mubr.bf16.gmra.mrb[0].mxu0 %v1130
      %v1227 = vpop.f32.mrb[0].mxu0
      %v1228 = vadd.f32 0.0, %v1227
      %v1229 = vpop.f32.mrb[0].mxu0
      %v1230 = vpop.f32.mrb[0].mxu0
      %v1231 = vadd.f32 0.0, %v1230
      %v1232 = vpop.f32.mrb[0].mxu0
      %1233 = vmatprep.mubr.bf16.mxu0 0
      %1234 = vmatmul.mubr.bf16.gmra.mrb[0].mxu0 %v1131
      %v1235 = vpop.f32.mrb[0].mxu0
      %v1236 = vadd.f32 0.0, %v1235
      %v1237 = vpop.f32.mrb[0].mxu0
      %v1238 = vpop.f32.mrb[0].mxu0
      %v1239 = vadd.f32 0.0, %v1238
      %v1240 = vpop.f32.mrb[0].mxu0
      %1241 = vmatprep.mubr.bf16.mxu0 0
      %1242 = vmatmul.mubr.bf16.gmra.mrb[0].mxu0 %v1132
      %v1243 = vpop.f32.mrb[0].mxu0
      %v1244 = vadd.f32 0.0, %v1243
      %v1245 = vpop.f32.mrb[0].mxu0
      %v1246 = vpop.f32.mrb[0].mxu0
      %v1247 = vadd.f32 0.0, %v1246
      %v1248 = vpop.f32.mrb[0].mxu0
      %1249 = vdwg.mxu0
      %v1250 = vld [vmem:[#allocation4] sm:$0xff]
      %v1251 = vld [vmem:[#allocation4 + $0x8] sm:$0xff]
      %v1252 = vld [vmem:[#allocation4 + $0x10] sm:$0xff]
      %v1253 = vld [vmem:[#allocation4 + $0x18] sm:$0xff]
      %v1254 = vld [vmem:[#allocation4 + $0x20] sm:$0xff]
      %v1255 = vld [vmem:[#allocation4 + $0x28] sm:$0xff]
      %v1256 = vld [vmem:[#allocation4 + $0x30] sm:$0xff]
      %v1257 = vld [vmem:[#allocation4 + $0x38] sm:$0xff]
      %v1258 = vadd.f32 %v1250, %v1220
      %v1259 = vadd.f32 %v1251, %v1223
      %v1260 = vadd.f32 %v1252, %v1228
      %v1261 = vadd.f32 %v1253, %v1231
      %v1262 = vadd.f32 %v1254, %v1236
      %v1263 = vadd.f32 %v1255, %v1239
      %v1264 = vadd.f32 %v1256, %v1244
      %v1265 = vadd.f32 %v1257, %v1247
      %1266 = vst [vmem:[#allocation4] sm:$0xff] %v1258
      %1267 = vst [vmem:[#allocation4 + $0x8] sm:$0xff] %v1259
      %1268 = vst [vmem:[#allocation4 + $0x10] sm:$0xff] %v1260
      %1269 = vst [vmem:[#allocation4 + $0x18] sm:$0xff] %v1261
      %1270 = vst [vmem:[#allocation4 + $0x20] sm:$0xff] %v1262
      %1271 = vst [vmem:[#allocation4 + $0x28] sm:$0xff] %v1263
      %1272 = vst [vmem:[#allocation4 + $0x30] sm:$0xff] %v1264
      %1273 = vst [vmem:[#allocation4 + $0x38] sm:$0xff] %v1265
      %v1274 = vld [vmem:[%s516] sm:$0xf]
      %v1275 = vld [vmem:[%s516 + $0x8] sm:$0xf]
      %v1276 = vld [vmem:[%s516 + $0x10] sm:$0xf]
      %v1277 = vld [vmem:[%s516 + $0x18] sm:$0xf]
      %v1278 = vld [vmem:[%s516 + $0x20] sm:$0xf]
      %v1279 = vld [vmem:[%s516 + $0x28] sm:$0xf]
      %v1280 = vld [vmem:[%s516 + $0x30] sm:$0xf]
      %v1281 = vld [vmem:[%s516 + $0x38] sm:$0xf]
      %s1282 = scalar_lea.vmem %s3, 192
      %v1283 = vld [vmem:[%s1282] sm:$0xf]
      %v1284 = vld [vmem:[%s1282 + $0x4] sm:$0xf]
      %v1285 = vld [vmem:[%s1282 + $0x8] sm:$0xf]
      %v1286 = vld [vmem:[%s1282 + $0xc] sm:$0xf]
      %v1287 = vld [vmem:[%s1282 + $0x10] sm:$0xf]
      %v1288 = vld [vmem:[%s1282 + $0x14] sm:$0xf]
      %v1289 = vld [vmem:[%s1282 + $0x18] sm:$0xf]
      %v1290 = vld [vmem:[%s1282 + $0x1c] sm:$0xf]
      %v1291 = vld [vmem:[%s1282 + $0x20] sm:$0xf]
      %v1292 = vld [vmem:[%s1282 + $0x24] sm:$0xf]
      %v1293 = vld [vmem:[%s1282 + $0x28] sm:$0xf]
      %v1294 = vld [vmem:[%s1282 + $0x2c] sm:$0xf]
      %v1295 = vld [vmem:[%s1282 + $0x30] sm:$0xf]
      %v1296 = vld [vmem:[%s1282 + $0x34] sm:$0xf]
      %v1297 = vld [vmem:[%s1282 + $0x38] sm:$0xf]
      %v1298 = vld [vmem:[%s1282 + $0x3c] sm:$0xf]
      %v1307 = vunpack.c.l.b16 %v1274
      %v1308 = vunpack.c.l.b16 %v1275
      %v1309 = vunpack.c.l.b16 %v1276
      %v1310 = vunpack.c.l.b16 %v1277
      %v1311 = vunpack.c.l.b16 %v1278
      %v1312 = vunpack.c.l.b16 %v1279
      %v1313 = vunpack.c.l.b16 %v1280
      %v1314 = vunpack.c.l.b16 %v1281
      %v1315 = vpack.c.b16 %v1308, %v1307
      %v1316 = vpack.c.b16 %v1310, %v1309
      %v1317 = vpack.c.b16 %v1312, %v1311
      %v1318 = vpack.c.b16 %v1314, %v1313
      %v1339 = vunpack.c.l.b16 %v1283
      %v1340 = vunpack.c.l.b16 %v1284
      %v1341 = vunpack.c.l.b16 %v1285
      %v1342 = vunpack.c.l.b16 %v1286
      %v1343 = vunpack.c.l.b16 %v1287
      %v1344 = vunpack.c.l.b16 %v1288
      %v1345 = vunpack.c.l.b16 %v1289
      %v1346 = vunpack.c.l.b16 %v1290
      %v1347 = vunpack.c.l.b16 %v1291
      %v1348 = vunpack.c.l.b16 %v1292
      %v1349 = vunpack.c.l.b16 %v1293
      %v1350 = vunpack.c.l.b16 %v1294
      %v1351 = vunpack.c.l.b16 %v1295
      %v1352 = vunpack.c.l.b16 %v1296
      %v1353 = vunpack.c.l.b16 %v1297
      %v1354 = vunpack.c.l.b16 %v1298
      %v1355 = vpack.c.b16 %v1340, %v1339
      %v1356 = vpack.c.b16 %v1342, %v1341
      %v1357 = vpack.c.b16 %v1344, %v1343
      %v1358 = vpack.c.b16 %v1346, %v1345
      %v1359 = vpack.c.b16 %v1348, %v1347
      %v1360 = vpack.c.b16 %v1350, %v1349
      %v1361 = vpack.c.b16 %v1352, %v1351
      %v1362 = vpack.c.b16 %v1354, %v1353
      %1371 = vmatprep.subr.bf16.mxu0 0
      %1372 = vmatpush1.bf16.msra.mxu0 %v1355
      %1373 = vmatprep.subr.bf16.mxu0 0
      %1374 = vmatpush1.bf16.msra.mxu0 %v1356
      %1375 = vmatprep.subr.bf16.mxu0 0
      %1376 = vmatpush1.bf16.msra.mxu0 %v1357
      %1377 = vmatprep.subr.bf16.mxu0 0
      %1378 = vmatpush1.bf16.msra.mxu0 %v1358
      %1379 = vmatprep.subr.bf16.mxu0 0
      %1380 = vmatpush1.bf16.msra.mxu0 %v1359
      %1381 = vmatprep.subr.bf16.mxu0 0
      %1382 = vmatpush1.bf16.msra.mxu0 %v1360
      %1383 = vmatprep.subr.bf16.mxu0 0
      %1384 = vmatpush1.bf16.msra.mxu0 %v1361
      %1385 = vmatprep.subr.bf16.mxu0 0
      %1386 = vmatpush1.bf16.msra.mxu0 %v1362
      %1387 = vmatprep.subr.bf16.mxu0 0
      %1388 = vmatpush1.bf16.msra.mxu0 0
      %1389 = vmatprep.subr.bf16.mxu0 0
      %1390 = vmatpush1.bf16.msra.mxu0 0
      %1391 = vmatprep.subr.bf16.mxu0 0
      %1392 = vmatpush1.bf16.msra.mxu0 0
      %1393 = vmatprep.subr.bf16.mxu0 0
      %1394 = vmatpush1.bf16.msra.mxu0 0
      %1395 = vmatprep.subr.bf16.mxu0 0
      %1396 = vmatpush1.bf16.msra.mxu0 0
      %1397 = vmatprep.subr.bf16.mxu0 0
      %1398 = vmatpush1.bf16.msra.mxu0 0
      %1399 = vmatprep.subr.bf16.mxu0 0
      %1400 = vmatpush1.bf16.msra.mxu0 0
      %1401 = vmatprep.subr.bf16.mxu0 0
      %1402 = vmatpush1.bf16.msra.mxu0 0
      %1403 = vmatprep.mubr.bf16.mxu0 0
      %1404 = vmatmul.mubr.bf16.gmra.mrb[0].mxu0 %v1315
      %v1405 = vpop.f32.mrb[0].mxu0
      %v1406 = vadd.f32 0.0, %v1405
      %v1407 = vpop.f32.mrb[0].mxu0
      %v1408 = vpop.f32.mrb[0].mxu0
      %v1409 = vadd.f32 0.0, %v1408
      %v1410 = vpop.f32.mrb[0].mxu0
      %1411 = vmatprep.mubr.bf16.mxu0 0
      %1412 = vmatmul.mubr.bf16.gmra.mrb[0].mxu0 %v1316
      %v1413 = vpop.f32.mrb[0].mxu0
      %v1414 = vadd.f32 0.0, %v1413
      %v1415 = vpop.f32.mrb[0].mxu0
      %v1416 = vpop.f32.mrb[0].mxu0
      %v1417 = vadd.f32 0.0, %v1416
      %v1418 = vpop.f32.mrb[0].mxu0
      %1419 = vmatprep.mubr.bf16.mxu0 0
      %1420 = vmatmul.mubr.bf16.gmra.mrb[0].mxu0 %v1317
      %v1421 = vpop.f32.mrb[0].mxu0
      %v1422 = vadd.f32 0.0, %v1421
      %v1423 = vpop.f32.mrb[0].mxu0
      %v1424 = vpop.f32.mrb[0].mxu0
      %v1425 = vadd.f32 0.0, %v1424
      %v1426 = vpop.f32.mrb[0].mxu0
      %1427 = vmatprep.mubr.bf16.mxu0 0
      %1428 = vmatmul.mubr.bf16.gmra.mrb[0].mxu0 %v1318
      %v1429 = vpop.f32.mrb[0].mxu0
      %v1430 = vadd.f32 0.0, %v1429
      %v1431 = vpop.f32.mrb[0].mxu0
      %v1432 = vpop.f32.mrb[0].mxu0
      %v1433 = vadd.f32 0.0, %v1432
      %v1434 = vpop.f32.mrb[0].mxu0
      %1435 = vdwg.mxu0
      %v1436 = vld [vmem:[#allocation4] sm:$0xff]
      %v1437 = vld [vmem:[#allocation4 + $0x8] sm:$0xff]
      %v1438 = vld [vmem:[#allocation4 + $0x10] sm:$0xff]
      %v1439 = vld [vmem:[#allocation4 + $0x18] sm:$0xff]
      %v1440 = vld [vmem:[#allocation4 + $0x20] sm:$0xff]
      %v1441 = vld [vmem:[#allocation4 + $0x28] sm:$0xff]
      %v1442 = vld [vmem:[#allocation4 + $0x30] sm:$0xff]
      %v1443 = vld [vmem:[#allocation4 + $0x38] sm:$0xff]
      %v1444 = vadd.f32 %v1436, %v1406
      %v1445 = vadd.f32 %v1437, %v1409
      %v1446 = vadd.f32 %v1438, %v1414
      %v1447 = vadd.f32 %v1439, %v1417
      %v1448 = vadd.f32 %v1440, %v1422
      %v1449 = vadd.f32 %v1441, %v1425
      %v1450 = vadd.f32 %v1442, %v1430
      %v1451 = vadd.f32 %v1443, %v1433
      %1452 = vst [vmem:[#allocation4] sm:$0xff] %v1444
      %1453 = vst [vmem:[#allocation4 + $0x8] sm:$0xff] %v1445
      %1454 = vst [vmem:[#allocation4 + $0x10] sm:$0xff] %v1446
      %1455 = vst [vmem:[#allocation4 + $0x18] sm:$0xff] %v1447
      %1456 = vst [vmem:[#allocation4 + $0x20] sm:$0xff] %v1448
      %1457 = vst [vmem:[#allocation4 + $0x28] sm:$0xff] %v1449
      %1458 = vst [vmem:[#allocation4 + $0x30] sm:$0xff] %v1450
      %1459 = vst [vmem:[#allocation4 + $0x38] sm:$0xff] %v1451
      %v1460 = vld [vmem:[%s516] sm:$0xf]
      %v1461 = vld [vmem:[%s516 + $0x4] sm:$0x1]
      %v1462 = vld [vmem:[%s516 + $0x8] sm:$0xf]
      %v1463 = vld [vmem:[%s516 + $0xc] sm:$0x1]
      %v1464 = vld [vmem:[%s516 + $0x10] sm:$0xf]
      %v1465 = vld [vmem:[%s516 + $0x14] sm:$0x1]
      %v1466 = vld [vmem:[%s516 + $0x18] sm:$0xf]
      %v1467 = vld [vmem:[%s516 + $0x1c] sm:$0x1]
      %v1468 = vld [vmem:[%s516 + $0x20] sm:$0xf]
      %v1469 = vld [vmem:[%s516 + $0x24] sm:$0x1]
      %v1470 = vld [vmem:[%s516 + $0x28] sm:$0xf]
      %v1471 = vld [vmem:[%s516 + $0x2c] sm:$0x1]
      %v1472 = vld [vmem:[%s516 + $0x30] sm:$0xf]
      %v1473 = vld [vmem:[%s516 + $0x34] sm:$0x1]
      %v1474 = vld [vmem:[%s516 + $0x38] sm:$0xf]
      %v1475 = vld [vmem:[%s516 + $0x3c] sm:$0x1]
      %v1477 = vshrl.u32 %v1460, 16
      %v1479 = vrot.slane %v1477, 4
      %v1480 = vshll.u32 %v1460, 16
      %v1482 = vrot.slane %v1480, 5
      %v1483 = vor.u32 %v1479, %v1482
      %v1484 = vrot.slane %v1483, 4
      %v1486 = vshll.u32 %v1461, 16
      %v1488 = vrot.slane %v1486, 5
      %v1489 = vsel %vm754, %v1484, %v1488
      %v1491 = vshrl.u32 %v1462, 16
      %v1493 = vrot.slane %v1491, 4
      %v1494 = vshll.u32 %v1462, 16
      %v1496 = vrot.slane %v1494, 5
      %v1497 = vor.u32 %v1493, %v1496
      %v1498 = vrot.slane %v1497, 4
      %v1500 = vshll.u32 %v1463, 16
      %v1502 = vrot.slane %v1500, 5
      %v1503 = vsel %vm754, %v1498, %v1502
      %v1505 = vshrl.u32 %v1464, 16
      %v1507 = vrot.slane %v1505, 4
      %v1508 = vshll.u32 %v1464, 16
      %v1510 = vrot.slane %v1508, 5
      %v1511 = vor.u32 %v1507, %v1510
      %v1512 = vrot.slane %v1511, 4
      %v1514 = vshll.u32 %v1465, 16
      %v1516 = vrot.slane %v1514, 5
      %v1517 = vsel %vm754, %v1512, %v1516
      %v1519 = vshrl.u32 %v1466, 16
      %v1521 = vrot.slane %v1519, 4
      %v1522 = vshll.u32 %v1466, 16
      %v1524 = vrot.slane %v1522, 5
      %v1525 = vor.u32 %v1521, %v1524
      %v1526 = vrot.slane %v1525, 4
      %v1528 = vshll.u32 %v1467, 16
      %v1530 = vrot.slane %v1528, 5
      %v1531 = vsel %vm754, %v1526, %v1530
      %v1533 = vshrl.u32 %v1468, 16
      %v1535 = vrot.slane %v1533, 4
      %v1536 = vshll.u32 %v1468, 16
      %v1538 = vrot.slane %v1536, 5
      %v1539 = vor.u32 %v1535, %v1538
      %v1540 = vrot.slane %v1539, 4
      %v1542 = vshll.u32 %v1469, 16
      %v1544 = vrot.slane %v1542, 5
      %v1545 = vsel %vm754, %v1540, %v1544
      %v1547 = vshrl.u32 %v1470, 16
      %v1549 = vrot.slane %v1547, 4
      %v1550 = vshll.u32 %v1470, 16
      %v1552 = vrot.slane %v1550, 5
      %v1553 = vor.u32 %v1549, %v1552
      %v1554 = vrot.slane %v1553, 4
      %v1556 = vshll.u32 %v1471, 16
      %v1558 = vrot.slane %v1556, 5
      %v1559 = vsel %vm754, %v1554, %v1558
      %v1561 = vshrl.u32 %v1472, 16
      %v1563 = vrot.slane %v1561, 4
      %v1564 = vshll.u32 %v1472, 16
      %v1566 = vrot.slane %v1564, 5
      %v1567 = vor.u32 %v1563, %v1566
      %v1568 = vrot.slane %v1567, 4
      %v1570 = vshll.u32 %v1473, 16
      %v1572 = vrot.slane %v1570, 5
      %v1573 = vsel %vm754, %v1568, %v1572
      %v1575 = vshrl.u32 %v1474, 16
      %v1577 = vrot.slane %v1575, 4
      %v1578 = vshll.u32 %v1474, 16
      %v1580 = vrot.slane %v1578, 5
      %v1581 = vor.u32 %v1577, %v1580
      %v1582 = vrot.slane %v1581, 4
      %v1584 = vshll.u32 %v1475, 16
      %v1586 = vrot.slane %v1584, 5
      %v1587 = vsel %vm754, %v1582, %v1586
      %s1588 = scalar_lea.vmem %s3, 256
      %v1589 = vld [vmem:[%s1588] sm:$0xf]
      %v1590 = vld [vmem:[%s1588 + $0x4] sm:$0xf]
      %v1591 = vld [vmem:[%s1588 + $0x8] sm:$0xf]
      %v1592 = vld [vmem:[%s1588 + $0xc] sm:$0xf]
      %v1593 = vld [vmem:[%s1588 + $0x10] sm:$0xf]
      %v1594 = vld [vmem:[%s1588 + $0x14] sm:$0xf]
      %v1595 = vld [vmem:[%s1588 + $0x18] sm:$0xf]
      %v1596 = vld [vmem:[%s1588 + $0x1c] sm:$0xf]
      %v1597 = vld [vmem:[%s1588 + $0x20] sm:$0xf]
      %v1598 = vld [vmem:[%s1588 + $0x24] sm:$0xf]
      %v1599 = vld [vmem:[%s1588 + $0x28] sm:$0xf]
      %v1600 = vld [vmem:[%s1588 + $0x2c] sm:$0xf]
      %v1601 = vld [vmem:[%s1588 + $0x30] sm:$0xf]
      %v1602 = vld [vmem:[%s1588 + $0x34] sm:$0xf]
      %v1603 = vld [vmem:[%s1588 + $0x38] sm:$0xf]
      %v1604 = vld [vmem:[%s1588 + $0x3c] sm:$0xf]
      %v1605 = vunpack.c.l.b16 %v1489
      %v1606 = vunpack.c.l.b16 %v1503
      %v1607 = vunpack.c.l.b16 %v1517
      %v1608 = vunpack.c.l.b16 %v1531
      %v1609 = vunpack.c.l.b16 %v1545
      %v1610 = vunpack.c.l.b16 %v1559
      %v1611 = vunpack.c.l.b16 %v1573
      %v1612 = vunpack.c.l.b16 %v1587
      %v1613 = vpack.c.b16 %v1606, %v1605
      %v1614 = vpack.c.b16 %v1608, %v1607
      %v1615 = vpack.c.b16 %v1610, %v1609
      %v1616 = vpack.c.b16 %v1612, %v1611
      %v1637 = vunpack.c.l.b16 %v1589
      %v1638 = vunpack.c.l.b16 %v1590
      %v1639 = vunpack.c.l.b16 %v1591
      %v1640 = vunpack.c.l.b16 %v1592
      %v1641 = vunpack.c.l.b16 %v1593
      %v1642 = vunpack.c.l.b16 %v1594
      %v1643 = vunpack.c.l.b16 %v1595
      %v1644 = vunpack.c.l.b16 %v1596
      %v1645 = vunpack.c.l.b16 %v1597
      %v1646 = vunpack.c.l.b16 %v1598
      %v1647 = vunpack.c.l.b16 %v1599
      %v1648 = vunpack.c.l.b16 %v1600
      %v1649 = vunpack.c.l.b16 %v1601
      %v1650 = vunpack.c.l.b16 %v1602
      %v1651 = vunpack.c.l.b16 %v1603
      %v1652 = vunpack.c.l.b16 %v1604
      %v1653 = vpack.c.b16 %v1638, %v1637
      %v1654 = vpack.c.b16 %v1640, %v1639
      %v1655 = vpack.c.b16 %v1642, %v1641
      %v1656 = vpack.c.b16 %v1644, %v1643
      %v1657 = vpack.c.b16 %v1646, %v1645
      %v1658 = vpack.c.b16 %v1648, %v1647
      %v1659 = vpack.c.b16 %v1650, %v1649
      %v1660 = vpack.c.b16 %v1652, %v1651
      %1669 = vmatprep.subr.bf16.mxu0 0
      %1670 = vmatpush1.bf16.msra.mxu0 %v1653
      %1671 = vmatprep.subr.bf16.mxu0 0
      %1672 = vmatpush1.bf16.msra.mxu0 %v1654
      %1673 = vmatprep.subr.bf16.mxu0 0
      %1674 = vmatpush1.bf16.msra.mxu0 %v1655
      %1675 = vmatprep.subr.bf16.mxu0 0
      %1676 = vmatpush1.bf16.msra.mxu0 %v1656
      %1677 = vmatprep.subr.bf16.mxu0 0
      %1678 = vmatpush1.bf16.msra.mxu0 %v1657
      %1679 = vmatprep.subr.bf16.mxu0 0
      %1680 = vmatpush1.bf16.msra.mxu0 %v1658
      %1681 = vmatprep.subr.bf16.mxu0 0
      %1682 = vmatpush1.bf16.msra.mxu0 %v1659
      %1683 = vmatprep.subr.bf16.mxu0 0
      %1684 = vmatpush1.bf16.msra.mxu0 %v1660
      %1685 = vmatprep.subr.bf16.mxu0 0
      %1686 = vmatpush1.bf16.msra.mxu0 0
      %1687 = vmatprep.subr.bf16.mxu0 0
      %1688 = vmatpush1.bf16.msra.mxu0 0
      %1689 = vmatprep.subr.bf16.mxu0 0
      %1690 = vmatpush1.bf16.msra.mxu0 0
      %1691 = vmatprep.subr.bf16.mxu0 0
      %1692 = vmatpush1.bf16.msra.mxu0 0
      %1693 = vmatprep.subr.bf16.mxu0 0
      %1694 = vmatpush1.bf16.msra.mxu0 0
      %1695 = vmatprep.subr.bf16.mxu0 0
      %1696 = vmatpush1.bf16.msra.mxu0 0
      %1697 = vmatprep.subr.bf16.mxu0 0
      %1698 = vmatpush1.bf16.msra.mxu0 0
      %1699 = vmatprep.subr.bf16.mxu0 0
      %1700 = vmatpush1.bf16.msra.mxu0 0
      %1701 = vmatprep.mubr.bf16.mxu0 0
      %1702 = vmatmul.mubr.bf16.gmra.mrb[0].mxu0 %v1613
      %v1703 = vpop.f32.mrb[0].mxu0
      %v1704 = vadd.f32 0.0, %v1703
      %v1705 = vpop.f32.mrb[0].mxu0
      %v1706 = vpop.f32.mrb[0].mxu0
      %v1707 = vadd.f32 0.0, %v1706
      %v1708 = vpop.f32.mrb[0].mxu0
      %1709 = vmatprep.mubr.bf16.mxu0 0
      %1710 = vmatmul.mubr.bf16.gmra.mrb[0].mxu0 %v1614
      %v1711 = vpop.f32.mrb[0].mxu0
      %v1712 = vadd.f32 0.0, %v1711
      %v1713 = vpop.f32.mrb[0].mxu0
      %v1714 = vpop.f32.mrb[0].mxu0
      %v1715 = vadd.f32 0.0, %v1714
      %v1716 = vpop.f32.mrb[0].mxu0
      %1717 = vmatprep.mubr.bf16.mxu0 0
      %1718 = vmatmul.mubr.bf16.gmra.mrb[0].mxu0 %v1615
      %v1719 = vpop.f32.mrb[0].mxu0
      %v1720 = vadd.f32 0.0, %v1719
      %v1721 = vpop.f32.mrb[0].mxu0
      %v1722 = vpop.f32.mrb[0].mxu0
      %v1723 = vadd.f32 0.0, %v1722
      %v1724 = vpop.f32.mrb[0].mxu0
      %1725 = vmatprep.mubr.bf16.mxu0 0
      %1726 = vmatmul.mubr.bf16.gmra.mrb[0].mxu0 %v1616
      %v1727 = vpop.f32.mrb[0].mxu0
      %v1728 = vadd.f32 0.0, %v1727
      %v1729 = vpop.f32.mrb[0].mxu0
      %v1730 = vpop.f32.mrb[0].mxu0
      %v1731 = vadd.f32 0.0, %v1730
      %v1732 = vpop.f32.mrb[0].mxu0
      %1733 = vdwg.mxu0
      %v1734 = vld [vmem:[#allocation4] sm:$0xff]
      %v1735 = vld [vmem:[#allocation4 + $0x8] sm:$0xff]
      %v1736 = vld [vmem:[#allocation4 + $0x10] sm:$0xff]
      %v1737 = vld [vmem:[#allocation4 + $0x18] sm:$0xff]
      %v1738 = vld [vmem:[#allocation4 + $0x20] sm:$0xff]
      %v1739 = vld [vmem:[#allocation4 + $0x28] sm:$0xff]
      %v1740 = vld [vmem:[#allocation4 + $0x30] sm:$0xff]
      %v1741 = vld [vmem:[#allocation4 + $0x38] sm:$0xff]
      %v1742 = vadd.f32 %v1734, %v1704
      %v1743 = vadd.f32 %v1735, %v1707
      %v1744 = vadd.f32 %v1736, %v1712
      %v1745 = vadd.f32 %v1737, %v1715
      %v1746 = vadd.f32 %v1738, %v1720
      %v1747 = vadd.f32 %v1739, %v1723
      %v1748 = vadd.f32 %v1740, %v1728
      %v1749 = vadd.f32 %v1741, %v1731
      %1750 = vst [vmem:[#allocation4] sm:$0xff] %v1742
      %1751 = vst [vmem:[#allocation4 + $0x8] sm:$0xff] %v1743
      %1752 = vst [vmem:[#allocation4 + $0x10] sm:$0xff] %v1744
      %1753 = vst [vmem:[#allocation4 + $0x18] sm:$0xff] %v1745
      %1754 = vst [vmem:[#allocation4 + $0x20] sm:$0xff] %v1746
      %1755 = vst [vmem:[#allocation4 + $0x28] sm:$0xff] %v1747
      %1756 = vst [vmem:[#allocation4 + $0x30] sm:$0xff] %v1748
      %1757 = vst [vmem:[#allocation4 + $0x38] sm:$0xff] %v1749
      %v1758 = vld [vmem:[%s516] sm:$0xe]
      %v1759 = vld [vmem:[%s516 + $0x4] sm:$0x1]
      %v1760 = vld [vmem:[%s516 + $0x8] sm:$0xe]
      %v1761 = vld [vmem:[%s516 + $0xc] sm:$0x1]
      %v1762 = vld [vmem:[%s516 + $0x10] sm:$0xe]
      %v1763 = vld [vmem:[%s516 + $0x14] sm:$0x1]
      %v1764 = vld [vmem:[%s516 + $0x18] sm:$0xe]
      %v1765 = vld [vmem:[%s516 + $0x1c] sm:$0x1]
      %v1766 = vld [vmem:[%s516 + $0x20] sm:$0xe]
      %v1767 = vld [vmem:[%s516 + $0x24] sm:$0x1]
      %v1768 = vld [vmem:[%s516 + $0x28] sm:$0xe]
      %v1769 = vld [vmem:[%s516 + $0x2c] sm:$0x1]
      %v1770 = vld [vmem:[%s516 + $0x30] sm:$0xe]
      %v1771 = vld [vmem:[%s516 + $0x34] sm:$0x1]
      %v1772 = vld [vmem:[%s516 + $0x38] sm:$0xe]
      %v1773 = vld [vmem:[%s516 + $0x3c] sm:$0x1]
      %v1790 = vrot.slane %v1758, 5
      %v1791 = vrot.slane %v1790, 4
      %v1792 = vrot.slane %v1759, 5
      %v1793 = vsel %vm1071, %v1791, %v1792
      %v1794 = vrot.slane %v1760, 5
      %v1795 = vrot.slane %v1794, 4
      %v1796 = vrot.slane %v1761, 5
      %v1797 = vsel %vm1071, %v1795, %v1796
      %v1798 = vrot.slane %v1762, 5
      %v1799 = vrot.slane %v1798, 4
      %v1800 = vrot.slane %v1763, 5
      %v1801 = vsel %vm1071, %v1799, %v1800
      %v1802 = vrot.slane %v1764, 5
      %v1803 = vrot.slane %v1802, 4
      %v1804 = vrot.slane %v1765, 5
      %v1805 = vsel %vm1071, %v1803, %v1804
      %v1806 = vrot.slane %v1766, 5
      %v1807 = vrot.slane %v1806, 4
      %v1808 = vrot.slane %v1767, 5
      %v1809 = vsel %vm1071, %v1807, %v1808
      %v1810 = vrot.slane %v1768, 5
      %v1811 = vrot.slane %v1810, 4
      %v1812 = vrot.slane %v1769, 5
      %v1813 = vsel %vm1071, %v1811, %v1812
      %v1814 = vrot.slane %v1770, 5
      %v1815 = vrot.slane %v1814, 4
      %v1816 = vrot.slane %v1771, 5
      %v1817 = vsel %vm1071, %v1815, %v1816
      %v1818 = vrot.slane %v1772, 5
      %v1819 = vrot.slane %v1818, 4
      %v1820 = vrot.slane %v1773, 5
      %v1821 = vsel %vm1071, %v1819, %v1820
      %s1822 = scalar_lea.vmem %s3, 320
      %v1823 = vld [vmem:[%s1822] sm:$0xf]
      %v1824 = vld [vmem:[%s1822 + $0x4] sm:$0xf]
      %v1825 = vld [vmem:[%s1822 + $0x8] sm:$0xf]
      %v1826 = vld [vmem:[%s1822 + $0xc] sm:$0xf]
      %v1827 = vld [vmem:[%s1822 + $0x10] sm:$0xf]
      %v1828 = vld [vmem:[%s1822 + $0x14] sm:$0xf]
      %v1829 = vld [vmem:[%s1822 + $0x18] sm:$0xf]
      %v1830 = vld [vmem:[%s1822 + $0x1c] sm:$0xf]
      %v1831 = vld [vmem:[%s1822 + $0x20] sm:$0xf]
      %v1832 = vld [vmem:[%s1822 + $0x24] sm:$0xf]
      %v1833 = vld [vmem:[%s1822 + $0x28] sm:$0xf]
      %v1834 = vld [vmem:[%s1822 + $0x2c] sm:$0xf]
      %v1835 = vld [vmem:[%s1822 + $0x30] sm:$0xf]
      %v1836 = vld [vmem:[%s1822 + $0x34] sm:$0xf]
      %v1837 = vld [vmem:[%s1822 + $0x38] sm:$0xf]
      %v1838 = vld [vmem:[%s1822 + $0x3c] sm:$0xf]
      %v1839 = vunpack.c.l.b16 %v1793
      %v1840 = vunpack.c.l.b16 %v1797
      %v1841 = vunpack.c.l.b16 %v1801
      %v1842 = vunpack.c.l.b16 %v1805
      %v1843 = vunpack.c.l.b16 %v1809
      %v1844 = vunpack.c.l.b16 %v1813
      %v1845 = vunpack.c.l.b16 %v1817
      %v1846 = vunpack.c.l.b16 %v1821
      %v1847 = vpack.c.b16 %v1840, %v1839
      %v1848 = vpack.c.b16 %v1842, %v1841
      %v1849 = vpack.c.b16 %v1844, %v1843
      %v1850 = vpack.c.b16 %v1846, %v1845
      %v1871 = vunpack.c.l.b16 %v1823
      %v1872 = vunpack.c.l.b16 %v1824
      %v1873 = vunpack.c.l.b16 %v1825
      %v1874 = vunpack.c.l.b16 %v1826
      %v1875 = vunpack.c.l.b16 %v1827
      %v1876 = vunpack.c.l.b16 %v1828
      %v1877 = vunpack.c.l.b16 %v1829
      %v1878 = vunpack.c.l.b16 %v1830
      %v1879 = vunpack.c.l.b16 %v1831
      %v1880 = vunpack.c.l.b16 %v1832
      %v1881 = vunpack.c.l.b16 %v1833
      %v1882 = vunpack.c.l.b16 %v1834
      %v1883 = vunpack.c.l.b16 %v1835
      %v1884 = vunpack.c.l.b16 %v1836
      %v1885 = vunpack.c.l.b16 %v1837
      %v1886 = vunpack.c.l.b16 %v1838
      %v1887 = vpack.c.b16 %v1872, %v1871
      %v1888 = vpack.c.b16 %v1874, %v1873
      %v1889 = vpack.c.b16 %v1876, %v1875
      %v1890 = vpack.c.b16 %v1878, %v1877
      %v1891 = vpack.c.b16 %v1880, %v1879
      %v1892 = vpack.c.b16 %v1882, %v1881
      %v1893 = vpack.c.b16 %v1884, %v1883
      %v1894 = vpack.c.b16 %v1886, %v1885
      %1903 = vmatprep.subr.bf16.mxu0 0
      %1904 = vmatpush1.bf16.msra.mxu0 %v1887
      %1905 = vmatprep.subr.bf16.mxu0 0
      %1906 = vmatpush1.bf16.msra.mxu0 %v1888
      %1907 = vmatprep.subr.bf16.mxu0 0
      %1908 = vmatpush1.bf16.msra.mxu0 %v1889
      %1909 = vmatprep.subr.bf16.mxu0 0
      %1910 = vmatpush1.bf16.msra.mxu0 %v1890
      %1911 = vmatprep.subr.bf16.mxu0 0
      %1912 = vmatpush1.bf16.msra.mxu0 %v1891
      %1913 = vmatprep.subr.bf16.mxu0 0
      %1914 = vmatpush1.bf16.msra.mxu0 %v1892
      %1915 = vmatprep.subr.bf16.mxu0 0
      %1916 = vmatpush1.bf16.msra.mxu0 %v1893
      %1917 = vmatprep.subr.bf16.mxu0 0
      %1918 = vmatpush1.bf16.msra.mxu0 %v1894
      %1919 = vmatprep.subr.bf16.mxu0 0
      %1920 = vmatpush1.bf16.msra.mxu0 0
      %1921 = vmatprep.subr.bf16.mxu0 0
      %1922 = vmatpush1.bf16.msra.mxu0 0
      %1923 = vmatprep.subr.bf16.mxu0 0
      %1924 = vmatpush1.bf16.msra.mxu0 0
      %1925 = vmatprep.subr.bf16.mxu0 0
      %1926 = vmatpush1.bf16.msra.mxu0 0
      %1927 = vmatprep.subr.bf16.mxu0 0
      %1928 = vmatpush1.bf16.msra.mxu0 0
      %1929 = vmatprep.subr.bf16.mxu0 0
      %1930 = vmatpush1.bf16.msra.mxu0 0
      %1931 = vmatprep.subr.bf16.mxu0 0
      %1932 = vmatpush1.bf16.msra.mxu0 0
      %1933 = vmatprep.subr.bf16.mxu0 0
      %1934 = vmatpush1.bf16.msra.mxu0 0
      %1935 = vmatprep.mubr.bf16.mxu0 0
      %1936 = vmatmul.mubr.bf16.gmra.mrb[0].mxu0 %v1847
      %v1937 = vpop.f32.mrb[0].mxu0
      %v1938 = vadd.f32 0.0, %v1937
      %v1939 = vpop.f32.mrb[0].mxu0
      %v1940 = vpop.f32.mrb[0].mxu0
      %v1941 = vadd.f32 0.0, %v1940
      %v1942 = vpop.f32.mrb[0].mxu0
      %1943 = vmatprep.mubr.bf16.mxu0 0
      %1944 = vmatmul.mubr.bf16.gmra.mrb[0].mxu0 %v1848
      %v1945 = vpop.f32.mrb[0].mxu0
      %v1946 = vadd.f32 0.0, %v1945
      %v1947 = vpop.f32.mrb[0].mxu0
      %v1948 = vpop.f32.mrb[0].mxu0
      %v1949 = vadd.f32 0.0, %v1948
      %v1950 = vpop.f32.mrb[0].mxu0
      %1951 = vmatprep.mubr.bf16.mxu0 0
      %1952 = vmatmul.mubr.bf16.gmra.mrb[0].mxu0 %v1849
      %v1953 = vpop.f32.mrb[0].mxu0
      %v1954 = vadd.f32 0.0, %v1953
      %v1955 = vpop.f32.mrb[0].mxu0
      %v1956 = vpop.f32.mrb[0].mxu0
      %v1957 = vadd.f32 0.0, %v1956
      %v1958 = vpop.f32.mrb[0].mxu0
      %1959 = vmatprep.mubr.bf16.mxu0 0
      %1960 = vmatmul.mubr.bf16.gmra.mrb[0].mxu0 %v1850
      %v1961 = vpop.f32.mrb[0].mxu0
      %v1962 = vadd.f32 0.0, %v1961
      %v1963 = vpop.f32.mrb[0].mxu0
      %v1964 = vpop.f32.mrb[0].mxu0
      %v1965 = vadd.f32 0.0, %v1964
      %v1966 = vpop.f32.mrb[0].mxu0
      %1967 = vdwg.mxu0
      %v1968 = vld [vmem:[#allocation4] sm:$0xff]
      %v1969 = vld [vmem:[#allocation4 + $0x8] sm:$0xff]
      %v1970 = vld [vmem:[#allocation4 + $0x10] sm:$0xff]
      %v1971 = vld [vmem:[#allocation4 + $0x18] sm:$0xff]
      %v1972 = vld [vmem:[#allocation4 + $0x20] sm:$0xff]
      %v1973 = vld [vmem:[#allocation4 + $0x28] sm:$0xff]
      %v1974 = vld [vmem:[#allocation4 + $0x30] sm:$0xff]
      %v1975 = vld [vmem:[#allocation4 + $0x38] sm:$0xff]
      %v1976 = vadd.f32 %v1968, %v1938
      %v1977 = vadd.f32 %v1969, %v1941
      %v1978 = vadd.f32 %v1970, %v1946
      %v1979 = vadd.f32 %v1971, %v1949
      %v1980 = vadd.f32 %v1972, %v1954
      %v1981 = vadd.f32 %v1973, %v1957
      %v1982 = vadd.f32 %v1974, %v1962
      %v1983 = vadd.f32 %v1975, %v1965
      %1984 = vst [vmem:[#allocation4] sm:$0xff] %v1976
      %1985 = vst [vmem:[#allocation4 + $0x8] sm:$0xff] %v1977
      %1986 = vst [vmem:[#allocation4 + $0x10] sm:$0xff] %v1978
      %1987 = vst [vmem:[#allocation4 + $0x18] sm:$0xff] %v1979
      %1988 = vst [vmem:[#allocation4 + $0x20] sm:$0xff] %v1980
      %1989 = vst [vmem:[#allocation4 + $0x28] sm:$0xff] %v1981
      %1990 = vst [vmem:[#allocation4 + $0x30] sm:$0xff] %v1982
      %1991 = vst [vmem:[#allocation4 + $0x38] sm:$0xff] %v1983
      %s1992 = scalar_lea.vmem [#allocation2], 16
      %v1993 = vld [vmem:[%s1992] sm:$0xf]
      %v1994 = vld [vmem:[%s1992 + $0x8] sm:$0xf]
      %v1995 = vld [vmem:[%s1992 + $0x10] sm:$0xf]
      %v1996 = vld [vmem:[%s1992 + $0x18] sm:$0xf]
      %v1997 = vld [vmem:[%s1992 + $0x20] sm:$0xf]
      %v1998 = vld [vmem:[%s1992 + $0x28] sm:$0xf]
      %v1999 = vld [vmem:[%s1992 + $0x30] sm:$0xf]
      %v2000 = vld [vmem:[%s1992 + $0x38] sm:$0xf]
      %s2001 = scalar_lea.vmem %s3, 384
      %v2002 = vld [vmem:[%s2001] sm:$0xf]
      %v2003 = vld [vmem:[%s2001 + $0x4] sm:$0xf]
      %v2004 = vld [vmem:[%s2001 + $0x8] sm:$0xf]
      %v2005 = vld [vmem:[%s2001 + $0xc] sm:$0xf]
      %v2006 = vld [vmem:[%s2001 + $0x10] sm:$0xf]
      %v2007 = vld [vmem:[%s2001 + $0x14] sm:$0xf]
      %v2008 = vld [vmem:[%s2001 + $0x18] sm:$0xf]
      %v2009 = vld [vmem:[%s2001 + $0x1c] sm:$0xf]
      %v2010 = vld [vmem:[%s2001 + $0x20] sm:$0xf]
      %v2011 = vld [vmem:[%s2001 + $0x24] sm:$0xf]
      %v2012 = vld [vmem:[%s2001 + $0x28] sm:$0xf]
      %v2013 = vld [vmem:[%s2001 + $0x2c] sm:$0xf]
      %v2014 = vld [vmem:[%s2001 + $0x30] sm:$0xf]
      %v2015 = vld [vmem:[%s2001 + $0x34] sm:$0xf]
      %v2016 = vld [vmem:[%s2001 + $0x38] sm:$0xf]
      %v2017 = vld [vmem:[%s2001 + $0x3c] sm:$0xf]
      %v2026 = vunpack.c.l.b16 %v1993
      %v2027 = vunpack.c.l.b16 %v1994
      %v2028 = vunpack.c.l.b16 %v1995
      %v2029 = vunpack.c.l.b16 %v1996
      %v2030 = vunpack.c.l.b16 %v1997
      %v2031 = vunpack.c.l.b16 %v1998
      %v2032 = vunpack.c.l.b16 %v1999
      %v2033 = vunpack.c.l.b16 %v2000
      %v2034 = vpack.c.b16 %v2027, %v2026
      %v2035 = vpack.c.b16 %v2029, %v2028
      %v2036 = vpack.c.b16 %v2031, %v2030
      %v2037 = vpack.c.b16 %v2033, %v2032
      %v2058 = vunpack.c.l.b16 %v2002
      %v2059 = vunpack.c.l.b16 %v2003
      %v2060 = vunpack.c.l.b16 %v2004
      %v2061 = vunpack.c.l.b16 %v2005
      %v2062 = vunpack.c.l.b16 %v2006
      %v2063 = vunpack.c.l.b16 %v2007
      %v2064 = vunpack.c.l.b16 %v2008
      %v2065 = vunpack.c.l.b16 %v2009
      %v2066 = vunpack.c.l.b16 %v2010
      %v2067 = vunpack.c.l.b16 %v2011
      %v2068 = vunpack.c.l.b16 %v2012
      %v2069 = vunpack.c.l.b16 %v2013
      %v2070 = vunpack.c.l.b16 %v2014
      %v2071 = vunpack.c.l.b16 %v2015
      %v2072 = vunpack.c.l.b16 %v2016
      %v2073 = vunpack.c.l.b16 %v2017
      %v2074 = vpack.c.b16 %v2059, %v2058
      %v2075 = vpack.c.b16 %v2061, %v2060
      %v2076 = vpack.c.b16 %v2063, %v2062
      %v2077 = vpack.c.b16 %v2065, %v2064
      %v2078 = vpack.c.b16 %v2067, %v2066
      %v2079 = vpack.c.b16 %v2069, %v2068
      %v2080 = vpack.c.b16 %v2071, %v2070
      %v2081 = vpack.c.b16 %v2073, %v2072
      %2090 = vmatprep.subr.bf16.mxu0 0
      %2091 = vmatpush1.bf16.msra.mxu0 %v2074
      %2092 = vmatprep.subr.bf16.mxu0 0
      %2093 = vmatpush1.bf16.msra.mxu0 %v2075
      %2094 = vmatprep.subr.bf16.mxu0 0
      %2095 = vmatpush1.bf16.msra.mxu0 %v2076
      %2096 = vmatprep.subr.bf16.mxu0 0
      %2097 = vmatpush1.bf16.msra.mxu0 %v2077
      %2098 = vmatprep.subr.bf16.mxu0 0
      %2099 = vmatpush1.bf16.msra.mxu0 %v2078
      %2100 = vmatprep.subr.bf16.mxu0 0
      %2101 = vmatpush1.bf16.msra.mxu0 %v2079
      %2102 = vmatprep.subr.bf16.mxu0 0
      %2103 = vmatpush1.bf16.msra.mxu0 %v2080
      %2104 = vmatprep.subr.bf16.mxu0 0
      %2105 = vmatpush1.bf16.msra.mxu0 %v2081
      %2106 = vmatprep.subr.bf16.mxu0 0
      %2107 = vmatpush1.bf16.msra.mxu0 0
      %2108 = vmatprep.subr.bf16.mxu0 0
      %2109 = vmatpush1.bf16.msra.mxu0 0
      %2110 = vmatprep.subr.bf16.mxu0 0
      %2111 = vmatpush1.bf16.msra.mxu0 0
      %2112 = vmatprep.subr.bf16.mxu0 0
      %2113 = vmatpush1.bf16.msra.mxu0 0
      %2114 = vmatprep.subr.bf16.mxu0 0
      %2115 = vmatpush1.bf16.msra.mxu0 0
      %2116 = vmatprep.subr.bf16.mxu0 0
      %2117 = vmatpush1.bf16.msra.mxu0 0
      %2118 = vmatprep.subr.bf16.mxu0 0
      %2119 = vmatpush1.bf16.msra.mxu0 0
      %2120 = vmatprep.subr.bf16.mxu0 0
      %2121 = vmatpush1.bf16.msra.mxu0 0
      %2122 = vmatprep.mubr.bf16.mxu0 0
      %2123 = vmatmul.mubr.bf16.gmra.mrb[0].mxu0 %v2034
      %v2124 = vpop.f32.mrb[0].mxu0
      %v2125 = vadd.f32 0.0, %v2124
      %v2126 = vpop.f32.mrb[0].mxu0
      %v2127 = vpop.f32.mrb[0].mxu0
      %v2128 = vadd.f32 0.0, %v2127
      %v2129 = vpop.f32.mrb[0].mxu0
      %2130 = vmatprep.mubr.bf16.mxu0 0
      %2131 = vmatmul.mubr.bf16.gmra.mrb[0].mxu0 %v2035
      %v2132 = vpop.f32.mrb[0].mxu0
      %v2133 = vadd.f32 0.0, %v2132
      %v2134 = vpop.f32.mrb[0].mxu0
      %v2135 = vpop.f32.mrb[0].mxu0
      %v2136 = vadd.f32 0.0, %v2135
      %v2137 = vpop.f32.mrb[0].mxu0
      %2138 = vmatprep.mubr.bf16.mxu0 0
      %2139 = vmatmul.mubr.bf16.gmra.mrb[0].mxu0 %v2036
      %v2140 = vpop.f32.mrb[0].mxu0
      %v2141 = vadd.f32 0.0, %v2140
      %v2142 = vpop.f32.mrb[0].mxu0
      %v2143 = vpop.f32.mrb[0].mxu0
      %v2144 = vadd.f32 0.0, %v2143
      %v2145 = vpop.f32.mrb[0].mxu0
      %2146 = vmatprep.mubr.bf16.mxu0 0
      %2147 = vmatmul.mubr.bf16.gmra.mrb[0].mxu0 %v2037
      %v2148 = vpop.f32.mrb[0].mxu0
      %v2149 = vadd.f32 0.0, %v2148
      %v2150 = vpop.f32.mrb[0].mxu0
      %v2151 = vpop.f32.mrb[0].mxu0
      %v2152 = vadd.f32 0.0, %v2151
      %v2153 = vpop.f32.mrb[0].mxu0
      %2154 = vdwg.mxu0
      %v2155 = vld [vmem:[#allocation4] sm:$0xff]
      %v2156 = vld [vmem:[#allocation4 + $0x8] sm:$0xff]
      %v2157 = vld [vmem:[#allocation4 + $0x10] sm:$0xff]
      %v2158 = vld [vmem:[#allocation4 + $0x18] sm:$0xff]
      %v2159 = vld [vmem:[#allocation4 + $0x20] sm:$0xff]
      %v2160 = vld [vmem:[#allocation4 + $0x28] sm:$0xff]
      %v2161 = vld [vmem:[#allocation4 + $0x30] sm:$0xff]
      %v2162 = vld [vmem:[#allocation4 + $0x38] sm:$0xff]
      %v2163 = vadd.f32 %v2155, %v2125
      %v2164 = vadd.f32 %v2156, %v2128
      %v2165 = vadd.f32 %v2157, %v2133
      %v2166 = vadd.f32 %v2158, %v2136
      %v2167 = vadd.f32 %v2159, %v2141
      %v2168 = vadd.f32 %v2160, %v2144
      %v2169 = vadd.f32 %v2161, %v2149
      %v2170 = vadd.f32 %v2162, %v2152
      %2171 = vst [vmem:[#allocation4] sm:$0xff] %v2163
      %2172 = vst [vmem:[#allocation4 + $0x8] sm:$0xff] %v2164
      %2173 = vst [vmem:[#allocation4 + $0x10] sm:$0xff] %v2165
      %2174 = vst [vmem:[#allocation4 + $0x18] sm:$0xff] %v2166
      %2175 = vst [vmem:[#allocation4 + $0x20] sm:$0xff] %v2167
      %2176 = vst [vmem:[#allocation4 + $0x28] sm:$0xff] %v2168
      %2177 = vst [vmem:[#allocation4 + $0x30] sm:$0xff] %v2169
      %2178 = vst [vmem:[#allocation4 + $0x38] sm:$0xff] %v2170
      %v2179 = vld [vmem:[%s1992] sm:$0xf]
      %v2180 = vld [vmem:[%s1992 + $0x4] sm:$0x1]
      %v2181 = vld [vmem:[%s1992 + $0x8] sm:$0xf]
      %v2182 = vld [vmem:[%s1992 + $0xc] sm:$0x1]
      %v2183 = vld [vmem:[%s1992 + $0x10] sm:$0xf]
      %v2184 = vld [vmem:[%s1992 + $0x14] sm:$0x1]
      %v2185 = vld [vmem:[%s1992 + $0x18] sm:$0xf]
      %v2186 = vld [vmem:[%s1992 + $0x1c] sm:$0x1]
      %v2187 = vld [vmem:[%s1992 + $0x20] sm:$0xf]
      %v2188 = vld [vmem:[%s1992 + $0x24] sm:$0x1]
      %v2189 = vld [vmem:[%s1992 + $0x28] sm:$0xf]
      %v2190 = vld [vmem:[%s1992 + $0x2c] sm:$0x1]
      %v2191 = vld [vmem:[%s1992 + $0x30] sm:$0xf]
      %v2192 = vld [vmem:[%s1992 + $0x34] sm:$0x1]
      %v2193 = vld [vmem:[%s1992 + $0x38] sm:$0xf]
      %v2194 = vld [vmem:[%s1992 + $0x3c] sm:$0x1]
      %v2196 = vshrl.u32 %v2179, 16
      %v2198 = vrot.slane %v2196, 4
      %v2199 = vshll.u32 %v2179, 16
      %v2201 = vrot.slane %v2199, 5
      %v2202 = vor.u32 %v2198, %v2201
      %v2203 = vrot.slane %v2202, 4
      %v2205 = vshll.u32 %v2180, 16
      %v2207 = vrot.slane %v2205, 5
      %v2208 = vsel %vm754, %v2203, %v2207
      %v2210 = vshrl.u32 %v2181, 16
      %v2212 = vrot.slane %v2210, 4
      %v2213 = vshll.u32 %v2181, 16
      %v2215 = vrot.slane %v2213, 5
      %v2216 = vor.u32 %v2212, %v2215
      %v2217 = vrot.slane %v2216, 4
      %v2219 = vshll.u32 %v2182, 16
      %v2221 = vrot.slane %v2219, 5
      %v2222 = vsel %vm754, %v2217, %v2221
      %v2224 = vshrl.u32 %v2183, 16
      %v2226 = vrot.slane %v2224, 4
      %v2227 = vshll.u32 %v2183, 16
      %v2229 = vrot.slane %v2227, 5
      %v2230 = vor.u32 %v2226, %v2229
      %v2231 = vrot.slane %v2230, 4
      %v2233 = vshll.u32 %v2184, 16
      %v2235 = vrot.slane %v2233, 5
      %v2236 = vsel %vm754, %v2231, %v2235
      %v2238 = vshrl.u32 %v2185, 16
      %v2240 = vrot.slane %v2238, 4
      %v2241 = vshll.u32 %v2185, 16
      %v2243 = vrot.slane %v2241, 5
      %v2244 = vor.u32 %v2240, %v2243
      %v2245 = vrot.slane %v2244, 4
      %v2247 = vshll.u32 %v2186, 16
      %v2249 = vrot.slane %v2247, 5
      %v2250 = vsel %vm754, %v2245, %v2249
      %v2252 = vshrl.u32 %v2187, 16
      %v2254 = vrot.slane %v2252, 4
      %v2255 = vshll.u32 %v2187, 16
      %v2257 = vrot.slane %v2255, 5
      %v2258 = vor.u32 %v2254, %v2257
      %v2259 = vrot.slane %v2258, 4
      %v2261 = vshll.u32 %v2188, 16
      %v2263 = vrot.slane %v2261, 5
      %v2264 = vsel %vm754, %v2259, %v2263
      %v2266 = vshrl.u32 %v2189, 16
      %v2268 = vrot.slane %v2266, 4
      %v2269 = vshll.u32 %v2189, 16
      %v2271 = vrot.slane %v2269, 5
      %v2272 = vor.u32 %v2268, %v2271
      %v2273 = vrot.slane %v2272, 4
      %v2275 = vshll.u32 %v2190, 16
      %v2277 = vrot.slane %v2275, 5
      %v2278 = vsel %vm754, %v2273, %v2277
      %v2280 = vshrl.u32 %v2191, 16
      %v2282 = vrot.slane %v2280, 4
      %v2283 = vshll.u32 %v2191, 16
      %v2285 = vrot.slane %v2283, 5
      %v2286 = vor.u32 %v2282, %v2285
      %v2287 = vrot.slane %v2286, 4
      %v2289 = vshll.u32 %v2192, 16
      %v2291 = vrot.slane %v2289, 5
      %v2292 = vsel %vm754, %v2287, %v2291
      %v2294 = vshrl.u32 %v2193, 16
      %v2296 = vrot.slane %v2294, 4
      %v2297 = vshll.u32 %v2193, 16
      %v2299 = vrot.slane %v2297, 5
      %v2300 = vor.u32 %v2296, %v2299
      %v2301 = vrot.slane %v2300, 4
      %v2303 = vshll.u32 %v2194, 16
      %v2305 = vrot.slane %v2303, 5
      %v2306 = vsel %vm754, %v2301, %v2305
      %s2307 = scalar_lea.vmem %s3, 448
      %v2308 = vld [vmem:[%s2307] sm:$0xf]
      %v2309 = vld [vmem:[%s2307 + $0x4] sm:$0xf]
      %v2310 = vld [vmem:[%s2307 + $0x8] sm:$0xf]
      %v2311 = vld [vmem:[%s2307 + $0xc] sm:$0xf]
      %v2312 = vld [vmem:[%s2307 + $0x10] sm:$0xf]
      %v2313 = vld [vmem:[%s2307 + $0x14] sm:$0xf]
      %v2314 = vld [vmem:[%s2307 + $0x18] sm:$0xf]
      %v2315 = vld [vmem:[%s2307 + $0x1c] sm:$0xf]
      %v2316 = vld [vmem:[%s2307 + $0x20] sm:$0xf]
      %v2317 = vld [vmem:[%s2307 + $0x24] sm:$0xf]
      %v2318 = vld [vmem:[%s2307 + $0x28] sm:$0xf]
      %v2319 = vld [vmem:[%s2307 + $0x2c] sm:$0xf]
      %v2320 = vld [vmem:[%s2307 + $0x30] sm:$0xf]
      %v2321 = vld [vmem:[%s2307 + $0x34] sm:$0xf]
      %v2322 = vld [vmem:[%s2307 + $0x38] sm:$0xf]
      %v2323 = vld [vmem:[%s2307 + $0x3c] sm:$0xf]
      %v2324 = vunpack.c.l.b16 %v2208
      %v2325 = vunpack.c.l.b16 %v2222
      %v2326 = vunpack.c.l.b16 %v2236
      %v2327 = vunpack.c.l.b16 %v2250
      %v2328 = vunpack.c.l.b16 %v2264
      %v2329 = vunpack.c.l.b16 %v2278
      %v2330 = vunpack.c.l.b16 %v2292
      %v2331 = vunpack.c.l.b16 %v2306
      %v2332 = vpack.c.b16 %v2325, %v2324
      %v2333 = vpack.c.b16 %v2327, %v2326
      %v2334 = vpack.c.b16 %v2329, %v2328
      %v2335 = vpack.c.b16 %v2331, %v2330
      %v2356 = vunpack.c.l.b16 %v2308
      %v2357 = vunpack.c.l.b16 %v2309
      %v2358 = vunpack.c.l.b16 %v2310
      %v2359 = vunpack.c.l.b16 %v2311
      %v2360 = vunpack.c.l.b16 %v2312
      %v2361 = vunpack.c.l.b16 %v2313
      %v2362 = vunpack.c.l.b16 %v2314
      %v2363 = vunpack.c.l.b16 %v2315
      %v2364 = vunpack.c.l.b16 %v2316
      %v2365 = vunpack.c.l.b16 %v2317
      %v2366 = vunpack.c.l.b16 %v2318
      %v2367 = vunpack.c.l.b16 %v2319
      %v2368 = vunpack.c.l.b16 %v2320
      %v2369 = vunpack.c.l.b16 %v2321
      %v2370 = vunpack.c.l.b16 %v2322
      %v2371 = vunpack.c.l.b16 %v2323
      %v2372 = vpack.c.b16 %v2357, %v2356
      %v2373 = vpack.c.b16 %v2359, %v2358
      %v2374 = vpack.c.b16 %v2361, %v2360
      %v2375 = vpack.c.b16 %v2363, %v2362
      %v2376 = vpack.c.b16 %v2365, %v2364
      %v2377 = vpack.c.b16 %v2367, %v2366
      %v2378 = vpack.c.b16 %v2369, %v2368
      %v2379 = vpack.c.b16 %v2371, %v2370
      %2388 = vmatprep.subr.bf16.mxu0 0
      %2389 = vmatpush1.bf16.msra.mxu0 %v2372
      %2390 = vmatprep.subr.bf16.mxu0 0
      %2391 = vmatpush1.bf16.msra.mxu0 %v2373
      %2392 = vmatprep.subr.bf16.mxu0 0
      %2393 = vmatpush1.bf16.msra.mxu0 %v2374
      %2394 = vmatprep.subr.bf16.mxu0 0
      %2395 = vmatpush1.bf16.msra.mxu0 %v2375
      %2396 = vmatprep.subr.bf16.mxu0 0
      %2397 = vmatpush1.bf16.msra.mxu0 %v2376
      %2398 = vmatprep.subr.bf16.mxu0 0
      %2399 = vmatpush1.bf16.msra.mxu0 %v2377
      %2400 = vmatprep.subr.bf16.mxu0 0
      %2401 = vmatpush1.bf16.msra.mxu0 %v2378
      %2402 = vmatprep.subr.bf16.mxu0 0
      %2403 = vmatpush1.bf16.msra.mxu0 %v2379
      %2404 = vmatprep.subr.bf16.mxu0 0
      %2405 = vmatpush1.bf16.msra.mxu0 0
      %2406 = vmatprep.subr.bf16.mxu0 0
      %2407 = vmatpush1.bf16.msra.mxu0 0
      %2408 = vmatprep.subr.bf16.mxu0 0
      %2409 = vmatpush1.bf16.msra.mxu0 0
      %2410 = vmatprep.subr.bf16.mxu0 0
      %2411 = vmatpush1.bf16.msra.mxu0 0
      %2412 = vmatprep.subr.bf16.mxu0 0
      %2413 = vmatpush1.bf16.msra.mxu0 0
      %2414 = vmatprep.subr.bf16.mxu0 0
      %2415 = vmatpush1.bf16.msra.mxu0 0
      %2416 = vmatprep.subr.bf16.mxu0 0
      %2417 = vmatpush1.bf16.msra.mxu0 0
      %2418 = vmatprep.subr.bf16.mxu0 0
      %2419 = vmatpush1.bf16.msra.mxu0 0
      %2420 = vmatprep.mubr.bf16.mxu0 0
      %2421 = vmatmul.mubr.bf16.gmra.mrb[0].mxu0 %v2332
      %v2422 = vpop.f32.mrb[0].mxu0
      %v2423 = vadd.f32 0.0, %v2422
      %v2424 = vpop.f32.mrb[0].mxu0
      %v2425 = vpop.f32.mrb[0].mxu0
      %v2426 = vadd.f32 0.0, %v2425
      %v2427 = vpop.f32.mrb[0].mxu0
      %2428 = vmatprep.mubr.bf16.mxu0 0
      %2429 = vmatmul.mubr.bf16.gmra.mrb[0].mxu0 %v2333
      %v2430 = vpop.f32.mrb[0].mxu0
      %v2431 = vadd.f32 0.0, %v2430
      %v2432 = vpop.f32.mrb[0].mxu0
      %v2433 = vpop.f32.mrb[0].mxu0
      %v2434 = vadd.f32 0.0, %v2433
      %v2435 = vpop.f32.mrb[0].mxu0
      %2436 = vmatprep.mubr.bf16.mxu0 0
      %2437 = vmatmul.mubr.bf16.gmra.mrb[0].mxu0 %v2334
      %v2438 = vpop.f32.mrb[0].mxu0
      %v2439 = vadd.f32 0.0, %v2438
      %v2440 = vpop.f32.mrb[0].mxu0
      %v2441 = vpop.f32.mrb[0].mxu0
      %v2442 = vadd.f32 0.0, %v2441
      %v2443 = vpop.f32.mrb[0].mxu0
      %2444 = vmatprep.mubr.bf16.mxu0 0
      %2445 = vmatmul.mubr.bf16.gmra.mrb[0].mxu0 %v2335
      %v2446 = vpop.f32.mrb[0].mxu0
      %v2447 = vadd.f32 0.0, %v2446
      %v2448 = vpop.f32.mrb[0].mxu0
      %v2449 = vpop.f32.mrb[0].mxu0
      %v2450 = vadd.f32 0.0, %v2449
      %v2451 = vpop.f32.mrb[0].mxu0
      %2452 = vdwg.mxu0
      %v2453 = vld [vmem:[#allocation4] sm:$0xff]
      %v2454 = vld [vmem:[#allocation4 + $0x8] sm:$0xff]
      %v2455 = vld [vmem:[#allocation4 + $0x10] sm:$0xff]
      %v2456 = vld [vmem:[#allocation4 + $0x18] sm:$0xff]
      %v2457 = vld [vmem:[#allocation4 + $0x20] sm:$0xff]
      %v2458 = vld [vmem:[#allocation4 + $0x28] sm:$0xff]
      %v2459 = vld [vmem:[#allocation4 + $0x30] sm:$0xff]
      %v2460 = vld [vmem:[#allocation4 + $0x38] sm:$0xff]
      %v2461 = vadd.f32 %v2453, %v2423
      %v2462 = vadd.f32 %v2454, %v2426
      %v2463 = vadd.f32 %v2455, %v2431
      %v2464 = vadd.f32 %v2456, %v2434
      %v2465 = vadd.f32 %v2457, %v2439
      %v2466 = vadd.f32 %v2458, %v2442
      %v2467 = vadd.f32 %v2459, %v2447
      %v2468 = vadd.f32 %v2460, %v2450
      %2469 = vst [vmem:[#allocation4] sm:$0xff] %v2461
      %2470 = vst [vmem:[#allocation4 + $0x8] sm:$0xff] %v2462
      %2471 = vst [vmem:[#allocation4 + $0x10] sm:$0xff] %v2463
      %2472 = vst [vmem:[#allocation4 + $0x18] sm:$0xff] %v2464
      %2473 = vst [vmem:[#allocation4 + $0x20] sm:$0xff] %v2465
      %2474 = vst [vmem:[#allocation4 + $0x28] sm:$0xff] %v2466
      %2475 = vst [vmem:[#allocation4 + $0x30] sm:$0xff] %v2467
      %2476 = vst [vmem:[#allocation4 + $0x38] sm:$0xff] %v2468
      %v2477 = vld [vmem:[%s1992] sm:$0xe]
      %v2478 = vld [vmem:[%s1992 + $0x4] sm:$0x1]
      %v2479 = vld [vmem:[%s1992 + $0x8] sm:$0xe]
      %v2480 = vld [vmem:[%s1992 + $0xc] sm:$0x1]
      %v2481 = vld [vmem:[%s1992 + $0x10] sm:$0xe]
      %v2482 = vld [vmem:[%s1992 + $0x14] sm:$0x1]
      %v2483 = vld [vmem:[%s1992 + $0x18] sm:$0xe]
      %v2484 = vld [vmem:[%s1992 + $0x1c] sm:$0x1]
      %v2485 = vld [vmem:[%s1992 + $0x20] sm:$0xe]
      %v2486 = vld [vmem:[%s1992 + $0x24] sm:$0x1]
      %v2487 = vld [vmem:[%s1992 + $0x28] sm:$0xe]
      %v2488 = vld [vmem:[%s1992 + $0x2c] sm:$0x1]
      %v2489 = vld [vmem:[%s1992 + $0x30] sm:$0xe]
      %v2490 = vld [vmem:[%s1992 + $0x34] sm:$0x1]
      %v2491 = vld [vmem:[%s1992 + $0x38] sm:$0xe]
      %v2492 = vld [vmem:[%s1992 + $0x3c] sm:$0x1]
      %v2509 = vrot.slane %v2477, 5
      %v2510 = vrot.slane %v2509, 4
      %v2511 = vrot.slane %v2478, 5
      %v2512 = vsel %vm1071, %v2510, %v2511
      %v2513 = vrot.slane %v2479, 5
      %v2514 = vrot.slane %v2513, 4
      %v2515 = vrot.slane %v2480, 5
      %v2516 = vsel %vm1071, %v2514, %v2515
      %v2517 = vrot.slane %v2481, 5
      %v2518 = vrot.slane %v2517, 4
      %v2519 = vrot.slane %v2482, 5
      %v2520 = vsel %vm1071, %v2518, %v2519
      %v2521 = vrot.slane %v2483, 5
      %v2522 = vrot.slane %v2521, 4
      %v2523 = vrot.slane %v2484, 5
      %v2524 = vsel %vm1071, %v2522, %v2523
      %v2525 = vrot.slane %v2485, 5
      %v2526 = vrot.slane %v2525, 4
      %v2527 = vrot.slane %v2486, 5
      %v2528 = vsel %vm1071, %v2526, %v2527
      %v2529 = vrot.slane %v2487, 5
      %v2530 = vrot.slane %v2529, 4
      %v2531 = vrot.slane %v2488, 5
      %v2532 = vsel %vm1071, %v2530, %v2531
      %v2533 = vrot.slane %v2489, 5
      %v2534 = vrot.slane %v2533, 4
      %v2535 = vrot.slane %v2490, 5
      %v2536 = vsel %vm1071, %v2534, %v2535
      %v2537 = vrot.slane %v2491, 5
      %v2538 = vrot.slane %v2537, 4
      %v2539 = vrot.slane %v2492, 5
      %v2540 = vsel %vm1071, %v2538, %v2539
      %s2541 = scalar_lea.vmem %s3, 512
      %v2542 = vld [vmem:[%s2541] sm:$0xf]
      %v2543 = vld [vmem:[%s2541 + $0x4] sm:$0xf]
      %v2544 = vld [vmem:[%s2541 + $0x8] sm:$0xf]
      %v2545 = vld [vmem:[%s2541 + $0xc] sm:$0xf]
      %v2546 = vld [vmem:[%s2541 + $0x10] sm:$0xf]
      %v2547 = vld [vmem:[%s2541 + $0x14] sm:$0xf]
      %v2548 = vld [vmem:[%s2541 + $0x18] sm:$0xf]
      %v2549 = vld [vmem:[%s2541 + $0x1c] sm:$0xf]
      %v2550 = vld [vmem:[%s2541 + $0x20] sm:$0xf]
      %v2551 = vld [vmem:[%s2541 + $0x24] sm:$0xf]
      %v2552 = vld [vmem:[%s2541 + $0x28] sm:$0xf]
      %v2553 = vld [vmem:[%s2541 + $0x2c] sm:$0xf]
      %v2554 = vld [vmem:[%s2541 + $0x30] sm:$0xf]
      %v2555 = vld [vmem:[%s2541 + $0x34] sm:$0xf]
      %v2556 = vld [vmem:[%s2541 + $0x38] sm:$0xf]
      %v2557 = vld [vmem:[%s2541 + $0x3c] sm:$0xf]
      %v2558 = vunpack.c.l.b16 %v2512
      %v2559 = vunpack.c.l.b16 %v2516
      %v2560 = vunpack.c.l.b16 %v2520
      %v2561 = vunpack.c.l.b16 %v2524
      %v2562 = vunpack.c.l.b16 %v2528
      %v2563 = vunpack.c.l.b16 %v2532
      %v2564 = vunpack.c.l.b16 %v2536
      %v2565 = vunpack.c.l.b16 %v2540
      %v2566 = vpack.c.b16 %v2559, %v2558
      %v2567 = vpack.c.b16 %v2561, %v2560
      %v2568 = vpack.c.b16 %v2563, %v2562
      %v2569 = vpack.c.b16 %v2565, %v2564
      %v2590 = vunpack.c.l.b16 %v2542
      %v2591 = vunpack.c.l.b16 %v2543
      %v2592 = vunpack.c.l.b16 %v2544
      %v2593 = vunpack.c.l.b16 %v2545
      %v2594 = vunpack.c.l.b16 %v2546
      %v2595 = vunpack.c.l.b16 %v2547
      %v2596 = vunpack.c.l.b16 %v2548
      %v2597 = vunpack.c.l.b16 %v2549
      %v2598 = vunpack.c.l.b16 %v2550
      %v2599 = vunpack.c.l.b16 %v2551
      %v2600 = vunpack.c.l.b16 %v2552
      %v2601 = vunpack.c.l.b16 %v2553
      %v2602 = vunpack.c.l.b16 %v2554
      %v2603 = vunpack.c.l.b16 %v2555
      %v2604 = vunpack.c.l.b16 %v2556
      %v2605 = vunpack.c.l.b16 %v2557
      %v2606 = vpack.c.b16 %v2591, %v2590
      %v2607 = vpack.c.b16 %v2593, %v2592
      %v2608 = vpack.c.b16 %v2595, %v2594
      %v2609 = vpack.c.b16 %v2597, %v2596
      %v2610 = vpack.c.b16 %v2599, %v2598
      %v2611 = vpack.c.b16 %v2601, %v2600
      %v2612 = vpack.c.b16 %v2603, %v2602
      %v2613 = vpack.c.b16 %v2605, %v2604
      %2622 = vmatprep.subr.bf16.mxu0 0
      %2623 = vmatpush1.bf16.msra.mxu0 %v2606
      %2624 = vmatprep.subr.bf16.mxu0 0
      %2625 = vmatpush1.bf16.msra.mxu0 %v2607
      %2626 = vmatprep.subr.bf16.mxu0 0
      %2627 = vmatpush1.bf16.msra.mxu0 %v2608
      %2628 = vmatprep.subr.bf16.mxu0 0
      %2629 = vmatpush1.bf16.msra.mxu0 %v2609
      %2630 = vmatprep.subr.bf16.mxu0 0
      %2631 = vmatpush1.bf16.msra.mxu0 %v2610
      %2632 = vmatprep.subr.bf16.mxu0 0
      %2633 = vmatpush1.bf16.msra.mxu0 %v2611
      %2634 = vmatprep.subr.bf16.mxu0 0
      %2635 = vmatpush1.bf16.msra.mxu0 %v2612
      %2636 = vmatprep.subr.bf16.mxu0 0
      %2637 = vmatpush1.bf16.msra.mxu0 %v2613
      %2638 = vmatprep.subr.bf16.mxu0 0
      %2639 = vmatpush1.bf16.msra.mxu0 0
      %2640 = vmatprep.subr.bf16.mxu0 0
      %2641 = vmatpush1.bf16.msra.mxu0 0
      %2642 = vmatprep.subr.bf16.mxu0 0
      %2643 = vmatpush1.bf16.msra.mxu0 0
      %2644 = vmatprep.subr.bf16.mxu0 0
      %2645 = vmatpush1.bf16.msra.mxu0 0
      %2646 = vmatprep.subr.bf16.mxu0 0
      %2647 = vmatpush1.bf16.msra.mxu0 0
      %2648 = vmatprep.subr.bf16.mxu0 0
      %2649 = vmatpush1.bf16.msra.mxu0 0
      %2650 = vmatprep.subr.bf16.mxu0 0
      %2651 = vmatpush1.bf16.msra.mxu0 0
      %2652 = vmatprep.subr.bf16.mxu0 0
      %2653 = vmatpush1.bf16.msra.mxu0 0
      %2654 = vmatprep.mubr.bf16.mxu0 0
      %2655 = vmatmul.mubr.bf16.gmra.mrb[0].mxu0 %v2566
      %v2656 = vpop.f32.mrb[0].mxu0
      %v2657 = vadd.f32 0.0, %v2656
      %v2658 = vpop.f32.mrb[0].mxu0
      %v2659 = vpop.f32.mrb[0].mxu0
      %v2660 = vadd.f32 0.0, %v2659
      %v2661 = vpop.f32.mrb[0].mxu0
      %2662 = vmatprep.mubr.bf16.mxu0 0
      %2663 = vmatmul.mubr.bf16.gmra.mrb[0].mxu0 %v2567
      %v2664 = vpop.f32.mrb[0].mxu0
      %v2665 = vadd.f32 0.0, %v2664
      %v2666 = vpop.f32.mrb[0].mxu0
      %v2667 = vpop.f32.mrb[0].mxu0
      %v2668 = vadd.f32 0.0, %v2667
      %v2669 = vpop.f32.mrb[0].mxu0
      %2670 = vmatprep.mubr.bf16.mxu0 0
      %2671 = vmatmul.mubr.bf16.gmra.mrb[0].mxu0 %v2568
      %v2672 = vpop.f32.mrb[0].mxu0
      %v2673 = vadd.f32 0.0, %v2672
      %v2674 = vpop.f32.mrb[0].mxu0
      %v2675 = vpop.f32.mrb[0].mxu0
      %v2676 = vadd.f32 0.0, %v2675
      %v2677 = vpop.f32.mrb[0].mxu0
      %2678 = vmatprep.mubr.bf16.mxu0 0
      %2679 = vmatmul.mubr.bf16.gmra.mrb[0].mxu0 %v2569
      %v2680 = vpop.f32.mrb[0].mxu0
      %v2681 = vadd.f32 0.0, %v2680
      %v2682 = vpop.f32.mrb[0].mxu0
      %v2683 = vpop.f32.mrb[0].mxu0
      %v2684 = vadd.f32 0.0, %v2683
      %v2685 = vpop.f32.mrb[0].mxu0
      %2686 = vdwg.mxu0
      %v2687 = vld [vmem:[#allocation4] sm:$0xff]
      %v2688 = vld [vmem:[#allocation4 + $0x8] sm:$0xff]
      %v2689 = vld [vmem:[#allocation4 + $0x10] sm:$0xff]
      %v2690 = vld [vmem:[#allocation4 + $0x18] sm:$0xff]
      %v2691 = vld [vmem:[#allocation4 + $0x20] sm:$0xff]
      %v2692 = vld [vmem:[#allocation4 + $0x28] sm:$0xff]
      %v2693 = vld [vmem:[#allocation4 + $0x30] sm:$0xff]
      %v2694 = vld [vmem:[#allocation4 + $0x38] sm:$0xff]
      %v2695 = vadd.f32 %v2687, %v2657
      %v2696 = vadd.f32 %v2688, %v2660
      %v2697 = vadd.f32 %v2689, %v2665
      %v2698 = vadd.f32 %v2690, %v2668
      %v2699 = vadd.f32 %v2691, %v2673
      %v2700 = vadd.f32 %v2692, %v2676
      %v2701 = vadd.f32 %v2693, %v2681
      %v2702 = vadd.f32 %v2694, %v2684
      %2703 = vst [vmem:[#allocation4] sm:$0xff] %v2695
      %2704 = vst [vmem:[#allocation4 + $0x8] sm:$0xff] %v2696
      %2705 = vst [vmem:[#allocation4 + $0x10] sm:$0xff] %v2697
      %2706 = vst [vmem:[#allocation4 + $0x18] sm:$0xff] %v2698
      %2707 = vst [vmem:[#allocation4 + $0x20] sm:$0xff] %v2699
      %2708 = vst [vmem:[#allocation4 + $0x28] sm:$0xff] %v2700
      %2709 = vst [vmem:[#allocation4 + $0x30] sm:$0xff] %v2701
      %2710 = vst [vmem:[#allocation4 + $0x38] sm:$0xff] %v2702
      %v2711 = vld [vmem:[#allocation4] sm:$0xff]
      %v2712 = vld [vmem:[#allocation4 + $0x8] sm:$0xff]
      %v2713 = vld [vmem:[#allocation4 + $0x10] sm:$0xff]
      %v2714 = vld [vmem:[#allocation4 + $0x18] sm:$0xff]
      %v2715 = vld [vmem:[#allocation4 + $0x20] sm:$0xff]
      %v2716 = vld [vmem:[#allocation4 + $0x28] sm:$0xff]
      %v2717 = vld [vmem:[#allocation4 + $0x30] sm:$0xff]
      %v2718 = vld [vmem:[#allocation4 + $0x38] sm:$0xff]
      %v2719 = vld [vmem:[%s4] sm:$0x1]
      %v2721 = vlaneseq
      %v2722 = vshrl.u32 %v2721, 7
      %v2723 = vsub.s32 0, %v2722
      %v2724 = vrot.slane %v2719, %v2723
      %v2726 = vmul.f32 %v2711, %v2724
      %v2727 = vmul.f32 %v2712, %v2724
      %v2728 = vmul.f32 %v2713, %v2724
      %v2729 = vmul.f32 %v2714, %v2724
      %v2730 = vmul.f32 %v2715, %v2724
      %v2731 = vmul.f32 %v2716, %v2724
      %v2732 = vmul.f32 %v2717, %v2724
      %v2733 = vmul.f32 %v2718, %v2724
      %v2734 = vld [vmem:[%s5] sm:$0x1]
      %v2736 = vlaneseq
      %v2737 = vshrl.u32 %v2736, 7
      %v2738 = vsub.s32 0, %v2737
      %v2739 = vrot.slane %v2734, %v2738
      %v2741 = vadd.f32 %v2726, %v2739
      %v2742 = vadd.f32 %v2727, %v2739
      %v2743 = vadd.f32 %v2728, %v2739
      %v2744 = vadd.f32 %v2729, %v2739
      %v2745 = vadd.f32 %v2730, %v2739
      %v2746 = vadd.f32 %v2731, %v2739
      %v2747 = vadd.f32 %v2732, %v2739
      %v2748 = vadd.f32 %v2733, %v2739
      %v2749 = vmax.f32 %v2741, 0.0
      %v2750 = vmax.f32 %v2742, 0.0
      %v2751 = vmax.f32 %v2743, 0.0
      %v2752 = vmax.f32 %v2744, 0.0
      %v2753 = vmax.f32 %v2745, 0.0
      %v2754 = vmax.f32 %v2746, 0.0
      %v2755 = vmax.f32 %v2747, 0.0
      %v2756 = vmax.f32 %v2748, 0.0
      %v2757 = vpack.c.bf16 %v2750, %v2749
      %v2758 = vpack.c.bf16 %v2752, %v2751
      %v2759 = vpack.c.bf16 %v2754, %v2753
      %v2760 = vpack.c.bf16 %v2756, %v2755
      %v2765 = vunpack.c.l.b16 %v2757
      %v2766 = vunpack.c.h.b16 %v2757
      %v2767 = vunpack.c.l.b16 %v2758
      %v2768 = vunpack.c.h.b16 %v2758
      %v2769 = vunpack.c.l.b16 %v2759
      %v2770 = vunpack.c.h.b16 %v2759
      %v2771 = vunpack.c.l.b16 %v2760
      %v2772 = vunpack.c.h.b16 %v2760
      %v2773 = vpack.c.b16 %v2765, %v2765
      %v2774 = vpack.c.b16 %v2766, %v2766
      %v2775 = vpack.c.b16 %v2767, %v2767
      %v2776 = vpack.c.b16 %v2768, %v2768
      %v2777 = vpack.c.b16 %v2769, %v2769
      %v2778 = vpack.c.b16 %v2770, %v2770
      %v2779 = vpack.c.b16 %v2771, %v2771
      %v2780 = vpack.c.b16 %v2772, %v2772
      %2781 = vst [vmem:[#allocation3] sm:$0xf] 0
      %2782 = vst [vmem:[#allocation3 + $0x4] sm:$0x1] 0
      %s2783 = scalar_lea.vmem [#allocation3], 72
      %2784 = vst [vmem:[%s2783] sm:$0xf] 0
      %2785 = vst [vmem:[%s2783 + $0x4] sm:$0x1] 0
      %v2786 = vld [vmem:[#allocation3] sm:$0x1]
      %v2787 = vsel %vm346, 0, %v2786
      %2788 = vst [vmem:[#allocation3] sm:$0x1] %v2787
      %v2789 = vld [vmem:[#allocation3 + $0x8] sm:$0x1]
      %v2790 = vsel %vm346, 0, %v2789
      %2791 = vst [vmem:[#allocation3 + $0x8] sm:$0x1] %v2790
      %v2792 = vld [vmem:[#allocation3 + $0x10] sm:$0x1]
      %v2793 = vsel %vm346, 0, %v2792
      %2794 = vst [vmem:[#allocation3 + $0x10] sm:$0x1] %v2793
      %v2795 = vld [vmem:[#allocation3 + $0x18] sm:$0x1]
      %v2796 = vsel %vm346, 0, %v2795
      %2797 = vst [vmem:[#allocation3 + $0x18] sm:$0x1] %v2796
      %v2798 = vld [vmem:[#allocation3 + $0x20] sm:$0x1]
      %v2799 = vsel %vm346, 0, %v2798
      %2800 = vst [vmem:[#allocation3 + $0x20] sm:$0x1] %v2799
      %v2801 = vld [vmem:[#allocation3 + $0x28] sm:$0x1]
      %v2802 = vsel %vm346, 0, %v2801
      %2803 = vst [vmem:[#allocation3 + $0x28] sm:$0x1] %v2802
      %v2804 = vld [vmem:[#allocation3 + $0x30] sm:$0x1]
      %v2805 = vsel %vm346, 0, %v2804
      %2806 = vst [vmem:[#allocation3 + $0x30] sm:$0x1] %v2805
      %v2807 = vld [vmem:[#allocation3 + $0x38] sm:$0x1]
      %v2808 = vsel %vm346, 0, %v2807
      %2809 = vst [vmem:[#allocation3 + $0x38] sm:$0x1] %v2808
      %v2810 = vld [vmem:[#allocation3 + $0x40] sm:$0x1]
      %v2811 = vsel %vm346, 0, %v2810
      %2812 = vst [vmem:[#allocation3 + $0x40] sm:$0x1] %v2811
      %v2813 = vld [vmem:[#allocation3 + $0x48] sm:$0x1]
      %v2814 = vsel %vm346, 0, %v2813
      %2815 = vst [vmem:[#allocation3 + $0x48] sm:$0x1] %v2814
      %v2816 = vld [vmem:[#allocation3 + $0x4] sm:$0x1]
      %v2817 = vsel %vm381, 0, %v2816
      %2818 = vst [vmem:[#allocation3 + $0x4] sm:$0x1] %v2817
      %v2819 = vld [vmem:[#allocation3 + $0xc] sm:$0x1]
      %v2820 = vsel %vm381, 0, %v2819
      %2821 = vst [vmem:[#allocation3 + $0xc] sm:$0x1] %v2820
      %v2822 = vld [vmem:[#allocation3 + $0x14] sm:$0x1]
      %v2823 = vsel %vm381, 0, %v2822
      %2824 = vst [vmem:[#allocation3 + $0x14] sm:$0x1] %v2823
      %v2825 = vld [vmem:[#allocation3 + $0x1c] sm:$0x1]
      %v2826 = vsel %vm381, 0, %v2825
      %2827 = vst [vmem:[#allocation3 + $0x1c] sm:$0x1] %v2826
      %v2828 = vld [vmem:[#allocation3 + $0x24] sm:$0x1]
      %v2829 = vsel %vm381, 0, %v2828
      %2830 = vst [vmem:[#allocation3 + $0x24] sm:$0x1] %v2829
      %v2831 = vld [vmem:[#allocation3 + $0x2c] sm:$0x1]
      %v2832 = vsel %vm381, 0, %v2831
      %2833 = vst [vmem:[#allocation3 + $0x2c] sm:$0x1] %v2832
      %v2834 = vld [vmem:[#allocation3 + $0x34] sm:$0x1]
      %v2835 = vsel %vm381, 0, %v2834
      %2836 = vst [vmem:[#allocation3 + $0x34] sm:$0x1] %v2835
      %v2837 = vld [vmem:[#allocation3 + $0x3c] sm:$0x1]
      %v2838 = vsel %vm381, 0, %v2837
      %2839 = vst [vmem:[#allocation3 + $0x3c] sm:$0x1] %v2838
      %v2840 = vld [vmem:[#allocation3 + $0x44] sm:$0x1]
      %v2841 = vsel %vm381, 0, %v2840
      %2842 = vst [vmem:[#allocation3 + $0x44] sm:$0x1] %v2841
      %v2843 = vld [vmem:[#allocation3 + $0x4c] sm:$0x1]
      %v2844 = vsel %vm381, 0, %v2843
      %2845 = vst [vmem:[#allocation3 + $0x4c] sm:$0x1] %v2844
      %v2847 = vshrl.u32 %v2773, 16
      %v2849 = vrot.slane %v2847, 7
      %v2850 = vshll.u32 %v2773, 16
      %v2852 = vor.u32 %v2849, %v2850
      %v2853 = vrot.slane %v2849, 4
      %v2855 = vshrl.u32 %v2774, 16
      %v2857 = vrot.slane %v2855, 7
      %v2858 = vshll.u32 %v2774, 16
      %v2860 = vor.u32 %v2857, %v2858
      %v2861 = vrot.slane %v2857, 4
      %v2863 = vshrl.u32 %v2775, 16
      %v2865 = vrot.slane %v2863, 7
      %v2866 = vshll.u32 %v2775, 16
      %v2868 = vor.u32 %v2865, %v2866
      %v2869 = vrot.slane %v2865, 4
      %v2871 = vshrl.u32 %v2776, 16
      %v2873 = vrot.slane %v2871, 7
      %v2874 = vshll.u32 %v2776, 16
      %v2876 = vor.u32 %v2873, %v2874
      %v2877 = vrot.slane %v2873, 4
      %v2879 = vshrl.u32 %v2777, 16
      %v2881 = vrot.slane %v2879, 7
      %v2882 = vshll.u32 %v2777, 16
      %v2884 = vor.u32 %v2881, %v2882
      %v2885 = vrot.slane %v2881, 4
      %v2887 = vshrl.u32 %v2778, 16
      %v2889 = vrot.slane %v2887, 7
      %v2890 = vshll.u32 %v2778, 16
      %v2892 = vor.u32 %v2889, %v2890
      %v2893 = vrot.slane %v2889, 4
      %v2895 = vshrl.u32 %v2779, 16
      %v2897 = vrot.slane %v2895, 7
      %v2898 = vshll.u32 %v2779, 16
      %v2900 = vor.u32 %v2897, %v2898
      %v2901 = vrot.slane %v2897, 4
      %v2903 = vshrl.u32 %v2780, 16
      %v2905 = vrot.slane %v2903, 7
      %v2906 = vshll.u32 %v2780, 16
      %v2908 = vor.u32 %v2905, %v2906
      %v2909 = vrot.slane %v2905, 4
      %s2926 = scalar_lea.vmem [#allocation3], 8
      %v2927 = vld [vmem:[%s2926] sm:$0xf]
      %v2928 = vsel %vm518, %v2852, %v2927
      %2929 = vst [vmem:[%s2926] sm:$0xf] %v2928
      %v2930 = vld [vmem:[%s2926 + $0x4] sm:$0x1]
      %v2931 = vsel %vm346, %v2853, %v2930
      %2932 = vst [vmem:[%s2926 + $0x4] sm:$0x1] %v2931
      %v2933 = vld [vmem:[%s2926 + $0x8] sm:$0xf]
      %v2934 = vsel %vm518, %v2860, %v2933
      %2935 = vst [vmem:[%s2926 + $0x8] sm:$0xf] %v2934
      %v2936 = vld [vmem:[%s2926 + $0xc] sm:$0x1]
      %v2937 = vsel %vm346, %v2861, %v2936
      %2938 = vst [vmem:[%s2926 + $0xc] sm:$0x1] %v2937
      %v2939 = vld [vmem:[%s2926 + $0x10] sm:$0xf]
      %v2940 = vsel %vm518, %v2868, %v2939
      %2941 = vst [vmem:[%s2926 + $0x10] sm:$0xf] %v2940
      %v2942 = vld [vmem:[%s2926 + $0x14] sm:$0x1]
      %v2943 = vsel %vm346, %v2869, %v2942
      %2944 = vst [vmem:[%s2926 + $0x14] sm:$0x1] %v2943
      %v2945 = vld [vmem:[%s2926 + $0x18] sm:$0xf]
      %v2946 = vsel %vm518, %v2876, %v2945
      %2947 = vst [vmem:[%s2926 + $0x18] sm:$0xf] %v2946
      %v2948 = vld [vmem:[%s2926 + $0x1c] sm:$0x1]
      %v2949 = vsel %vm346, %v2877, %v2948
      %2950 = vst [vmem:[%s2926 + $0x1c] sm:$0x1] %v2949
      %v2951 = vld [vmem:[%s2926 + $0x20] sm:$0xf]
      %v2952 = vsel %vm518, %v2884, %v2951
      %2953 = vst [vmem:[%s2926 + $0x20] sm:$0xf] %v2952
      %v2954 = vld [vmem:[%s2926 + $0x24] sm:$0x1]
      %v2955 = vsel %vm346, %v2885, %v2954
      %2956 = vst [vmem:[%s2926 + $0x24] sm:$0x1] %v2955
      %v2957 = vld [vmem:[%s2926 + $0x28] sm:$0xf]
      %v2958 = vsel %vm518, %v2892, %v2957
      %2959 = vst [vmem:[%s2926 + $0x28] sm:$0xf] %v2958
      %v2960 = vld [vmem:[%s2926 + $0x2c] sm:$0x1]
      %v2961 = vsel %vm346, %v2893, %v2960
      %2962 = vst [vmem:[%s2926 + $0x2c] sm:$0x1] %v2961
      %v2963 = vld [vmem:[%s2926 + $0x30] sm:$0xf]
      %v2964 = vsel %vm518, %v2900, %v2963
      %2965 = vst [vmem:[%s2926 + $0x30] sm:$0xf] %v2964
      %v2966 = vld [vmem:[%s2926 + $0x34] sm:$0x1]
      %v2967 = vsel %vm346, %v2901, %v2966
      %2968 = vst [vmem:[%s2926 + $0x34] sm:$0x1] %v2967
      %v2969 = vld [vmem:[%s2926 + $0x38] sm:$0xf]
      %v2970 = vsel %vm518, %v2908, %v2969
      %2971 = vst [vmem:[%s2926 + $0x38] sm:$0xf] %v2970
      %v2972 = vld [vmem:[%s2926 + $0x3c] sm:$0x1]
      %v2973 = vsel %vm346, %v2909, %v2972
      %2974 = vst [vmem:[%s2926 + $0x3c] sm:$0x1] %v2973
      %2975 = vst [vmem:[#allocation4] sm:$0xff] %v288
      %2976 = vst [vmem:[#allocation4 + $0x8] sm:$0xff] %v289
      %2977 = vst [vmem:[#allocation4 + $0x10] sm:$0xff] %v290
      %2978 = vst [vmem:[#allocation4 + $0x18] sm:$0xff] %v291
      %2979 = vst [vmem:[#allocation4 + $0x20] sm:$0xff] %v292
      %2980 = vst [vmem:[#allocation4 + $0x28] sm:$0xff] %v293
      %2981 = vst [vmem:[#allocation4 + $0x30] sm:$0xff] %v294
      %2982 = vst [vmem:[#allocation4 + $0x38] sm:$0xff] %v295
      %v2983 = vld [vmem:[#allocation3] sm:$0xf]
      %v2984 = vld [vmem:[#allocation3 + $0x8] sm:$0xf]
      %v2985 = vld [vmem:[#allocation3 + $0x10] sm:$0xf]
      %v2986 = vld [vmem:[#allocation3 + $0x18] sm:$0xf]
      %v2987 = vld [vmem:[#allocation3 + $0x20] sm:$0xf]
      %v2988 = vld [vmem:[#allocation3 + $0x28] sm:$0xf]
      %v2989 = vld [vmem:[#allocation3 + $0x30] sm:$0xf]
      %v2990 = vld [vmem:[#allocation3 + $0x38] sm:$0xf]
      %v2991 = vld [vmem:[#allocation4] sm:$0xff]
      %v2992 = vld [vmem:[#allocation4 + $0x8] sm:$0xff]
      %v2993 = vld [vmem:[#allocation4 + $0x10] sm:$0xff]
      %v2994 = vld [vmem:[#allocation4 + $0x18] sm:$0xff]
      %v2995 = vld [vmem:[#allocation4 + $0x20] sm:$0xff]
      %v2996 = vld [vmem:[#allocation4 + $0x28] sm:$0xff]
      %v2997 = vld [vmem:[#allocation4 + $0x30] sm:$0xff]
      %v2998 = vld [vmem:[#allocation4 + $0x38] sm:$0xff]
      %v2999 = vld [vmem:[%s6] sm:$0xf]
      %v3000 = vld [vmem:[%s6 + $0x4] sm:$0xf]
      %v3001 = vld [vmem:[%s6 + $0x8] sm:$0xf]
      %v3002 = vld [vmem:[%s6 + $0xc] sm:$0xf]
      %v3003 = vld [vmem:[%s6 + $0x10] sm:$0xf]
      %v3004 = vld [vmem:[%s6 + $0x14] sm:$0xf]
      %v3005 = vld [vmem:[%s6 + $0x18] sm:$0xf]
      %v3006 = vld [vmem:[%s6 + $0x1c] sm:$0xf]
      %v3007 = vld [vmem:[%s6 + $0x20] sm:$0xf]
      %v3008 = vld [vmem:[%s6 + $0x24] sm:$0xf]
      %v3009 = vld [vmem:[%s6 + $0x28] sm:$0xf]
      %v3010 = vld [vmem:[%s6 + $0x2c] sm:$0xf]
      %v3011 = vld [vmem:[%s6 + $0x30] sm:$0xf]
      %v3012 = vld [vmem:[%s6 + $0x34] sm:$0xf]
      %v3013 = vld [vmem:[%s6 + $0x38] sm:$0xf]
      %v3014 = vld [vmem:[%s6 + $0x3c] sm:$0xf]
      %v3023 = vunpack.c.l.b16 %v2983
      %v3024 = vunpack.c.l.b16 %v2984
      %v3025 = vunpack.c.l.b16 %v2985
      %v3026 = vunpack.c.l.b16 %v2986
      %v3027 = vunpack.c.l.b16 %v2987
      %v3028 = vunpack.c.l.b16 %v2988
      %v3029 = vunpack.c.l.b16 %v2989
      %v3030 = vunpack.c.l.b16 %v2990
      %v3031 = vpack.c.b16 %v3024, %v3023
      %v3032 = vpack.c.b16 %v3026, %v3025
      %v3033 = vpack.c.b16 %v3028, %v3027
      %v3034 = vpack.c.b16 %v3030, %v3029
      %v3055 = vunpack.c.l.b16 %v2999
      %v3056 = vunpack.c.l.b16 %v3000
      %v3057 = vunpack.c.l.b16 %v3001
      %v3058 = vunpack.c.l.b16 %v3002
      %v3059 = vunpack.c.l.b16 %v3003
      %v3060 = vunpack.c.l.b16 %v3004
      %v3061 = vunpack.c.l.b16 %v3005
      %v3062 = vunpack.c.l.b16 %v3006
      %v3063 = vunpack.c.l.b16 %v3007
      %v3064 = vunpack.c.l.b16 %v3008
      %v3065 = vunpack.c.l.b16 %v3009
      %v3066 = vunpack.c.l.b16 %v3010
      %v3067 = vunpack.c.l.b16 %v3011
      %v3068 = vunpack.c.l.b16 %v3012
      %v3069 = vunpack.c.l.b16 %v3013
      %v3070 = vunpack.c.l.b16 %v3014
      %v3071 = vpack.c.b16 %v3056, %v3055
      %v3072 = vpack.c.b16 %v3058, %v3057
      %v3073 = vpack.c.b16 %v3060, %v3059
      %v3074 = vpack.c.b16 %v3062, %v3061
      %v3075 = vpack.c.b16 %v3064, %v3063
      %v3076 = vpack.c.b16 %v3066, %v3065
      %v3077 = vpack.c.b16 %v3068, %v3067
      %v3078 = vpack.c.b16 %v3070, %v3069
      %3087 = vmatprep.subr.bf16.mxu0 0
      %3088 = vmatpush1.bf16.msra.mxu0 %v3071
      %3089 = vmatprep.subr.bf16.mxu0 0
      %3090 = vmatpush1.bf16.msra.mxu0 %v3072
      %3091 = vmatprep.subr.bf16.mxu0 0
      %3092 = vmatpush1.bf16.msra.mxu0 %v3073
      %3093 = vmatprep.subr.bf16.mxu0 0
      %3094 = vmatpush1.bf16.msra.mxu0 %v3074
      %3095 = vmatprep.subr.bf16.mxu0 0
      %3096 = vmatpush1.bf16.msra.mxu0 %v3075
      %3097 = vmatprep.subr.bf16.mxu0 0
      %3098 = vmatpush1.bf16.msra.mxu0 %v3076
      %3099 = vmatprep.subr.bf16.mxu0 0
      %3100 = vmatpush1.bf16.msra.mxu0 %v3077
      %3101 = vmatprep.subr.bf16.mxu0 0
      %3102 = vmatpush1.bf16.msra.mxu0 %v3078
      %3103 = vmatprep.subr.bf16.mxu0 0
      %3104 = vmatpush1.bf16.msra.mxu0 0
      %3105 = vmatprep.subr.bf16.mxu0 0
      %3106 = vmatpush1.bf16.msra.mxu0 0
      %3107 = vmatprep.subr.bf16.mxu0 0
      %3108 = vmatpush1.bf16.msra.mxu0 0
      %3109 = vmatprep.subr.bf16.mxu0 0
      %3110 = vmatpush1.bf16.msra.mxu0 0
      %3111 = vmatprep.subr.bf16.mxu0 0
      %3112 = vmatpush1.bf16.msra.mxu0 0
      %3113 = vmatprep.subr.bf16.mxu0 0
      %3114 = vmatpush1.bf16.msra.mxu0 0
      %3115 = vmatprep.subr.bf16.mxu0 0
      %3116 = vmatpush1.bf16.msra.mxu0 0
      %3117 = vmatprep.subr.bf16.mxu0 0
      %3118 = vmatpush1.bf16.msra.mxu0 0
      %3119 = vmatprep.mubr.bf16.mxu0 0
      %3120 = vmatmul.mubr.bf16.gmra.mrb[0].mxu0 %v3031
      %v3121 = vpop.f32.mrb[0].mxu0
      %v3122 = vadd.f32 0.0, %v3121
      %v3123 = vpop.f32.mrb[0].mxu0
      %v3124 = vpop.f32.mrb[0].mxu0
      %v3125 = vadd.f32 0.0, %v3124
      %v3126 = vpop.f32.mrb[0].mxu0
      %3127 = vmatprep.mubr.bf16.mxu0 0
      %3128 = vmatmul.mubr.bf16.gmra.mrb[0].mxu0 %v3032
      %v3129 = vpop.f32.mrb[0].mxu0
      %v3130 = vadd.f32 0.0, %v3129
      %v3131 = vpop.f32.mrb[0].mxu0
      %v3132 = vpop.f32.mrb[0].mxu0
      %v3133 = vadd.f32 0.0, %v3132
      %v3134 = vpop.f32.mrb[0].mxu0
      %3135 = vmatprep.mubr.bf16.mxu0 0
      %3136 = vmatmul.mubr.bf16.gmra.mrb[0].mxu0 %v3033
      %v3137 = vpop.f32.mrb[0].mxu0
      %v3138 = vadd.f32 0.0, %v3137
      %v3139 = vpop.f32.mrb[0].mxu0
      %v3140 = vpop.f32.mrb[0].mxu0
      %v3141 = vadd.f32 0.0, %v3140
      %v3142 = vpop.f32.mrb[0].mxu0
      %3143 = vmatprep.mubr.bf16.mxu0 0
      %3144 = vmatmul.mubr.bf16.gmra.mrb[0].mxu0 %v3034
      %v3145 = vpop.f32.mrb[0].mxu0
      %v3146 = vadd.f32 0.0, %v3145
      %v3147 = vpop.f32.mrb[0].mxu0
      %v3148 = vpop.f32.mrb[0].mxu0
      %v3149 = vadd.f32 0.0, %v3148
      %v3150 = vpop.f32.mrb[0].mxu0
      %3151 = vdwg.mxu0
      %v3152 = vadd.f32 %v2991, %v3122
      %v3153 = vadd.f32 %v2992, %v3125
      %v3154 = vadd.f32 %v2993, %v3130
      %v3155 = vadd.f32 %v2994, %v3133
      %v3156 = vadd.f32 %v2995, %v3138
      %v3157 = vadd.f32 %v2996, %v3141
      %v3158 = vadd.f32 %v2997, %v3146
      %v3159 = vadd.f32 %v2998, %v3149
      %3160 = vst [vmem:[#allocation4] sm:$0xff] %v3152
      %3161 = vst [vmem:[#allocation4 + $0x8] sm:$0xff] %v3153
      %3162 = vst [vmem:[#allocation4 + $0x10] sm:$0xff] %v3154
      %3163 = vst [vmem:[#allocation4 + $0x18] sm:$0xff] %v3155
      %3164 = vst [vmem:[#allocation4 + $0x20] sm:$0xff] %v3156
      %3165 = vst [vmem:[#allocation4 + $0x28] sm:$0xff] %v3157
      %3166 = vst [vmem:[#allocation4 + $0x30] sm:$0xff] %v3158
      %3167 = vst [vmem:[#allocation4 + $0x38] sm:$0xff] %v3159
      %v3168 = vld [vmem:[#allocation3] sm:$0xf]
      %v3169 = vld [vmem:[#allocation3 + $0x4] sm:$0x1]
      %v3170 = vld [vmem:[#allocation3 + $0x8] sm:$0xf]
      %v3171 = vld [vmem:[#allocation3 + $0xc] sm:$0x1]
      %v3172 = vld [vmem:[#allocation3 + $0x10] sm:$0xf]
      %v3173 = vld [vmem:[#allocation3 + $0x14] sm:$0x1]
      %v3174 = vld [vmem:[#allocation3 + $0x18] sm:$0xf]
      %v3175 = vld [vmem:[#allocation3 + $0x1c] sm:$0x1]
      %v3176 = vld [vmem:[#allocation3 + $0x20] sm:$0xf]
      %v3177 = vld [vmem:[#allocation3 + $0x24] sm:$0x1]
      %v3178 = vld [vmem:[#allocation3 + $0x28] sm:$0xf]
      %v3179 = vld [vmem:[#allocation3 + $0x2c] sm:$0x1]
      %v3180 = vld [vmem:[#allocation3 + $0x30] sm:$0xf]
      %v3181 = vld [vmem:[#allocation3 + $0x34] sm:$0x1]
      %v3182 = vld [vmem:[#allocation3 + $0x38] sm:$0xf]
      %v3183 = vld [vmem:[#allocation3 + $0x3c] sm:$0x1]
      %v3185 = vshrl.u32 %v3168, 16
      %v3187 = vrot.slane %v3185, 4
      %v3188 = vshll.u32 %v3168, 16
      %v3190 = vrot.slane %v3188, 5
      %v3191 = vor.u32 %v3187, %v3190
      %v3192 = vrot.slane %v3191, 4
      %v3194 = vshll.u32 %v3169, 16
      %v3196 = vrot.slane %v3194, 5
      %v3197 = vsel %vm754, %v3192, %v3196
      %v3199 = vshrl.u32 %v3170, 16
      %v3201 = vrot.slane %v3199, 4
      %v3202 = vshll.u32 %v3170, 16
      %v3204 = vrot.slane %v3202, 5
      %v3205 = vor.u32 %v3201, %v3204
      %v3206 = vrot.slane %v3205, 4
      %v3208 = vshll.u32 %v3171, 16
      %v3210 = vrot.slane %v3208, 5
      %v3211 = vsel %vm754, %v3206, %v3210
      %v3213 = vshrl.u32 %v3172, 16
      %v3215 = vrot.slane %v3213, 4
      %v3216 = vshll.u32 %v3172, 16
      %v3218 = vrot.slane %v3216, 5
      %v3219 = vor.u32 %v3215, %v3218
      %v3220 = vrot.slane %v3219, 4
      %v3222 = vshll.u32 %v3173, 16
      %v3224 = vrot.slane %v3222, 5
      %v3225 = vsel %vm754, %v3220, %v3224
      %v3227 = vshrl.u32 %v3174, 16
      %v3229 = vrot.slane %v3227, 4
      %v3230 = vshll.u32 %v3174, 16
      %v3232 = vrot.slane %v3230, 5
      %v3233 = vor.u32 %v3229, %v3232
      %v3234 = vrot.slane %v3233, 4
      %v3236 = vshll.u32 %v3175, 16
      %v3238 = vrot.slane %v3236, 5
      %v3239 = vsel %vm754, %v3234, %v3238
      %v3241 = vshrl.u32 %v3176, 16
      %v3243 = vrot.slane %v3241, 4
      %v3244 = vshll.u32 %v3176, 16
      %v3246 = vrot.slane %v3244, 5
      %v3247 = vor.u32 %v3243, %v3246
      %v3248 = vrot.slane %v3247, 4
      %v3250 = vshll.u32 %v3177, 16
      %v3252 = vrot.slane %v3250, 5
      %v3253 = vsel %vm754, %v3248, %v3252
      %v3255 = vshrl.u32 %v3178, 16
      %v3257 = vrot.slane %v3255, 4
      %v3258 = vshll.u32 %v3178, 16
      %v3260 = vrot.slane %v3258, 5
      %v3261 = vor.u32 %v3257, %v3260
      %v3262 = vrot.slane %v3261, 4
      %v3264 = vshll.u32 %v3179, 16
      %v3266 = vrot.slane %v3264, 5
      %v3267 = vsel %vm754, %v3262, %v3266
      %v3269 = vshrl.u32 %v3180, 16
      %v3271 = vrot.slane %v3269, 4
      %v3272 = vshll.u32 %v3180, 16
      %v3274 = vrot.slane %v3272, 5
      %v3275 = vor.u32 %v3271, %v3274
      %v3276 = vrot.slane %v3275, 4
      %v3278 = vshll.u32 %v3181, 16
      %v3280 = vrot.slane %v3278, 5
      %v3281 = vsel %vm754, %v3276, %v3280
      %v3283 = vshrl.u32 %v3182, 16
      %v3285 = vrot.slane %v3283, 4
      %v3286 = vshll.u32 %v3182, 16
      %v3288 = vrot.slane %v3286, 5
      %v3289 = vor.u32 %v3285, %v3288
      %v3290 = vrot.slane %v3289, 4
      %v3292 = vshll.u32 %v3183, 16
      %v3294 = vrot.slane %v3292, 5
      %v3295 = vsel %vm754, %v3290, %v3294
      %v3296 = vld [vmem:[#allocation4] sm:$0xff]
      %v3297 = vld [vmem:[#allocation4 + $0x8] sm:$0xff]
      %v3298 = vld [vmem:[#allocation4 + $0x10] sm:$0xff]
      %v3299 = vld [vmem:[#allocation4 + $0x18] sm:$0xff]
      %v3300 = vld [vmem:[#allocation4 + $0x20] sm:$0xff]
      %v3301 = vld [vmem:[#allocation4 + $0x28] sm:$0xff]
      %v3302 = vld [vmem:[#allocation4 + $0x30] sm:$0xff]
      %v3303 = vld [vmem:[#allocation4 + $0x38] sm:$0xff]
      %s3304 = scalar_lea.vmem %s6, 64
      %v3305 = vld [vmem:[%s3304] sm:$0xf]
      %v3306 = vld [vmem:[%s3304 + $0x4] sm:$0xf]
      %v3307 = vld [vmem:[%s3304 + $0x8] sm:$0xf]
      %v3308 = vld [vmem:[%s3304 + $0xc] sm:$0xf]
      %v3309 = vld [vmem:[%s3304 + $0x10] sm:$0xf]
      %v3310 = vld [vmem:[%s3304 + $0x14] sm:$0xf]
      %v3311 = vld [vmem:[%s3304 + $0x18] sm:$0xf]
      %v3312 = vld [vmem:[%s3304 + $0x1c] sm:$0xf]
      %v3313 = vld [vmem:[%s3304 + $0x20] sm:$0xf]
      %v3314 = vld [vmem:[%s3304 + $0x24] sm:$0xf]
      %v3315 = vld [vmem:[%s3304 + $0x28] sm:$0xf]
      %v3316 = vld [vmem:[%s3304 + $0x2c] sm:$0xf]
      %v3317 = vld [vmem:[%s3304 + $0x30] sm:$0xf]
      %v3318 = vld [vmem:[%s3304 + $0x34] sm:$0xf]
      %v3319 = vld [vmem:[%s3304 + $0x38] sm:$0xf]
      %v3320 = vld [vmem:[%s3304 + $0x3c] sm:$0xf]
      %v3321 = vunpack.c.l.b16 %v3197
      %v3322 = vunpack.c.l.b16 %v3211
      %v3323 = vunpack.c.l.b16 %v3225
      %v3324 = vunpack.c.l.b16 %v3239
      %v3325 = vunpack.c.l.b16 %v3253
      %v3326 = vunpack.c.l.b16 %v3267
      %v3327 = vunpack.c.l.b16 %v3281
      %v3328 = vunpack.c.l.b16 %v3295
      %v3329 = vpack.c.b16 %v3322, %v3321
      %v3330 = vpack.c.b16 %v3324, %v3323
      %v3331 = vpack.c.b16 %v3326, %v3325
      %v3332 = vpack.c.b16 %v3328, %v3327
      %v3353 = vunpack.c.l.b16 %v3305
      %v3354 = vunpack.c.l.b16 %v3306
      %v3355 = vunpack.c.l.b16 %v3307
      %v3356 = vunpack.c.l.b16 %v3308
      %v3357 = vunpack.c.l.b16 %v3309
      %v3358 = vunpack.c.l.b16 %v3310
      %v3359 = vunpack.c.l.b16 %v3311
      %v3360 = vunpack.c.l.b16 %v3312
      %v3361 = vunpack.c.l.b16 %v3313
      %v3362 = vunpack.c.l.b16 %v3314
      %v3363 = vunpack.c.l.b16 %v3315
      %v3364 = vunpack.c.l.b16 %v3316
      %v3365 = vunpack.c.l.b16 %v3317
      %v3366 = vunpack.c.l.b16 %v3318
      %v3367 = vunpack.c.l.b16 %v3319
      %v3368 = vunpack.c.l.b16 %v3320
      %v3369 = vpack.c.b16 %v3354, %v3353
      %v3370 = vpack.c.b16 %v3356, %v3355
      %v3371 = vpack.c.b16 %v3358, %v3357
      %v3372 = vpack.c.b16 %v3360, %v3359
      %v3373 = vpack.c.b16 %v3362, %v3361
      %v3374 = vpack.c.b16 %v3364, %v3363
      %v3375 = vpack.c.b16 %v3366, %v3365
      %v3376 = vpack.c.b16 %v3368, %v3367
      %3385 = vmatprep.subr.bf16.mxu0 0
      %3386 = vmatpush1.bf16.msra.mxu0 %v3369
      %3387 = vmatprep.subr.bf16.mxu0 0
      %3388 = vmatpush1.bf16.msra.mxu0 %v3370
      %3389 = vmatprep.subr.bf16.mxu0 0
      %3390 = vmatpush1.bf16.msra.mxu0 %v3371
      %3391 = vmatprep.subr.bf16.mxu0 0
      %3392 = vmatpush1.bf16.msra.mxu0 %v3372
      %3393 = vmatprep.subr.bf16.mxu0 0
      %3394 = vmatpush1.bf16.msra.mxu0 %v3373
      %3395 = vmatprep.subr.bf16.mxu0 0
      %3396 = vmatpush1.bf16.msra.mxu0 %v3374
      %3397 = vmatprep.subr.bf16.mxu0 0
      %3398 = vmatpush1.bf16.msra.mxu0 %v3375
      %3399 = vmatprep.subr.bf16.mxu0 0
      %3400 = vmatpush1.bf16.msra.mxu0 %v3376
      %3401 = vmatprep.subr.bf16.mxu0 0
      %3402 = vmatpush1.bf16.msra.mxu0 0
      %3403 = vmatprep.subr.bf16.mxu0 0
      %3404 = vmatpush1.bf16.msra.mxu0 0
      %3405 = vmatprep.subr.bf16.mxu0 0
      %3406 = vmatpush1.bf16.msra.mxu0 0
      %3407 = vmatprep.subr.bf16.mxu0 0
      %3408 = vmatpush1.bf16.msra.mxu0 0
      %3409 = vmatprep.subr.bf16.mxu0 0
      %3410 = vmatpush1.bf16.msra.mxu0 0
      %3411 = vmatprep.subr.bf16.mxu0 0
      %3412 = vmatpush1.bf16.msra.mxu0 0
      %3413 = vmatprep.subr.bf16.mxu0 0
      %3414 = vmatpush1.bf16.msra.mxu0 0
      %3415 = vmatprep.subr.bf16.mxu0 0
      %3416 = vmatpush1.bf16.msra.mxu0 0
      %3417 = vmatprep.mubr.bf16.mxu0 0
      %3418 = vmatmul.mubr.bf16.gmra.mrb[0].mxu0 %v3329
      %v3419 = vpop.f32.mrb[0].mxu0
      %v3420 = vadd.f32 0.0, %v3419
      %v3421 = vpop.f32.mrb[0].mxu0
      %v3422 = vpop.f32.mrb[0].mxu0
      %v3423 = vadd.f32 0.0, %v3422
      %v3424 = vpop.f32.mrb[0].mxu0
      %3425 = vmatprep.mubr.bf16.mxu0 0
      %3426 = vmatmul.mubr.bf16.gmra.mrb[0].mxu0 %v3330
      %v3427 = vpop.f32.mrb[0].mxu0
      %v3428 = vadd.f32 0.0, %v3427
      %v3429 = vpop.f32.mrb[0].mxu0
      %v3430 = vpop.f32.mrb[0].mxu0
      %v3431 = vadd.f32 0.0, %v3430
      %v3432 = vpop.f32.mrb[0].mxu0
      %3433 = vmatprep.mubr.bf16.mxu0 0
      %3434 = vmatmul.mubr.bf16.gmra.mrb[0].mxu0 %v3331
      %v3435 = vpop.f32.mrb[0].mxu0
      %v3436 = vadd.f32 0.0, %v3435
      %v3437 = vpop.f32.mrb[0].mxu0
      %v3438 = vpop.f32.mrb[0].mxu0
      %v3439 = vadd.f32 0.0, %v3438
      %v3440 = vpop.f32.mrb[0].mxu0
      %3441 = vmatprep.mubr.bf16.mxu0 0
      %3442 = vmatmul.mubr.bf16.gmra.mrb[0].mxu0 %v3332
      %v3443 = vpop.f32.mrb[0].mxu0
      %v3444 = vadd.f32 0.0, %v3443
      %v3445 = vpop.f32.mrb[0].mxu0
      %v3446 = vpop.f32.mrb[0].mxu0
      %v3447 = vadd.f32 0.0, %v3446
      %v3448 = vpop.f32.mrb[0].mxu0
      %3449 = vdwg.mxu0
      %v3450 = vadd.f32 %v3296, %v3420
      %v3451 = vadd.f32 %v3297, %v3423
      %v3452 = vadd.f32 %v3298, %v3428
      %v3453 = vadd.f32 %v3299, %v3431
      %v3454 = vadd.f32 %v3300, %v3436
      %v3455 = vadd.f32 %v3301, %v3439
      %v3456 = vadd.f32 %v3302, %v3444
      %v3457 = vadd.f32 %v3303, %v3447
      %3458 = vst [vmem:[#allocation4] sm:$0xff] %v3450
      %3459 = vst [vmem:[#allocation4 + $0x8] sm:$0xff] %v3451
      %3460 = vst [vmem:[#allocation4 + $0x10] sm:$0xff] %v3452
      %3461 = vst [vmem:[#allocation4 + $0x18] sm:$0xff] %v3453
      %3462 = vst [vmem:[#allocation4 + $0x20] sm:$0xff] %v3454
      %3463 = vst [vmem:[#allocation4 + $0x28] sm:$0xff] %v3455
      %3464 = vst [vmem:[#allocation4 + $0x30] sm:$0xff] %v3456
      %3465 = vst [vmem:[#allocation4 + $0x38] sm:$0xff] %v3457
      %v3466 = vld [vmem:[#allocation3] sm:$0xe]
      %v3467 = vld [vmem:[#allocation3 + $0x4] sm:$0x1]
      %v3468 = vld [vmem:[#allocation3 + $0x8] sm:$0xe]
      %v3469 = vld [vmem:[#allocation3 + $0xc] sm:$0x1]
      %v3470 = vld [vmem:[#allocation3 + $0x10] sm:$0xe]
      %v3471 = vld [vmem:[#allocation3 + $0x14] sm:$0x1]
      %v3472 = vld [vmem:[#allocation3 + $0x18] sm:$0xe]
      %v3473 = vld [vmem:[#allocation3 + $0x1c] sm:$0x1]
      %v3474 = vld [vmem:[#allocation3 + $0x20] sm:$0xe]
      %v3475 = vld [vmem:[#allocation3 + $0x24] sm:$0x1]
      %v3476 = vld [vmem:[#allocation3 + $0x28] sm:$0xe]
      %v3477 = vld [vmem:[#allocation3 + $0x2c] sm:$0x1]
      %v3478 = vld [vmem:[#allocation3 + $0x30] sm:$0xe]
      %v3479 = vld [vmem:[#allocation3 + $0x34] sm:$0x1]
      %v3480 = vld [vmem:[#allocation3 + $0x38] sm:$0xe]
      %v3481 = vld [vmem:[#allocation3 + $0x3c] sm:$0x1]
      %v3498 = vrot.slane %v3466, 5
      %v3499 = vrot.slane %v3498, 4
      %v3500 = vrot.slane %v3467, 5
      %v3501 = vsel %vm1071, %v3499, %v3500
      %v3502 = vrot.slane %v3468, 5
      %v3503 = vrot.slane %v3502, 4
      %v3504 = vrot.slane %v3469, 5
      %v3505 = vsel %vm1071, %v3503, %v3504
      %v3506 = vrot.slane %v3470, 5
      %v3507 = vrot.slane %v3506, 4
      %v3508 = vrot.slane %v3471, 5
      %v3509 = vsel %vm1071, %v3507, %v3508
      %v3510 = vrot.slane %v3472, 5
      %v3511 = vrot.slane %v3510, 4
      %v3512 = vrot.slane %v3473, 5
      %v3513 = vsel %vm1071, %v3511, %v3512
      %v3514 = vrot.slane %v3474, 5
      %v3515 = vrot.slane %v3514, 4
      %v3516 = vrot.slane %v3475, 5
      %v3517 = vsel %vm1071, %v3515, %v3516
      %v3518 = vrot.slane %v3476, 5
      %v3519 = vrot.slane %v3518, 4
      %v3520 = vrot.slane %v3477, 5
      %v3521 = vsel %vm1071, %v3519, %v3520
      %v3522 = vrot.slane %v3478, 5
      %v3523 = vrot.slane %v3522, 4
      %v3524 = vrot.slane %v3479, 5
      %v3525 = vsel %vm1071, %v3523, %v3524
      %v3526 = vrot.slane %v3480, 5
      %v3527 = vrot.slane %v3526, 4
      %v3528 = vrot.slane %v3481, 5
      %v3529 = vsel %vm1071, %v3527, %v3528
      %v3530 = vld [vmem:[#allocation4] sm:$0xff]
      %v3531 = vld [vmem:[#allocation4 + $0x8] sm:$0xff]
      %v3532 = vld [vmem:[#allocation4 + $0x10] sm:$0xff]
      %v3533 = vld [vmem:[#allocation4 + $0x18] sm:$0xff]
      %v3534 = vld [vmem:[#allocation4 + $0x20] sm:$0xff]
      %v3535 = vld [vmem:[#allocation4 + $0x28] sm:$0xff]
      %v3536 = vld [vmem:[#allocation4 + $0x30] sm:$0xff]
      %v3537 = vld [vmem:[#allocation4 + $0x38] sm:$0xff]
      %s3538 = scalar_lea.vmem %s6, 128
      %v3539 = vld [vmem:[%s3538] sm:$0xf]
      %v3540 = vld [vmem:[%s3538 + $0x4] sm:$0xf]
      %v3541 = vld [vmem:[%s3538 + $0x8] sm:$0xf]
      %v3542 = vld [vmem:[%s3538 + $0xc] sm:$0xf]
      %v3543 = vld [vmem:[%s3538 + $0x10] sm:$0xf]
      %v3544 = vld [vmem:[%s3538 + $0x14] sm:$0xf]
      %v3545 = vld [vmem:[%s3538 + $0x18] sm:$0xf]
      %v3546 = vld [vmem:[%s3538 + $0x1c] sm:$0xf]
      %v3547 = vld [vmem:[%s3538 + $0x20] sm:$0xf]
      %v3548 = vld [vmem:[%s3538 + $0x24] sm:$0xf]
      %v3549 = vld [vmem:[%s3538 + $0x28] sm:$0xf]
      %v3550 = vld [vmem:[%s3538 + $0x2c] sm:$0xf]
      %v3551 = vld [vmem:[%s3538 + $0x30] sm:$0xf]
      %v3552 = vld [vmem:[%s3538 + $0x34] sm:$0xf]
      %v3553 = vld [vmem:[%s3538 + $0x38] sm:$0xf]
      %v3554 = vld [vmem:[%s3538 + $0x3c] sm:$0xf]
      %v3555 = vunpack.c.l.b16 %v3501
      %v3556 = vunpack.c.l.b16 %v3505
      %v3557 = vunpack.c.l.b16 %v3509
      %v3558 = vunpack.c.l.b16 %v3513
      %v3559 = vunpack.c.l.b16 %v3517
      %v3560 = vunpack.c.l.b16 %v3521
      %v3561 = vunpack.c.l.b16 %v3525
      %v3562 = vunpack.c.l.b16 %v3529
      %v3563 = vpack.c.b16 %v3556, %v3555
      %v3564 = vpack.c.b16 %v3558, %v3557
      %v3565 = vpack.c.b16 %v3560, %v3559
      %v3566 = vpack.c.b16 %v3562, %v3561
      %v3587 = vunpack.c.l.b16 %v3539
      %v3588 = vunpack.c.l.b16 %v3540
      %v3589 = vunpack.c.l.b16 %v3541
      %v3590 = vunpack.c.l.b16 %v3542
      %v3591 = vunpack.c.l.b16 %v3543
      %v3592 = vunpack.c.l.b16 %v3544
      %v3593 = vunpack.c.l.b16 %v3545
      %v3594 = vunpack.c.l.b16 %v3546
      %v3595 = vunpack.c.l.b16 %v3547
      %v3596 = vunpack.c.l.b16 %v3548
      %v3597 = vunpack.c.l.b16 %v3549
      %v3598 = vunpack.c.l.b16 %v3550
      %v3599 = vunpack.c.l.b16 %v3551
      %v3600 = vunpack.c.l.b16 %v3552
      %v3601 = vunpack.c.l.b16 %v3553
      %v3602 = vunpack.c.l.b16 %v3554
      %v3603 = vpack.c.b16 %v3588, %v3587
      %v3604 = vpack.c.b16 %v3590, %v3589
      %v3605 = vpack.c.b16 %v3592, %v3591
      %v3606 = vpack.c.b16 %v3594, %v3593
      %v3607 = vpack.c.b16 %v3596, %v3595
      %v3608 = vpack.c.b16 %v3598, %v3597
      %v3609 = vpack.c.b16 %v3600, %v3599
      %v3610 = vpack.c.b16 %v3602, %v3601
      %3619 = vmatprep.subr.bf16.mxu0 0
      %3620 = vmatpush1.bf16.msra.mxu0 %v3603
      %3621 = vmatprep.subr.bf16.mxu0 0
      %3622 = vmatpush1.bf16.msra.mxu0 %v3604
      %3623 = vmatprep.subr.bf16.mxu0 0
      %3624 = vmatpush1.bf16.msra.mxu0 %v3605
      %3625 = vmatprep.subr.bf16.mxu0 0
      %3626 = vmatpush1.bf16.msra.mxu0 %v3606
      %3627 = vmatprep.subr.bf16.mxu0 0
      %3628 = vmatpush1.bf16.msra.mxu0 %v3607
      %3629 = vmatprep.subr.bf16.mxu0 0
      %3630 = vmatpush1.bf16.msra.mxu0 %v3608
      %3631 = vmatprep.subr.bf16.mxu0 0
      %3632 = vmatpush1.bf16.msra.mxu0 %v3609
      %3633 = vmatprep.subr.bf16.mxu0 0
      %3634 = vmatpush1.bf16.msra.mxu0 %v3610
      %3635 = vmatprep.subr.bf16.mxu0 0
      %3636 = vmatpush1.bf16.msra.mxu0 0
      %3637 = vmatprep.subr.bf16.mxu0 0
      %3638 = vmatpush1.bf16.msra.mxu0 0
      %3639 = vmatprep.subr.bf16.mxu0 0
      %3640 = vmatpush1.bf16.msra.mxu0 0
      %3641 = vmatprep.subr.bf16.mxu0 0
      %3642 = vmatpush1.bf16.msra.mxu0 0
      %3643 = vmatprep.subr.bf16.mxu0 0
      %3644 = vmatpush1.bf16.msra.mxu0 0
      %3645 = vmatprep.subr.bf16.mxu0 0
      %3646 = vmatpush1.bf16.msra.mxu0 0
      %3647 = vmatprep.subr.bf16.mxu0 0
      %3648 = vmatpush1.bf16.msra.mxu0 0
      %3649 = vmatprep.subr.bf16.mxu0 0
      %3650 = vmatpush1.bf16.msra.mxu0 0
      %3651 = vmatprep.mubr.bf16.mxu0 0
      %3652 = vmatmul.mubr.bf16.gmra.mrb[0].mxu0 %v3563
      %v3653 = vpop.f32.mrb[0].mxu0
      %v3654 = vadd.f32 0.0, %v3653
      %v3655 = vpop.f32.mrb[0].mxu0
      %v3656 = vpop.f32.mrb[0].mxu0
      %v3657 = vadd.f32 0.0, %v3656
      %v3658 = vpop.f32.mrb[0].mxu0
      %3659 = vmatprep.mubr.bf16.mxu0 0
      %3660 = vmatmul.mubr.bf16.gmra.mrb[0].mxu0 %v3564
      %v3661 = vpop.f32.mrb[0].mxu0
      %v3662 = vadd.f32 0.0, %v3661
      %v3663 = vpop.f32.mrb[0].mxu0
      %v3664 = vpop.f32.mrb[0].mxu0
      %v3665 = vadd.f32 0.0, %v3664
      %v3666 = vpop.f32.mrb[0].mxu0
      %3667 = vmatprep.mubr.bf16.mxu0 0
      %3668 = vmatmul.mubr.bf16.gmra.mrb[0].mxu0 %v3565
      %v3669 = vpop.f32.mrb[0].mxu0
      %v3670 = vadd.f32 0.0, %v3669
      %v3671 = vpop.f32.mrb[0].mxu0
      %v3672 = vpop.f32.mrb[0].mxu0
      %v3673 = vadd.f32 0.0, %v3672
      %v3674 = vpop.f32.mrb[0].mxu0
      %3675 = vmatprep.mubr.bf16.mxu0 0
      %3676 = vmatmul.mubr.bf16.gmra.mrb[0].mxu0 %v3566
      %v3677 = vpop.f32.mrb[0].mxu0
      %v3678 = vadd.f32 0.0, %v3677
      %v3679 = vpop.f32.mrb[0].mxu0
      %v3680 = vpop.f32.mrb[0].mxu0
      %v3681 = vadd.f32 0.0, %v3680
      %v3682 = vpop.f32.mrb[0].mxu0
      %3683 = vdwg.mxu0
      %v3684 = vadd.f32 %v3530, %v3654
      %v3685 = vadd.f32 %v3531, %v3657
      %v3686 = vadd.f32 %v3532, %v3662
      %v3687 = vadd.f32 %v3533, %v3665
      %v3688 = vadd.f32 %v3534, %v3670
      %v3689 = vadd.f32 %v3535, %v3673
      %v3690 = vadd.f32 %v3536, %v3678
      %v3691 = vadd.f32 %v3537, %v3681
      %3692 = vst [vmem:[#allocation4] sm:$0xff] %v3684
      %3693 = vst [vmem:[#allocation4 + $0x8] sm:$0xff] %v3685
      %3694 = vst [vmem:[#allocation4 + $0x10] sm:$0xff] %v3686
      %3695 = vst [vmem:[#allocation4 + $0x18] sm:$0xff] %v3687
      %3696 = vst [vmem:[#allocation4 + $0x20] sm:$0xff] %v3688
      %3697 = vst [vmem:[#allocation4 + $0x28] sm:$0xff] %v3689
      %3698 = vst [vmem:[#allocation4 + $0x30] sm:$0xff] %v3690
      %3699 = vst [vmem:[#allocation4 + $0x38] sm:$0xff] %v3691
      %v3700 = vld [vmem:[%s2926] sm:$0xf]
      %v3701 = vld [vmem:[%s2926 + $0x8] sm:$0xf]
      %v3702 = vld [vmem:[%s2926 + $0x10] sm:$0xf]
      %v3703 = vld [vmem:[%s2926 + $0x18] sm:$0xf]
      %v3704 = vld [vmem:[%s2926 + $0x20] sm:$0xf]
      %v3705 = vld [vmem:[%s2926 + $0x28] sm:$0xf]
      %v3706 = vld [vmem:[%s2926 + $0x30] sm:$0xf]
      %v3707 = vld [vmem:[%s2926 + $0x38] sm:$0xf]
      %v3708 = vld [vmem:[#allocation4] sm:$0xff]
      %v3709 = vld [vmem:[#allocation4 + $0x8] sm:$0xff]
      %v3710 = vld [vmem:[#allocation4 + $0x10] sm:$0xff]
      %v3711 = vld [vmem:[#allocation4 + $0x18] sm:$0xff]
      %v3712 = vld [vmem:[#allocation4 + $0x20] sm:$0xff]
      %v3713 = vld [vmem:[#allocation4 + $0x28] sm:$0xff]
      %v3714 = vld [vmem:[#allocation4 + $0x30] sm:$0xff]
      %v3715 = vld [vmem:[#allocation4 + $0x38] sm:$0xff]
      %s3716 = scalar_lea.vmem %s6, 192
      %v3717 = vld [vmem:[%s3716] sm:$0xf]
      %v3718 = vld [vmem:[%s3716 + $0x4] sm:$0xf]
      %v3719 = vld [vmem:[%s3716 + $0x8] sm:$0xf]
      %v3720 = vld [vmem:[%s3716 + $0xc] sm:$0xf]
      %v3721 = vld [vmem:[%s3716 + $0x10] sm:$0xf]
      %v3722 = vld [vmem:[%s3716 + $0x14] sm:$0xf]
      %v3723 = vld [vmem:[%s3716 + $0x18] sm:$0xf]
      %v3724 = vld [vmem:[%s3716 + $0x1c] sm:$0xf]
      %v3725 = vld [vmem:[%s3716 + $0x20] sm:$0xf]
      %v3726 = vld [vmem:[%s3716 + $0x24] sm:$0xf]
      %v3727 = vld [vmem:[%s3716 + $0x28] sm:$0xf]
      %v3728 = vld [vmem:[%s3716 + $0x2c] sm:$0xf]
      %v3729 = vld [vmem:[%s3716 + $0x30] sm:$0xf]
      %v3730 = vld [vmem:[%s3716 + $0x34] sm:$0xf]
      %v3731 = vld [vmem:[%s3716 + $0x38] sm:$0xf]
      %v3732 = vld [vmem:[%s3716 + $0x3c] sm:$0xf]
      %v3741 = vunpack.c.l.b16 %v3700
      %v3742 = vunpack.c.l.b16 %v3701
      %v3743 = vunpack.c.l.b16 %v3702
      %v3744 = vunpack.c.l.b16 %v3703
      %v3745 = vunpack.c.l.b16 %v3704
      %v3746 = vunpack.c.l.b16 %v3705
      %v3747 = vunpack.c.l.b16 %v3706
      %v3748 = vunpack.c.l.b16 %v3707
      %v3749 = vpack.c.b16 %v3742, %v3741
      %v3750 = vpack.c.b16 %v3744, %v3743
      %v3751 = vpack.c.b16 %v3746, %v3745
      %v3752 = vpack.c.b16 %v3748, %v3747
      %v3773 = vunpack.c.l.b16 %v3717
      %v3774 = vunpack.c.l.b16 %v3718
      %v3775 = vunpack.c.l.b16 %v3719
      %v3776 = vunpack.c.l.b16 %v3720
      %v3777 = vunpack.c.l.b16 %v3721
      %v3778 = vunpack.c.l.b16 %v3722
      %v3779 = vunpack.c.l.b16 %v3723
      %v3780 = vunpack.c.l.b16 %v3724
      %v3781 = vunpack.c.l.b16 %v3725
      %v3782 = vunpack.c.l.b16 %v3726
      %v3783 = vunpack.c.l.b16 %v3727
      %v3784 = vunpack.c.l.b16 %v3728
      %v3785 = vunpack.c.l.b16 %v3729
      %v3786 = vunpack.c.l.b16 %v3730
      %v3787 = vunpack.c.l.b16 %v3731
      %v3788 = vunpack.c.l.b16 %v3732
      %v3789 = vpack.c.b16 %v3774, %v3773
      %v3790 = vpack.c.b16 %v3776, %v3775
      %v3791 = vpack.c.b16 %v3778, %v3777
      %v3792 = vpack.c.b16 %v3780, %v3779
      %v3793 = vpack.c.b16 %v3782, %v3781
      %v3794 = vpack.c.b16 %v3784, %v3783
      %v3795 = vpack.c.b16 %v3786, %v3785
      %v3796 = vpack.c.b16 %v3788, %v3787
      %3805 = vmatprep.subr.bf16.mxu0 0
      %3806 = vmatpush1.bf16.msra.mxu0 %v3789
      %3807 = vmatprep.subr.bf16.mxu0 0
      %3808 = vmatpush1.bf16.msra.mxu0 %v3790
      %3809 = vmatprep.subr.bf16.mxu0 0
      %3810 = vmatpush1.bf16.msra.mxu0 %v3791
      %3811 = vmatprep.subr.bf16.mxu0 0
      %3812 = vmatpush1.bf16.msra.mxu0 %v3792
      %3813 = vmatprep.subr.bf16.mxu0 0
      %3814 = vmatpush1.bf16.msra.mxu0 %v3793
      %3815 = vmatprep.subr.bf16.mxu0 0
      %3816 = vmatpush1.bf16.msra.mxu0 %v3794
      %3817 = vmatprep.subr.bf16.mxu0 0
      %3818 = vmatpush1.bf16.msra.mxu0 %v3795
      %3819 = vmatprep.subr.bf16.mxu0 0
      %3820 = vmatpush1.bf16.msra.mxu0 %v3796
      %3821 = vmatprep.subr.bf16.mxu0 0
      %3822 = vmatpush1.bf16.msra.mxu0 0
      %3823 = vmatprep.subr.bf16.mxu0 0
      %3824 = vmatpush1.bf16.msra.mxu0 0
      %3825 = vmatprep.subr.bf16.mxu0 0
      %3826 = vmatpush1.bf16.msra.mxu0 0
      %3827 = vmatprep.subr.bf16.mxu0 0
      %3828 = vmatpush1.bf16.msra.mxu0 0
      %3829 = vmatprep.subr.bf16.mxu0 0
      %3830 = vmatpush1.bf16.msra.mxu0 0
      %3831 = vmatprep.subr.bf16.mxu0 0
      %3832 = vmatpush1.bf16.msra.mxu0 0
      %3833 = vmatprep.subr.bf16.mxu0 0
      %3834 = vmatpush1.bf16.msra.mxu0 0
      %3835 = vmatprep.subr.bf16.mxu0 0
      %3836 = vmatpush1.bf16.msra.mxu0 0
      %3837 = vmatprep.mubr.bf16.mxu0 0
      %3838 = vmatmul.mubr.bf16.gmra.mrb[0].mxu0 %v3749
      %v3839 = vpop.f32.mrb[0].mxu0
      %v3840 = vadd.f32 0.0, %v3839
      %v3841 = vpop.f32.mrb[0].mxu0
      %v3842 = vpop.f32.mrb[0].mxu0
      %v3843 = vadd.f32 0.0, %v3842
      %v3844 = vpop.f32.mrb[0].mxu0
      %3845 = vmatprep.mubr.bf16.mxu0 0
      %3846 = vmatmul.mubr.bf16.gmra.mrb[0].mxu0 %v3750
      %v3847 = vpop.f32.mrb[0].mxu0
      %v3848 = vadd.f32 0.0, %v3847
      %v3849 = vpop.f32.mrb[0].mxu0
      %v3850 = vpop.f32.mrb[0].mxu0
      %v3851 = vadd.f32 0.0, %v3850
      %v3852 = vpop.f32.mrb[0].mxu0
      %3853 = vmatprep.mubr.bf16.mxu0 0
      %3854 = vmatmul.mubr.bf16.gmra.mrb[0].mxu0 %v3751
      %v3855 = vpop.f32.mrb[0].mxu0
      %v3856 = vadd.f32 0.0, %v3855
      %v3857 = vpop.f32.mrb[0].mxu0
      %v3858 = vpop.f32.mrb[0].mxu0
      %v3859 = vadd.f32 0.0, %v3858
      %v3860 = vpop.f32.mrb[0].mxu0
      %3861 = vmatprep.mubr.bf16.mxu0 0
      %3862 = vmatmul.mubr.bf16.gmra.mrb[0].mxu0 %v3752
      %v3863 = vpop.f32.mrb[0].mxu0
      %v3864 = vadd.f32 0.0, %v3863
      %v3865 = vpop.f32.mrb[0].mxu0
      %v3866 = vpop.f32.mrb[0].mxu0
      %v3867 = vadd.f32 0.0, %v3866
      %v3868 = vpop.f32.mrb[0].mxu0
      %3869 = vdwg.mxu0
      %v3870 = vadd.f32 %v3708, %v3840
      %v3871 = vadd.f32 %v3709, %v3843
      %v3872 = vadd.f32 %v3710, %v3848
      %v3873 = vadd.f32 %v3711, %v3851
      %v3874 = vadd.f32 %v3712, %v3856
      %v3875 = vadd.f32 %v3713, %v3859
      %v3876 = vadd.f32 %v3714, %v3864
      %v3877 = vadd.f32 %v3715, %v3867
      %3878 = vst [vmem:[#allocation4] sm:$0xff] %v3870
      %3879 = vst [vmem:[#allocation4 + $0x8] sm:$0xff] %v3871
      %3880 = vst [vmem:[#allocation4 + $0x10] sm:$0xff] %v3872
      %3881 = vst [vmem:[#allocation4 + $0x18] sm:$0xff] %v3873
      %3882 = vst [vmem:[#allocation4 + $0x20] sm:$0xff] %v3874
      %3883 = vst [vmem:[#allocation4 + $0x28] sm:$0xff] %v3875
      %3884 = vst [vmem:[#allocation4 + $0x30] sm:$0xff] %v3876
      %3885 = vst [vmem:[#allocation4 + $0x38] sm:$0xff] %v3877
      %v3886 = vld [vmem:[%s2926] sm:$0xf]
      %v3887 = vld [vmem:[%s2926 + $0x4] sm:$0x1]
      %v3888 = vld [vmem:[%s2926 + $0x8] sm:$0xf]
      %v3889 = vld [vmem:[%s2926 + $0xc] sm:$0x1]
      %v3890 = vld [vmem:[%s2926 + $0x10] sm:$0xf]
      %v3891 = vld [vmem:[%s2926 + $0x14] sm:$0x1]
      %v3892 = vld [vmem:[%s2926 + $0x18] sm:$0xf]
      %v3893 = vld [vmem:[%s2926 + $0x1c] sm:$0x1]
      %v3894 = vld [vmem:[%s2926 + $0x20] sm:$0xf]
      %v3895 = vld [vmem:[%s2926 + $0x24] sm:$0x1]
      %v3896 = vld [vmem:[%s2926 + $0x28] sm:$0xf]
      %v3897 = vld [vmem:[%s2926 + $0x2c] sm:$0x1]
      %v3898 = vld [vmem:[%s2926 + $0x30] sm:$0xf]
      %v3899 = vld [vmem:[%s2926 + $0x34] sm:$0x1]
      %v3900 = vld [vmem:[%s2926 + $0x38] sm:$0xf]
      %v3901 = vld [vmem:[%s2926 + $0x3c] sm:$0x1]
      %v3903 = vshrl.u32 %v3886, 16
      %v3905 = vrot.slane %v3903, 4
      %v3906 = vshll.u32 %v3886, 16
      %v3908 = vrot.slane %v3906, 5
      %v3909 = vor.u32 %v3905, %v3908
      %v3910 = vrot.slane %v3909, 4
      %v3912 = vshll.u32 %v3887, 16
      %v3914 = vrot.slane %v3912, 5
      %v3915 = vsel %vm754, %v3910, %v3914
      %v3917 = vshrl.u32 %v3888, 16
      %v3919 = vrot.slane %v3917, 4
      %v3920 = vshll.u32 %v3888, 16
      %v3922 = vrot.slane %v3920, 5
      %v3923 = vor.u32 %v3919, %v3922
      %v3924 = vrot.slane %v3923, 4
      %v3926 = vshll.u32 %v3889, 16
      %v3928 = vrot.slane %v3926, 5
      %v3929 = vsel %vm754, %v3924, %v3928
      %v3931 = vshrl.u32 %v3890, 16
      %v3933 = vrot.slane %v3931, 4
      %v3934 = vshll.u32 %v3890, 16
      %v3936 = vrot.slane %v3934, 5
      %v3937 = vor.u32 %v3933, %v3936
      %v3938 = vrot.slane %v3937, 4
      %v3940 = vshll.u32 %v3891, 16
      %v3942 = vrot.slane %v3940, 5
      %v3943 = vsel %vm754, %v3938, %v3942
      %v3945 = vshrl.u32 %v3892, 16
      %v3947 = vrot.slane %v3945, 4
      %v3948 = vshll.u32 %v3892, 16
      %v3950 = vrot.slane %v3948, 5
      %v3951 = vor.u32 %v3947, %v3950
      %v3952 = vrot.slane %v3951, 4
      %v3954 = vshll.u32 %v3893, 16
      %v3956 = vrot.slane %v3954, 5
      %v3957 = vsel %vm754, %v3952, %v3956
      %v3959 = vshrl.u32 %v3894, 16
      %v3961 = vrot.slane %v3959, 4
      %v3962 = vshll.u32 %v3894, 16
      %v3964 = vrot.slane %v3962, 5
      %v3965 = vor.u32 %v3961, %v3964
      %v3966 = vrot.slane %v3965, 4
      %v3968 = vshll.u32 %v3895, 16
      %v3970 = vrot.slane %v3968, 5
      %v3971 = vsel %vm754, %v3966, %v3970
      %v3973 = vshrl.u32 %v3896, 16
      %v3975 = vrot.slane %v3973, 4
      %v3976 = vshll.u32 %v3896, 16
      %v3978 = vrot.slane %v3976, 5
      %v3979 = vor.u32 %v3975, %v3978
      %v3980 = vrot.slane %v3979, 4
      %v3982 = vshll.u32 %v3897, 16
      %v3984 = vrot.slane %v3982, 5
      %v3985 = vsel %vm754, %v3980, %v3984
      %v3987 = vshrl.u32 %v3898, 16
      %v3989 = vrot.slane %v3987, 4
      %v3990 = vshll.u32 %v3898, 16
      %v3992 = vrot.slane %v3990, 5
      %v3993 = vor.u32 %v3989, %v3992
      %v3994 = vrot.slane %v3993, 4
      %v3996 = vshll.u32 %v3899, 16
      %v3998 = vrot.slane %v3996, 5
      %v3999 = vsel %vm754, %v3994, %v3998
      %v4001 = vshrl.u32 %v3900, 16
      %v4003 = vrot.slane %v4001, 4
      %v4004 = vshll.u32 %v3900, 16
      %v4006 = vrot.slane %v4004, 5
      %v4007 = vor.u32 %v4003, %v4006
      %v4008 = vrot.slane %v4007, 4
      %v4010 = vshll.u32 %v3901, 16
      %v4012 = vrot.slane %v4010, 5
      %v4013 = vsel %vm754, %v4008, %v4012
      %v4014 = vld [vmem:[#allocation4] sm:$0xff]
      %v4015 = vld [vmem:[#allocation4 + $0x8] sm:$0xff]
      %v4016 = vld [vmem:[#allocation4 + $0x10] sm:$0xff]
      %v4017 = vld [vmem:[#allocation4 + $0x18] sm:$0xff]
      %v4018 = vld [vmem:[#allocation4 + $0x20] sm:$0xff]
      %v4019 = vld [vmem:[#allocation4 + $0x28] sm:$0xff]
      %v4020 = vld [vmem:[#allocation4 + $0x30] sm:$0xff]
      %v4021 = vld [vmem:[#allocation4 + $0x38] sm:$0xff]
      %s4022 = scalar_lea.vmem %s6, 256
      %v4023 = vld [vmem:[%s4022] sm:$0xf]
      %v4024 = vld [vmem:[%s4022 + $0x4] sm:$0xf]
      %v4025 = vld [vmem:[%s4022 + $0x8] sm:$0xf]
      %v4026 = vld [vmem:[%s4022 + $0xc] sm:$0xf]
      %v4027 = vld [vmem:[%s4022 + $0x10] sm:$0xf]
      %v4028 = vld [vmem:[%s4022 + $0x14] sm:$0xf]
      %v4029 = vld [vmem:[%s4022 + $0x18] sm:$0xf]
      %v4030 = vld [vmem:[%s4022 + $0x1c] sm:$0xf]
      %v4031 = vld [vmem:[%s4022 + $0x20] sm:$0xf]
      %v4032 = vld [vmem:[%s4022 + $0x24] sm:$0xf]
      %v4033 = vld [vmem:[%s4022 + $0x28] sm:$0xf]
      %v4034 = vld [vmem:[%s4022 + $0x2c] sm:$0xf]
      %v4035 = vld [vmem:[%s4022 + $0x30] sm:$0xf]
      %v4036 = vld [vmem:[%s4022 + $0x34] sm:$0xf]
      %v4037 = vld [vmem:[%s4022 + $0x38] sm:$0xf]
      %v4038 = vld [vmem:[%s4022 + $0x3c] sm:$0xf]
      %v4039 = vunpack.c.l.b16 %v3915
      %v4040 = vunpack.c.l.b16 %v3929
      %v4041 = vunpack.c.l.b16 %v3943
      %v4042 = vunpack.c.l.b16 %v3957
      %v4043 = vunpack.c.l.b16 %v3971
      %v4044 = vunpack.c.l.b16 %v3985
      %v4045 = vunpack.c.l.b16 %v3999
      %v4046 = vunpack.c.l.b16 %v4013
      %v4047 = vpack.c.b16 %v4040, %v4039
      %v4048 = vpack.c.b16 %v4042, %v4041
      %v4049 = vpack.c.b16 %v4044, %v4043
      %v4050 = vpack.c.b16 %v4046, %v4045
      %v4071 = vunpack.c.l.b16 %v4023
      %v4072 = vunpack.c.l.b16 %v4024
      %v4073 = vunpack.c.l.b16 %v4025
      %v4074 = vunpack.c.l.b16 %v4026
      %v4075 = vunpack.c.l.b16 %v4027
      %v4076 = vunpack.c.l.b16 %v4028
      %v4077 = vunpack.c.l.b16 %v4029
      %v4078 = vunpack.c.l.b16 %v4030
      %v4079 = vunpack.c.l.b16 %v4031
      %v4080 = vunpack.c.l.b16 %v4032
      %v4081 = vunpack.c.l.b16 %v4033
      %v4082 = vunpack.c.l.b16 %v4034
      %v4083 = vunpack.c.l.b16 %v4035
      %v4084 = vunpack.c.l.b16 %v4036
      %v4085 = vunpack.c.l.b16 %v4037
      %v4086 = vunpack.c.l.b16 %v4038
      %v4087 = vpack.c.b16 %v4072, %v4071
      %v4088 = vpack.c.b16 %v4074, %v4073
      %v4089 = vpack.c.b16 %v4076, %v4075
      %v4090 = vpack.c.b16 %v4078, %v4077
      %v4091 = vpack.c.b16 %v4080, %v4079
      %v4092 = vpack.c.b16 %v4082, %v4081
      %v4093 = vpack.c.b16 %v4084, %v4083
      %v4094 = vpack.c.b16 %v4086, %v4085
      %4103 = vmatprep.subr.bf16.mxu0 0
      %4104 = vmatpush1.bf16.msra.mxu0 %v4087
      %4105 = vmatprep.subr.bf16.mxu0 0
      %4106 = vmatpush1.bf16.msra.mxu0 %v4088
      %4107 = vmatprep.subr.bf16.mxu0 0
      %4108 = vmatpush1.bf16.msra.mxu0 %v4089
      %4109 = vmatprep.subr.bf16.mxu0 0
      %4110 = vmatpush1.bf16.msra.mxu0 %v4090
      %4111 = vmatprep.subr.bf16.mxu0 0
      %4112 = vmatpush1.bf16.msra.mxu0 %v4091
      %4113 = vmatprep.subr.bf16.mxu0 0
      %4114 = vmatpush1.bf16.msra.mxu0 %v4092
      %4115 = vmatprep.subr.bf16.mxu0 0
      %4116 = vmatpush1.bf16.msra.mxu0 %v4093
      %4117 = vmatprep.subr.bf16.mxu0 0
      %4118 = vmatpush1.bf16.msra.mxu0 %v4094
      %4119 = vmatprep.subr.bf16.mxu0 0
      %4120 = vmatpush1.bf16.msra.mxu0 0
      %4121 = vmatprep.subr.bf16.mxu0 0
      %4122 = vmatpush1.bf16.msra.mxu0 0
      %4123 = vmatprep.subr.bf16.mxu0 0
      %4124 = vmatpush1.bf16.msra.mxu0 0
      %4125 = vmatprep.subr.bf16.mxu0 0
      %4126 = vmatpush1.bf16.msra.mxu0 0
      %4127 = vmatprep.subr.bf16.mxu0 0
      %4128 = vmatpush1.bf16.msra.mxu0 0
      %4129 = vmatprep.subr.bf16.mxu0 0
      %4130 = vmatpush1.bf16.msra.mxu0 0
      %4131 = vmatprep.subr.bf16.mxu0 0
      %4132 = vmatpush1.bf16.msra.mxu0 0
      %4133 = vmatprep.subr.bf16.mxu0 0
      %4134 = vmatpush1.bf16.msra.mxu0 0
      %4135 = vmatprep.mubr.bf16.mxu0 0
      %4136 = vmatmul.mubr.bf16.gmra.mrb[0].mxu0 %v4047
      %v4137 = vpop.f32.mrb[0].mxu0
      %v4138 = vadd.f32 0.0, %v4137
      %v4139 = vpop.f32.mrb[0].mxu0
      %v4140 = vpop.f32.mrb[0].mxu0
      %v4141 = vadd.f32 0.0, %v4140
      %v4142 = vpop.f32.mrb[0].mxu0
      %4143 = vmatprep.mubr.bf16.mxu0 0
      %4144 = vmatmul.mubr.bf16.gmra.mrb[0].mxu0 %v4048
      %v4145 = vpop.f32.mrb[0].mxu0
      %v4146 = vadd.f32 0.0, %v4145
      %v4147 = vpop.f32.mrb[0].mxu0
      %v4148 = vpop.f32.mrb[0].mxu0
      %v4149 = vadd.f32 0.0, %v4148
      %v4150 = vpop.f32.mrb[0].mxu0
      %4151 = vmatprep.mubr.bf16.mxu0 0
      %4152 = vmatmul.mubr.bf16.gmra.mrb[0].mxu0 %v4049
      %v4153 = vpop.f32.mrb[0].mxu0
      %v4154 = vadd.f32 0.0, %v4153
      %v4155 = vpop.f32.mrb[0].mxu0
      %v4156 = vpop.f32.mrb[0].mxu0
      %v4157 = vadd.f32 0.0, %v4156
      %v4158 = vpop.f32.mrb[0].mxu0
      %4159 = vmatprep.mubr.bf16.mxu0 0
      %4160 = vmatmul.mubr.bf16.gmra.mrb[0].mxu0 %v4050
      %v4161 = vpop.f32.mrb[0].mxu0
      %v4162 = vadd.f32 0.0, %v4161
      %v4163 = vpop.f32.mrb[0].mxu0
      %v4164 = vpop.f32.mrb[0].mxu0
      %v4165 = vadd.f32 0.0, %v4164
      %v4166 = vpop.f32.mrb[0].mxu0
      %4167 = vdwg.mxu0
      %v4168 = vadd.f32 %v4014, %v4138
      %v4169 = vadd.f32 %v4015, %v4141
      %v4170 = vadd.f32 %v4016, %v4146
      %v4171 = vadd.f32 %v4017, %v4149
      %v4172 = vadd.f32 %v4018, %v4154
      %v4173 = vadd.f32 %v4019, %v4157
      %v4174 = vadd.f32 %v4020, %v4162
      %v4175 = vadd.f32 %v4021, %v4165
      %4176 = vst [vmem:[#allocation4] sm:$0xff] %v4168
      %4177 = vst [vmem:[#allocation4 + $0x8] sm:$0xff] %v4169
      %4178 = vst [vmem:[#allocation4 + $0x10] sm:$0xff] %v4170
      %4179 = vst [vmem:[#allocation4 + $0x18] sm:$0xff] %v4171
      %4180 = vst [vmem:[#allocation4 + $0x20] sm:$0xff] %v4172
      %4181 = vst [vmem:[#allocation4 + $0x28] sm:$0xff] %v4173
      %4182 = vst [vmem:[#allocation4 + $0x30] sm:$0xff] %v4174
      %4183 = vst [vmem:[#allocation4 + $0x38] sm:$0xff] %v4175
      %v4184 = vld [vmem:[%s2926] sm:$0xe]
      %v4185 = vld [vmem:[%s2926 + $0x4] sm:$0x1]
      %v4186 = vld [vmem:[%s2926 + $0x8] sm:$0xe]
      %v4187 = vld [vmem:[%s2926 + $0xc] sm:$0x1]
      %v4188 = vld [vmem:[%s2926 + $0x10] sm:$0xe]
      %v4189 = vld [vmem:[%s2926 + $0x14] sm:$0x1]
      %v4190 = vld [vmem:[%s2926 + $0x18] sm:$0xe]
      %v4191 = vld [vmem:[%s2926 + $0x1c] sm:$0x1]
      %v4192 = vld [vmem:[%s2926 + $0x20] sm:$0xe]
      %v4193 = vld [vmem:[%s2926 + $0x24] sm:$0x1]
      %v4194 = vld [vmem:[%s2926 + $0x28] sm:$0xe]
      %v4195 = vld [vmem:[%s2926 + $0x2c] sm:$0x1]
      %v4196 = vld [vmem:[%s2926 + $0x30] sm:$0xe]
      %v4197 = vld [vmem:[%s2926 + $0x34] sm:$0x1]
      %v4198 = vld [vmem:[%s2926 + $0x38] sm:$0xe]
      %v4199 = vld [vmem:[%s2926 + $0x3c] sm:$0x1]
      %v4216 = vrot.slane %v4184, 5
      %v4217 = vrot.slane %v4216, 4
      %v4218 = vrot.slane %v4185, 5
      %v4219 = vsel %vm1071, %v4217, %v4218
      %v4220 = vrot.slane %v4186, 5
      %v4221 = vrot.slane %v4220, 4
      %v4222 = vrot.slane %v4187, 5
      %v4223 = vsel %vm1071, %v4221, %v4222
      %v4224 = vrot.slane %v4188, 5
      %v4225 = vrot.slane %v4224, 4
      %v4226 = vrot.slane %v4189, 5
      %v4227 = vsel %vm1071, %v4225, %v4226
      %v4228 = vrot.slane %v4190, 5
      %v4229 = vrot.slane %v4228, 4
      %v4230 = vrot.slane %v4191, 5
      %v4231 = vsel %vm1071, %v4229, %v4230
      %v4232 = vrot.slane %v4192, 5
      %v4233 = vrot.slane %v4232, 4
      %v4234 = vrot.slane %v4193, 5
      %v4235 = vsel %vm1071, %v4233, %v4234
      %v4236 = vrot.slane %v4194, 5
      %v4237 = vrot.slane %v4236, 4
      %v4238 = vrot.slane %v4195, 5
      %v4239 = vsel %vm1071, %v4237, %v4238
      %v4240 = vrot.slane %v4196, 5
      %v4241 = vrot.slane %v4240, 4
      %v4242 = vrot.slane %v4197, 5
      %v4243 = vsel %vm1071, %v4241, %v4242
      %v4244 = vrot.slane %v4198, 5
      %v4245 = vrot.slane %v4244, 4
      %v4246 = vrot.slane %v4199, 5
      %v4247 = vsel %vm1071, %v4245, %v4246
      %v4248 = vld [vmem:[#allocation4] sm:$0xff]
      %v4249 = vld [vmem:[#allocation4 + $0x8] sm:$0xff]
      %v4250 = vld [vmem:[#allocation4 + $0x10] sm:$0xff]
      %v4251 = vld [vmem:[#allocation4 + $0x18] sm:$0xff]
      %v4252 = vld [vmem:[#allocation4 + $0x20] sm:$0xff]
      %v4253 = vld [vmem:[#allocation4 + $0x28] sm:$0xff]
      %v4254 = vld [vmem:[#allocation4 + $0x30] sm:$0xff]
      %v4255 = vld [vmem:[#allocation4 + $0x38] sm:$0xff]
      %s4256 = scalar_lea.vmem %s6, 320
      %v4257 = vld [vmem:[%s4256] sm:$0xf]
      %v4258 = vld [vmem:[%s4256 + $0x4] sm:$0xf]
      %v4259 = vld [vmem:[%s4256 + $0x8] sm:$0xf]
      %v4260 = vld [vmem:[%s4256 + $0xc] sm:$0xf]
      %v4261 = vld [vmem:[%s4256 + $0x10] sm:$0xf]
      %v4262 = vld [vmem:[%s4256 + $0x14] sm:$0xf]
      %v4263 = vld [vmem:[%s4256 + $0x18] sm:$0xf]
      %v4264 = vld [vmem:[%s4256 + $0x1c] sm:$0xf]
      %v4265 = vld [vmem:[%s4256 + $0x20] sm:$0xf]
      %v4266 = vld [vmem:[%s4256 + $0x24] sm:$0xf]
      %v4267 = vld [vmem:[%s4256 + $0x28] sm:$0xf]
      %v4268 = vld [vmem:[%s4256 + $0x2c] sm:$0xf]
      %v4269 = vld [vmem:[%s4256 + $0x30] sm:$0xf]
      %v4270 = vld [vmem:[%s4256 + $0x34] sm:$0xf]
      %v4271 = vld [vmem:[%s4256 + $0x38] sm:$0xf]
      %v4272 = vld [vmem:[%s4256 + $0x3c] sm:$0xf]
      %v4273 = vunpack.c.l.b16 %v4219
      %v4274 = vunpack.c.l.b16 %v4223
      %v4275 = vunpack.c.l.b16 %v4227
      %v4276 = vunpack.c.l.b16 %v4231
      %v4277 = vunpack.c.l.b16 %v4235
      %v4278 = vunpack.c.l.b16 %v4239
      %v4279 = vunpack.c.l.b16 %v4243
      %v4280 = vunpack.c.l.b16 %v4247
      %v4281 = vpack.c.b16 %v4274, %v4273
      %v4282 = vpack.c.b16 %v4276, %v4275
      %v4283 = vpack.c.b16 %v4278, %v4277
      %v4284 = vpack.c.b16 %v4280, %v4279
      %v4305 = vunpack.c.l.b16 %v4257
      %v4306 = vunpack.c.l.b16 %v4258
      %v4307 = vunpack.c.l.b16 %v4259
      %v4308 = vunpack.c.l.b16 %v4260
      %v4309 = vunpack.c.l.b16 %v4261
      %v4310 = vunpack.c.l.b16 %v4262
      %v4311 = vunpack.c.l.b16 %v4263
      %v4312 = vunpack.c.l.b16 %v4264
      %v4313 = vunpack.c.l.b16 %v4265
      %v4314 = vunpack.c.l.b16 %v4266
      %v4315 = vunpack.c.l.b16 %v4267
      %v4316 = vunpack.c.l.b16 %v4268
      %v4317 = vunpack.c.l.b16 %v4269
      %v4318 = vunpack.c.l.b16 %v4270
      %v4319 = vunpack.c.l.b16 %v4271
      %v4320 = vunpack.c.l.b16 %v4272
      %v4321 = vpack.c.b16 %v4306, %v4305
      %v4322 = vpack.c.b16 %v4308, %v4307
      %v4323 = vpack.c.b16 %v4310, %v4309
      %v4324 = vpack.c.b16 %v4312, %v4311
      %v4325 = vpack.c.b16 %v4314, %v4313
      %v4326 = vpack.c.b16 %v4316, %v4315
      %v4327 = vpack.c.b16 %v4318, %v4317
      %v4328 = vpack.c.b16 %v4320, %v4319
      %4337 = vmatprep.subr.bf16.mxu0 0
      %4338 = vmatpush1.bf16.msra.mxu0 %v4321
      %4339 = vmatprep.subr.bf16.mxu0 0
      %4340 = vmatpush1.bf16.msra.mxu0 %v4322
      %4341 = vmatprep.subr.bf16.mxu0 0
      %4342 = vmatpush1.bf16.msra.mxu0 %v4323
      %4343 = vmatprep.subr.bf16.mxu0 0
      %4344 = vmatpush1.bf16.msra.mxu0 %v4324
      %4345 = vmatprep.subr.bf16.mxu0 0
      %4346 = vmatpush1.bf16.msra.mxu0 %v4325
      %4347 = vmatprep.subr.bf16.mxu0 0
      %4348 = vmatpush1.bf16.msra.mxu0 %v4326
      %4349 = vmatprep.subr.bf16.mxu0 0
      %4350 = vmatpush1.bf16.msra.mxu0 %v4327
      %4351 = vmatprep.subr.bf16.mxu0 0
      %4352 = vmatpush1.bf16.msra.mxu0 %v4328
      %4353 = vmatprep.subr.bf16.mxu0 0
      %4354 = vmatpush1.bf16.msra.mxu0 0
      %4355 = vmatprep.subr.bf16.mxu0 0
      %4356 = vmatpush1.bf16.msra.mxu0 0
      %4357 = vmatprep.subr.bf16.mxu0 0
      %4358 = vmatpush1.bf16.msra.mxu0 0
      %4359 = vmatprep.subr.bf16.mxu0 0
      %4360 = vmatpush1.bf16.msra.mxu0 0
      %4361 = vmatprep.subr.bf16.mxu0 0
      %4362 = vmatpush1.bf16.msra.mxu0 0
      %4363 = vmatprep.subr.bf16.mxu0 0
      %4364 = vmatpush1.bf16.msra.mxu0 0
      %4365 = vmatprep.subr.bf16.mxu0 0
      %4366 = vmatpush1.bf16.msra.mxu0 0
      %4367 = vmatprep.subr.bf16.mxu0 0
      %4368 = vmatpush1.bf16.msra.mxu0 0
      %4369 = vmatprep.mubr.bf16.mxu0 0
      %4370 = vmatmul.mubr.bf16.gmra.mrb[0].mxu0 %v4281
      %v4371 = vpop.f32.mrb[0].mxu0
      %v4372 = vadd.f32 0.0, %v4371
      %v4373 = vpop.f32.mrb[0].mxu0
      %v4374 = vpop.f32.mrb[0].mxu0
      %v4375 = vadd.f32 0.0, %v4374
      %v4376 = vpop.f32.mrb[0].mxu0
      %4377 = vmatprep.mubr.bf16.mxu0 0
      %4378 = vmatmul.mubr.bf16.gmra.mrb[0].mxu0 %v4282
      %v4379 = vpop.f32.mrb[0].mxu0
      %v4380 = vadd.f32 0.0, %v4379
      %v4381 = vpop.f32.mrb[0].mxu0
      %v4382 = vpop.f32.mrb[0].mxu0
      %v4383 = vadd.f32 0.0, %v4382
      %v4384 = vpop.f32.mrb[0].mxu0
      %4385 = vmatprep.mubr.bf16.mxu0 0
      %4386 = vmatmul.mubr.bf16.gmra.mrb[0].mxu0 %v4283
      %v4387 = vpop.f32.mrb[0].mxu0
      %v4388 = vadd.f32 0.0, %v4387
      %v4389 = vpop.f32.mrb[0].mxu0
      %v4390 = vpop.f32.mrb[0].mxu0
      %v4391 = vadd.f32 0.0, %v4390
      %v4392 = vpop.f32.mrb[0].mxu0
      %4393 = vmatprep.mubr.bf16.mxu0 0
      %4394 = vmatmul.mubr.bf16.gmra.mrb[0].mxu0 %v4284
      %v4395 = vpop.f32.mrb[0].mxu0
      %v4396 = vadd.f32 0.0, %v4395
      %v4397 = vpop.f32.mrb[0].mxu0
      %v4398 = vpop.f32.mrb[0].mxu0
      %v4399 = vadd.f32 0.0, %v4398
      %v4400 = vpop.f32.mrb[0].mxu0
      %4401 = vdwg.mxu0
      %v4402 = vadd.f32 %v4248, %v4372
      %v4403 = vadd.f32 %v4249, %v4375
      %v4404 = vadd.f32 %v4250, %v4380
      %v4405 = vadd.f32 %v4251, %v4383
      %v4406 = vadd.f32 %v4252, %v4388
      %v4407 = vadd.f32 %v4253, %v4391
      %v4408 = vadd.f32 %v4254, %v4396
      %v4409 = vadd.f32 %v4255, %v4399
      %4410 = vst [vmem:[#allocation4] sm:$0xff] %v4402
      %4411 = vst [vmem:[#allocation4 + $0x8] sm:$0xff] %v4403
      %4412 = vst [vmem:[#allocation4 + $0x10] sm:$0xff] %v4404
      %4413 = vst [vmem:[#allocation4 + $0x18] sm:$0xff] %v4405
      %4414 = vst [vmem:[#allocation4 + $0x20] sm:$0xff] %v4406
      %4415 = vst [vmem:[#allocation4 + $0x28] sm:$0xff] %v4407
      %4416 = vst [vmem:[#allocation4 + $0x30] sm:$0xff] %v4408
      %4417 = vst [vmem:[#allocation4 + $0x38] sm:$0xff] %v4409
      %s4418 = scalar_lea.vmem [#allocation3], 16
      %v4419 = vld [vmem:[%s4418] sm:$0xf]
      %v4420 = vld [vmem:[%s4418 + $0x8] sm:$0xf]
      %v4421 = vld [vmem:[%s4418 + $0x10] sm:$0xf]
      %v4422 = vld [vmem:[%s4418 + $0x18] sm:$0xf]
      %v4423 = vld [vmem:[%s4418 + $0x20] sm:$0xf]
      %v4424 = vld [vmem:[%s4418 + $0x28] sm:$0xf]
      %v4425 = vld [vmem:[%s4418 + $0x30] sm:$0xf]
      %v4426 = vld [vmem:[%s4418 + $0x38] sm:$0xf]
      %v4427 = vld [vmem:[#allocation4] sm:$0xff]
      %v4428 = vld [vmem:[#allocation4 + $0x8] sm:$0xff]
      %v4429 = vld [vmem:[#allocation4 + $0x10] sm:$0xff]
      %v4430 = vld [vmem:[#allocation4 + $0x18] sm:$0xff]
      %v4431 = vld [vmem:[#allocation4 + $0x20] sm:$0xff]
      %v4432 = vld [vmem:[#allocation4 + $0x28] sm:$0xff]
      %v4433 = vld [vmem:[#allocation4 + $0x30] sm:$0xff]
      %v4434 = vld [vmem:[#allocation4 + $0x38] sm:$0xff]
      %s4435 = scalar_lea.vmem %s6, 384
      %v4436 = vld [vmem:[%s4435] sm:$0xf]
      %v4437 = vld [vmem:[%s4435 + $0x4] sm:$0xf]
      %v4438 = vld [vmem:[%s4435 + $0x8] sm:$0xf]
      %v4439 = vld [vmem:[%s4435 + $0xc] sm:$0xf]
      %v4440 = vld [vmem:[%s4435 + $0x10] sm:$0xf]
      %v4441 = vld [vmem:[%s4435 + $0x14] sm:$0xf]
      %v4442 = vld [vmem:[%s4435 + $0x18] sm:$0xf]
      %v4443 = vld [vmem:[%s4435 + $0x1c] sm:$0xf]
      %v4444 = vld [vmem:[%s4435 + $0x20] sm:$0xf]
      %v4445 = vld [vmem:[%s4435 + $0x24] sm:$0xf]
      %v4446 = vld [vmem:[%s4435 + $0x28] sm:$0xf]
      %v4447 = vld [vmem:[%s4435 + $0x2c] sm:$0xf]
      %v4448 = vld [vmem:[%s4435 + $0x30] sm:$0xf]
      %v4449 = vld [vmem:[%s4435 + $0x34] sm:$0xf]
      %v4450 = vld [vmem:[%s4435 + $0x38] sm:$0xf]
      %v4451 = vld [vmem:[%s4435 + $0x3c] sm:$0xf]
      %v4460 = vunpack.c.l.b16 %v4419
      %v4461 = vunpack.c.l.b16 %v4420
      %v4462 = vunpack.c.l.b16 %v4421
      %v4463 = vunpack.c.l.b16 %v4422
      %v4464 = vunpack.c.l.b16 %v4423
      %v4465 = vunpack.c.l.b16 %v4424
      %v4466 = vunpack.c.l.b16 %v4425
      %v4467 = vunpack.c.l.b16 %v4426
      %v4468 = vpack.c.b16 %v4461, %v4460
      %v4469 = vpack.c.b16 %v4463, %v4462
      %v4470 = vpack.c.b16 %v4465, %v4464
      %v4471 = vpack.c.b16 %v4467, %v4466
      %v4492 = vunpack.c.l.b16 %v4436
      %v4493 = vunpack.c.l.b16 %v4437
      %v4494 = vunpack.c.l.b16 %v4438
      %v4495 = vunpack.c.l.b16 %v4439
      %v4496 = vunpack.c.l.b16 %v4440
      %v4497 = vunpack.c.l.b16 %v4441
      %v4498 = vunpack.c.l.b16 %v4442
      %v4499 = vunpack.c.l.b16 %v4443
      %v4500 = vunpack.c.l.b16 %v4444
      %v4501 = vunpack.c.l.b16 %v4445
      %v4502 = vunpack.c.l.b16 %v4446
      %v4503 = vunpack.c.l.b16 %v4447
      %v4504 = vunpack.c.l.b16 %v4448
      %v4505 = vunpack.c.l.b16 %v4449
      %v4506 = vunpack.c.l.b16 %v4450
      %v4507 = vunpack.c.l.b16 %v4451
      %v4508 = vpack.c.b16 %v4493, %v4492
      %v4509 = vpack.c.b16 %v4495, %v4494
      %v4510 = vpack.c.b16 %v4497, %v4496
      %v4511 = vpack.c.b16 %v4499, %v4498
      %v4512 = vpack.c.b16 %v4501, %v4500
      %v4513 = vpack.c.b16 %v4503, %v4502
      %v4514 = vpack.c.b16 %v4505, %v4504
      %v4515 = vpack.c.b16 %v4507, %v4506
      %4524 = vmatprep.subr.bf16.mxu0 0
      %4525 = vmatpush1.bf16.msra.mxu0 %v4508
      %4526 = vmatprep.subr.bf16.mxu0 0
      %4527 = vmatpush1.bf16.msra.mxu0 %v4509
      %4528 = vmatprep.subr.bf16.mxu0 0
      %4529 = vmatpush1.bf16.msra.mxu0 %v4510
      %4530 = vmatprep.subr.bf16.mxu0 0
      %4531 = vmatpush1.bf16.msra.mxu0 %v4511
      %4532 = vmatprep.subr.bf16.mxu0 0
      %4533 = vmatpush1.bf16.msra.mxu0 %v4512
      %4534 = vmatprep.subr.bf16.mxu0 0
      %4535 = vmatpush1.bf16.msra.mxu0 %v4513
      %4536 = vmatprep.subr.bf16.mxu0 0
      %4537 = vmatpush1.bf16.msra.mxu0 %v4514
      %4538 = vmatprep.subr.bf16.mxu0 0
      %4539 = vmatpush1.bf16.msra.mxu0 %v4515
      %4540 = vmatprep.subr.bf16.mxu0 0
      %4541 = vmatpush1.bf16.msra.mxu0 0
      %4542 = vmatprep.subr.bf16.mxu0 0
      %4543 = vmatpush1.bf16.msra.mxu0 0
      %4544 = vmatprep.subr.bf16.mxu0 0
      %4545 = vmatpush1.bf16.msra.mxu0 0
      %4546 = vmatprep.subr.bf16.mxu0 0
      %4547 = vmatpush1.bf16.msra.mxu0 0
      %4548 = vmatprep.subr.bf16.mxu0 0
      %4549 = vmatpush1.bf16.msra.mxu0 0
      %4550 = vmatprep.subr.bf16.mxu0 0
      %4551 = vmatpush1.bf16.msra.mxu0 0
      %4552 = vmatprep.subr.bf16.mxu0 0
      %4553 = vmatpush1.bf16.msra.mxu0 0
      %4554 = vmatprep.subr.bf16.mxu0 0
      %4555 = vmatpush1.bf16.msra.mxu0 0
      %4556 = vmatprep.mubr.bf16.mxu0 0
      %4557 = vmatmul.mubr.bf16.gmra.mrb[0].mxu0 %v4468
      %v4558 = vpop.f32.mrb[0].mxu0
      %v4559 = vadd.f32 0.0, %v4558
      %v4560 = vpop.f32.mrb[0].mxu0
      %v4561 = vpop.f32.mrb[0].mxu0
      %v4562 = vadd.f32 0.0, %v4561
      %v4563 = vpop.f32.mrb[0].mxu0
      %4564 = vmatprep.mubr.bf16.mxu0 0
      %4565 = vmatmul.mubr.bf16.gmra.mrb[0].mxu0 %v4469
      %v4566 = vpop.f32.mrb[0].mxu0
      %v4567 = vadd.f32 0.0, %v4566
      %v4568 = vpop.f32.mrb[0].mxu0
      %v4569 = vpop.f32.mrb[0].mxu0
      %v4570 = vadd.f32 0.0, %v4569
      %v4571 = vpop.f32.mrb[0].mxu0
      %4572 = vmatprep.mubr.bf16.mxu0 0
      %4573 = vmatmul.mubr.bf16.gmra.mrb[0].mxu0 %v4470
      %v4574 = vpop.f32.mrb[0].mxu0
      %v4575 = vadd.f32 0.0, %v4574
      %v4576 = vpop.f32.mrb[0].mxu0
      %v4577 = vpop.f32.mrb[0].mxu0
      %v4578 = vadd.f32 0.0, %v4577
      %v4579 = vpop.f32.mrb[0].mxu0
      %4580 = vmatprep.mubr.bf16.mxu0 0
      %4581 = vmatmul.mubr.bf16.gmra.mrb[0].mxu0 %v4471
      %v4582 = vpop.f32.mrb[0].mxu0
      %v4583 = vadd.f32 0.0, %v4582
      %v4584 = vpop.f32.mrb[0].mxu0
      %v4585 = vpop.f32.mrb[0].mxu0
      %v4586 = vadd.f32 0.0, %v4585
      %v4587 = vpop.f32.mrb[0].mxu0
      %4588 = vdwg.mxu0
      %v4589 = vadd.f32 %v4427, %v4559
      %v4590 = vadd.f32 %v4428, %v4562
      %v4591 = vadd.f32 %v4429, %v4567
      %v4592 = vadd.f32 %v4430, %v4570
      %v4593 = vadd.f32 %v4431, %v4575
      %v4594 = vadd.f32 %v4432, %v4578
      %v4595 = vadd.f32 %v4433, %v4583
      %v4596 = vadd.f32 %v4434, %v4586
      %4597 = vst [vmem:[#allocation4] sm:$0xff] %v4589
      %4598 = vst [vmem:[#allocation4 + $0x8] sm:$0xff] %v4590
      %4599 = vst [vmem:[#allocation4 + $0x10] sm:$0xff] %v4591
      %4600 = vst [vmem:[#allocation4 + $0x18] sm:$0xff] %v4592
      %4601 = vst [vmem:[#allocation4 + $0x20] sm:$0xff] %v4593
      %4602 = vst [vmem:[#allocation4 + $0x28] sm:$0xff] %v4594
      %4603 = vst [vmem:[#allocation4 + $0x30] sm:$0xff] %v4595
      %4604 = vst [vmem:[#allocation4 + $0x38] sm:$0xff] %v4596
      %v4605 = vld [vmem:[%s4418] sm:$0xf]
      %v4606 = vld [vmem:[%s4418 + $0x4] sm:$0x1]
      %v4607 = vld [vmem:[%s4418 + $0x8] sm:$0xf]
      %v4608 = vld [vmem:[%s4418 + $0xc] sm:$0x1]
      %v4609 = vld [vmem:[%s4418 + $0x10] sm:$0xf]
      %v4610 = vld [vmem:[%s4418 + $0x14] sm:$0x1]
      %v4611 = vld [vmem:[%s4418 + $0x18] sm:$0xf]
      %v4612 = vld [vmem:[%s4418 + $0x1c] sm:$0x1]
      %v4613 = vld [vmem:[%s4418 + $0x20] sm:$0xf]
      %v4614 = vld [vmem:[%s4418 + $0x24] sm:$0x1]
      %v4615 = vld [vmem:[%s4418 + $0x28] sm:$0xf]
      %v4616 = vld [vmem:[%s4418 + $0x2c] sm:$0x1]
      %v4617 = vld [vmem:[%s4418 + $0x30] sm:$0xf]
      %v4618 = vld [vmem:[%s4418 + $0x34] sm:$0x1]
      %v4619 = vld [vmem:[%s4418 + $0x38] sm:$0xf]
      %v4620 = vld [vmem:[%s4418 + $0x3c] sm:$0x1]
      %v4622 = vshrl.u32 %v4605, 16
      %v4624 = vrot.slane %v4622, 4
      %v4625 = vshll.u32 %v4605, 16
      %v4627 = vrot.slane %v4625, 5
      %v4628 = vor.u32 %v4624, %v4627
      %v4629 = vrot.slane %v4628, 4
      %v4631 = vshll.u32 %v4606, 16
      %v4633 = vrot.slane %v4631, 5
      %v4634 = vsel %vm754, %v4629, %v4633
      %v4636 = vshrl.u32 %v4607, 16
      %v4638 = vrot.slane %v4636, 4
      %v4639 = vshll.u32 %v4607, 16
      %v4641 = vrot.slane %v4639, 5
      %v4642 = vor.u32 %v4638, %v4641
      %v4643 = vrot.slane %v4642, 4
      %v4645 = vshll.u32 %v4608, 16
      %v4647 = vrot.slane %v4645, 5
      %v4648 = vsel %vm754, %v4643, %v4647
      %v4650 = vshrl.u32 %v4609, 16
      %v4652 = vrot.slane %v4650, 4
      %v4653 = vshll.u32 %v4609, 16
      %v4655 = vrot.slane %v4653, 5
      %v4656 = vor.u32 %v4652, %v4655
      %v4657 = vrot.slane %v4656, 4
      %v4659 = vshll.u32 %v4610, 16
      %v4661 = vrot.slane %v4659, 5
      %v4662 = vsel %vm754, %v4657, %v4661
      %v4664 = vshrl.u32 %v4611, 16
      %v4666 = vrot.slane %v4664, 4
      %v4667 = vshll.u32 %v4611, 16
      %v4669 = vrot.slane %v4667, 5
      %v4670 = vor.u32 %v4666, %v4669
      %v4671 = vrot.slane %v4670, 4
      %v4673 = vshll.u32 %v4612, 16
      %v4675 = vrot.slane %v4673, 5
      %v4676 = vsel %vm754, %v4671, %v4675
      %v4678 = vshrl.u32 %v4613, 16
      %v4680 = vrot.slane %v4678, 4
      %v4681 = vshll.u32 %v4613, 16
      %v4683 = vrot.slane %v4681, 5
      %v4684 = vor.u32 %v4680, %v4683
      %v4685 = vrot.slane %v4684, 4
      %v4687 = vshll.u32 %v4614, 16
      %v4689 = vrot.slane %v4687, 5
      %v4690 = vsel %vm754, %v4685, %v4689
      %v4692 = vshrl.u32 %v4615, 16
      %v4694 = vrot.slane %v4692, 4
      %v4695 = vshll.u32 %v4615, 16
      %v4697 = vrot.slane %v4695, 5
      %v4698 = vor.u32 %v4694, %v4697
      %v4699 = vrot.slane %v4698, 4
      %v4701 = vshll.u32 %v4616, 16
      %v4703 = vrot.slane %v4701, 5
      %v4704 = vsel %vm754, %v4699, %v4703
      %v4706 = vshrl.u32 %v4617, 16
      %v4708 = vrot.slane %v4706, 4
      %v4709 = vshll.u32 %v4617, 16
      %v4711 = vrot.slane %v4709, 5
      %v4712 = vor.u32 %v4708, %v4711
      %v4713 = vrot.slane %v4712, 4
      %v4715 = vshll.u32 %v4618, 16
      %v4717 = vrot.slane %v4715, 5
      %v4718 = vsel %vm754, %v4713, %v4717
      %v4720 = vshrl.u32 %v4619, 16
      %v4722 = vrot.slane %v4720, 4
      %v4723 = vshll.u32 %v4619, 16
      %v4725 = vrot.slane %v4723, 5
      %v4726 = vor.u32 %v4722, %v4725
      %v4727 = vrot.slane %v4726, 4
      %v4729 = vshll.u32 %v4620, 16
      %v4731 = vrot.slane %v4729, 5
      %v4732 = vsel %vm754, %v4727, %v4731
      %v4733 = vld [vmem:[#allocation4] sm:$0xff]
      %v4734 = vld [vmem:[#allocation4 + $0x8] sm:$0xff]
      %v4735 = vld [vmem:[#allocation4 + $0x10] sm:$0xff]
      %v4736 = vld [vmem:[#allocation4 + $0x18] sm:$0xff]
      %v4737 = vld [vmem:[#allocation4 + $0x20] sm:$0xff]
      %v4738 = vld [vmem:[#allocation4 + $0x28] sm:$0xff]
      %v4739 = vld [vmem:[#allocation4 + $0x30] sm:$0xff]
      %v4740 = vld [vmem:[#allocation4 + $0x38] sm:$0xff]
      %s4741 = scalar_lea.vmem %s6, 448
      %v4742 = vld [vmem:[%s4741] sm:$0xf]
      %v4743 = vld [vmem:[%s4741 + $0x4] sm:$0xf]
      %v4744 = vld [vmem:[%s4741 + $0x8] sm:$0xf]
      %v4745 = vld [vmem:[%s4741 + $0xc] sm:$0xf]
      %v4746 = vld [vmem:[%s4741 + $0x10] sm:$0xf]
      %v4747 = vld [vmem:[%s4741 + $0x14] sm:$0xf]
      %v4748 = vld [vmem:[%s4741 + $0x18] sm:$0xf]
      %v4749 = vld [vmem:[%s4741 + $0x1c] sm:$0xf]
      %v4750 = vld [vmem:[%s4741 + $0x20] sm:$0xf]
      %v4751 = vld [vmem:[%s4741 + $0x24] sm:$0xf]
      %v4752 = vld [vmem:[%s4741 + $0x28] sm:$0xf]
      %v4753 = vld [vmem:[%s4741 + $0x2c] sm:$0xf]
      %v4754 = vld [vmem:[%s4741 + $0x30] sm:$0xf]
      %v4755 = vld [vmem:[%s4741 + $0x34] sm:$0xf]
      %v4756 = vld [vmem:[%s4741 + $0x38] sm:$0xf]
      %v4757 = vld [vmem:[%s4741 + $0x3c] sm:$0xf]
      %v4758 = vunpack.c.l.b16 %v4634
      %v4759 = vunpack.c.l.b16 %v4648
      %v4760 = vunpack.c.l.b16 %v4662
      %v4761 = vunpack.c.l.b16 %v4676
      %v4762 = vunpack.c.l.b16 %v4690
      %v4763 = vunpack.c.l.b16 %v4704
      %v4764 = vunpack.c.l.b16 %v4718
      %v4765 = vunpack.c.l.b16 %v4732
      %v4766 = vpack.c.b16 %v4759, %v4758
      %v4767 = vpack.c.b16 %v4761, %v4760
      %v4768 = vpack.c.b16 %v4763, %v4762
      %v4769 = vpack.c.b16 %v4765, %v4764
      %v4790 = vunpack.c.l.b16 %v4742
      %v4791 = vunpack.c.l.b16 %v4743
      %v4792 = vunpack.c.l.b16 %v4744
      %v4793 = vunpack.c.l.b16 %v4745
      %v4794 = vunpack.c.l.b16 %v4746
      %v4795 = vunpack.c.l.b16 %v4747
      %v4796 = vunpack.c.l.b16 %v4748
      %v4797 = vunpack.c.l.b16 %v4749
      %v4798 = vunpack.c.l.b16 %v4750
      %v4799 = vunpack.c.l.b16 %v4751
      %v4800 = vunpack.c.l.b16 %v4752
      %v4801 = vunpack.c.l.b16 %v4753
      %v4802 = vunpack.c.l.b16 %v4754
      %v4803 = vunpack.c.l.b16 %v4755
      %v4804 = vunpack.c.l.b16 %v4756
      %v4805 = vunpack.c.l.b16 %v4757
      %v4806 = vpack.c.b16 %v4791, %v4790
      %v4807 = vpack.c.b16 %v4793, %v4792
      %v4808 = vpack.c.b16 %v4795, %v4794
      %v4809 = vpack.c.b16 %v4797, %v4796
      %v4810 = vpack.c.b16 %v4799, %v4798
      %v4811 = vpack.c.b16 %v4801, %v4800
      %v4812 = vpack.c.b16 %v4803, %v4802
      %v4813 = vpack.c.b16 %v4805, %v4804
      %4822 = vmatprep.subr.bf16.mxu0 0
      %4823 = vmatpush1.bf16.msra.mxu0 %v4806
      %4824 = vmatprep.subr.bf16.mxu0 0
      %4825 = vmatpush1.bf16.msra.mxu0 %v4807
      %4826 = vmatprep.subr.bf16.mxu0 0
      %4827 = vmatpush1.bf16.msra.mxu0 %v4808
      %4828 = vmatprep.subr.bf16.mxu0 0
      %4829 = vmatpush1.bf16.msra.mxu0 %v4809
      %4830 = vmatprep.subr.bf16.mxu0 0
      %4831 = vmatpush1.bf16.msra.mxu0 %v4810
      %4832 = vmatprep.subr.bf16.mxu0 0
      %4833 = vmatpush1.bf16.msra.mxu0 %v4811
      %4834 = vmatprep.subr.bf16.mxu0 0
      %4835 = vmatpush1.bf16.msra.mxu0 %v4812
      %4836 = vmatprep.subr.bf16.mxu0 0
      %4837 = vmatpush1.bf16.msra.mxu0 %v4813
      %4838 = vmatprep.subr.bf16.mxu0 0
      %4839 = vmatpush1.bf16.msra.mxu0 0
      %4840 = vmatprep.subr.bf16.mxu0 0
      %4841 = vmatpush1.bf16.msra.mxu0 0
      %4842 = vmatprep.subr.bf16.mxu0 0
      %4843 = vmatpush1.bf16.msra.mxu0 0
      %4844 = vmatprep.subr.bf16.mxu0 0
      %4845 = vmatpush1.bf16.msra.mxu0 0
      %4846 = vmatprep.subr.bf16.mxu0 0
      %4847 = vmatpush1.bf16.msra.mxu0 0
      %4848 = vmatprep.subr.bf16.mxu0 0
      %4849 = vmatpush1.bf16.msra.mxu0 0
      %4850 = vmatprep.subr.bf16.mxu0 0
      %4851 = vmatpush1.bf16.msra.mxu0 0
      %4852 = vmatprep.subr.bf16.mxu0 0
      %4853 = vmatpush1.bf16.msra.mxu0 0
      %4854 = vmatprep.mubr.bf16.mxu0 0
      %4855 = vmatmul.mubr.bf16.gmra.mrb[0].mxu0 %v4766
      %v4856 = vpop.f32.mrb[0].mxu0
      %v4857 = vadd.f32 0.0, %v4856
      %v4858 = vpop.f32.mrb[0].mxu0
      %v4859 = vpop.f32.mrb[0].mxu0
      %v4860 = vadd.f32 0.0, %v4859
      %v4861 = vpop.f32.mrb[0].mxu0
      %4862 = vmatprep.mubr.bf16.mxu0 0
      %4863 = vmatmul.mubr.bf16.gmra.mrb[0].mxu0 %v4767
      %v4864 = vpop.f32.mrb[0].mxu0
      %v4865 = vadd.f32 0.0, %v4864
      %v4866 = vpop.f32.mrb[0].mxu0
      %v4867 = vpop.f32.mrb[0].mxu0
      %v4868 = vadd.f32 0.0, %v4867
      %v4869 = vpop.f32.mrb[0].mxu0
      %4870 = vmatprep.mubr.bf16.mxu0 0
      %4871 = vmatmul.mubr.bf16.gmra.mrb[0].mxu0 %v4768
      %v4872 = vpop.f32.mrb[0].mxu0
      %v4873 = vadd.f32 0.0, %v4872
      %v4874 = vpop.f32.mrb[0].mxu0
      %v4875 = vpop.f32.mrb[0].mxu0
      %v4876 = vadd.f32 0.0, %v4875
      %v4877 = vpop.f32.mrb[0].mxu0
      %4878 = vmatprep.mubr.bf16.mxu0 0
      %4879 = vmatmul.mubr.bf16.gmra.mrb[0].mxu0 %v4769
      %v4880 = vpop.f32.mrb[0].mxu0
      %v4881 = vadd.f32 0.0, %v4880
      %v4882 = vpop.f32.mrb[0].mxu0
      %v4883 = vpop.f32.mrb[0].mxu0
      %v4884 = vadd.f32 0.0, %v4883
      %v4885 = vpop.f32.mrb[0].mxu0
      %4886 = vdwg.mxu0
      %v4887 = vadd.f32 %v4733, %v4857
      %v4888 = vadd.f32 %v4734, %v4860
      %v4889 = vadd.f32 %v4735, %v4865
      %v4890 = vadd.f32 %v4736, %v4868
      %v4891 = vadd.f32 %v4737, %v4873
      %v4892 = vadd.f32 %v4738, %v4876
      %v4893 = vadd.f32 %v4739, %v4881
      %v4894 = vadd.f32 %v4740, %v4884
      %4895 = vst [vmem:[#allocation4] sm:$0xff] %v4887
      %4896 = vst [vmem:[#allocation4 + $0x8] sm:$0xff] %v4888
      %4897 = vst [vmem:[#allocation4 + $0x10] sm:$0xff] %v4889
      %4898 = vst [vmem:[#allocation4 + $0x18] sm:$0xff] %v4890
      %4899 = vst [vmem:[#allocation4 + $0x20] sm:$0xff] %v4891
      %4900 = vst [vmem:[#allocation4 + $0x28] sm:$0xff] %v4892
      %4901 = vst [vmem:[#allocation4 + $0x30] sm:$0xff] %v4893
      %4902 = vst [vmem:[#allocation4 + $0x38] sm:$0xff] %v4894
      %v4903 = vld [vmem:[%s4418] sm:$0xe]
      %v4904 = vld [vmem:[%s4418 + $0x4] sm:$0x1]
      %v4905 = vld [vmem:[%s4418 + $0x8] sm:$0xe]
      %v4906 = vld [vmem:[%s4418 + $0xc] sm:$0x1]
      %v4907 = vld [vmem:[%s4418 + $0x10] sm:$0xe]
      %v4908 = vld [vmem:[%s4418 + $0x14] sm:$0x1]
      %v4909 = vld [vmem:[%s4418 + $0x18] sm:$0xe]
      %v4910 = vld [vmem:[%s4418 + $0x1c] sm:$0x1]
      %v4911 = vld [vmem:[%s4418 + $0x20] sm:$0xe]
      %v4912 = vld [vmem:[%s4418 + $0x24] sm:$0x1]
      %v4913 = vld [vmem:[%s4418 + $0x28] sm:$0xe]
      %v4914 = vld [vmem:[%s4418 + $0x2c] sm:$0x1]
      %v4915 = vld [vmem:[%s4418 + $0x30] sm:$0xe]
      %v4916 = vld [vmem:[%s4418 + $0x34] sm:$0x1]
      %v4917 = vld [vmem:[%s4418 + $0x38] sm:$0xe]
      %v4918 = vld [vmem:[%s4418 + $0x3c] sm:$0x1]
      %v4935 = vrot.slane %v4903, 5
      %v4936 = vrot.slane %v4935, 4
      %v4937 = vrot.slane %v4904, 5
      %v4938 = vsel %vm1071, %v4936, %v4937
      %v4939 = vrot.slane %v4905, 5
      %v4940 = vrot.slane %v4939, 4
      %v4941 = vrot.slane %v4906, 5
      %v4942 = vsel %vm1071, %v4940, %v4941
      %v4943 = vrot.slane %v4907, 5
      %v4944 = vrot.slane %v4943, 4
      %v4945 = vrot.slane %v4908, 5
      %v4946 = vsel %vm1071, %v4944, %v4945
      %v4947 = vrot.slane %v4909, 5
      %v4948 = vrot.slane %v4947, 4
      %v4949 = vrot.slane %v4910, 5
      %v4950 = vsel %vm1071, %v4948, %v4949
      %v4951 = vrot.slane %v4911, 5
      %v4952 = vrot.slane %v4951, 4
      %v4953 = vrot.slane %v4912, 5
      %v4954 = vsel %vm1071, %v4952, %v4953
      %v4955 = vrot.slane %v4913, 5
      %v4956 = vrot.slane %v4955, 4
      %v4957 = vrot.slane %v4914, 5
      %v4958 = vsel %vm1071, %v4956, %v4957
      %v4959 = vrot.slane %v4915, 5
      %v4960 = vrot.slane %v4959, 4
      %v4961 = vrot.slane %v4916, 5
      %v4962 = vsel %vm1071, %v4960, %v4961
      %v4963 = vrot.slane %v4917, 5
      %v4964 = vrot.slane %v4963, 4
      %v4965 = vrot.slane %v4918, 5
      %v4966 = vsel %vm1071, %v4964, %v4965
      %v4967 = vld [vmem:[#allocation4] sm:$0xff]
      %v4968 = vld [vmem:[#allocation4 + $0x8] sm:$0xff]
      %v4969 = vld [vmem:[#allocation4 + $0x10] sm:$0xff]
      %v4970 = vld [vmem:[#allocation4 + $0x18] sm:$0xff]
      %v4971 = vld [vmem:[#allocation4 + $0x20] sm:$0xff]
      %v4972 = vld [vmem:[#allocation4 + $0x28] sm:$0xff]
      %v4973 = vld [vmem:[#allocation4 + $0x30] sm:$0xff]
      %v4974 = vld [vmem:[#allocation4 + $0x38] sm:$0xff]
      %s4975 = scalar_lea.vmem %s6, 512
      %v4976 = vld [vmem:[%s4975] sm:$0xf]
      %v4977 = vld [vmem:[%s4975 + $0x4] sm:$0xf]
      %v4978 = vld [vmem:[%s4975 + $0x8] sm:$0xf]
      %v4979 = vld [vmem:[%s4975 + $0xc] sm:$0xf]
      %v4980 = vld [vmem:[%s4975 + $0x10] sm:$0xf]
      %v4981 = vld [vmem:[%s4975 + $0x14] sm:$0xf]
      %v4982 = vld [vmem:[%s4975 + $0x18] sm:$0xf]
      %v4983 = vld [vmem:[%s4975 + $0x1c] sm:$0xf]
      %v4984 = vld [vmem:[%s4975 + $0x20] sm:$0xf]
      %v4985 = vld [vmem:[%s4975 + $0x24] sm:$0xf]
      %v4986 = vld [vmem:[%s4975 + $0x28] sm:$0xf]
      %v4987 = vld [vmem:[%s4975 + $0x2c] sm:$0xf]
      %v4988 = vld [vmem:[%s4975 + $0x30] sm:$0xf]
      %v4989 = vld [vmem:[%s4975 + $0x34] sm:$0xf]
      %v4990 = vld [vmem:[%s4975 + $0x38] sm:$0xf]
      %v4991 = vld [vmem:[%s4975 + $0x3c] sm:$0xf]
      %v4992 = vunpack.c.l.b16 %v4938
      %v4993 = vunpack.c.l.b16 %v4942
      %v4994 = vunpack.c.l.b16 %v4946
      %v4995 = vunpack.c.l.b16 %v4950
      %v4996 = vunpack.c.l.b16 %v4954
      %v4997 = vunpack.c.l.b16 %v4958
      %v4998 = vunpack.c.l.b16 %v4962
      %v4999 = vunpack.c.l.b16 %v4966
      %v5000 = vpack.c.b16 %v4993, %v4992
      %v5001 = vpack.c.b16 %v4995, %v4994
      %v5002 = vpack.c.b16 %v4997, %v4996
      %v5003 = vpack.c.b16 %v4999, %v4998
      %v5024 = vunpack.c.l.b16 %v4976
      %v5025 = vunpack.c.l.b16 %v4977
      %v5026 = vunpack.c.l.b16 %v4978
      %v5027 = vunpack.c.l.b16 %v4979
      %v5028 = vunpack.c.l.b16 %v4980
      %v5029 = vunpack.c.l.b16 %v4981
      %v5030 = vunpack.c.l.b16 %v4982
      %v5031 = vunpack.c.l.b16 %v4983
      %v5032 = vunpack.c.l.b16 %v4984
      %v5033 = vunpack.c.l.b16 %v4985
      %v5034 = vunpack.c.l.b16 %v4986
      %v5035 = vunpack.c.l.b16 %v4987
      %v5036 = vunpack.c.l.b16 %v4988
      %v5037 = vunpack.c.l.b16 %v4989
      %v5038 = vunpack.c.l.b16 %v4990
      %v5039 = vunpack.c.l.b16 %v4991
      %v5040 = vpack.c.b16 %v5025, %v5024
      %v5041 = vpack.c.b16 %v5027, %v5026
      %v5042 = vpack.c.b16 %v5029, %v5028
      %v5043 = vpack.c.b16 %v5031, %v5030
      %v5044 = vpack.c.b16 %v5033, %v5032
      %v5045 = vpack.c.b16 %v5035, %v5034
      %v5046 = vpack.c.b16 %v5037, %v5036
      %v5047 = vpack.c.b16 %v5039, %v5038
      %5056 = vmatprep.subr.bf16.mxu0 0
      %5057 = vmatpush1.bf16.msra.mxu0 %v5040
      %5058 = vmatprep.subr.bf16.mxu0 0
      %5059 = vmatpush1.bf16.msra.mxu0 %v5041
      %5060 = vmatprep.subr.bf16.mxu0 0
      %5061 = vmatpush1.bf16.msra.mxu0 %v5042
      %5062 = vmatprep.subr.bf16.mxu0 0
      %5063 = vmatpush1.bf16.msra.mxu0 %v5043
      %5064 = vmatprep.subr.bf16.mxu0 0
      %5065 = vmatpush1.bf16.msra.mxu0 %v5044
      %5066 = vmatprep.subr.bf16.mxu0 0
      %5067 = vmatpush1.bf16.msra.mxu0 %v5045
      %5068 = vmatprep.subr.bf16.mxu0 0
      %5069 = vmatpush1.bf16.msra.mxu0 %v5046
      %5070 = vmatprep.subr.bf16.mxu0 0
      %5071 = vmatpush1.bf16.msra.mxu0 %v5047
      %5072 = vmatprep.subr.bf16.mxu0 0
      %5073 = vmatpush1.bf16.msra.mxu0 0
      %5074 = vmatprep.subr.bf16.mxu0 0
      %5075 = vmatpush1.bf16.msra.mxu0 0
      %5076 = vmatprep.subr.bf16.mxu0 0
      %5077 = vmatpush1.bf16.msra.mxu0 0
      %5078 = vmatprep.subr.bf16.mxu0 0
      %5079 = vmatpush1.bf16.msra.mxu0 0
      %5080 = vmatprep.subr.bf16.mxu0 0
      %5081 = vmatpush1.bf16.msra.mxu0 0
      %5082 = vmatprep.subr.bf16.mxu0 0
      %5083 = vmatpush1.bf16.msra.mxu0 0
      %5084 = vmatprep.subr.bf16.mxu0 0
      %5085 = vmatpush1.bf16.msra.mxu0 0
      %5086 = vmatprep.subr.bf16.mxu0 0
      %5087 = vmatpush1.bf16.msra.mxu0 0
      %5088 = vmatprep.mubr.bf16.mxu0 0
      %5089 = vmatmul.mubr.bf16.gmra.mrb[0].mxu0 %v5000
      %v5090 = vpop.f32.mrb[0].mxu0
      %v5091 = vadd.f32 0.0, %v5090
      %v5092 = vpop.f32.mrb[0].mxu0
      %v5093 = vpop.f32.mrb[0].mxu0
      %v5094 = vadd.f32 0.0, %v5093
      %v5095 = vpop.f32.mrb[0].mxu0
      %5096 = vmatprep.mubr.bf16.mxu0 0
      %5097 = vmatmul.mubr.bf16.gmra.mrb[0].mxu0 %v5001
      %v5098 = vpop.f32.mrb[0].mxu0
      %v5099 = vadd.f32 0.0, %v5098
      %v5100 = vpop.f32.mrb[0].mxu0
      %v5101 = vpop.f32.mrb[0].mxu0
      %v5102 = vadd.f32 0.0, %v5101
      %v5103 = vpop.f32.mrb[0].mxu0
      %5104 = vmatprep.mubr.bf16.mxu0 0
      %5105 = vmatmul.mubr.bf16.gmra.mrb[0].mxu0 %v5002
      %v5106 = vpop.f32.mrb[0].mxu0
      %v5107 = vadd.f32 0.0, %v5106
      %v5108 = vpop.f32.mrb[0].mxu0
      %v5109 = vpop.f32.mrb[0].mxu0
      %v5110 = vadd.f32 0.0, %v5109
      %v5111 = vpop.f32.mrb[0].mxu0
      %5112 = vmatprep.mubr.bf16.mxu0 0
      %5113 = vmatmul.mubr.bf16.gmra.mrb[0].mxu0 %v5003
      %v5114 = vpop.f32.mrb[0].mxu0
      %v5115 = vadd.f32 0.0, %v5114
      %v5116 = vpop.f32.mrb[0].mxu0
      %v5117 = vpop.f32.mrb[0].mxu0
      %v5118 = vadd.f32 0.0, %v5117
      %v5119 = vpop.f32.mrb[0].mxu0
      %5120 = vdwg.mxu0
      %v5121 = vadd.f32 %v4967, %v5091
      %v5122 = vadd.f32 %v4968, %v5094
      %v5123 = vadd.f32 %v4969, %v5099
      %v5124 = vadd.f32 %v4970, %v5102
      %v5125 = vadd.f32 %v4971, %v5107
      %v5126 = vadd.f32 %v4972, %v5110
      %v5127 = vadd.f32 %v4973, %v5115
      %v5128 = vadd.f32 %v4974, %v5118
      %5129 = vst [vmem:[#allocation4] sm:$0xff] %v5121
      %5130 = vst [vmem:[#allocation4 + $0x8] sm:$0xff] %v5122
      %5131 = vst [vmem:[#allocation4 + $0x10] sm:$0xff] %v5123
      %5132 = vst [vmem:[#allocation4 + $0x18] sm:$0xff] %v5124
      %5133 = vst [vmem:[#allocation4 + $0x20] sm:$0xff] %v5125
      %5134 = vst [vmem:[#allocation4 + $0x28] sm:$0xff] %v5126
      %5135 = vst [vmem:[#allocation4 + $0x30] sm:$0xff] %v5127
      %5136 = vst [vmem:[#allocation4 + $0x38] sm:$0xff] %v5128
      %v5137 = vld [vmem:[#allocation4] sm:$0xff]
      %v5138 = vld [vmem:[#allocation4 + $0x8] sm:$0xff]
      %v5139 = vld [vmem:[#allocation4 + $0x10] sm:$0xff]
      %v5140 = vld [vmem:[#allocation4 + $0x18] sm:$0xff]
      %v5141 = vld [vmem:[#allocation4 + $0x20] sm:$0xff]
      %v5142 = vld [vmem:[#allocation4 + $0x28] sm:$0xff]
      %v5143 = vld [vmem:[#allocation4 + $0x30] sm:$0xff]
      %v5144 = vld [vmem:[#allocation4 + $0x38] sm:$0xff]
      %v5145 = vpack.c.bf16 %v5137, %v5137
      %v5146 = vpack.c.bf16 %v5138, %v5138
      %v5147 = vpack.c.bf16 %v5139, %v5139
      %v5148 = vpack.c.bf16 %v5140, %v5140
      %v5149 = vpack.c.bf16 %v5141, %v5141
      %v5150 = vpack.c.bf16 %v5142, %v5142
      %v5151 = vpack.c.bf16 %v5143, %v5143
      %v5152 = vpack.c.bf16 %v5144, %v5144
      %5153 = vst [vmem:[%s278] sm:$0xf] %v5145
      %5154 = vst [vmem:[%s278 + $0x4] sm:$0xf] %v5146
      %5155 = vst [vmem:[%s278 + $0x8] sm:$0xf] %v5147
      %5156 = vst [vmem:[%s278 + $0xc] sm:$0xf] %v5148
      %5157 = vst [vmem:[%s278 + $0x10] sm:$0xf] %v5149
      %5158 = vst [vmem:[%s278 + $0x14] sm:$0xf] %v5150
      %5159 = vst [vmem:[%s278 + $0x18] sm:$0xf] %v5151
      %5160 = vst [vmem:[%s278 + $0x1c] sm:$0xf] %v5152
      %p5161 = scmp.lt.s32.totalorder %s18, 1
      %s5162 = scalar_select %p5161, %s18, 1
      %s5163 = smul.addr %s5162, 8
      %s5164 = smul.addr %s5163, 4
      %s5165 = scalar_lea.vmem %s7, %s5164
      // Predicated region
      $region49: #{network_block_forward.3} parent=47 // pred_check
        %p5166 = pneg %p188
      $region50: #{network_block_forward.3} parent=47 // pred_check_branch
        %5168 = sbr.rel (%p5166) target = $region52
      $region51: #{network_block_forward.3} parent=47 // pred_region
        _
      $region52: #{network_block_forward.3} parent=47 // pred_fallthru
        _
    $region48: #{network_block_forward.3} parent=5 // pred_fallthru
      _
    %p5169 = scmp.le.s32.totalorder 2, %s13
    // Predicated region
    $region53: #{network_block_forward.3} parent=5 // pred_check
      %p5170 = pneg %p5169
    $region54: #{network_block_forward.3} parent=5 // pred_check_branch
      %5172 = sbr.rel (%p5170) target = $region56
    $region55: #{network_block_forward.3} parent=5 // pred_region
      %s5173 = ssub.s32 %s13, 2
      // Predicated region
      $region57: #{network_block_forward.3} parent=55 // pred_check
        %p5174 = pneg %p194
      $region58: #{network_block_forward.3} parent=55 // pred_check_branch
        %5176 = sbr.rel (%p5174) target = $region60
      $region59: #{network_block_forward.3} parent=55 // pred_region
        %p5177 = scmp.lt.s32.totalorder %s19, 1
        %s5178 = scalar_select %p5177, %s19, 1
        %s5179 = smul.addr %s5178, 8
        %s5180 = smul.addr %s5179, 4
        %s5181 = scalar_lea.vmem %s7, %s5180
      $region60: #{network_block_forward.3} parent=55 // pred_fallthru
        _
    $region56: #{network_block_forward.3} parent=5 // pred_fallthru
      _
  $region6: #{network_block_forward.3} parent=0 // loop_footer
    %s17 = sadd.s32 1, %s13
  $region7: #{network_block_forward.3} parent=0 // loop_footer_branch
    %12 = sbr.rel target = $region3
  $region8: #{network_block_forward.3} parent=0 // loop_exit
    _

</llo_original>
